<compile_context>
chip_gen: v7x
topology: tpu7x:2x2x1
jax: 0.10.0
libtpu: 0.0.40
codegen_flags: <defaults>
</compile_context>

<pallas_src>
import jax
import jax.numpy as jnp
from jax.experimental import pallas as pl
from jax.experimental.pallas import tpu as pltpu

# ----------------------------- config -----------------------------------
VOCAB = 40
VOCAB_PAD = 128          # lane-dense logits slab; sliced back to VOCAB in the wrapper
EMBED = 16
HIDDEN = 32
NUM_LAYERS = 2           # the fused kernel hard-codes a 2-layer wavefront
BATCH = 2
T_ENC = 8
T_DEC = 6

GATE_PAD = 128           # each GRU gate (r|z|n) gets its own 128-lane block
NG = 3 * GATE_PAD        # 384

# --------------------- weight-slab row layout (static) --------------------
_R_TAB_E0 = 0                         # enc layer-0:  Emb @ W_ih + b_ih   (VOCAB rows)
_R_WHH_E0 = _R_TAB_E0 + VOCAB         # enc layer-0:  W_hh                (H rows)
_R_WIH_E1 = _R_WHH_E0 + HIDDEN        # enc layer-1:  W_ih
_R_WHH_E1 = _R_WIH_E1 + HIDDEN        # enc layer-1:  W_hh
_R_TAB_D0 = _R_WHH_E1 + HIDDEN        # dec layer-0:  Emb @ W_ih[:E] + b_ih
_R_WCTX_D0 = _R_TAB_D0 + VOCAB        # dec layer-0:  context part W_ih[E:]
_R_WHH_D0 = _R_WCTX_D0 + HIDDEN       # dec layer-0:  W_hh
_R_WIH_D1 = _R_WHH_D0 + HIDDEN        # dec layer-1:  W_ih
_R_WHH_D1 = _R_WIH_D1 + HIDDEN        # dec layer-1:  W_hh
_R_WOUT = _R_WHH_D1 + HIDDEN          # output proj (lanes 0:VOCAB used)
_W_ROWS = _R_WOUT + HIDDEN            # 336 rows (all offsets multiples of 8)

# bias-slab rows
_B_HH_E0, _B_IH_E1, _B_HH_E1, _B_HH_D0, _B_IH_D1, _B_HH_D1, _B_OUT = range(7)
_B_ROWS = 8


# ----------------------- fused seq2seq Pallas kernel ----------------------
def _seq2seq_kernel(enc_ids, dec_ids, w_ref, b_ref,      # inputs
                    logits_ref, state_ref,                # outputs
                    gi_e0, gi_d0):                        # VMEM scratch
    """Whole encoder-decoder forward, single invocation (no grid).

    enc_ids/dec_ids : (B, T) int32 token ids in SMEM
    w_ref           : (336, 384) f32 fused weight slab in VMEM (layout above)
    b_ref           : (8, 384)   f32 fused bias slab
    logits_ref      : (B, T_dec, VOCAB_PAD) lane-dense logits (padded lanes are 0)
    state_ref       : (NUM_LAYERS, B, HIDDEN) final decoder hidden states
    gi_e0 / gi_d0   : (T, B, 3*128) hoisted layer-0 input projections
    """
    f32 = jnp.float32
    H = HIDDEN
    B, T_enc = enc_ids.shape
    _, T_dec = dec_ids.shape

    def gates(gi, gh, h):
        # gi/gh: (B, 3*128); gate g lives in lanes [g*128, g*128+H) -> 128-aligned slices.
        r = jax.nn.sigmoid(gi[:, 0:H] + gh[:, 0:H])
        z = jax.nn.sigmoid(gi[:, GATE_PAD:GATE_PAD + H] + gh[:, GATE_PAD:GATE_PAD + H])
        n = jnp.tanh(gi[:, 2 * GATE_PAD:2 * GATE_PAD + H]
                     + r * gh[:, 2 * GATE_PAD:2 * GATE_PAD + H])   # PyTorch: r*(Whn h + bhn)
        return (1.0 - z) * n + z * h

    def wavefront(gi0_ref, w_hh0, b_hh0, w_ih1, b_ih1, w_hh1, b_hh1,
                  h0, h1, T, collect):
        """Two stacked GRU layers advanced as a wavefront: in round r, layer-0 does
        step r and layer-1 does step r-1.  The 2-3 dots of a round are mutually
        independent, so their MXU fill/pop latencies overlap (serial chain ~= T+1
        rounds instead of 2T steps)."""
        outs = []
        for r in range(T + 1):            # fully unrolled (static trip count)
            x1 = h0                        # layer-0 hidden after r steps = layer-1 input
            gh0 = gi1 = gh1 = None
            # --- independent MXU dots of this round, issued back-to-back ---
            if r < T:
                gh0 = jnp.dot(h0, w_hh0, preferred_element_type=f32) + b_hh0
            if r >= 1:
                gi1 = jnp.dot(x1, w_ih1, preferred_element_type=f32) + b_ih1
                gh1 = jnp.dot(h1, w_hh1, preferred_element_type=f32) + b_hh1
            # --- elementwise gate math (VPU/EUP), independent across layers ---
            if r < T:
                h0 = gates(gi0_ref[r], gh0, h0)
            if r >= 1:
                h1 = gates(gi1, gh1, h1)
                if collect:
                    outs.append(h1)
        return h0, h1, outs

    zero_h = jnp.zeros((B, H), f32)

    # ------------- encoder layer-0 input projections (in-kernel gather) -------------
    # gi = Emb[token] @ W_ih + b_ih is precomputed per-token at prep time, so the
    # gather is a single 384-lane row read per (t, b).
    for t in range(T_enc):
        for b in range(B):
            gi_e0[t, b] = w_ref[_R_TAB_E0 + enc_ids[b, t]]

    # ------------------------------ encoder wavefront ------------------------------
    e_whh0 = w_ref[_R_WHH_E0:_R_WHH_E0 + H, :]
    e_wih1 = w_ref[_R_WIH_E1:_R_WIH_E1 + H, :]
    e_whh1 = w_ref[_R_WHH_E1:_R_WHH_E1 + H, :]
    enc_h0, enc_h1, _ = wavefront(
        gi_e0, e_whh0, b_ref[_B_HH_E0],
        e_wih1, b_ref[_B_IH_E1],
        e_whh1, b_ref[_B_HH_E1],
        zero_h, zero_h, T_enc, collect=False)

    # -------- decoder layer-0 input projections: gather + fixed context term --------
    # context = encoder top-layer final state; its projection is computed ONCE
    # (equivalent to concat([emb, ctx]) @ W_ih with W_ih split at row E).
    w_ctx = w_ref[_R_WCTX_D0:_R_WCTX_D0 + H, :]
    ctx_proj = jnp.dot(enc_h1, w_ctx, preferred_element_type=f32)    # (B, 3*128)
    for t in range(T_dec):
        for b in range(B):
            gi_d0[t, b] = w_ref[_R_TAB_D0 + dec_ids[b, t]] + ctx_proj[b]

    # ------------------------------ decoder wavefront ------------------------------
    d_whh0 = w_ref[_R_WHH_D0:_R_WHH_D0 + H, :]
    d_wih1 = w_ref[_R_WIH_D1:_R_WIH_D1 + H, :]
    d_whh1 = w_ref[_R_WHH_D1:_R_WHH_D1 + H, :]
    dec_h0, dec_h1, dec_tops = wavefront(
        gi_d0, d_whh0, b_ref[_B_HH_D0],
        d_wih1, b_ref[_B_IH_D1],
        d_whh1, b_ref[_B_HH_D1],
        enc_h0, enc_h1, T_dec, collect=True)

    # -------- output projection, emitted directly in (B, T_dec, VOCAB_PAD) order ----
    w_out = w_ref[_R_WOUT:_R_WOUT + H, :][:, :VOCAB_PAD]             # (H, 128)
    b_out = b_ref[_B_OUT][:VOCAB_PAD]                                # (128,)
    for b in range(B):
        top_b = jnp.stack([o[b] for o in dec_tops], axis=0)          # (T_dec, H)
        logits_ref[b] = jnp.dot(top_b, w_out, preferred_element_type=f32) + b_out

    # final decoder hidden states
    state_ref[0] = dec_h0
    state_ref[1] = dec_h1


# ------------------------------ wrapper ------------------------------------
def seq2seq_pallas(w_slab, b_slab, enc_X, dec_X):
    """Per-call work is just the pallas_call + a lane slice of the logits."""
    B, T_enc = enc_X.shape
    _, T_dec = dec_X.shape

    logits_pad, state = pl.pallas_call(
        _seq2seq_kernel,
        out_shape=(
            jax.ShapeDtypeStruct((B, T_dec, VOCAB_PAD), jnp.float32),
            jax.ShapeDtypeStruct((NUM_LAYERS, B, HIDDEN), jnp.float32),
        ),
        in_specs=[
            pl.BlockSpec(memory_space=pltpu.MemorySpace.SMEM),   # encoder token ids
            pl.BlockSpec(memory_space=pltpu.MemorySpace.SMEM),   # decoder token ids
            pl.BlockSpec(memory_space=pltpu.MemorySpace.VMEM),   # fused weight slab
            pl.BlockSpec(memory_space=pltpu.MemorySpace.VMEM),   # fused bias slab
        ],
        out_specs=(
            pl.BlockSpec(memory_space=pltpu.MemorySpace.VMEM),
            pl.BlockSpec(memory_space=pltpu.MemorySpace.VMEM),
        ),
        scratch_shapes=[
            pltpu.VMEM((T_enc, B, NG), jnp.float32),   # hoisted encoder layer-0 gi
            pltpu.VMEM((T_dec, B, NG), jnp.float32),   # hoisted decoder layer-0 gi
        ],
    )(enc_X.astype(jnp.int32), dec_X.astype(jnp.int32), w_slab, b_slab)

    return logits_pad[..., :VOCAB], state


# --------------------------- parameter handling ----------------------------
def init_params(key):
    """PyTorch-layout parameters (fused r|z|n gates), shared by kernel prep + reference."""
    counter = [0]

    def rnd(shape):
        counter[0] += 1
        k = jax.random.fold_in(key, counter[0])
        return (0.1 * jax.random.normal(k, shape)).astype(jnp.float32)

    params = {
        "enc_emb": rnd((VOCAB, EMBED)),
        "dec_emb": rnd((VOCAB, EMBED)),
        "w_out": rnd((HIDDEN, VOCAB)),
        "b_out": rnd((1, VOCAB)),
        "enc_gru": [],
        "dec_gru": [],
    }
    for layer in range(NUM_LAYERS):
        din_enc = EMBED if layer == 0 else HIDDEN
        din_dec = (EMBED + HIDDEN) if layer == 0 else HIDDEN
        params["enc_gru"].append((
            rnd((din_enc, 3 * HIDDEN)),   # w_ih fused (r|z|n)
            rnd((HIDDEN, 3 * HIDDEN)),    # w_hh fused
            rnd((1, 3 * HIDDEN)),         # b_ih
            rnd((1, 3 * HIDDEN)),         # b_hh
        ))
        params["dec_gru"].append((
            rnd((din_dec, 3 * HIDDEN)),
            rnd((HIDDEN, 3 * HIDDEN)),
            rnd((1, 3 * HIDDEN)),
            rnd((1, 3 * HIDDEN)),
        ))
    return params


def _pad_gate_cols(w):
    """(Din, 3H) -> (Din, 3*128); gate g copied to lanes [g*128, g*128+H), rest zero."""
    out = jnp.zeros((w.shape[0], NG), jnp.float32)
    for g in range(3):
        out = out.at[:, g * GATE_PAD:g * GATE_PAD + HIDDEN].set(
            w[:, g * HIDDEN:(g + 1) * HIDDEN])
    return out


def prep_params(params):
    """One-time weight prep: fold Emb@W_ih+b_ih into gather tables, pad gate lanes,
    and bundle everything into one weight slab + one bias slab (2 DMAs)."""
    HI = jax.lax.Precision.HIGHEST
    e_wih0, e_whh0, e_bih0, e_bhh0 = params["enc_gru"][0]
    e_wih1, e_whh1, e_bih1, e_bhh1 = params["enc_gru"][1]
    d_wih0, d_whh0, d_bih0, d_bhh0 = params["dec_gru"][0]
    d_wih1, d_whh1, d_bih1, d_bhh1 = params["dec_gru"][1]

    tab_e0 = (jnp.dot(params["enc_emb"], _pad_gate_cols(e_wih0), precision=HI)
              + _pad_gate_cols(e_bih0))                                   # (VOCAB, 384)
    tab_d0 = (jnp.dot(params["dec_emb"], _pad_gate_cols(d_wih0[:EMBED]), precision=HI)
              + _pad_gate_cols(d_bih0))                                   # (VOCAB, 384)

    # output projection padded to the slab width; lanes >= VOCAB stay zero so the
    # padded logits lanes are guaranteed zero.
    w_out_pad = jnp.zeros((HIDDEN, NG), jnp.float32).at[:, :VOCAB].set(params["w_out"])
    b_out_pad = jnp.zeros((1, NG), jnp.float32).at[:, :VOCAB].set(params["b_out"])

    w_slab = jnp.concatenate([
        tab_e0,                          # _R_TAB_E0
        _pad_gate_cols(e_whh0),          # _R_WHH_E0
        _pad_gate_cols(e_wih1),          # _R_WIH_E1
        _pad_gate_cols(e_whh1),          # _R_WHH_E1
        tab_d0,                          # _R_TAB_D0
        _pad_gate_cols(d_wih0[EMBED:]),  # _R_WCTX_D0 (context rows of dec layer-0 W_ih)
        _pad_gate_cols(d_whh0),          # _R_WHH_D0
        _pad_gate_cols(d_wih1),          # _R_WIH_D1
        _pad_gate_cols(d_whh1),          # _R_WHH_D1
        w_out_pad,                       # _R_WOUT
    ], axis=0)
    assert w_slab.shape == (_W_ROWS, NG), w_slab.shape

    b_slab = jnp.concatenate([
        _pad_gate_cols(e_bhh0),          # _B_HH_E0
        _pad_gate_cols(e_bih1),          # _B_IH_E1
        _pad_gate_cols(e_bhh1),          # _B_HH_E1
        _pad_gate_cols(d_bhh0),          # _B_HH_D0
        _pad_gate_cols(d_bih1),          # _B_IH_D1
        _pad_gate_cols(d_bhh1),          # _B_HH_D1
        b_out_pad,                       # _B_OUT
        jnp.zeros((1, NG), jnp.float32),
    ], axis=0)
    assert b_slab.shape == (_B_ROWS, NG), b_slab.shape
    return w_slab, b_slab


# ------------------------- pure-JAX reference -----------------------------
def _ref_gru_layer(x, h0, w_ih, w_hh, b_ih, b_hh):
    H = h0.shape[-1]
    HI = jax.lax.Precision.HIGHEST

    def step(h, xt):
        gi = jnp.dot(xt, w_ih, precision=HI) + b_ih
        gh = jnp.dot(h, w_hh, precision=HI) + b_hh
        r = jax.nn.sigmoid(gi[:, :H] + gh[:, :H])
        z = jax.nn.sigmoid(gi[:, H:2 * H] + gh[:, H:2 * H])
        n = jnp.tanh(gi[:, 2 * H:] + r * gh[:, 2 * H:])
        h_new = (1.0 - z) * n + z * h
        return h_new, h_new

    hT, out = jax.lax.scan(step, h0, x)
    return out, hT


def ref_forward(params, enc_X, dec_X):
    HI = jax.lax.Precision.HIGHEST
    B = enc_X.shape[0]
    x = jnp.transpose(params["enc_emb"][enc_X], (1, 0, 2))
    states = []
    for layer in range(NUM_LAYERS):
        h0 = jnp.zeros((B, HIDDEN), jnp.float32)
        x, hT = _ref_gru_layer(x, h0, *params["enc_gru"][layer])
        states.append(hT)
    state = jnp.stack(states)

    x = jnp.transpose(params["dec_emb"][dec_X], (1, 0, 2))
    context = jnp.broadcast_to(state[-1][None], (x.shape[0],) + state[-1].shape)
    x = jnp.concatenate([x, context], axis=2)
    new_states = []
    for layer in range(NUM_LAYERS):
        x, hT = _ref_gru_layer(x, state[layer], *params["dec_gru"][layer])
        new_states.append(hT)
    logits = jnp.dot(x, params["w_out"], precision=HI) + params["b_out"]
    return jnp.transpose(logits, (1, 0, 2)), jnp.stack(new_states)


# --------------------------------- main -----------------------------------
if __name__ == "__main__":
    key = jax.random.PRNGKey(0)
    kp, ke, kd = jax.random.split(key, 3)
    params = init_params(kp)
    w_slab, b_slab = prep_params(params)   # one-time prep, not per call

    enc_X = jax.random.randint(ke, (BATCH, T_ENC), 0, VOCAB, dtype=jnp.int32)
    dec_X = jax.random.randint(kd, (BATCH, T_DEC), 0, VOCAB, dtype=jnp.int32)

    fwd = jax.jit(seq2seq_pallas)
    logits, state = fwd(w_slab, b_slab, enc_X, dec_X)
    jax.block_until_ready((logits, state))

    ref_logits, ref_state = ref_forward(params, enc_X, dec_X)
    assert logits.shape == (BATCH, T_DEC, VOCAB), logits.shape
    assert state.shape == (NUM_LAYERS, BATCH, HIDDEN), state.shape

    # The kernel's recurrence dots run at DEFAULT MXU precision (single bf16 pass,
    # per the performance review); the reference runs at HIGHEST-precision f32, so
    # compare with a correspondingly relaxed tolerance.
    assert jnp.allclose(logits, ref_logits, atol=5e-3, rtol=5e-3), \
        float(jnp.max(jnp.abs(logits - ref_logits)))
    assert jnp.allclose(state, ref_state, atol=5e-3, rtol=5e-3), \
        float(jnp.max(jnp.abs(state - ref_state)))

    print("KERNEL_OK")
</pallas_src>

<mosaic_0001>
module attributes {stable_mosaic.version = 11 : i64} {
  func.func @_seq2seq_kernel(%arg0: memref<2x8xi32, #tpu.memory_space<smem>>, %arg1: memref<2x6xi32, #tpu.memory_space<smem>>, %arg2: memref<336x384xf32, #tpu.memory_space<vmem>>, %arg3: memref<8x384xf32, #tpu.memory_space<vmem>>, %arg4: memref<2x6x128xf32, #tpu.memory_space<vmem>>, %arg5: memref<2x2x32xf32, #tpu.memory_space<vmem>>, %arg6: memref<8x2x384xf32, #tpu.memory_space<vmem>>, %arg7: memref<6x2x384xf32, #tpu.memory_space<vmem>>) attributes {dimension_semantics = [], scalar_prefetch = 0 : i64, scratch_operands = 2 : i64, tpu.core_type = #tpu.core_type<tc>} {
    %cst = arith.constant 0.000000e+00 : f32
    %0 = vector.broadcast %cst : f32 to vector<2x32xf32>
    %c0 = arith.constant 0 : index
    %c0_0 = arith.constant 0 : index
    %1 = memref.load %arg0[%c0, %c0_0] : memref<2x8xi32, #tpu.memory_space<smem>>
    %c0_i32 = arith.constant 0 : i32
    %2 = arith.addi %c0_i32, %1 : i32
    %3 = arith.index_cast %2 : i32 to index
    %c0_1 = arith.constant 0 : index
    %4 = vector.load %arg2[%3, %c0_1] : memref<336x384xf32, #tpu.memory_space<vmem>>, vector<1x384xf32>
    %5 = vector.shape_cast %4 : vector<1x384xf32> to vector<384xf32>
    %c0_2 = arith.constant 0 : index
    %c0_3 = arith.constant 0 : index
    %c0_4 = arith.constant 0 : index
    %6 = vector.load %arg6[%c0_2, %c0_3, %c0_4] : memref<8x2x384xf32, #tpu.memory_space<vmem>>, vector<1x1x384xf32>
    %7 = vector.shape_cast %6 : vector<1x1x384xf32> to vector<384xf32>
    %8 = vector.shape_cast %5 : vector<384xf32> to vector<1x1x384xf32>
    tpu.vector_store %arg6[%c0_2, %c0_3, %c0_4], %8 {strides = array<i32>} : memref<8x2x384xf32, #tpu.memory_space<vmem>>, vector<1x1x384xf32>,
    %c1 = arith.constant 1 : index
    %c0_5 = arith.constant 0 : index
    %9 = memref.load %arg0[%c1, %c0_5] : memref<2x8xi32, #tpu.memory_space<smem>>
    %c0_i32_6 = arith.constant 0 : i32
    %10 = arith.addi %c0_i32_6, %9 : i32
    %11 = arith.index_cast %10 : i32 to index
    %c0_7 = arith.constant 0 : index
    %12 = vector.load %arg2[%11, %c0_7] : memref<336x384xf32, #tpu.memory_space<vmem>>, vector<1x384xf32>
    %13 = vector.shape_cast %12 : vector<1x384xf32> to vector<384xf32>
    %c0_8 = arith.constant 0 : index
    %c1_9 = arith.constant 1 : index
    %c0_10 = arith.constant 0 : index
    %14 = vector.load %arg6[%c0_8, %c1_9, %c0_10] : memref<8x2x384xf32, #tpu.memory_space<vmem>>, vector<1x1x384xf32>
    %15 = vector.shape_cast %14 : vector<1x1x384xf32> to vector<384xf32>
    %16 = vector.shape_cast %13 : vector<384xf32> to vector<1x1x384xf32>
    tpu.vector_store %arg6[%c0_8, %c1_9, %c0_10], %16 {strides = array<i32>} : memref<8x2x384xf32, #tpu.memory_space<vmem>>, vector<1x1x384xf32>,
    %c0_11 = arith.constant 0 : index
    %c1_12 = arith.constant 1 : index
    %17 = memref.load %arg0[%c0_11, %c1_12] : memref<2x8xi32, #tpu.memory_space<smem>>
    %c0_i32_13 = arith.constant 0 : i32
    %18 = arith.addi %c0_i32_13, %17 : i32
    %19 = arith.index_cast %18 : i32 to index
    %c0_14 = arith.constant 0 : index
    %20 = vector.load %arg2[%19, %c0_14] : memref<336x384xf32, #tpu.memory_space<vmem>>, vector<1x384xf32>
    %21 = vector.shape_cast %20 : vector<1x384xf32> to vector<384xf32>
    %c1_15 = arith.constant 1 : index
    %c0_16 = arith.constant 0 : index
    %c0_17 = arith.constant 0 : index
    %22 = vector.load %arg6[%c1_15, %c0_16, %c0_17] : memref<8x2x384xf32, #tpu.memory_space<vmem>>, vector<1x1x384xf32>
    %23 = vector.shape_cast %22 : vector<1x1x384xf32> to vector<384xf32>
    %24 = vector.shape_cast %21 : vector<384xf32> to vector<1x1x384xf32>
    tpu.vector_store %arg6[%c1_15, %c0_16, %c0_17], %24 {strides = array<i32>} : memref<8x2x384xf32, #tpu.memory_space<vmem>>, vector<1x1x384xf32>,
    %c1_18 = arith.constant 1 : index
    %c1_19 = arith.constant 1 : index
    %25 = memref.load %arg0[%c1_18, %c1_19] : memref<2x8xi32, #tpu.memory_space<smem>>
    %c0_i32_20 = arith.constant 0 : i32
    %26 = arith.addi %c0_i32_20, %25 : i32
    %27 = arith.index_cast %26 : i32 to index
    %c0_21 = arith.constant 0 : index
    %28 = vector.load %arg2[%27, %c0_21] : memref<336x384xf32, #tpu.memory_space<vmem>>, vector<1x384xf32>
    %29 = vector.shape_cast %28 : vector<1x384xf32> to vector<384xf32>
    %c1_22 = arith.constant 1 : index
    %c1_23 = arith.constant 1 : index
    %c0_24 = arith.constant 0 : index
    %30 = vector.load %arg6[%c1_22, %c1_23, %c0_24] : memref<8x2x384xf32, #tpu.memory_space<vmem>>, vector<1x1x384xf32>
    %31 = vector.shape_cast %30 : vector<1x1x384xf32> to vector<384xf32>
    %32 = vector.shape_cast %29 : vector<384xf32> to vector<1x1x384xf32>
    tpu.vector_store %arg6[%c1_22, %c1_23, %c0_24], %32 {strides = array<i32>} : memref<8x2x384xf32, #tpu.memory_space<vmem>>, vector<1x1x384xf32>,
    %c0_25 = arith.constant 0 : index
    %c2 = arith.constant 2 : index
    %33 = memref.load %arg0[%c0_25, %c2] : memref<2x8xi32, #tpu.memory_space<smem>>
    %c0_i32_26 = arith.constant 0 : i32
    %34 = arith.addi %c0_i32_26, %33 : i32
    %35 = arith.index_cast %34 : i32 to index
    %c0_27 = arith.constant 0 : index
    %36 = vector.load %arg2[%35, %c0_27] : memref<336x384xf32, #tpu.memory_space<vmem>>, vector<1x384xf32>
    %37 = vector.shape_cast %36 : vector<1x384xf32> to vector<384xf32>
    %c2_28 = arith.constant 2 : index
    %c0_29 = arith.constant 0 : index
    %c0_30 = arith.constant 0 : index
    %38 = vector.load %arg6[%c2_28, %c0_29, %c0_30] : memref<8x2x384xf32, #tpu.memory_space<vmem>>, vector<1x1x384xf32>
    %39 = vector.shape_cast %38 : vector<1x1x384xf32> to vector<384xf32>
    %40 = vector.shape_cast %37 : vector<384xf32> to vector<1x1x384xf32>
    tpu.vector_store %arg6[%c2_28, %c0_29, %c0_30], %40 {strides = array<i32>} : memref<8x2x384xf32, #tpu.memory_space<vmem>>, vector<1x1x384xf32>,
    %c1_31 = arith.constant 1 : index
    %c2_32 = arith.constant 2 : index
    %41 = memref.load %arg0[%c1_31, %c2_32] : memref<2x8xi32, #tpu.memory_space<smem>>
    %c0_i32_33 = arith.constant 0 : i32
    %42 = arith.addi %c0_i32_33, %41 : i32
    %43 = arith.index_cast %42 : i32 to index
    %c0_34 = arith.constant 0 : index
    %44 = vector.load %arg2[%43, %c0_34] : memref<336x384xf32, #tpu.memory_space<vmem>>, vector<1x384xf32>
    %45 = vector.shape_cast %44 : vector<1x384xf32> to vector<384xf32>
    %c2_35 = arith.constant 2 : index
    %c1_36 = arith.constant 1 : index
    %c0_37 = arith.constant 0 : index
    %46 = vector.load %arg6[%c2_35, %c1_36, %c0_37] : memref<8x2x384xf32, #tpu.memory_space<vmem>>, vector<1x1x384xf32>
    %47 = vector.shape_cast %46 : vector<1x1x384xf32> to vector<384xf32>
    %48 = vector.shape_cast %45 : vector<384xf32> to vector<1x1x384xf32>
    tpu.vector_store %arg6[%c2_35, %c1_36, %c0_37], %48 {strides = array<i32>} : memref<8x2x384xf32, #tpu.memory_space<vmem>>, vector<1x1x384xf32>,
    %c0_38 = arith.constant 0 : index
    %c3 = arith.constant 3 : index
    %49 = memref.load %arg0[%c0_38, %c3] : memref<2x8xi32, #tpu.memory_space<smem>>
    %c0_i32_39 = arith.constant 0 : i32
    %50 = arith.addi %c0_i32_39, %49 : i32
    %51 = arith.index_cast %50 : i32 to index
    %c0_40 = arith.constant 0 : index
    %52 = vector.load %arg2[%51, %c0_40] : memref<336x384xf32, #tpu.memory_space<vmem>>, vector<1x384xf32>
    %53 = vector.shape_cast %52 : vector<1x384xf32> to vector<384xf32>
    %c3_41 = arith.constant 3 : index
    %c0_42 = arith.constant 0 : index
    %c0_43 = arith.constant 0 : index
    %54 = vector.load %arg6[%c3_41, %c0_42, %c0_43] : memref<8x2x384xf32, #tpu.memory_space<vmem>>, vector<1x1x384xf32>
    %55 = vector.shape_cast %54 : vector<1x1x384xf32> to vector<384xf32>
    %56 = vector.shape_cast %53 : vector<384xf32> to vector<1x1x384xf32>
    tpu.vector_store %arg6[%c3_41, %c0_42, %c0_43], %56 {strides = array<i32>} : memref<8x2x384xf32, #tpu.memory_space<vmem>>, vector<1x1x384xf32>,
    %c1_44 = arith.constant 1 : index
    %c3_45 = arith.constant 3 : index
    %57 = memref.load %arg0[%c1_44, %c3_45] : memref<2x8xi32, #tpu.memory_space<smem>>
    %c0_i32_46 = arith.constant 0 : i32
    %58 = arith.addi %c0_i32_46, %57 : i32
    %59 = arith.index_cast %58 : i32 to index
    %c0_47 = arith.constant 0 : index
    %60 = vector.load %arg2[%59, %c0_47] : memref<336x384xf32, #tpu.memory_space<vmem>>, vector<1x384xf32>
    %61 = vector.shape_cast %60 : vector<1x384xf32> to vector<384xf32>
    %c3_48 = arith.constant 3 : index
    %c1_49 = arith.constant 1 : index
    %c0_50 = arith.constant 0 : index
    %62 = vector.load %arg6[%c3_48, %c1_49, %c0_50] : memref<8x2x384xf32, #tpu.memory_space<vmem>>, vector<1x1x384xf32>
    %63 = vector.shape_cast %62 : vector<1x1x384xf32> to vector<384xf32>
    %64 = vector.shape_cast %61 : vector<384xf32> to vector<1x1x384xf32>
    tpu.vector_store %arg6[%c3_48, %c1_49, %c0_50], %64 {strides = array<i32>} : memref<8x2x384xf32, #tpu.memory_space<vmem>>, vector<1x1x384xf32>,
    %c0_51 = arith.constant 0 : index
    %c4 = arith.constant 4 : index
    %65 = memref.load %arg0[%c0_51, %c4] : memref<2x8xi32, #tpu.memory_space<smem>>
    %c0_i32_52 = arith.constant 0 : i32
    %66 = arith.addi %c0_i32_52, %65 : i32
    %67 = arith.index_cast %66 : i32 to index
    %c0_53 = arith.constant 0 : index
    %68 = vector.load %arg2[%67, %c0_53] : memref<336x384xf32, #tpu.memory_space<vmem>>, vector<1x384xf32>
    %69 = vector.shape_cast %68 : vector<1x384xf32> to vector<384xf32>
    %c4_54 = arith.constant 4 : index
    %c0_55 = arith.constant 0 : index
    %c0_56 = arith.constant 0 : index
    %70 = vector.load %arg6[%c4_54, %c0_55, %c0_56] : memref<8x2x384xf32, #tpu.memory_space<vmem>>, vector<1x1x384xf32>
    %71 = vector.shape_cast %70 : vector<1x1x384xf32> to vector<384xf32>
    %72 = vector.shape_cast %69 : vector<384xf32> to vector<1x1x384xf32>
    tpu.vector_store %arg6[%c4_54, %c0_55, %c0_56], %72 {strides = array<i32>} : memref<8x2x384xf32, #tpu.memory_space<vmem>>, vector<1x1x384xf32>,
    %c1_57 = arith.constant 1 : index
    %c4_58 = arith.constant 4 : index
    %73 = memref.load %arg0[%c1_57, %c4_58] : memref<2x8xi32, #tpu.memory_space<smem>>
    %c0_i32_59 = arith.constant 0 : i32
    %74 = arith.addi %c0_i32_59, %73 : i32
    %75 = arith.index_cast %74 : i32 to index
    %c0_60 = arith.constant 0 : index
    %76 = vector.load %arg2[%75, %c0_60] : memref<336x384xf32, #tpu.memory_space<vmem>>, vector<1x384xf32>
    %77 = vector.shape_cast %76 : vector<1x384xf32> to vector<384xf32>
    %c4_61 = arith.constant 4 : index
    %c1_62 = arith.constant 1 : index
    %c0_63 = arith.constant 0 : index
    %78 = vector.load %arg6[%c4_61, %c1_62, %c0_63] : memref<8x2x384xf32, #tpu.memory_space<vmem>>, vector<1x1x384xf32>
    %79 = vector.shape_cast %78 : vector<1x1x384xf32> to vector<384xf32>
    %80 = vector.shape_cast %77 : vector<384xf32> to vector<1x1x384xf32>
    tpu.vector_store %arg6[%c4_61, %c1_62, %c0_63], %80 {strides = array<i32>} : memref<8x2x384xf32, #tpu.memory_space<vmem>>, vector<1x1x384xf32>,
    %c0_64 = arith.constant 0 : index
    %c5 = arith.constant 5 : index
    %81 = memref.load %arg0[%c0_64, %c5] : memref<2x8xi32, #tpu.memory_space<smem>>
    %c0_i32_65 = arith.constant 0 : i32
    %82 = arith.addi %c0_i32_65, %81 : i32
    %83 = arith.index_cast %82 : i32 to index
    %c0_66 = arith.constant 0 : index
    %84 = vector.load %arg2[%83, %c0_66] : memref<336x384xf32, #tpu.memory_space<vmem>>, vector<1x384xf32>
    %85 = vector.shape_cast %84 : vector<1x384xf32> to vector<384xf32>
    %c5_67 = arith.constant 5 : index
    %c0_68 = arith.constant 0 : index
    %c0_69 = arith.constant 0 : index
    %86 = vector.load %arg6[%c5_67, %c0_68, %c0_69] : memref<8x2x384xf32, #tpu.memory_space<vmem>>, vector<1x1x384xf32>
    %87 = vector.shape_cast %86 : vector<1x1x384xf32> to vector<384xf32>
    %88 = vector.shape_cast %85 : vector<384xf32> to vector<1x1x384xf32>
    tpu.vector_store %arg6[%c5_67, %c0_68, %c0_69], %88 {strides = array<i32>} : memref<8x2x384xf32, #tpu.memory_space<vmem>>, vector<1x1x384xf32>,
    %c1_70 = arith.constant 1 : index
    %c5_71 = arith.constant 5 : index
    %89 = memref.load %arg0[%c1_70, %c5_71] : memref<2x8xi32, #tpu.memory_space<smem>>
    %c0_i32_72 = arith.constant 0 : i32
    %90 = arith.addi %c0_i32_72, %89 : i32
    %91 = arith.index_cast %90 : i32 to index
    %c0_73 = arith.constant 0 : index
    %92 = vector.load %arg2[%91, %c0_73] : memref<336x384xf32, #tpu.memory_space<vmem>>, vector<1x384xf32>
    %93 = vector.shape_cast %92 : vector<1x384xf32> to vector<384xf32>
    %c5_74 = arith.constant 5 : index
    %c1_75 = arith.constant 1 : index
    %c0_76 = arith.constant 0 : index
    %94 = vector.load %arg6[%c5_74, %c1_75, %c0_76] : memref<8x2x384xf32, #tpu.memory_space<vmem>>, vector<1x1x384xf32>
    %95 = vector.shape_cast %94 : vector<1x1x384xf32> to vector<384xf32>
    %96 = vector.shape_cast %93 : vector<384xf32> to vector<1x1x384xf32>
    tpu.vector_store %arg6[%c5_74, %c1_75, %c0_76], %96 {strides = array<i32>} : memref<8x2x384xf32, #tpu.memory_space<vmem>>, vector<1x1x384xf32>,
    %c0_77 = arith.constant 0 : index
    %c6 = arith.constant 6 : index
    %97 = memref.load %arg0[%c0_77, %c6] : memref<2x8xi32, #tpu.memory_space<smem>>
    %c0_i32_78 = arith.constant 0 : i32
    %98 = arith.addi %c0_i32_78, %97 : i32
    %99 = arith.index_cast %98 : i32 to index
    %c0_79 = arith.constant 0 : index
    %100 = vector.load %arg2[%99, %c0_79] : memref<336x384xf32, #tpu.memory_space<vmem>>, vector<1x384xf32>
    %101 = vector.shape_cast %100 : vector<1x384xf32> to vector<384xf32>
    %c6_80 = arith.constant 6 : index
    %c0_81 = arith.constant 0 : index
    %c0_82 = arith.constant 0 : index
    %102 = vector.load %arg6[%c6_80, %c0_81, %c0_82] : memref<8x2x384xf32, #tpu.memory_space<vmem>>, vector<1x1x384xf32>
    %103 = vector.shape_cast %102 : vector<1x1x384xf32> to vector<384xf32>
    %104 = vector.shape_cast %101 : vector<384xf32> to vector<1x1x384xf32>
    tpu.vector_store %arg6[%c6_80, %c0_81, %c0_82], %104 {strides = array<i32>} : memref<8x2x384xf32, #tpu.memory_space<vmem>>, vector<1x1x384xf32>,
    %c1_83 = arith.constant 1 : index
    %c6_84 = arith.constant 6 : index
    %105 = memref.load %arg0[%c1_83, %c6_84] : memref<2x8xi32, #tpu.memory_space<smem>>
    %c0_i32_85 = arith.constant 0 : i32
    %106 = arith.addi %c0_i32_85, %105 : i32
    %107 = arith.index_cast %106 : i32 to index
    %c0_86 = arith.constant 0 : index
    %108 = vector.load %arg2[%107, %c0_86] : memref<336x384xf32, #tpu.memory_space<vmem>>, vector<1x384xf32>
    %109 = vector.shape_cast %108 : vector<1x384xf32> to vector<384xf32>
    %c6_87 = arith.constant 6 : index
    %c1_88 = arith.constant 1 : index
    %c0_89 = arith.constant 0 : index
    %110 = vector.load %arg6[%c6_87, %c1_88, %c0_89] : memref<8x2x384xf32, #tpu.memory_space<vmem>>, vector<1x1x384xf32>
    %111 = vector.shape_cast %110 : vector<1x1x384xf32> to vector<384xf32>
    %112 = vector.shape_cast %109 : vector<384xf32> to vector<1x1x384xf32>
    tpu.vector_store %arg6[%c6_87, %c1_88, %c0_89], %112 {strides = array<i32>} : memref<8x2x384xf32, #tpu.memory_space<vmem>>, vector<1x1x384xf32>,
    %c0_90 = arith.constant 0 : index
    %c7 = arith.constant 7 : index
    %113 = memref.load %arg0[%c0_90, %c7] : memref<2x8xi32, #tpu.memory_space<smem>>
    %c0_i32_91 = arith.constant 0 : i32
    %114 = arith.addi %c0_i32_91, %113 : i32
    %115 = arith.index_cast %114 : i32 to index
    %c0_92 = arith.constant 0 : index
    %116 = vector.load %arg2[%115, %c0_92] : memref<336x384xf32, #tpu.memory_space<vmem>>, vector<1x384xf32>
    %117 = vector.shape_cast %116 : vector<1x384xf32> to vector<384xf32>
    %c7_93 = arith.constant 7 : index
    %c0_94 = arith.constant 0 : index
    %c0_95 = arith.constant 0 : index
    %118 = vector.load %arg6[%c7_93, %c0_94, %c0_95] : memref<8x2x384xf32, #tpu.memory_space<vmem>>, vector<1x1x384xf32>
    %119 = vector.shape_cast %118 : vector<1x1x384xf32> to vector<384xf32>
    %120 = vector.shape_cast %117 : vector<384xf32> to vector<1x1x384xf32>
    tpu.vector_store %arg6[%c7_93, %c0_94, %c0_95], %120 {strides = array<i32>} : memref<8x2x384xf32, #tpu.memory_space<vmem>>, vector<1x1x384xf32>,
    %c1_96 = arith.constant 1 : index
    %c7_97 = arith.constant 7 : index
    %121 = memref.load %arg0[%c1_96, %c7_97] : memref<2x8xi32, #tpu.memory_space<smem>>
    %c0_i32_98 = arith.constant 0 : i32
    %122 = arith.addi %c0_i32_98, %121 : i32
    %123 = arith.index_cast %122 : i32 to index
    %c0_99 = arith.constant 0 : index
    %124 = vector.load %arg2[%123, %c0_99] : memref<336x384xf32, #tpu.memory_space<vmem>>, vector<1x384xf32>
    %125 = vector.shape_cast %124 : vector<1x384xf32> to vector<384xf32>
    %c7_100 = arith.constant 7 : index
    %c1_101 = arith.constant 1 : index
    %c0_102 = arith.constant 0 : index
    %126 = vector.load %arg6[%c7_100, %c1_101, %c0_102] : memref<8x2x384xf32, #tpu.memory_space<vmem>>, vector<1x1x384xf32>
    %127 = vector.shape_cast %126 : vector<1x1x384xf32> to vector<384xf32>
    %128 = vector.shape_cast %125 : vector<384xf32> to vector<1x1x384xf32>
    tpu.vector_store %arg6[%c7_100, %c1_101, %c0_102], %128 {strides = array<i32>} : memref<8x2x384xf32, #tpu.memory_space<vmem>>, vector<1x1x384xf32>,
    %c40 = arith.constant 40 : index
    %c0_103 = arith.constant 0 : index
    %129 = vector.load %arg2[%c40, %c0_103] : memref<336x384xf32, #tpu.memory_space<vmem>>, vector<32x384xf32>
    %c72 = arith.constant 72 : index
    %c0_104 = arith.constant 0 : index
    %130 = vector.load %arg2[%c72, %c0_104] : memref<336x384xf32, #tpu.memory_space<vmem>>, vector<32x384xf32>
    %c104 = arith.constant 104 : index
    %c0_105 = arith.constant 0 : index
    %131 = vector.load %arg2[%c104, %c0_105] : memref<336x384xf32, #tpu.memory_space<vmem>>, vector<32x384xf32>
    %c0_106 = arith.constant 0 : index
    %c0_107 = arith.constant 0 : index
    %132 = vector.load %arg3[%c0_106, %c0_107] : memref<8x384xf32, #tpu.memory_space<vmem>>, vector<1x384xf32>
    %133 = vector.shape_cast %132 : vector<1x384xf32> to vector<384xf32>
    %c1_108 = arith.constant 1 : index
    %c0_109 = arith.constant 0 : index
    %134 = vector.load %arg3[%c1_108, %c0_109] : memref<8x384xf32, #tpu.memory_space<vmem>>, vector<1x384xf32>
    %135 = vector.shape_cast %134 : vector<1x384xf32> to vector<384xf32>
    %c2_110 = arith.constant 2 : index
    %c0_111 = arith.constant 0 : index
    %136 = vector.load %arg3[%c2_110, %c0_111] : memref<8x384xf32, #tpu.memory_space<vmem>>, vector<1x384xf32>
    %137 = vector.shape_cast %136 : vector<1x384xf32> to vector<384xf32>
    %cst_112 = arith.constant dense<0.000000e+00> : vector<2x384xf32>
    %138 = tpu.matmul %0, %129, %cst_112 {dimension_numbers = #tpu.dot_dimension_numbers<[1], [0], [0], [1], [0, 0, 1, 1], [], []>} : vector<2x32xf32>, vector<32x384xf32>, vector<2x384xf32> -> vector<2x384xf32>
    %139 = vector.shape_cast %133 : vector<384xf32> to vector<1x384xf32>
    %140 = vector.broadcast %139 : vector<1x384xf32> to vector<2x384xf32>
    %141 = arith.addf %138, %140 : vector<2x384xf32>
    %c0_113 = arith.constant 0 : index
    %c0_114 = arith.constant 0 : index
    %c0_115 = arith.constant 0 : index
    %142 = vector.load %arg6[%c0_113, %c0_114, %c0_115] : memref<8x2x384xf32, #tpu.memory_space<vmem>>, vector<1x2x384xf32>
    %143 = vector.shape_cast %142 : vector<1x2x384xf32> to vector<2x384xf32>
    %144 = vector.extract_strided_slice %143 {offsets = [0, 0], sizes = [2, 32], strides = [1, 1]} : vector<2x384xf32> to vector<2x32xf32>
    %145 = vector.extract_strided_slice %141 {offsets = [0, 0], sizes = [2, 32], strides = [1, 1]} : vector<2x384xf32> to vector<2x32xf32>
    %146 = arith.addf %144, %145 : vector<2x32xf32>
    %147 = arith.negf %146 : vector<2x32xf32>
    %148 = math.exp %147 : vector<2x32xf32>
    %cst_116 = arith.constant 1.000000e+00 : f32
    %149 = vector.broadcast %cst_116 : f32 to vector<2x32xf32>
    %150 = arith.addf %149, %148 : vector<2x32xf32>
    %151 = arith.divf %149, %150 : vector<2x32xf32>
    %152 = vector.extract_strided_slice %143 {offsets = [0, 128], sizes = [2, 32], strides = [1, 1]} : vector<2x384xf32> to vector<2x32xf32>
    %153 = vector.extract_strided_slice %141 {offsets = [0, 128], sizes = [2, 32], strides = [1, 1]} : vector<2x384xf32> to vector<2x32xf32>
    %154 = arith.addf %152, %153 : vector<2x32xf32>
    %155 = arith.negf %154 : vector<2x32xf32>
    %156 = math.exp %155 : vector<2x32xf32>
    %cst_117 = arith.constant 1.000000e+00 : f32
    %157 = vector.broadcast %cst_117 : f32 to vector<2x32xf32>
    %158 = arith.addf %157, %156 : vector<2x32xf32>
    %159 = arith.divf %157, %158 : vector<2x32xf32>
    %160 = vector.extract_strided_slice %143 {offsets = [0, 256], sizes = [2, 32], strides = [1, 1]} : vector<2x384xf32> to vector<2x32xf32>
    %161 = vector.extract_strided_slice %141 {offsets = [0, 256], sizes = [2, 32], strides = [1, 1]} : vector<2x384xf32> to vector<2x32xf32>
    %162 = arith.mulf %151, %161 : vector<2x32xf32>
    %163 = arith.addf %160, %162 : vector<2x32xf32>
    %164 = math.tanh %163 : vector<2x32xf32>
    %cst_118 = arith.constant 1.000000e+00 : f32
    %165 = vector.broadcast %cst_118 : f32 to vector<2x32xf32>
    %166 = arith.subf %165, %159 : vector<2x32xf32>
    %167 = arith.mulf %166, %164 : vector<2x32xf32>
    %168 = arith.mulf %159, %0 : vector<2x32xf32>
    %169 = arith.addf %167, %168 : vector<2x32xf32>
    %cst_119 = arith.constant dense<0.000000e+00> : vector<2x384xf32>
    %170 = tpu.matmul %169, %129, %cst_119 {dimension_numbers = #tpu.dot_dimension_numbers<[1], [0], [0], [1], [0, 0, 1, 1], [], []>} : vector<2x32xf32>, vector<32x384xf32>, vector<2x384xf32> -> vector<2x384xf32>
    %171 = vector.shape_cast %133 : vector<384xf32> to vector<1x384xf32>
    %172 = vector.broadcast %171 : vector<1x384xf32> to vector<2x384xf32>
    %173 = arith.addf %170, %172 : vector<2x384xf32>
    %cst_120 = arith.constant dense<0.000000e+00> : vector<2x384xf32>
    %174 = tpu.matmul %169, %130, %cst_120 {dimension_numbers = #tpu.dot_dimension_numbers<[1], [0], [0], [1], [0, 0, 1, 1], [], []>} : vector<2x32xf32>, vector<32x384xf32>, vector<2x384xf32> -> vector<2x384xf32>
    %175 = vector.shape_cast %135 : vector<384xf32> to vector<1x384xf32>
    %176 = vector.broadcast %175 : vector<1x384xf32> to vector<2x384xf32>
    %177 = arith.addf %174, %176 : vector<2x384xf32>
    %cst_121 = arith.constant dense<0.000000e+00> : vector<2x384xf32>
    %178 = tpu.matmul %0, %131, %cst_121 {dimension_numbers = #tpu.dot_dimension_numbers<[1], [0], [0], [1], [0, 0, 1, 1], [], []>} : vector<2x32xf32>, vector<32x384xf32>, vector<2x384xf32> -> vector<2x384xf32>
    %179 = vector.shape_cast %137 : vector<384xf32> to vector<1x384xf32>
    %180 = vector.broadcast %179 : vector<1x384xf32> to vector<2x384xf32>
    %181 = arith.addf %178, %180 : vector<2x384xf32>
    %c1_122 = arith.constant 1 : index
    %c0_123 = arith.constant 0 : index
    %c0_124 = arith.constant 0 : index
    %182 = vector.load %arg6[%c1_122, %c0_123, %c0_124] : memref<8x2x384xf32, #tpu.memory_space<vmem>>, vector<1x2x384xf32>
    %183 = vector.shape_cast %182 : vector<1x2x384xf32> to vector<2x384xf32>
    %184 = vector.extract_strided_slice %183 {offsets = [0, 0], sizes = [2, 32], strides = [1, 1]} : vector<2x384xf32> to vector<2x32xf32>
    %185 = vector.extract_strided_slice %173 {offsets = [0, 0], sizes = [2, 32], strides = [1, 1]} : vector<2x384xf32> to vector<2x32xf32>
    %186 = arith.addf %184, %185 : vector<2x32xf32>
    %187 = arith.negf %186 : vector<2x32xf32>
    %188 = math.exp %187 : vector<2x32xf32>
    %cst_125 = arith.constant 1.000000e+00 : f32
    %189 = vector.broadcast %cst_125 : f32 to vector<2x32xf32>
    %190 = arith.addf %189, %188 : vector<2x32xf32>
    %191 = arith.divf %189, %190 : vector<2x32xf32>
    %192 = vector.extract_strided_slice %183 {offsets = [0, 128], sizes = [2, 32], strides = [1, 1]} : vector<2x384xf32> to vector<2x32xf32>
    %193 = vector.extract_strided_slice %173 {offsets = [0, 128], sizes = [2, 32], strides = [1, 1]} : vector<2x384xf32> to vector<2x32xf32>
    %194 = arith.addf %192, %193 : vector<2x32xf32>
    %195 = arith.negf %194 : vector<2x32xf32>
    %196 = math.exp %195 : vector<2x32xf32>
    %cst_126 = arith.constant 1.000000e+00 : f32
    %197 = vector.broadcast %cst_126 : f32 to vector<2x32xf32>
    %198 = arith.addf %197, %196 : vector<2x32xf32>
    %199 = arith.divf %197, %198 : vector<2x32xf32>
    %200 = vector.extract_strided_slice %183 {offsets = [0, 256], sizes = [2, 32], strides = [1, 1]} : vector<2x384xf32> to vector<2x32xf32>
    %201 = vector.extract_strided_slice %173 {offsets = [0, 256], sizes = [2, 32], strides = [1, 1]} : vector<2x384xf32> to vector<2x32xf32>
    %202 = arith.mulf %191, %201 : vector<2x32xf32>
    %203 = arith.addf %200, %202 : vector<2x32xf32>
    %204 = math.tanh %203 : vector<2x32xf32>
    %cst_127 = arith.constant 1.000000e+00 : f32
    %205 = vector.broadcast %cst_127 : f32 to vector<2x32xf32>
    %206 = arith.subf %205, %199 : vector<2x32xf32>
    %207 = arith.mulf %206, %204 : vector<2x32xf32>
    %208 = arith.mulf %199, %169 : vector<2x32xf32>
    %209 = arith.addf %207, %208 : vector<2x32xf32>
    %210 = vector.extract_strided_slice %177 {offsets = [0, 0], sizes = [2, 32], strides = [1, 1]} : vector<2x384xf32> to vector<2x32xf32>
    %211 = vector.extract_strided_slice %181 {offsets = [0, 0], sizes = [2, 32], strides = [1, 1]} : vector<2x384xf32> to vector<2x32xf32>
    %212 = arith.addf %210, %211 : vector<2x32xf32>
    %213 = arith.negf %212 : vector<2x32xf32>
    %214 = math.exp %213 : vector<2x32xf32>
    %cst_128 = arith.constant 1.000000e+00 : f32
    %215 = vector.broadcast %cst_128 : f32 to vector<2x32xf32>
    %216 = arith.addf %215, %214 : vector<2x32xf32>
    %217 = arith.divf %215, %216 : vector<2x32xf32>
    %218 = vector.extract_strided_slice %177 {offsets = [0, 128], sizes = [2, 32], strides = [1, 1]} : vector<2x384xf32> to vector<2x32xf32>
    %219 = vector.extract_strided_slice %181 {offsets = [0, 128], sizes = [2, 32], strides = [1, 1]} : vector<2x384xf32> to vector<2x32xf32>
    %220 = arith.addf %218, %219 : vector<2x32xf32>
    %221 = arith.negf %220 : vector<2x32xf32>
    %222 = math.exp %221 : vector<2x32xf32>
    %cst_129 = arith.constant 1.000000e+00 : f32
    %223 = vector.broadcast %cst_129 : f32 to vector<2x32xf32>
    %224 = arith.addf %223, %222 : vector<2x32xf32>
    %225 = arith.divf %223, %224 : vector<2x32xf32>
    %226 = vector.extract_strided_slice %177 {offsets = [0, 256], sizes = [2, 32], strides = [1, 1]} : vector<2x384xf32> to vector<2x32xf32>
    %227 = vector.extract_strided_slice %181 {offsets = [0, 256], sizes = [2, 32], strides = [1, 1]} : vector<2x384xf32> to vector<2x32xf32>
    %228 = arith.mulf %217, %227 : vector<2x32xf32>
    %229 = arith.addf %226, %228 : vector<2x32xf32>
    %230 = math.tanh %229 : vector<2x32xf32>
    %cst_130 = arith.constant 1.000000e+00 : f32
    %231 = vector.broadcast %cst_130 : f32 to vector<2x32xf32>
    %232 = arith.subf %231, %225 : vector<2x32xf32>
    %233 = arith.mulf %232, %230 : vector<2x32xf32>
    %234 = arith.mulf %225, %0 : vector<2x32xf32>
    %235 = arith.addf %233, %234 : vector<2x32xf32>
    %cst_131 = arith.constant dense<0.000000e+00> : vector<2x384xf32>
    %236 = tpu.matmul %209, %129, %cst_131 {dimension_numbers = #tpu.dot_dimension_numbers<[1], [0], [0], [1], [0, 0, 1, 1], [], []>} : vector<2x32xf32>, vector<32x384xf32>, vector<2x384xf32> -> vector<2x384xf32>
    %237 = vector.shape_cast %133 : vector<384xf32> to vector<1x384xf32>
    %238 = vector.broadcast %237 : vector<1x384xf32> to vector<2x384xf32>
    %239 = arith.addf %236, %238 : vector<2x384xf32>
    %cst_132 = arith.constant dense<0.000000e+00> : vector<2x384xf32>
    %240 = tpu.matmul %209, %130, %cst_132 {dimension_numbers = #tpu.dot_dimension_numbers<[1], [0], [0], [1], [0, 0, 1, 1], [], []>} : vector<2x32xf32>, vector<32x384xf32>, vector<2x384xf32> -> vector<2x384xf32>
    %241 = vector.shape_cast %135 : vector<384xf32> to vector<1x384xf32>
    %242 = vector.broadcast %241 : vector<1x384xf32> to vector<2x384xf32>
    %243 = arith.addf %240, %242 : vector<2x384xf32>
    %cst_133 = arith.constant dense<0.000000e+00> : vector<2x384xf32>
    %244 = tpu.matmul %235, %131, %cst_133 {dimension_numbers = #tpu.dot_dimension_numbers<[1], [0], [0], [1], [0, 0, 1, 1], [], []>} : vector<2x32xf32>, vector<32x384xf32>, vector<2x384xf32> -> vector<2x384xf32>
    %245 = vector.shape_cast %137 : vector<384xf32> to vector<1x384xf32>
    %246 = vector.broadcast %245 : vector<1x384xf32> to vector<2x384xf32>
    %247 = arith.addf %244, %246 : vector<2x384xf32>
    %c2_134 = arith.constant 2 : index
    %c0_135 = arith.constant 0 : index
    %c0_136 = arith.constant 0 : index
    %248 = vector.load %arg6[%c2_134, %c0_135, %c0_136] : memref<8x2x384xf32, #tpu.memory_space<vmem>>, vector<1x2x384xf32>
    %249 = vector.shape_cast %248 : vector<1x2x384xf32> to vector<2x384xf32>
    %250 = vector.extract_strided_slice %249 {offsets = [0, 0], sizes = [2, 32], strides = [1, 1]} : vector<2x384xf32> to vector<2x32xf32>
    %251 = vector.extract_strided_slice %239 {offsets = [0, 0], sizes = [2, 32], strides = [1, 1]} : vector<2x384xf32> to vector<2x32xf32>
    %252 = arith.addf %250, %251 : vector<2x32xf32>
    %253 = arith.negf %252 : vector<2x32xf32>
    %254 = math.exp %253 : vector<2x32xf32>
    %cst_137 = arith.constant 1.000000e+00 : f32
    %255 = vector.broadcast %cst_137 : f32 to vector<2x32xf32>
    %256 = arith.addf %255, %254 : vector<2x32xf32>
    %257 = arith.divf %255, %256 : vector<2x32xf32>
    %258 = vector.extract_strided_slice %249 {offsets = [0, 128], sizes = [2, 32], strides = [1, 1]} : vector<2x384xf32> to vector<2x32xf32>
    %259 = vector.extract_strided_slice %239 {offsets = [0, 128], sizes = [2, 32], strides = [1, 1]} : vector<2x384xf32> to vector<2x32xf32>
    %260 = arith.addf %258, %259 : vector<2x32xf32>
    %261 = arith.negf %260 : vector<2x32xf32>
    %262 = math.exp %261 : vector<2x32xf32>
    %cst_138 = arith.constant 1.000000e+00 : f32
    %263 = vector.broadcast %cst_138 : f32 to vector<2x32xf32>
    %264 = arith.addf %263, %262 : vector<2x32xf32>
    %265 = arith.divf %263, %264 : vector<2x32xf32>
    %266 = vector.extract_strided_slice %249 {offsets = [0, 256], sizes = [2, 32], strides = [1, 1]} : vector<2x384xf32> to vector<2x32xf32>
    %267 = vector.extract_strided_slice %239 {offsets = [0, 256], sizes = [2, 32], strides = [1, 1]} : vector<2x384xf32> to vector<2x32xf32>
    %268 = arith.mulf %257, %267 : vector<2x32xf32>
    %269 = arith.addf %266, %268 : vector<2x32xf32>
    %270 = math.tanh %269 : vector<2x32xf32>
    %cst_139 = arith.constant 1.000000e+00 : f32
    %271 = vector.broadcast %cst_139 : f32 to vector<2x32xf32>
    %272 = arith.subf %271, %265 : vector<2x32xf32>
    %273 = arith.mulf %272, %270 : vector<2x32xf32>
    %274 = arith.mulf %265, %209 : vector<2x32xf32>
    %275 = arith.addf %273, %274 : vector<2x32xf32>
    %276 = vector.extract_strided_slice %243 {offsets = [0, 0], sizes = [2, 32], strides = [1, 1]} : vector<2x384xf32> to vector<2x32xf32>
    %277 = vector.extract_strided_slice %247 {offsets = [0, 0], sizes = [2, 32], strides = [1, 1]} : vector<2x384xf32> to vector<2x32xf32>
    %278 = arith.addf %276, %277 : vector<2x32xf32>
    %279 = arith.negf %278 : vector<2x32xf32>
    %280 = math.exp %279 : vector<2x32xf32>
    %cst_140 = arith.constant 1.000000e+00 : f32
    %281 = vector.broadcast %cst_140 : f32 to vector<2x32xf32>
    %282 = arith.addf %281, %280 : vector<2x32xf32>
    %283 = arith.divf %281, %282 : vector<2x32xf32>
    %284 = vector.extract_strided_slice %243 {offsets = [0, 128], sizes = [2, 32], strides = [1, 1]} : vector<2x384xf32> to vector<2x32xf32>
    %285 = vector.extract_strided_slice %247 {offsets = [0, 128], sizes = [2, 32], strides = [1, 1]} : vector<2x384xf32> to vector<2x32xf32>
    %286 = arith.addf %284, %285 : vector<2x32xf32>
    %287 = arith.negf %286 : vector<2x32xf32>
    %288 = math.exp %287 : vector<2x32xf32>
    %cst_141 = arith.constant 1.000000e+00 : f32
    %289 = vector.broadcast %cst_141 : f32 to vector<2x32xf32>
    %290 = arith.addf %289, %288 : vector<2x32xf32>
    %291 = arith.divf %289, %290 : vector<2x32xf32>
    %292 = vector.extract_strided_slice %243 {offsets = [0, 256], sizes = [2, 32], strides = [1, 1]} : vector<2x384xf32> to vector<2x32xf32>
    %293 = vector.extract_strided_slice %247 {offsets = [0, 256], sizes = [2, 32], strides = [1, 1]} : vector<2x384xf32> to vector<2x32xf32>
    %294 = arith.mulf %283, %293 : vector<2x32xf32>
    %295 = arith.addf %292, %294 : vector<2x32xf32>
    %296 = math.tanh %295 : vector<2x32xf32>
    %cst_142 = arith.constant 1.000000e+00 : f32
    %297 = vector.broadcast %cst_142 : f32 to vector<2x32xf32>
    %298 = arith.subf %297, %291 : vector<2x32xf32>
    %299 = arith.mulf %298, %296 : vector<2x32xf32>
    %300 = arith.mulf %291, %235 : vector<2x32xf32>
    %301 = arith.addf %299, %300 : vector<2x32xf32>
    %cst_143 = arith.constant dense<0.000000e+00> : vector<2x384xf32>
    %302 = tpu.matmul %275, %129, %cst_143 {dimension_numbers = #tpu.dot_dimension_numbers<[1], [0], [0], [1], [0, 0, 1, 1], [], []>} : vector<2x32xf32>, vector<32x384xf32>, vector<2x384xf32> -> vector<2x384xf32>
    %303 = vector.shape_cast %133 : vector<384xf32> to vector<1x384xf32>
    %304 = vector.broadcast %303 : vector<1x384xf32> to vector<2x384xf32>
    %305 = arith.addf %302, %304 : vector<2x384xf32>
    %cst_144 = arith.constant dense<0.000000e+00> : vector<2x384xf32>
    %306 = tpu.matmul %275, %130, %cst_144 {dimension_numbers = #tpu.dot_dimension_numbers<[1], [0], [0], [1], [0, 0, 1, 1], [], []>} : vector<2x32xf32>, vector<32x384xf32>, vector<2x384xf32> -> vector<2x384xf32>
    %307 = vector.shape_cast %135 : vector<384xf32> to vector<1x384xf32>
    %308 = vector.broadcast %307 : vector<1x384xf32> to vector<2x384xf32>
    %309 = arith.addf %306, %308 : vector<2x384xf32>
    %cst_145 = arith.constant dense<0.000000e+00> : vector<2x384xf32>
    %310 = tpu.matmul %301, %131, %cst_145 {dimension_numbers = #tpu.dot_dimension_numbers<[1], [0], [0], [1], [0, 0, 1, 1], [], []>} : vector<2x32xf32>, vector<32x384xf32>, vector<2x384xf32> -> vector<2x384xf32>
    %311 = vector.shape_cast %137 : vector<384xf32> to vector<1x384xf32>
    %312 = vector.broadcast %311 : vector<1x384xf32> to vector<2x384xf32>
    %313 = arith.addf %310, %312 : vector<2x384xf32>
    %c3_146 = arith.constant 3 : index
    %c0_147 = arith.constant 0 : index
    %c0_148 = arith.constant 0 : index
    %314 = vector.load %arg6[%c3_146, %c0_147, %c0_148] : memref<8x2x384xf32, #tpu.memory_space<vmem>>, vector<1x2x384xf32>
    %315 = vector.shape_cast %314 : vector<1x2x384xf32> to vector<2x384xf32>
    %316 = vector.extract_strided_slice %315 {offsets = [0, 0], sizes = [2, 32], strides = [1, 1]} : vector<2x384xf32> to vector<2x32xf32>
    %317 = vector.extract_strided_slice %305 {offsets = [0, 0], sizes = [2, 32], strides = [1, 1]} : vector<2x384xf32> to vector<2x32xf32>
    %318 = arith.addf %316, %317 : vector<2x32xf32>
    %319 = arith.negf %318 : vector<2x32xf32>
    %320 = math.exp %319 : vector<2x32xf32>
    %cst_149 = arith.constant 1.000000e+00 : f32
    %321 = vector.broadcast %cst_149 : f32 to vector<2x32xf32>
    %322 = arith.addf %321, %320 : vector<2x32xf32>
    %323 = arith.divf %321, %322 : vector<2x32xf32>
    %324 = vector.extract_strided_slice %315 {offsets = [0, 128], sizes = [2, 32], strides = [1, 1]} : vector<2x384xf32> to vector<2x32xf32>
    %325 = vector.extract_strided_slice %305 {offsets = [0, 128], sizes = [2, 32], strides = [1, 1]} : vector<2x384xf32> to vector<2x32xf32>
    %326 = arith.addf %324, %325 : vector<2x32xf32>
    %327 = arith.negf %326 : vector<2x32xf32>
    %328 = math.exp %327 : vector<2x32xf32>
    %cst_150 = arith.constant 1.000000e+00 : f32
    %329 = vector.broadcast %cst_150 : f32 to vector<2x32xf32>
    %330 = arith.addf %329, %328 : vector<2x32xf32>
    %331 = arith.divf %329, %330 : vector<2x32xf32>
    %332 = vector.extract_strided_slice %315 {offsets = [0, 256], sizes = [2, 32], strides = [1, 1]} : vector<2x384xf32> to vector<2x32xf32>
    %333 = vector.extract_strided_slice %305 {offsets = [0, 256], sizes = [2, 32], strides = [1, 1]} : vector<2x384xf32> to vector<2x32xf32>
    %334 = arith.mulf %323, %333 : vector<2x32xf32>
    %335 = arith.addf %332, %334 : vector<2x32xf32>
    %336 = math.tanh %335 : vector<2x32xf32>
    %cst_151 = arith.constant 1.000000e+00 : f32
    %337 = vector.broadcast %cst_151 : f32 to vector<2x32xf32>
    %338 = arith.subf %337, %331 : vector<2x32xf32>
    %339 = arith.mulf %338, %336 : vector<2x32xf32>
    %340 = arith.mulf %331, %275 : vector<2x32xf32>
    %341 = arith.addf %339, %340 : vector<2x32xf32>
    %342 = vector.extract_strided_slice %309 {offsets = [0, 0], sizes = [2, 32], strides = [1, 1]} : vector<2x384xf32> to vector<2x32xf32>
    %343 = vector.extract_strided_slice %313 {offsets = [0, 0], sizes = [2, 32], strides = [1, 1]} : vector<2x384xf32> to vector<2x32xf32>
    %344 = arith.addf %342, %343 : vector<2x32xf32>
    %345 = arith.negf %344 : vector<2x32xf32>
    %346 = math.exp %345 : vector<2x32xf32>
    %cst_152 = arith.constant 1.000000e+00 : f32
    %347 = vector.broadcast %cst_152 : f32 to vector<2x32xf32>
    %348 = arith.addf %347, %346 : vector<2x32xf32>
    %349 = arith.divf %347, %348 : vector<2x32xf32>
    %350 = vector.extract_strided_slice %309 {offsets = [0, 128], sizes = [2, 32], strides = [1, 1]} : vector<2x384xf32> to vector<2x32xf32>
    %351 = vector.extract_strided_slice %313 {offsets = [0, 128], sizes = [2, 32], strides = [1, 1]} : vector<2x384xf32> to vector<2x32xf32>
    %352 = arith.addf %350, %351 : vector<2x32xf32>
    %353 = arith.negf %352 : vector<2x32xf32>
    %354 = math.exp %353 : vector<2x32xf32>
    %cst_153 = arith.constant 1.000000e+00 : f32
    %355 = vector.broadcast %cst_153 : f32 to vector<2x32xf32>
    %356 = arith.addf %355, %354 : vector<2x32xf32>
    %357 = arith.divf %355, %356 : vector<2x32xf32>
    %358 = vector.extract_strided_slice %309 {offsets = [0, 256], sizes = [2, 32], strides = [1, 1]} : vector<2x384xf32> to vector<2x32xf32>
    %359 = vector.extract_strided_slice %313 {offsets = [0, 256], sizes = [2, 32], strides = [1, 1]} : vector<2x384xf32> to vector<2x32xf32>
    %360 = arith.mulf %349, %359 : vector<2x32xf32>
    %361 = arith.addf %358, %360 : vector<2x32xf32>
    %362 = math.tanh %361 : vector<2x32xf32>
    %cst_154 = arith.constant 1.000000e+00 : f32
    %363 = vector.broadcast %cst_154 : f32 to vector<2x32xf32>
    %364 = arith.subf %363, %357 : vector<2x32xf32>
    %365 = arith.mulf %364, %362 : vector<2x32xf32>
    %366 = arith.mulf %357, %301 : vector<2x32xf32>
    %367 = arith.addf %365, %366 : vector<2x32xf32>
    %cst_155 = arith.constant dense<0.000000e+00> : vector<2x384xf32>
    %368 = tpu.matmul %341, %129, %cst_155 {dimension_numbers = #tpu.dot_dimension_numbers<[1], [0], [0], [1], [0, 0, 1, 1], [], []>} : vector<2x32xf32>, vector<32x384xf32>, vector<2x384xf32> -> vector<2x384xf32>
    %369 = vector.shape_cast %133 : vector<384xf32> to vector<1x384xf32>
    %370 = vector.broadcast %369 : vector<1x384xf32> to vector<2x384xf32>
    %371 = arith.addf %368, %370 : vector<2x384xf32>
    %cst_156 = arith.constant dense<0.000000e+00> : vector<2x384xf32>
    %372 = tpu.matmul %341, %130, %cst_156 {dimension_numbers = #tpu.dot_dimension_numbers<[1], [0], [0], [1], [0, 0, 1, 1], [], []>} : vector<2x32xf32>, vector<32x384xf32>, vector<2x384xf32> -> vector<2x384xf32>
    %373 = vector.shape_cast %135 : vector<384xf32> to vector<1x384xf32>
    %374 = vector.broadcast %373 : vector<1x384xf32> to vector<2x384xf32>
    %375 = arith.addf %372, %374 : vector<2x384xf32>
    %cst_157 = arith.constant dense<0.000000e+00> : vector<2x384xf32>
    %376 = tpu.matmul %367, %131, %cst_157 {dimension_numbers = #tpu.dot_dimension_numbers<[1], [0], [0], [1], [0, 0, 1, 1], [], []>} : vector<2x32xf32>, vector<32x384xf32>, vector<2x384xf32> -> vector<2x384xf32>
    %377 = vector.shape_cast %137 : vector<384xf32> to vector<1x384xf32>
    %378 = vector.broadcast %377 : vector<1x384xf32> to vector<2x384xf32>
    %379 = arith.addf %376, %378 : vector<2x384xf32>
    %c4_158 = arith.constant 4 : index
    %c0_159 = arith.constant 0 : index
    %c0_160 = arith.constant 0 : index
    %380 = vector.load %arg6[%c4_158, %c0_159, %c0_160] : memref<8x2x384xf32, #tpu.memory_space<vmem>>, vector<1x2x384xf32>
    %381 = vector.shape_cast %380 : vector<1x2x384xf32> to vector<2x384xf32>
    %382 = vector.extract_strided_slice %381 {offsets = [0, 0], sizes = [2, 32], strides = [1, 1]} : vector<2x384xf32> to vector<2x32xf32>
    %383 = vector.extract_strided_slice %371 {offsets = [0, 0], sizes = [2, 32], strides = [1, 1]} : vector<2x384xf32> to vector<2x32xf32>
    %384 = arith.addf %382, %383 : vector<2x32xf32>
    %385 = arith.negf %384 : vector<2x32xf32>
    %386 = math.exp %385 : vector<2x32xf32>
    %cst_161 = arith.constant 1.000000e+00 : f32
    %387 = vector.broadcast %cst_161 : f32 to vector<2x32xf32>
    %388 = arith.addf %387, %386 : vector<2x32xf32>
    %389 = arith.divf %387, %388 : vector<2x32xf32>
    %390 = vector.extract_strided_slice %381 {offsets = [0, 128], sizes = [2, 32], strides = [1, 1]} : vector<2x384xf32> to vector<2x32xf32>
    %391 = vector.extract_strided_slice %371 {offsets = [0, 128], sizes = [2, 32], strides = [1, 1]} : vector<2x384xf32> to vector<2x32xf32>
    %392 = arith.addf %390, %391 : vector<2x32xf32>
    %393 = arith.negf %392 : vector<2x32xf32>
    %394 = math.exp %393 : vector<2x32xf32>
    %cst_162 = arith.constant 1.000000e+00 : f32
    %395 = vector.broadcast %cst_162 : f32 to vector<2x32xf32>
    %396 = arith.addf %395, %394 : vector<2x32xf32>
    %397 = arith.divf %395, %396 : vector<2x32xf32>
    %398 = vector.extract_strided_slice %381 {offsets = [0, 256], sizes = [2, 32], strides = [1, 1]} : vector<2x384xf32> to vector<2x32xf32>
    %399 = vector.extract_strided_slice %371 {offsets = [0, 256], sizes = [2, 32], strides = [1, 1]} : vector<2x384xf32> to vector<2x32xf32>
    %400 = arith.mulf %389, %399 : vector<2x32xf32>
    %401 = arith.addf %398, %400 : vector<2x32xf32>
    %402 = math.tanh %401 : vector<2x32xf32>
    %cst_163 = arith.constant 1.000000e+00 : f32
    %403 = vector.broadcast %cst_163 : f32 to vector<2x32xf32>
    %404 = arith.subf %403, %397 : vector<2x32xf32>
    %405 = arith.mulf %404, %402 : vector<2x32xf32>
    %406 = arith.mulf %397, %341 : vector<2x32xf32>
    %407 = arith.addf %405, %406 : vector<2x32xf32>
    %408 = vector.extract_strided_slice %375 {offsets = [0, 0], sizes = [2, 32], strides = [1, 1]} : vector<2x384xf32> to vector<2x32xf32>
    %409 = vector.extract_strided_slice %379 {offsets = [0, 0], sizes = [2, 32], strides = [1, 1]} : vector<2x384xf32> to vector<2x32xf32>
    %410 = arith.addf %408, %409 : vector<2x32xf32>
    %411 = arith.negf %410 : vector<2x32xf32>
    %412 = math.exp %411 : vector<2x32xf32>
    %cst_164 = arith.constant 1.000000e+00 : f32
    %413 = vector.broadcast %cst_164 : f32 to vector<2x32xf32>
    %414 = arith.addf %413, %412 : vector<2x32xf32>
    %415 = arith.divf %413, %414 : vector<2x32xf32>
    %416 = vector.extract_strided_slice %375 {offsets = [0, 128], sizes = [2, 32], strides = [1, 1]} : vector<2x384xf32> to vector<2x32xf32>
    %417 = vector.extract_strided_slice %379 {offsets = [0, 128], sizes = [2, 32], strides = [1, 1]} : vector<2x384xf32> to vector<2x32xf32>
    %418 = arith.addf %416, %417 : vector<2x32xf32>
    %419 = arith.negf %418 : vector<2x32xf32>
    %420 = math.exp %419 : vector<2x32xf32>
    %cst_165 = arith.constant 1.000000e+00 : f32
    %421 = vector.broadcast %cst_165 : f32 to vector<2x32xf32>
    %422 = arith.addf %421, %420 : vector<2x32xf32>
    %423 = arith.divf %421, %422 : vector<2x32xf32>
    %424 = vector.extract_strided_slice %375 {offsets = [0, 256], sizes = [2, 32], strides = [1, 1]} : vector<2x384xf32> to vector<2x32xf32>
    %425 = vector.extract_strided_slice %379 {offsets = [0, 256], sizes = [2, 32], strides = [1, 1]} : vector<2x384xf32> to vector<2x32xf32>
    %426 = arith.mulf %415, %425 : vector<2x32xf32>
    %427 = arith.addf %424, %426 : vector<2x32xf32>
    %428 = math.tanh %427 : vector<2x32xf32>
    %cst_166 = arith.constant 1.000000e+00 : f32
    %429 = vector.broadcast %cst_166 : f32 to vector<2x32xf32>
    %430 = arith.subf %429, %423 : vector<2x32xf32>
    %431 = arith.mulf %430, %428 : vector<2x32xf32>
    %432 = arith.mulf %423, %367 : vector<2x32xf32>
    %433 = arith.addf %431, %432 : vector<2x32xf32>
    %cst_167 = arith.constant dense<0.000000e+00> : vector<2x384xf32>
    %434 = tpu.matmul %407, %129, %cst_167 {dimension_numbers = #tpu.dot_dimension_numbers<[1], [0], [0], [1], [0, 0, 1, 1], [], []>} : vector<2x32xf32>, vector<32x384xf32>, vector<2x384xf32> -> vector<2x384xf32>
    %435 = vector.shape_cast %133 : vector<384xf32> to vector<1x384xf32>
    %436 = vector.broadcast %435 : vector<1x384xf32> to vector<2x384xf32>
    %437 = arith.addf %434, %436 : vector<2x384xf32>
    %cst_168 = arith.constant dense<0.000000e+00> : vector<2x384xf32>
    %438 = tpu.matmul %407, %130, %cst_168 {dimension_numbers = #tpu.dot_dimension_numbers<[1], [0], [0], [1], [0, 0, 1, 1], [], []>} : vector<2x32xf32>, vector<32x384xf32>, vector<2x384xf32> -> vector<2x384xf32>
    %439 = vector.shape_cast %135 : vector<384xf32> to vector<1x384xf32>
    %440 = vector.broadcast %439 : vector<1x384xf32> to vector<2x384xf32>
    %441 = arith.addf %438, %440 : vector<2x384xf32>
    %cst_169 = arith.constant dense<0.000000e+00> : vector<2x384xf32>
    %442 = tpu.matmul %433, %131, %cst_169 {dimension_numbers = #tpu.dot_dimension_numbers<[1], [0], [0], [1], [0, 0, 1, 1], [], []>} : vector<2x32xf32>, vector<32x384xf32>, vector<2x384xf32> -> vector<2x384xf32>
    %443 = vector.shape_cast %137 : vector<384xf32> to vector<1x384xf32>
    %444 = vector.broadcast %443 : vector<1x384xf32> to vector<2x384xf32>
    %445 = arith.addf %442, %444 : vector<2x384xf32>
    %c5_170 = arith.constant 5 : index
    %c0_171 = arith.constant 0 : index
    %c0_172 = arith.constant 0 : index
    %446 = vector.load %arg6[%c5_170, %c0_171, %c0_172] : memref<8x2x384xf32, #tpu.memory_space<vmem>>, vector<1x2x384xf32>
    %447 = vector.shape_cast %446 : vector<1x2x384xf32> to vector<2x384xf32>
    %448 = vector.extract_strided_slice %447 {offsets = [0, 0], sizes = [2, 32], strides = [1, 1]} : vector<2x384xf32> to vector<2x32xf32>
    %449 = vector.extract_strided_slice %437 {offsets = [0, 0], sizes = [2, 32], strides = [1, 1]} : vector<2x384xf32> to vector<2x32xf32>
    %450 = arith.addf %448, %449 : vector<2x32xf32>
    %451 = arith.negf %450 : vector<2x32xf32>
    %452 = math.exp %451 : vector<2x32xf32>
    %cst_173 = arith.constant 1.000000e+00 : f32
    %453 = vector.broadcast %cst_173 : f32 to vector<2x32xf32>
    %454 = arith.addf %453, %452 : vector<2x32xf32>
    %455 = arith.divf %453, %454 : vector<2x32xf32>
    %456 = vector.extract_strided_slice %447 {offsets = [0, 128], sizes = [2, 32], strides = [1, 1]} : vector<2x384xf32> to vector<2x32xf32>
    %457 = vector.extract_strided_slice %437 {offsets = [0, 128], sizes = [2, 32], strides = [1, 1]} : vector<2x384xf32> to vector<2x32xf32>
    %458 = arith.addf %456, %457 : vector<2x32xf32>
    %459 = arith.negf %458 : vector<2x32xf32>
    %460 = math.exp %459 : vector<2x32xf32>
    %cst_174 = arith.constant 1.000000e+00 : f32
    %461 = vector.broadcast %cst_174 : f32 to vector<2x32xf32>
    %462 = arith.addf %461, %460 : vector<2x32xf32>
    %463 = arith.divf %461, %462 : vector<2x32xf32>
    %464 = vector.extract_strided_slice %447 {offsets = [0, 256], sizes = [2, 32], strides = [1, 1]} : vector<2x384xf32> to vector<2x32xf32>
    %465 = vector.extract_strided_slice %437 {offsets = [0, 256], sizes = [2, 32], strides = [1, 1]} : vector<2x384xf32> to vector<2x32xf32>
    %466 = arith.mulf %455, %465 : vector<2x32xf32>
    %467 = arith.addf %464, %466 : vector<2x32xf32>
    %468 = math.tanh %467 : vector<2x32xf32>
    %cst_175 = arith.constant 1.000000e+00 : f32
    %469 = vector.broadcast %cst_175 : f32 to vector<2x32xf32>
    %470 = arith.subf %469, %463 : vector<2x32xf32>
    %471 = arith.mulf %470, %468 : vector<2x32xf32>
    %472 = arith.mulf %463, %407 : vector<2x32xf32>
    %473 = arith.addf %471, %472 : vector<2x32xf32>
    %474 = vector.extract_strided_slice %441 {offsets = [0, 0], sizes = [2, 32], strides = [1, 1]} : vector<2x384xf32> to vector<2x32xf32>
    %475 = vector.extract_strided_slice %445 {offsets = [0, 0], sizes = [2, 32], strides = [1, 1]} : vector<2x384xf32> to vector<2x32xf32>
    %476 = arith.addf %474, %475 : vector<2x32xf32>
    %477 = arith.negf %476 : vector<2x32xf32>
    %478 = math.exp %477 : vector<2x32xf32>
    %cst_176 = arith.constant 1.000000e+00 : f32
    %479 = vector.broadcast %cst_176 : f32 to vector<2x32xf32>
    %480 = arith.addf %479, %478 : vector<2x32xf32>
    %481 = arith.divf %479, %480 : vector<2x32xf32>
    %482 = vector.extract_strided_slice %441 {offsets = [0, 128], sizes = [2, 32], strides = [1, 1]} : vector<2x384xf32> to vector<2x32xf32>
    %483 = vector.extract_strided_slice %445 {offsets = [0, 128], sizes = [2, 32], strides = [1, 1]} : vector<2x384xf32> to vector<2x32xf32>
    %484 = arith.addf %482, %483 : vector<2x32xf32>
    %485 = arith.negf %484 : vector<2x32xf32>
    %486 = math.exp %485 : vector<2x32xf32>
    %cst_177 = arith.constant 1.000000e+00 : f32
    %487 = vector.broadcast %cst_177 : f32 to vector<2x32xf32>
    %488 = arith.addf %487, %486 : vector<2x32xf32>
    %489 = arith.divf %487, %488 : vector<2x32xf32>
    %490 = vector.extract_strided_slice %441 {offsets = [0, 256], sizes = [2, 32], strides = [1, 1]} : vector<2x384xf32> to vector<2x32xf32>
    %491 = vector.extract_strided_slice %445 {offsets = [0, 256], sizes = [2, 32], strides = [1, 1]} : vector<2x384xf32> to vector<2x32xf32>
    %492 = arith.mulf %481, %491 : vector<2x32xf32>
    %493 = arith.addf %490, %492 : vector<2x32xf32>
    %494 = math.tanh %493 : vector<2x32xf32>
    %cst_178 = arith.constant 1.000000e+00 : f32
    %495 = vector.broadcast %cst_178 : f32 to vector<2x32xf32>
    %496 = arith.subf %495, %489 : vector<2x32xf32>
    %497 = arith.mulf %496, %494 : vector<2x32xf32>
    %498 = arith.mulf %489, %433 : vector<2x32xf32>
    %499 = arith.addf %497, %498 : vector<2x32xf32>
    %cst_179 = arith.constant dense<0.000000e+00> : vector<2x384xf32>
    %500 = tpu.matmul %473, %129, %cst_179 {dimension_numbers = #tpu.dot_dimension_numbers<[1], [0], [0], [1], [0, 0, 1, 1], [], []>} : vector<2x32xf32>, vector<32x384xf32>, vector<2x384xf32> -> vector<2x384xf32>
    %501 = vector.shape_cast %133 : vector<384xf32> to vector<1x384xf32>
    %502 = vector.broadcast %501 : vector<1x384xf32> to vector<2x384xf32>
    %503 = arith.addf %500, %502 : vector<2x384xf32>
    %cst_180 = arith.constant dense<0.000000e+00> : vector<2x384xf32>
    %504 = tpu.matmul %473, %130, %cst_180 {dimension_numbers = #tpu.dot_dimension_numbers<[1], [0], [0], [1], [0, 0, 1, 1], [], []>} : vector<2x32xf32>, vector<32x384xf32>, vector<2x384xf32> -> vector<2x384xf32>
    %505 = vector.shape_cast %135 : vector<384xf32> to vector<1x384xf32>
    %506 = vector.broadcast %505 : vector<1x384xf32> to vector<2x384xf32>
    %507 = arith.addf %504, %506 : vector<2x384xf32>
    %cst_181 = arith.constant dense<0.000000e+00> : vector<2x384xf32>
    %508 = tpu.matmul %499, %131, %cst_181 {dimension_numbers = #tpu.dot_dimension_numbers<[1], [0], [0], [1], [0, 0, 1, 1], [], []>} : vector<2x32xf32>, vector<32x384xf32>, vector<2x384xf32> -> vector<2x384xf32>
    %509 = vector.shape_cast %137 : vector<384xf32> to vector<1x384xf32>
    %510 = vector.broadcast %509 : vector<1x384xf32> to vector<2x384xf32>
    %511 = arith.addf %508, %510 : vector<2x384xf32>
    %c6_182 = arith.constant 6 : index
    %c0_183 = arith.constant 0 : index
    %c0_184 = arith.constant 0 : index
    %512 = vector.load %arg6[%c6_182, %c0_183, %c0_184] : memref<8x2x384xf32, #tpu.memory_space<vmem>>, vector<1x2x384xf32>
    %513 = vector.shape_cast %512 : vector<1x2x384xf32> to vector<2x384xf32>
    %514 = vector.extract_strided_slice %513 {offsets = [0, 0], sizes = [2, 32], strides = [1, 1]} : vector<2x384xf32> to vector<2x32xf32>
    %515 = vector.extract_strided_slice %503 {offsets = [0, 0], sizes = [2, 32], strides = [1, 1]} : vector<2x384xf32> to vector<2x32xf32>
    %516 = arith.addf %514, %515 : vector<2x32xf32>
    %517 = arith.negf %516 : vector<2x32xf32>
    %518 = math.exp %517 : vector<2x32xf32>
    %cst_185 = arith.constant 1.000000e+00 : f32
    %519 = vector.broadcast %cst_185 : f32 to vector<2x32xf32>
    %520 = arith.addf %519, %518 : vector<2x32xf32>
    %521 = arith.divf %519, %520 : vector<2x32xf32>
    %522 = vector.extract_strided_slice %513 {offsets = [0, 128], sizes = [2, 32], strides = [1, 1]} : vector<2x384xf32> to vector<2x32xf32>
    %523 = vector.extract_strided_slice %503 {offsets = [0, 128], sizes = [2, 32], strides = [1, 1]} : vector<2x384xf32> to vector<2x32xf32>
    %524 = arith.addf %522, %523 : vector<2x32xf32>
    %525 = arith.negf %524 : vector<2x32xf32>
    %526 = math.exp %525 : vector<2x32xf32>
    %cst_186 = arith.constant 1.000000e+00 : f32
    %527 = vector.broadcast %cst_186 : f32 to vector<2x32xf32>
    %528 = arith.addf %527, %526 : vector<2x32xf32>
    %529 = arith.divf %527, %528 : vector<2x32xf32>
    %530 = vector.extract_strided_slice %513 {offsets = [0, 256], sizes = [2, 32], strides = [1, 1]} : vector<2x384xf32> to vector<2x32xf32>
    %531 = vector.extract_strided_slice %503 {offsets = [0, 256], sizes = [2, 32], strides = [1, 1]} : vector<2x384xf32> to vector<2x32xf32>
    %532 = arith.mulf %521, %531 : vector<2x32xf32>
    %533 = arith.addf %530, %532 : vector<2x32xf32>
    %534 = math.tanh %533 : vector<2x32xf32>
    %cst_187 = arith.constant 1.000000e+00 : f32
    %535 = vector.broadcast %cst_187 : f32 to vector<2x32xf32>
    %536 = arith.subf %535, %529 : vector<2x32xf32>
    %537 = arith.mulf %536, %534 : vector<2x32xf32>
    %538 = arith.mulf %529, %473 : vector<2x32xf32>
    %539 = arith.addf %537, %538 : vector<2x32xf32>
    %540 = vector.extract_strided_slice %507 {offsets = [0, 0], sizes = [2, 32], strides = [1, 1]} : vector<2x384xf32> to vector<2x32xf32>
    %541 = vector.extract_strided_slice %511 {offsets = [0, 0], sizes = [2, 32], strides = [1, 1]} : vector<2x384xf32> to vector<2x32xf32>
    %542 = arith.addf %540, %541 : vector<2x32xf32>
    %543 = arith.negf %542 : vector<2x32xf32>
    %544 = math.exp %543 : vector<2x32xf32>
    %cst_188 = arith.constant 1.000000e+00 : f32
    %545 = vector.broadcast %cst_188 : f32 to vector<2x32xf32>
    %546 = arith.addf %545, %544 : vector<2x32xf32>
    %547 = arith.divf %545, %546 : vector<2x32xf32>
    %548 = vector.extract_strided_slice %507 {offsets = [0, 128], sizes = [2, 32], strides = [1, 1]} : vector<2x384xf32> to vector<2x32xf32>
    %549 = vector.extract_strided_slice %511 {offsets = [0, 128], sizes = [2, 32], strides = [1, 1]} : vector<2x384xf32> to vector<2x32xf32>
    %550 = arith.addf %548, %549 : vector<2x32xf32>
    %551 = arith.negf %550 : vector<2x32xf32>
    %552 = math.exp %551 : vector<2x32xf32>
    %cst_189 = arith.constant 1.000000e+00 : f32
    %553 = vector.broadcast %cst_189 : f32 to vector<2x32xf32>
    %554 = arith.addf %553, %552 : vector<2x32xf32>
    %555 = arith.divf %553, %554 : vector<2x32xf32>
    %556 = vector.extract_strided_slice %507 {offsets = [0, 256], sizes = [2, 32], strides = [1, 1]} : vector<2x384xf32> to vector<2x32xf32>
    %557 = vector.extract_strided_slice %511 {offsets = [0, 256], sizes = [2, 32], strides = [1, 1]} : vector<2x384xf32> to vector<2x32xf32>
    %558 = arith.mulf %547, %557 : vector<2x32xf32>
    %559 = arith.addf %556, %558 : vector<2x32xf32>
    %560 = math.tanh %559 : vector<2x32xf32>
    %cst_190 = arith.constant 1.000000e+00 : f32
    %561 = vector.broadcast %cst_190 : f32 to vector<2x32xf32>
    %562 = arith.subf %561, %555 : vector<2x32xf32>
    %563 = arith.mulf %562, %560 : vector<2x32xf32>
    %564 = arith.mulf %555, %499 : vector<2x32xf32>
    %565 = arith.addf %563, %564 : vector<2x32xf32>
    %cst_191 = arith.constant dense<0.000000e+00> : vector<2x384xf32>
    %566 = tpu.matmul %539, %129, %cst_191 {dimension_numbers = #tpu.dot_dimension_numbers<[1], [0], [0], [1], [0, 0, 1, 1], [], []>} : vector<2x32xf32>, vector<32x384xf32>, vector<2x384xf32> -> vector<2x384xf32>
    %567 = vector.shape_cast %133 : vector<384xf32> to vector<1x384xf32>
    %568 = vector.broadcast %567 : vector<1x384xf32> to vector<2x384xf32>
    %569 = arith.addf %566, %568 : vector<2x384xf32>
    %cst_192 = arith.constant dense<0.000000e+00> : vector<2x384xf32>
    %570 = tpu.matmul %539, %130, %cst_192 {dimension_numbers = #tpu.dot_dimension_numbers<[1], [0], [0], [1], [0, 0, 1, 1], [], []>} : vector<2x32xf32>, vector<32x384xf32>, vector<2x384xf32> -> vector<2x384xf32>
    %571 = vector.shape_cast %135 : vector<384xf32> to vector<1x384xf32>
    %572 = vector.broadcast %571 : vector<1x384xf32> to vector<2x384xf32>
    %573 = arith.addf %570, %572 : vector<2x384xf32>
    %cst_193 = arith.constant dense<0.000000e+00> : vector<2x384xf32>
    %574 = tpu.matmul %565, %131, %cst_193 {dimension_numbers = #tpu.dot_dimension_numbers<[1], [0], [0], [1], [0, 0, 1, 1], [], []>} : vector<2x32xf32>, vector<32x384xf32>, vector<2x384xf32> -> vector<2x384xf32>
    %575 = vector.shape_cast %137 : vector<384xf32> to vector<1x384xf32>
    %576 = vector.broadcast %575 : vector<1x384xf32> to vector<2x384xf32>
    %577 = arith.addf %574, %576 : vector<2x384xf32>
    %c7_194 = arith.constant 7 : index
    %c0_195 = arith.constant 0 : index
    %c0_196 = arith.constant 0 : index
    %578 = vector.load %arg6[%c7_194, %c0_195, %c0_196] : memref<8x2x384xf32, #tpu.memory_space<vmem>>, vector<1x2x384xf32>
    %579 = vector.shape_cast %578 : vector<1x2x384xf32> to vector<2x384xf32>
    %580 = vector.extract_strided_slice %579 {offsets = [0, 0], sizes = [2, 32], strides = [1, 1]} : vector<2x384xf32> to vector<2x32xf32>
    %581 = vector.extract_strided_slice %569 {offsets = [0, 0], sizes = [2, 32], strides = [1, 1]} : vector<2x384xf32> to vector<2x32xf32>
    %582 = arith.addf %580, %581 : vector<2x32xf32>
    %583 = arith.negf %582 : vector<2x32xf32>
    %584 = math.exp %583 : vector<2x32xf32>
    %cst_197 = arith.constant 1.000000e+00 : f32
    %585 = vector.broadcast %cst_197 : f32 to vector<2x32xf32>
    %586 = arith.addf %585, %584 : vector<2x32xf32>
    %587 = arith.divf %585, %586 : vector<2x32xf32>
    %588 = vector.extract_strided_slice %579 {offsets = [0, 128], sizes = [2, 32], strides = [1, 1]} : vector<2x384xf32> to vector<2x32xf32>
    %589 = vector.extract_strided_slice %569 {offsets = [0, 128], sizes = [2, 32], strides = [1, 1]} : vector<2x384xf32> to vector<2x32xf32>
    %590 = arith.addf %588, %589 : vector<2x32xf32>
    %591 = arith.negf %590 : vector<2x32xf32>
    %592 = math.exp %591 : vector<2x32xf32>
    %cst_198 = arith.constant 1.000000e+00 : f32
    %593 = vector.broadcast %cst_198 : f32 to vector<2x32xf32>
    %594 = arith.addf %593, %592 : vector<2x32xf32>
    %595 = arith.divf %593, %594 : vector<2x32xf32>
    %596 = vector.extract_strided_slice %579 {offsets = [0, 256], sizes = [2, 32], strides = [1, 1]} : vector<2x384xf32> to vector<2x32xf32>
    %597 = vector.extract_strided_slice %569 {offsets = [0, 256], sizes = [2, 32], strides = [1, 1]} : vector<2x384xf32> to vector<2x32xf32>
    %598 = arith.mulf %587, %597 : vector<2x32xf32>
    %599 = arith.addf %596, %598 : vector<2x32xf32>
    %600 = math.tanh %599 : vector<2x32xf32>
    %cst_199 = arith.constant 1.000000e+00 : f32
    %601 = vector.broadcast %cst_199 : f32 to vector<2x32xf32>
    %602 = arith.subf %601, %595 : vector<2x32xf32>
    %603 = arith.mulf %602, %600 : vector<2x32xf32>
    %604 = arith.mulf %595, %539 : vector<2x32xf32>
    %605 = arith.addf %603, %604 : vector<2x32xf32>
    %606 = vector.extract_strided_slice %573 {offsets = [0, 0], sizes = [2, 32], strides = [1, 1]} : vector<2x384xf32> to vector<2x32xf32>
    %607 = vector.extract_strided_slice %577 {offsets = [0, 0], sizes = [2, 32], strides = [1, 1]} : vector<2x384xf32> to vector<2x32xf32>
    %608 = arith.addf %606, %607 : vector<2x32xf32>
    %609 = arith.negf %608 : vector<2x32xf32>
    %610 = math.exp %609 : vector<2x32xf32>
    %cst_200 = arith.constant 1.000000e+00 : f32
    %611 = vector.broadcast %cst_200 : f32 to vector<2x32xf32>
    %612 = arith.addf %611, %610 : vector<2x32xf32>
    %613 = arith.divf %611, %612 : vector<2x32xf32>
    %614 = vector.extract_strided_slice %573 {offsets = [0, 128], sizes = [2, 32], strides = [1, 1]} : vector<2x384xf32> to vector<2x32xf32>
    %615 = vector.extract_strided_slice %577 {offsets = [0, 128], sizes = [2, 32], strides = [1, 1]} : vector<2x384xf32> to vector<2x32xf32>
    %616 = arith.addf %614, %615 : vector<2x32xf32>
    %617 = arith.negf %616 : vector<2x32xf32>
    %618 = math.exp %617 : vector<2x32xf32>
    %cst_201 = arith.constant 1.000000e+00 : f32
    %619 = vector.broadcast %cst_201 : f32 to vector<2x32xf32>
    %620 = arith.addf %619, %618 : vector<2x32xf32>
    %621 = arith.divf %619, %620 : vector<2x32xf32>
    %622 = vector.extract_strided_slice %573 {offsets = [0, 256], sizes = [2, 32], strides = [1, 1]} : vector<2x384xf32> to vector<2x32xf32>
    %623 = vector.extract_strided_slice %577 {offsets = [0, 256], sizes = [2, 32], strides = [1, 1]} : vector<2x384xf32> to vector<2x32xf32>
    %624 = arith.mulf %613, %623 : vector<2x32xf32>
    %625 = arith.addf %622, %624 : vector<2x32xf32>
    %626 = math.tanh %625 : vector<2x32xf32>
    %cst_202 = arith.constant 1.000000e+00 : f32
    %627 = vector.broadcast %cst_202 : f32 to vector<2x32xf32>
    %628 = arith.subf %627, %621 : vector<2x32xf32>
    %629 = arith.mulf %628, %626 : vector<2x32xf32>
    %630 = arith.mulf %621, %565 : vector<2x32xf32>
    %631 = arith.addf %629, %630 : vector<2x32xf32>
    %cst_203 = arith.constant dense<0.000000e+00> : vector<2x384xf32>
    %632 = tpu.matmul %605, %130, %cst_203 {dimension_numbers = #tpu.dot_dimension_numbers<[1], [0], [0], [1], [0, 0, 1, 1], [], []>} : vector<2x32xf32>, vector<32x384xf32>, vector<2x384xf32> -> vector<2x384xf32>
    %633 = vector.shape_cast %135 : vector<384xf32> to vector<1x384xf32>
    %634 = vector.broadcast %633 : vector<1x384xf32> to vector<2x384xf32>
    %635 = arith.addf %632, %634 : vector<2x384xf32>
    %cst_204 = arith.constant dense<0.000000e+00> : vector<2x384xf32>
    %636 = tpu.matmul %631, %131, %cst_204 {dimension_numbers = #tpu.dot_dimension_numbers<[1], [0], [0], [1], [0, 0, 1, 1], [], []>} : vector<2x32xf32>, vector<32x384xf32>, vector<2x384xf32> -> vector<2x384xf32>
    %637 = vector.shape_cast %137 : vector<384xf32> to vector<1x384xf32>
    %638 = vector.broadcast %637 : vector<1x384xf32> to vector<2x384xf32>
    %639 = arith.addf %636, %638 : vector<2x384xf32>
    %640 = vector.extract_strided_slice %635 {offsets = [0, 0], sizes = [2, 32], strides = [1, 1]} : vector<2x384xf32> to vector<2x32xf32>
    %641 = vector.extract_strided_slice %639 {offsets = [0, 0], sizes = [2, 32], strides = [1, 1]} : vector<2x384xf32> to vector<2x32xf32>
    %642 = arith.addf %640, %641 : vector<2x32xf32>
    %643 = arith.negf %642 : vector<2x32xf32>
    %644 = math.exp %643 : vector<2x32xf32>
    %cst_205 = arith.constant 1.000000e+00 : f32
    %645 = vector.broadcast %cst_205 : f32 to vector<2x32xf32>
    %646 = arith.addf %645, %644 : vector<2x32xf32>
    %647 = arith.divf %645, %646 : vector<2x32xf32>
    %648 = vector.extract_strided_slice %635 {offsets = [0, 128], sizes = [2, 32], strides = [1, 1]} : vector<2x384xf32> to vector<2x32xf32>
    %649 = vector.extract_strided_slice %639 {offsets = [0, 128], sizes = [2, 32], strides = [1, 1]} : vector<2x384xf32> to vector<2x32xf32>
    %650 = arith.addf %648, %649 : vector<2x32xf32>
    %651 = arith.negf %650 : vector<2x32xf32>
    %652 = math.exp %651 : vector<2x32xf32>
    %cst_206 = arith.constant 1.000000e+00 : f32
    %653 = vector.broadcast %cst_206 : f32 to vector<2x32xf32>
    %654 = arith.addf %653, %652 : vector<2x32xf32>
    %655 = arith.divf %653, %654 : vector<2x32xf32>
    %656 = vector.extract_strided_slice %635 {offsets = [0, 256], sizes = [2, 32], strides = [1, 1]} : vector<2x384xf32> to vector<2x32xf32>
    %657 = vector.extract_strided_slice %639 {offsets = [0, 256], sizes = [2, 32], strides = [1, 1]} : vector<2x384xf32> to vector<2x32xf32>
    %658 = arith.mulf %647, %657 : vector<2x32xf32>
    %659 = arith.addf %656, %658 : vector<2x32xf32>
    %660 = math.tanh %659 : vector<2x32xf32>
    %cst_207 = arith.constant 1.000000e+00 : f32
    %661 = vector.broadcast %cst_207 : f32 to vector<2x32xf32>
    %662 = arith.subf %661, %655 : vector<2x32xf32>
    %663 = arith.mulf %662, %660 : vector<2x32xf32>
    %664 = arith.mulf %655, %631 : vector<2x32xf32>
    %665 = arith.addf %663, %664 : vector<2x32xf32>
    %c176 = arith.constant 176 : index
    %c0_208 = arith.constant 0 : index
    %666 = vector.load %arg2[%c176, %c0_208] : memref<336x384xf32, #tpu.memory_space<vmem>>, vector<32x384xf32>
    %cst_209 = arith.constant dense<0.000000e+00> : vector<2x384xf32>
    %667 = tpu.matmul %665, %666, %cst_209 {dimension_numbers = #tpu.dot_dimension_numbers<[1], [0], [0], [1], [0, 0, 1, 1], [], []>} : vector<2x32xf32>, vector<32x384xf32>, vector<2x384xf32> -> vector<2x384xf32>
    %c0_210 = arith.constant 0 : index
    %c0_211 = arith.constant 0 : index
    %668 = memref.load %arg1[%c0_210, %c0_211] : memref<2x6xi32, #tpu.memory_space<smem>>
    %c136_i32 = arith.constant 136 : i32
    %669 = arith.addi %c136_i32, %668 : i32
    %670 = arith.index_cast %669 : i32 to index
    %c0_212 = arith.constant 0 : index
    %671 = vector.load %arg2[%670, %c0_212] : memref<336x384xf32, #tpu.memory_space<vmem>>, vector<1x384xf32>
    %672 = vector.shape_cast %671 : vector<1x384xf32> to vector<384xf32>
    %673 = vector.extract_strided_slice %667 {offsets = [0, 0], sizes = [1, 384], strides = [1, 1]} : vector<2x384xf32> to vector<1x384xf32>
    %674 = vector.shape_cast %673 : vector<1x384xf32> to vector<384xf32>
    %675 = arith.addf %672, %674 : vector<384xf32>
    %c0_213 = arith.constant 0 : index
    %c0_214 = arith.constant 0 : index
    %c0_215 = arith.constant 0 : index
    %676 = vector.load %arg7[%c0_213, %c0_214, %c0_215] : memref<6x2x384xf32, #tpu.memory_space<vmem>>, vector<1x1x384xf32>
    %677 = vector.shape_cast %676 : vector<1x1x384xf32> to vector<384xf32>
    %678 = vector.shape_cast %675 : vector<384xf32> to vector<1x1x384xf32>
    tpu.vector_store %arg7[%c0_213, %c0_214, %c0_215], %678 {strides = array<i32>} : memref<6x2x384xf32, #tpu.memory_space<vmem>>, vector<1x1x384xf32>,
    %c1_216 = arith.constant 1 : index
    %c0_217 = arith.constant 0 : index
    %679 = memref.load %arg1[%c1_216, %c0_217] : memref<2x6xi32, #tpu.memory_space<smem>>
    %c136_i32_218 = arith.constant 136 : i32
    %680 = arith.addi %c136_i32_218, %679 : i32
    %681 = arith.index_cast %680 : i32 to index
    %c0_219 = arith.constant 0 : index
    %682 = vector.load %arg2[%681, %c0_219] : memref<336x384xf32, #tpu.memory_space<vmem>>, vector<1x384xf32>
    %683 = vector.shape_cast %682 : vector<1x384xf32> to vector<384xf32>
    %684 = vector.extract_strided_slice %667 {offsets = [1, 0], sizes = [1, 384], strides = [1, 1]} : vector<2x384xf32> to vector<1x384xf32>
    %685 = vector.shape_cast %684 : vector<1x384xf32> to vector<384xf32>
    %686 = arith.addf %683, %685 : vector<384xf32>
    %c0_220 = arith.constant 0 : index
    %c1_221 = arith.constant 1 : index
    %c0_222 = arith.constant 0 : index
    %687 = vector.load %arg7[%c0_220, %c1_221, %c0_222] : memref<6x2x384xf32, #tpu.memory_space<vmem>>, vector<1x1x384xf32>
    %688 = vector.shape_cast %687 : vector<1x1x384xf32> to vector<384xf32>
    %689 = vector.shape_cast %686 : vector<384xf32> to vector<1x1x384xf32>
    tpu.vector_store %arg7[%c0_220, %c1_221, %c0_222], %689 {strides = array<i32>} : memref<6x2x384xf32, #tpu.memory_space<vmem>>, vector<1x1x384xf32>,
    %c0_223 = arith.constant 0 : index
    %c1_224 = arith.constant 1 : index
    %690 = memref.load %arg1[%c0_223, %c1_224] : memref<2x6xi32, #tpu.memory_space<smem>>
    %c136_i32_225 = arith.constant 136 : i32
    %691 = arith.addi %c136_i32_225, %690 : i32
    %692 = arith.index_cast %691 : i32 to index
    %c0_226 = arith.constant 0 : index
    %693 = vector.load %arg2[%692, %c0_226] : memref<336x384xf32, #tpu.memory_space<vmem>>, vector<1x384xf32>
    %694 = vector.shape_cast %693 : vector<1x384xf32> to vector<384xf32>
    %695 = vector.extract_strided_slice %667 {offsets = [0, 0], sizes = [1, 384], strides = [1, 1]} : vector<2x384xf32> to vector<1x384xf32>
    %696 = vector.shape_cast %695 : vector<1x384xf32> to vector<384xf32>
    %697 = arith.addf %694, %696 : vector<384xf32>
    %c1_227 = arith.constant 1 : index
    %c0_228 = arith.constant 0 : index
    %c0_229 = arith.constant 0 : index
    %698 = vector.load %arg7[%c1_227, %c0_228, %c0_229] : memref<6x2x384xf32, #tpu.memory_space<vmem>>, vector<1x1x384xf32>
    %699 = vector.shape_cast %698 : vector<1x1x384xf32> to vector<384xf32>
    %700 = vector.shape_cast %697 : vector<384xf32> to vector<1x1x384xf32>
    tpu.vector_store %arg7[%c1_227, %c0_228, %c0_229], %700 {strides = array<i32>} : memref<6x2x384xf32, #tpu.memory_space<vmem>>, vector<1x1x384xf32>,
    %c1_230 = arith.constant 1 : index
    %c1_231 = arith.constant 1 : index
    %701 = memref.load %arg1[%c1_230, %c1_231] : memref<2x6xi32, #tpu.memory_space<smem>>
    %c136_i32_232 = arith.constant 136 : i32
    %702 = arith.addi %c136_i32_232, %701 : i32
    %703 = arith.index_cast %702 : i32 to index
    %c0_233 = arith.constant 0 : index
    %704 = vector.load %arg2[%703, %c0_233] : memref<336x384xf32, #tpu.memory_space<vmem>>, vector<1x384xf32>
    %705 = vector.shape_cast %704 : vector<1x384xf32> to vector<384xf32>
    %706 = vector.extract_strided_slice %667 {offsets = [1, 0], sizes = [1, 384], strides = [1, 1]} : vector<2x384xf32> to vector<1x384xf32>
    %707 = vector.shape_cast %706 : vector<1x384xf32> to vector<384xf32>
    %708 = arith.addf %705, %707 : vector<384xf32>
    %c1_234 = arith.constant 1 : index
    %c1_235 = arith.constant 1 : index
    %c0_236 = arith.constant 0 : index
    %709 = vector.load %arg7[%c1_234, %c1_235, %c0_236] : memref<6x2x384xf32, #tpu.memory_space<vmem>>, vector<1x1x384xf32>
    %710 = vector.shape_cast %709 : vector<1x1x384xf32> to vector<384xf32>
    %711 = vector.shape_cast %708 : vector<384xf32> to vector<1x1x384xf32>
    tpu.vector_store %arg7[%c1_234, %c1_235, %c0_236], %711 {strides = array<i32>} : memref<6x2x384xf32, #tpu.memory_space<vmem>>, vector<1x1x384xf32>,
    %c0_237 = arith.constant 0 : index
    %c2_238 = arith.constant 2 : index
    %712 = memref.load %arg1[%c0_237, %c2_238] : memref<2x6xi32, #tpu.memory_space<smem>>
    %c136_i32_239 = arith.constant 136 : i32
    %713 = arith.addi %c136_i32_239, %712 : i32
    %714 = arith.index_cast %713 : i32 to index
    %c0_240 = arith.constant 0 : index
    %715 = vector.load %arg2[%714, %c0_240] : memref<336x384xf32, #tpu.memory_space<vmem>>, vector<1x384xf32>
    %716 = vector.shape_cast %715 : vector<1x384xf32> to vector<384xf32>
    %717 = vector.extract_strided_slice %667 {offsets = [0, 0], sizes = [1, 384], strides = [1, 1]} : vector<2x384xf32> to vector<1x384xf32>
    %718 = vector.shape_cast %717 : vector<1x384xf32> to vector<384xf32>
    %719 = arith.addf %716, %718 : vector<384xf32>
    %c2_241 = arith.constant 2 : index
    %c0_242 = arith.constant 0 : index
    %c0_243 = arith.constant 0 : index
    %720 = vector.load %arg7[%c2_241, %c0_242, %c0_243] : memref<6x2x384xf32, #tpu.memory_space<vmem>>, vector<1x1x384xf32>
    %721 = vector.shape_cast %720 : vector<1x1x384xf32> to vector<384xf32>
    %722 = vector.shape_cast %719 : vector<384xf32> to vector<1x1x384xf32>
    tpu.vector_store %arg7[%c2_241, %c0_242, %c0_243], %722 {strides = array<i32>} : memref<6x2x384xf32, #tpu.memory_space<vmem>>, vector<1x1x384xf32>,
    %c1_244 = arith.constant 1 : index
    %c2_245 = arith.constant 2 : index
    %723 = memref.load %arg1[%c1_244, %c2_245] : memref<2x6xi32, #tpu.memory_space<smem>>
    %c136_i32_246 = arith.constant 136 : i32
    %724 = arith.addi %c136_i32_246, %723 : i32
    %725 = arith.index_cast %724 : i32 to index
    %c0_247 = arith.constant 0 : index
    %726 = vector.load %arg2[%725, %c0_247] : memref<336x384xf32, #tpu.memory_space<vmem>>, vector<1x384xf32>
    %727 = vector.shape_cast %726 : vector<1x384xf32> to vector<384xf32>
    %728 = vector.extract_strided_slice %667 {offsets = [1, 0], sizes = [1, 384], strides = [1, 1]} : vector<2x384xf32> to vector<1x384xf32>
    %729 = vector.shape_cast %728 : vector<1x384xf32> to vector<384xf32>
    %730 = arith.addf %727, %729 : vector<384xf32>
    %c2_248 = arith.constant 2 : index
    %c1_249 = arith.constant 1 : index
    %c0_250 = arith.constant 0 : index
    %731 = vector.load %arg7[%c2_248, %c1_249, %c0_250] : memref<6x2x384xf32, #tpu.memory_space<vmem>>, vector<1x1x384xf32>
    %732 = vector.shape_cast %731 : vector<1x1x384xf32> to vector<384xf32>
    %733 = vector.shape_cast %730 : vector<384xf32> to vector<1x1x384xf32>
    tpu.vector_store %arg7[%c2_248, %c1_249, %c0_250], %733 {strides = array<i32>} : memref<6x2x384xf32, #tpu.memory_space<vmem>>, vector<1x1x384xf32>,
    %c0_251 = arith.constant 0 : index
    %c3_252 = arith.constant 3 : index
    %734 = memref.load %arg1[%c0_251, %c3_252] : memref<2x6xi32, #tpu.memory_space<smem>>
    %c136_i32_253 = arith.constant 136 : i32
    %735 = arith.addi %c136_i32_253, %734 : i32
    %736 = arith.index_cast %735 : i32 to index
    %c0_254 = arith.constant 0 : index
    %737 = vector.load %arg2[%736, %c0_254] : memref<336x384xf32, #tpu.memory_space<vmem>>, vector<1x384xf32>
    %738 = vector.shape_cast %737 : vector<1x384xf32> to vector<384xf32>
    %739 = vector.extract_strided_slice %667 {offsets = [0, 0], sizes = [1, 384], strides = [1, 1]} : vector<2x384xf32> to vector<1x384xf32>
    %740 = vector.shape_cast %739 : vector<1x384xf32> to vector<384xf32>
    %741 = arith.addf %738, %740 : vector<384xf32>
    %c3_255 = arith.constant 3 : index
    %c0_256 = arith.constant 0 : index
    %c0_257 = arith.constant 0 : index
    %742 = vector.load %arg7[%c3_255, %c0_256, %c0_257] : memref<6x2x384xf32, #tpu.memory_space<vmem>>, vector<1x1x384xf32>
    %743 = vector.shape_cast %742 : vector<1x1x384xf32> to vector<384xf32>
    %744 = vector.shape_cast %741 : vector<384xf32> to vector<1x1x384xf32>
    tpu.vector_store %arg7[%c3_255, %c0_256, %c0_257], %744 {strides = array<i32>} : memref<6x2x384xf32, #tpu.memory_space<vmem>>, vector<1x1x384xf32>,
    %c1_258 = arith.constant 1 : index
    %c3_259 = arith.constant 3 : index
    %745 = memref.load %arg1[%c1_258, %c3_259] : memref<2x6xi32, #tpu.memory_space<smem>>
    %c136_i32_260 = arith.constant 136 : i32
    %746 = arith.addi %c136_i32_260, %745 : i32
    %747 = arith.index_cast %746 : i32 to index
    %c0_261 = arith.constant 0 : index
    %748 = vector.load %arg2[%747, %c0_261] : memref<336x384xf32, #tpu.memory_space<vmem>>, vector<1x384xf32>
    %749 = vector.shape_cast %748 : vector<1x384xf32> to vector<384xf32>
    %750 = vector.extract_strided_slice %667 {offsets = [1, 0], sizes = [1, 384], strides = [1, 1]} : vector<2x384xf32> to vector<1x384xf32>
    %751 = vector.shape_cast %750 : vector<1x384xf32> to vector<384xf32>
    %752 = arith.addf %749, %751 : vector<384xf32>
    %c3_262 = arith.constant 3 : index
    %c1_263 = arith.constant 1 : index
    %c0_264 = arith.constant 0 : index
    %753 = vector.load %arg7[%c3_262, %c1_263, %c0_264] : memref<6x2x384xf32, #tpu.memory_space<vmem>>, vector<1x1x384xf32>
    %754 = vector.shape_cast %753 : vector<1x1x384xf32> to vector<384xf32>
    %755 = vector.shape_cast %752 : vector<384xf32> to vector<1x1x384xf32>
    tpu.vector_store %arg7[%c3_262, %c1_263, %c0_264], %755 {strides = array<i32>} : memref<6x2x384xf32, #tpu.memory_space<vmem>>, vector<1x1x384xf32>,
    %c0_265 = arith.constant 0 : index
    %c4_266 = arith.constant 4 : index
    %756 = memref.load %arg1[%c0_265, %c4_266] : memref<2x6xi32, #tpu.memory_space<smem>>
    %c136_i32_267 = arith.constant 136 : i32
    %757 = arith.addi %c136_i32_267, %756 : i32
    %758 = arith.index_cast %757 : i32 to index
    %c0_268 = arith.constant 0 : index
    %759 = vector.load %arg2[%758, %c0_268] : memref<336x384xf32, #tpu.memory_space<vmem>>, vector<1x384xf32>
    %760 = vector.shape_cast %759 : vector<1x384xf32> to vector<384xf32>
    %761 = vector.extract_strided_slice %667 {offsets = [0, 0], sizes = [1, 384], strides = [1, 1]} : vector<2x384xf32> to vector<1x384xf32>
    %762 = vector.shape_cast %761 : vector<1x384xf32> to vector<384xf32>
    %763 = arith.addf %760, %762 : vector<384xf32>
    %c4_269 = arith.constant 4 : index
    %c0_270 = arith.constant 0 : index
    %c0_271 = arith.constant 0 : index
    %764 = vector.load %arg7[%c4_269, %c0_270, %c0_271] : memref<6x2x384xf32, #tpu.memory_space<vmem>>, vector<1x1x384xf32>
    %765 = vector.shape_cast %764 : vector<1x1x384xf32> to vector<384xf32>
    %766 = vector.shape_cast %763 : vector<384xf32> to vector<1x1x384xf32>
    tpu.vector_store %arg7[%c4_269, %c0_270, %c0_271], %766 {strides = array<i32>} : memref<6x2x384xf32, #tpu.memory_space<vmem>>, vector<1x1x384xf32>,
    %c1_272 = arith.constant 1 : index
    %c4_273 = arith.constant 4 : index
    %767 = memref.load %arg1[%c1_272, %c4_273] : memref<2x6xi32, #tpu.memory_space<smem>>
    %c136_i32_274 = arith.constant 136 : i32
    %768 = arith.addi %c136_i32_274, %767 : i32
    %769 = arith.index_cast %768 : i32 to index
    %c0_275 = arith.constant 0 : index
    %770 = vector.load %arg2[%769, %c0_275] : memref<336x384xf32, #tpu.memory_space<vmem>>, vector<1x384xf32>
    %771 = vector.shape_cast %770 : vector<1x384xf32> to vector<384xf32>
    %772 = vector.extract_strided_slice %667 {offsets = [1, 0], sizes = [1, 384], strides = [1, 1]} : vector<2x384xf32> to vector<1x384xf32>
    %773 = vector.shape_cast %772 : vector<1x384xf32> to vector<384xf32>
    %774 = arith.addf %771, %773 : vector<384xf32>
    %c4_276 = arith.constant 4 : index
    %c1_277 = arith.constant 1 : index
    %c0_278 = arith.constant 0 : index
    %775 = vector.load %arg7[%c4_276, %c1_277, %c0_278] : memref<6x2x384xf32, #tpu.memory_space<vmem>>, vector<1x1x384xf32>
    %776 = vector.shape_cast %775 : vector<1x1x384xf32> to vector<384xf32>
    %777 = vector.shape_cast %774 : vector<384xf32> to vector<1x1x384xf32>
    tpu.vector_store %arg7[%c4_276, %c1_277, %c0_278], %777 {strides = array<i32>} : memref<6x2x384xf32, #tpu.memory_space<vmem>>, vector<1x1x384xf32>,
    %c0_279 = arith.constant 0 : index
    %c5_280 = arith.constant 5 : index
    %778 = memref.load %arg1[%c0_279, %c5_280] : memref<2x6xi32, #tpu.memory_space<smem>>
    %c136_i32_281 = arith.constant 136 : i32
    %779 = arith.addi %c136_i32_281, %778 : i32
    %780 = arith.index_cast %779 : i32 to index
    %c0_282 = arith.constant 0 : index
    %781 = vector.load %arg2[%780, %c0_282] : memref<336x384xf32, #tpu.memory_space<vmem>>, vector<1x384xf32>
    %782 = vector.shape_cast %781 : vector<1x384xf32> to vector<384xf32>
    %783 = vector.extract_strided_slice %667 {offsets = [0, 0], sizes = [1, 384], strides = [1, 1]} : vector<2x384xf32> to vector<1x384xf32>
    %784 = vector.shape_cast %783 : vector<1x384xf32> to vector<384xf32>
    %785 = arith.addf %782, %784 : vector<384xf32>
    %c5_283 = arith.constant 5 : index
    %c0_284 = arith.constant 0 : index
    %c0_285 = arith.constant 0 : index
    %786 = vector.load %arg7[%c5_283, %c0_284, %c0_285] : memref<6x2x384xf32, #tpu.memory_space<vmem>>, vector<1x1x384xf32>
    %787 = vector.shape_cast %786 : vector<1x1x384xf32> to vector<384xf32>
    %788 = vector.shape_cast %785 : vector<384xf32> to vector<1x1x384xf32>
    tpu.vector_store %arg7[%c5_283, %c0_284, %c0_285], %788 {strides = array<i32>} : memref<6x2x384xf32, #tpu.memory_space<vmem>>, vector<1x1x384xf32>,
    %c1_286 = arith.constant 1 : index
    %c5_287 = arith.constant 5 : index
    %789 = memref.load %arg1[%c1_286, %c5_287] : memref<2x6xi32, #tpu.memory_space<smem>>
    %c136_i32_288 = arith.constant 136 : i32
    %790 = arith.addi %c136_i32_288, %789 : i32
    %791 = arith.index_cast %790 : i32 to index
    %c0_289 = arith.constant 0 : index
    %792 = vector.load %arg2[%791, %c0_289] : memref<336x384xf32, #tpu.memory_space<vmem>>, vector<1x384xf32>
    %793 = vector.shape_cast %792 : vector<1x384xf32> to vector<384xf32>
    %794 = vector.extract_strided_slice %667 {offsets = [1, 0], sizes = [1, 384], strides = [1, 1]} : vector<2x384xf32> to vector<1x384xf32>
    %795 = vector.shape_cast %794 : vector<1x384xf32> to vector<384xf32>
    %796 = arith.addf %793, %795 : vector<384xf32>
    %c5_290 = arith.constant 5 : index
    %c1_291 = arith.constant 1 : index
    %c0_292 = arith.constant 0 : index
    %797 = vector.load %arg7[%c5_290, %c1_291, %c0_292] : memref<6x2x384xf32, #tpu.memory_space<vmem>>, vector<1x1x384xf32>
    %798 = vector.shape_cast %797 : vector<1x1x384xf32> to vector<384xf32>
    %799 = vector.shape_cast %796 : vector<384xf32> to vector<1x1x384xf32>
    tpu.vector_store %arg7[%c5_290, %c1_291, %c0_292], %799 {strides = array<i32>} : memref<6x2x384xf32, #tpu.memory_space<vmem>>, vector<1x1x384xf32>,
    %c208 = arith.constant 208 : index
    %c0_293 = arith.constant 0 : index
    %800 = vector.load %arg2[%c208, %c0_293] : memref<336x384xf32, #tpu.memory_space<vmem>>, vector<32x384xf32>
    %c240 = arith.constant 240 : index
    %c0_294 = arith.constant 0 : index
    %801 = vector.load %arg2[%c240, %c0_294] : memref<336x384xf32, #tpu.memory_space<vmem>>, vector<32x384xf32>
    %c272 = arith.constant 272 : index
    %c0_295 = arith.constant 0 : index
    %802 = vector.load %arg2[%c272, %c0_295] : memref<336x384xf32, #tpu.memory_space<vmem>>, vector<32x384xf32>
    %c3_296 = arith.constant 3 : index
    %c0_297 = arith.constant 0 : index
    %803 = vector.load %arg3[%c3_296, %c0_297] : memref<8x384xf32, #tpu.memory_space<vmem>>, vector<1x384xf32>
    %804 = vector.shape_cast %803 : vector<1x384xf32> to vector<384xf32>
    %c4_298 = arith.constant 4 : index
    %c0_299 = arith.constant 0 : index
    %805 = vector.load %arg3[%c4_298, %c0_299] : memref<8x384xf32, #tpu.memory_space<vmem>>, vector<1x384xf32>
    %806 = vector.shape_cast %805 : vector<1x384xf32> to vector<384xf32>
    %c5_300 = arith.constant 5 : index
    %c0_301 = arith.constant 0 : index
    %807 = vector.load %arg3[%c5_300, %c0_301] : memref<8x384xf32, #tpu.memory_space<vmem>>, vector<1x384xf32>
    %808 = vector.shape_cast %807 : vector<1x384xf32> to vector<384xf32>
    %cst_302 = arith.constant dense<0.000000e+00> : vector<2x384xf32>
    %809 = tpu.matmul %605, %800, %cst_302 {dimension_numbers = #tpu.dot_dimension_numbers<[1], [0], [0], [1], [0, 0, 1, 1], [], []>} : vector<2x32xf32>, vector<32x384xf32>, vector<2x384xf32> -> vector<2x384xf32>
    %810 = vector.shape_cast %804 : vector<384xf32> to vector<1x384xf32>
    %811 = vector.broadcast %810 : vector<1x384xf32> to vector<2x384xf32>
    %812 = arith.addf %809, %811 : vector<2x384xf32>
    %c0_303 = arith.constant 0 : index
    %c0_304 = arith.constant 0 : index
    %c0_305 = arith.constant 0 : index
    %813 = vector.load %arg7[%c0_303, %c0_304, %c0_305] : memref<6x2x384xf32, #tpu.memory_space<vmem>>, vector<1x2x384xf32>
    %814 = vector.shape_cast %813 : vector<1x2x384xf32> to vector<2x384xf32>
    %815 = vector.extract_strided_slice %814 {offsets = [0, 0], sizes = [2, 32], strides = [1, 1]} : vector<2x384xf32> to vector<2x32xf32>
    %816 = vector.extract_strided_slice %812 {offsets = [0, 0], sizes = [2, 32], strides = [1, 1]} : vector<2x384xf32> to vector<2x32xf32>
    %817 = arith.addf %815, %816 : vector<2x32xf32>
    %818 = arith.negf %817 : vector<2x32xf32>
    %819 = math.exp %818 : vector<2x32xf32>
    %cst_306 = arith.constant 1.000000e+00 : f32
    %820 = vector.broadcast %cst_306 : f32 to vector<2x32xf32>
    %821 = arith.addf %820, %819 : vector<2x32xf32>
    %822 = arith.divf %820, %821 : vector<2x32xf32>
    %823 = vector.extract_strided_slice %814 {offsets = [0, 128], sizes = [2, 32], strides = [1, 1]} : vector<2x384xf32> to vector<2x32xf32>
    %824 = vector.extract_strided_slice %812 {offsets = [0, 128], sizes = [2, 32], strides = [1, 1]} : vector<2x384xf32> to vector<2x32xf32>
    %825 = arith.addf %823, %824 : vector<2x32xf32>
    %826 = arith.negf %825 : vector<2x32xf32>
    %827 = math.exp %826 : vector<2x32xf32>
    %cst_307 = arith.constant 1.000000e+00 : f32
    %828 = vector.broadcast %cst_307 : f32 to vector<2x32xf32>
    %829 = arith.addf %828, %827 : vector<2x32xf32>
    %830 = arith.divf %828, %829 : vector<2x32xf32>
    %831 = vector.extract_strided_slice %814 {offsets = [0, 256], sizes = [2, 32], strides = [1, 1]} : vector<2x384xf32> to vector<2x32xf32>
    %832 = vector.extract_strided_slice %812 {offsets = [0, 256], sizes = [2, 32], strides = [1, 1]} : vector<2x384xf32> to vector<2x32xf32>
    %833 = arith.mulf %822, %832 : vector<2x32xf32>
    %834 = arith.addf %831, %833 : vector<2x32xf32>
    %835 = math.tanh %834 : vector<2x32xf32>
    %cst_308 = arith.constant 1.000000e+00 : f32
    %836 = vector.broadcast %cst_308 : f32 to vector<2x32xf32>
    %837 = arith.subf %836, %830 : vector<2x32xf32>
    %838 = arith.mulf %837, %835 : vector<2x32xf32>
    %839 = arith.mulf %830, %605 : vector<2x32xf32>
    %840 = arith.addf %838, %839 : vector<2x32xf32>
    %cst_309 = arith.constant dense<0.000000e+00> : vector<2x384xf32>
    %841 = tpu.matmul %840, %800, %cst_309 {dimension_numbers = #tpu.dot_dimension_numbers<[1], [0], [0], [1], [0, 0, 1, 1], [], []>} : vector<2x32xf32>, vector<32x384xf32>, vector<2x384xf32> -> vector<2x384xf32>
    %842 = vector.shape_cast %804 : vector<384xf32> to vector<1x384xf32>
    %843 = vector.broadcast %842 : vector<1x384xf32> to vector<2x384xf32>
    %844 = arith.addf %841, %843 : vector<2x384xf32>
    %cst_310 = arith.constant dense<0.000000e+00> : vector<2x384xf32>
    %845 = tpu.matmul %840, %801, %cst_310 {dimension_numbers = #tpu.dot_dimension_numbers<[1], [0], [0], [1], [0, 0, 1, 1], [], []>} : vector<2x32xf32>, vector<32x384xf32>, vector<2x384xf32> -> vector<2x384xf32>
    %846 = vector.shape_cast %806 : vector<384xf32> to vector<1x384xf32>
    %847 = vector.broadcast %846 : vector<1x384xf32> to vector<2x384xf32>
    %848 = arith.addf %845, %847 : vector<2x384xf32>
    %cst_311 = arith.constant dense<0.000000e+00> : vector<2x384xf32>
    %849 = tpu.matmul %665, %802, %cst_311 {dimension_numbers = #tpu.dot_dimension_numbers<[1], [0], [0], [1], [0, 0, 1, 1], [], []>} : vector<2x32xf32>, vector<32x384xf32>, vector<2x384xf32> -> vector<2x384xf32>
    %850 = vector.shape_cast %808 : vector<384xf32> to vector<1x384xf32>
    %851 = vector.broadcast %850 : vector<1x384xf32> to vector<2x384xf32>
    %852 = arith.addf %849, %851 : vector<2x384xf32>
    %c1_312 = arith.constant 1 : index
    %c0_313 = arith.constant 0 : index
    %c0_314 = arith.constant 0 : index
    %853 = vector.load %arg7[%c1_312, %c0_313, %c0_314] : memref<6x2x384xf32, #tpu.memory_space<vmem>>, vector<1x2x384xf32>
    %854 = vector.shape_cast %853 : vector<1x2x384xf32> to vector<2x384xf32>
    %855 = vector.extract_strided_slice %854 {offsets = [0, 0], sizes = [2, 32], strides = [1, 1]} : vector<2x384xf32> to vector<2x32xf32>
    %856 = vector.extract_strided_slice %844 {offsets = [0, 0], sizes = [2, 32], strides = [1, 1]} : vector<2x384xf32> to vector<2x32xf32>
    %857 = arith.addf %855, %856 : vector<2x32xf32>
    %858 = arith.negf %857 : vector<2x32xf32>
    %859 = math.exp %858 : vector<2x32xf32>
    %cst_315 = arith.constant 1.000000e+00 : f32
    %860 = vector.broadcast %cst_315 : f32 to vector<2x32xf32>
    %861 = arith.addf %860, %859 : vector<2x32xf32>
    %862 = arith.divf %860, %861 : vector<2x32xf32>
    %863 = vector.extract_strided_slice %854 {offsets = [0, 128], sizes = [2, 32], strides = [1, 1]} : vector<2x384xf32> to vector<2x32xf32>
    %864 = vector.extract_strided_slice %844 {offsets = [0, 128], sizes = [2, 32], strides = [1, 1]} : vector<2x384xf32> to vector<2x32xf32>
    %865 = arith.addf %863, %864 : vector<2x32xf32>
    %866 = arith.negf %865 : vector<2x32xf32>
    %867 = math.exp %866 : vector<2x32xf32>
    %cst_316 = arith.constant 1.000000e+00 : f32
    %868 = vector.broadcast %cst_316 : f32 to vector<2x32xf32>
    %869 = arith.addf %868, %867 : vector<2x32xf32>
    %870 = arith.divf %868, %869 : vector<2x32xf32>
    %871 = vector.extract_strided_slice %854 {offsets = [0, 256], sizes = [2, 32], strides = [1, 1]} : vector<2x384xf32> to vector<2x32xf32>
    %872 = vector.extract_strided_slice %844 {offsets = [0, 256], sizes = [2, 32], strides = [1, 1]} : vector<2x384xf32> to vector<2x32xf32>
    %873 = arith.mulf %862, %872 : vector<2x32xf32>
    %874 = arith.addf %871, %873 : vector<2x32xf32>
    %875 = math.tanh %874 : vector<2x32xf32>
    %cst_317 = arith.constant 1.000000e+00 : f32
    %876 = vector.broadcast %cst_317 : f32 to vector<2x32xf32>
    %877 = arith.subf %876, %870 : vector<2x32xf32>
    %878 = arith.mulf %877, %875 : vector<2x32xf32>
    %879 = arith.mulf %870, %840 : vector<2x32xf32>
    %880 = arith.addf %878, %879 : vector<2x32xf32>
    %881 = vector.extract_strided_slice %848 {offsets = [0, 0], sizes = [2, 32], strides = [1, 1]} : vector<2x384xf32> to vector<2x32xf32>
    %882 = vector.extract_strided_slice %852 {offsets = [0, 0], sizes = [2, 32], strides = [1, 1]} : vector<2x384xf32> to vector<2x32xf32>
    %883 = arith.addf %881, %882 : vector<2x32xf32>
    %884 = arith.negf %883 : vector<2x32xf32>
    %885 = math.exp %884 : vector<2x32xf32>
    %cst_318 = arith.constant 1.000000e+00 : f32
    %886 = vector.broadcast %cst_318 : f32 to vector<2x32xf32>
    %887 = arith.addf %886, %885 : vector<2x32xf32>
    %888 = arith.divf %886, %887 : vector<2x32xf32>
    %889 = vector.extract_strided_slice %848 {offsets = [0, 128], sizes = [2, 32], strides = [1, 1]} : vector<2x384xf32> to vector<2x32xf32>
    %890 = vector.extract_strided_slice %852 {offsets = [0, 128], sizes = [2, 32], strides = [1, 1]} : vector<2x384xf32> to vector<2x32xf32>
    %891 = arith.addf %889, %890 : vector<2x32xf32>
    %892 = arith.negf %891 : vector<2x32xf32>
    %893 = math.exp %892 : vector<2x32xf32>
    %cst_319 = arith.constant 1.000000e+00 : f32
    %894 = vector.broadcast %cst_319 : f32 to vector<2x32xf32>
    %895 = arith.addf %894, %893 : vector<2x32xf32>
    %896 = arith.divf %894, %895 : vector<2x32xf32>
    %897 = vector.extract_strided_slice %848 {offsets = [0, 256], sizes = [2, 32], strides = [1, 1]} : vector<2x384xf32> to vector<2x32xf32>
    %898 = vector.extract_strided_slice %852 {offsets = [0, 256], sizes = [2, 32], strides = [1, 1]} : vector<2x384xf32> to vector<2x32xf32>
    %899 = arith.mulf %888, %898 : vector<2x32xf32>
    %900 = arith.addf %897, %899 : vector<2x32xf32>
    %901 = math.tanh %900 : vector<2x32xf32>
    %cst_320 = arith.constant 1.000000e+00 : f32
    %902 = vector.broadcast %cst_320 : f32 to vector<2x32xf32>
    %903 = arith.subf %902, %896 : vector<2x32xf32>
    %904 = arith.mulf %903, %901 : vector<2x32xf32>
    %905 = arith.mulf %896, %665 : vector<2x32xf32>
    %906 = arith.addf %904, %905 : vector<2x32xf32>
    %cst_321 = arith.constant dense<0.000000e+00> : vector<2x384xf32>
    %907 = tpu.matmul %880, %800, %cst_321 {dimension_numbers = #tpu.dot_dimension_numbers<[1], [0], [0], [1], [0, 0, 1, 1], [], []>} : vector<2x32xf32>, vector<32x384xf32>, vector<2x384xf32> -> vector<2x384xf32>
    %908 = vector.shape_cast %804 : vector<384xf32> to vector<1x384xf32>
    %909 = vector.broadcast %908 : vector<1x384xf32> to vector<2x384xf32>
    %910 = arith.addf %907, %909 : vector<2x384xf32>
    %cst_322 = arith.constant dense<0.000000e+00> : vector<2x384xf32>
    %911 = tpu.matmul %880, %801, %cst_322 {dimension_numbers = #tpu.dot_dimension_numbers<[1], [0], [0], [1], [0, 0, 1, 1], [], []>} : vector<2x32xf32>, vector<32x384xf32>, vector<2x384xf32> -> vector<2x384xf32>
    %912 = vector.shape_cast %806 : vector<384xf32> to vector<1x384xf32>
    %913 = vector.broadcast %912 : vector<1x384xf32> to vector<2x384xf32>
    %914 = arith.addf %911, %913 : vector<2x384xf32>
    %cst_323 = arith.constant dense<0.000000e+00> : vector<2x384xf32>
    %915 = tpu.matmul %906, %802, %cst_323 {dimension_numbers = #tpu.dot_dimension_numbers<[1], [0], [0], [1], [0, 0, 1, 1], [], []>} : vector<2x32xf32>, vector<32x384xf32>, vector<2x384xf32> -> vector<2x384xf32>
    %916 = vector.shape_cast %808 : vector<384xf32> to vector<1x384xf32>
    %917 = vector.broadcast %916 : vector<1x384xf32> to vector<2x384xf32>
    %918 = arith.addf %915, %917 : vector<2x384xf32>
    %c2_324 = arith.constant 2 : index
    %c0_325 = arith.constant 0 : index
    %c0_326 = arith.constant 0 : index
    %919 = vector.load %arg7[%c2_324, %c0_325, %c0_326] : memref<6x2x384xf32, #tpu.memory_space<vmem>>, vector<1x2x384xf32>
    %920 = vector.shape_cast %919 : vector<1x2x384xf32> to vector<2x384xf32>
    %921 = vector.extract_strided_slice %920 {offsets = [0, 0], sizes = [2, 32], strides = [1, 1]} : vector<2x384xf32> to vector<2x32xf32>
    %922 = vector.extract_strided_slice %910 {offsets = [0, 0], sizes = [2, 32], strides = [1, 1]} : vector<2x384xf32> to vector<2x32xf32>
    %923 = arith.addf %921, %922 : vector<2x32xf32>
    %924 = arith.negf %923 : vector<2x32xf32>
    %925 = math.exp %924 : vector<2x32xf32>
    %cst_327 = arith.constant 1.000000e+00 : f32
    %926 = vector.broadcast %cst_327 : f32 to vector<2x32xf32>
    %927 = arith.addf %926, %925 : vector<2x32xf32>
    %928 = arith.divf %926, %927 : vector<2x32xf32>
    %929 = vector.extract_strided_slice %920 {offsets = [0, 128], sizes = [2, 32], strides = [1, 1]} : vector<2x384xf32> to vector<2x32xf32>
    %930 = vector.extract_strided_slice %910 {offsets = [0, 128], sizes = [2, 32], strides = [1, 1]} : vector<2x384xf32> to vector<2x32xf32>
    %931 = arith.addf %929, %930 : vector<2x32xf32>
    %932 = arith.negf %931 : vector<2x32xf32>
    %933 = math.exp %932 : vector<2x32xf32>
    %cst_328 = arith.constant 1.000000e+00 : f32
    %934 = vector.broadcast %cst_328 : f32 to vector<2x32xf32>
    %935 = arith.addf %934, %933 : vector<2x32xf32>
    %936 = arith.divf %934, %935 : vector<2x32xf32>
    %937 = vector.extract_strided_slice %920 {offsets = [0, 256], sizes = [2, 32], strides = [1, 1]} : vector<2x384xf32> to vector<2x32xf32>
    %938 = vector.extract_strided_slice %910 {offsets = [0, 256], sizes = [2, 32], strides = [1, 1]} : vector<2x384xf32> to vector<2x32xf32>
    %939 = arith.mulf %928, %938 : vector<2x32xf32>
    %940 = arith.addf %937, %939 : vector<2x32xf32>
    %941 = math.tanh %940 : vector<2x32xf32>
    %cst_329 = arith.constant 1.000000e+00 : f32
    %942 = vector.broadcast %cst_329 : f32 to vector<2x32xf32>
    %943 = arith.subf %942, %936 : vector<2x32xf32>
    %944 = arith.mulf %943, %941 : vector<2x32xf32>
    %945 = arith.mulf %936, %880 : vector<2x32xf32>
    %946 = arith.addf %944, %945 : vector<2x32xf32>
    %947 = vector.extract_strided_slice %914 {offsets = [0, 0], sizes = [2, 32], strides = [1, 1]} : vector<2x384xf32> to vector<2x32xf32>
    %948 = vector.extract_strided_slice %918 {offsets = [0, 0], sizes = [2, 32], strides = [1, 1]} : vector<2x384xf32> to vector<2x32xf32>
    %949 = arith.addf %947, %948 : vector<2x32xf32>
    %950 = arith.negf %949 : vector<2x32xf32>
    %951 = math.exp %950 : vector<2x32xf32>
    %cst_330 = arith.constant 1.000000e+00 : f32
    %952 = vector.broadcast %cst_330 : f32 to vector<2x32xf32>
    %953 = arith.addf %952, %951 : vector<2x32xf32>
    %954 = arith.divf %952, %953 : vector<2x32xf32>
    %955 = vector.extract_strided_slice %914 {offsets = [0, 128], sizes = [2, 32], strides = [1, 1]} : vector<2x384xf32> to vector<2x32xf32>
    %956 = vector.extract_strided_slice %918 {offsets = [0, 128], sizes = [2, 32], strides = [1, 1]} : vector<2x384xf32> to vector<2x32xf32>
    %957 = arith.addf %955, %956 : vector<2x32xf32>
    %958 = arith.negf %957 : vector<2x32xf32>
    %959 = math.exp %958 : vector<2x32xf32>
    %cst_331 = arith.constant 1.000000e+00 : f32
    %960 = vector.broadcast %cst_331 : f32 to vector<2x32xf32>
    %961 = arith.addf %960, %959 : vector<2x32xf32>
    %962 = arith.divf %960, %961 : vector<2x32xf32>
    %963 = vector.extract_strided_slice %914 {offsets = [0, 256], sizes = [2, 32], strides = [1, 1]} : vector<2x384xf32> to vector<2x32xf32>
    %964 = vector.extract_strided_slice %918 {offsets = [0, 256], sizes = [2, 32], strides = [1, 1]} : vector<2x384xf32> to vector<2x32xf32>
    %965 = arith.mulf %954, %964 : vector<2x32xf32>
    %966 = arith.addf %963, %965 : vector<2x32xf32>
    %967 = math.tanh %966 : vector<2x32xf32>
    %cst_332 = arith.constant 1.000000e+00 : f32
    %968 = vector.broadcast %cst_332 : f32 to vector<2x32xf32>
    %969 = arith.subf %968, %962 : vector<2x32xf32>
    %970 = arith.mulf %969, %967 : vector<2x32xf32>
    %971 = arith.mulf %962, %906 : vector<2x32xf32>
    %972 = arith.addf %970, %971 : vector<2x32xf32>
    %cst_333 = arith.constant dense<0.000000e+00> : vector<2x384xf32>
    %973 = tpu.matmul %946, %800, %cst_333 {dimension_numbers = #tpu.dot_dimension_numbers<[1], [0], [0], [1], [0, 0, 1, 1], [], []>} : vector<2x32xf32>, vector<32x384xf32>, vector<2x384xf32> -> vector<2x384xf32>
    %974 = vector.shape_cast %804 : vector<384xf32> to vector<1x384xf32>
    %975 = vector.broadcast %974 : vector<1x384xf32> to vector<2x384xf32>
    %976 = arith.addf %973, %975 : vector<2x384xf32>
    %cst_334 = arith.constant dense<0.000000e+00> : vector<2x384xf32>
    %977 = tpu.matmul %946, %801, %cst_334 {dimension_numbers = #tpu.dot_dimension_numbers<[1], [0], [0], [1], [0, 0, 1, 1], [], []>} : vector<2x32xf32>, vector<32x384xf32>, vector<2x384xf32> -> vector<2x384xf32>
    %978 = vector.shape_cast %806 : vector<384xf32> to vector<1x384xf32>
    %979 = vector.broadcast %978 : vector<1x384xf32> to vector<2x384xf32>
    %980 = arith.addf %977, %979 : vector<2x384xf32>
    %cst_335 = arith.constant dense<0.000000e+00> : vector<2x384xf32>
    %981 = tpu.matmul %972, %802, %cst_335 {dimension_numbers = #tpu.dot_dimension_numbers<[1], [0], [0], [1], [0, 0, 1, 1], [], []>} : vector<2x32xf32>, vector<32x384xf32>, vector<2x384xf32> -> vector<2x384xf32>
    %982 = vector.shape_cast %808 : vector<384xf32> to vector<1x384xf32>
    %983 = vector.broadcast %982 : vector<1x384xf32> to vector<2x384xf32>
    %984 = arith.addf %981, %983 : vector<2x384xf32>
    %c3_336 = arith.constant 3 : index
    %c0_337 = arith.constant 0 : index
    %c0_338 = arith.constant 0 : index
    %985 = vector.load %arg7[%c3_336, %c0_337, %c0_338] : memref<6x2x384xf32, #tpu.memory_space<vmem>>, vector<1x2x384xf32>
    %986 = vector.shape_cast %985 : vector<1x2x384xf32> to vector<2x384xf32>
    %987 = vector.extract_strided_slice %986 {offsets = [0, 0], sizes = [2, 32], strides = [1, 1]} : vector<2x384xf32> to vector<2x32xf32>
    %988 = vector.extract_strided_slice %976 {offsets = [0, 0], sizes = [2, 32], strides = [1, 1]} : vector<2x384xf32> to vector<2x32xf32>
    %989 = arith.addf %987, %988 : vector<2x32xf32>
    %990 = arith.negf %989 : vector<2x32xf32>
    %991 = math.exp %990 : vector<2x32xf32>
    %cst_339 = arith.constant 1.000000e+00 : f32
    %992 = vector.broadcast %cst_339 : f32 to vector<2x32xf32>
    %993 = arith.addf %992, %991 : vector<2x32xf32>
    %994 = arith.divf %992, %993 : vector<2x32xf32>
    %995 = vector.extract_strided_slice %986 {offsets = [0, 128], sizes = [2, 32], strides = [1, 1]} : vector<2x384xf32> to vector<2x32xf32>
    %996 = vector.extract_strided_slice %976 {offsets = [0, 128], sizes = [2, 32], strides = [1, 1]} : vector<2x384xf32> to vector<2x32xf32>
    %997 = arith.addf %995, %996 : vector<2x32xf32>
    %998 = arith.negf %997 : vector<2x32xf32>
    %999 = math.exp %998 : vector<2x32xf32>
    %cst_340 = arith.constant 1.000000e+00 : f32
    %1000 = vector.broadcast %cst_340 : f32 to vector<2x32xf32>
    %1001 = arith.addf %1000, %999 : vector<2x32xf32>
    %1002 = arith.divf %1000, %1001 : vector<2x32xf32>
    %1003 = vector.extract_strided_slice %986 {offsets = [0, 256], sizes = [2, 32], strides = [1, 1]} : vector<2x384xf32> to vector<2x32xf32>
    %1004 = vector.extract_strided_slice %976 {offsets = [0, 256], sizes = [2, 32], strides = [1, 1]} : vector<2x384xf32> to vector<2x32xf32>
    %1005 = arith.mulf %994, %1004 : vector<2x32xf32>
    %1006 = arith.addf %1003, %1005 : vector<2x32xf32>
    %1007 = math.tanh %1006 : vector<2x32xf32>
    %cst_341 = arith.constant 1.000000e+00 : f32
    %1008 = vector.broadcast %cst_341 : f32 to vector<2x32xf32>
    %1009 = arith.subf %1008, %1002 : vector<2x32xf32>
    %1010 = arith.mulf %1009, %1007 : vector<2x32xf32>
    %1011 = arith.mulf %1002, %946 : vector<2x32xf32>
    %1012 = arith.addf %1010, %1011 : vector<2x32xf32>
    %1013 = vector.extract_strided_slice %980 {offsets = [0, 0], sizes = [2, 32], strides = [1, 1]} : vector<2x384xf32> to vector<2x32xf32>
    %1014 = vector.extract_strided_slice %984 {offsets = [0, 0], sizes = [2, 32], strides = [1, 1]} : vector<2x384xf32> to vector<2x32xf32>
    %1015 = arith.addf %1013, %1014 : vector<2x32xf32>
    %1016 = arith.negf %1015 : vector<2x32xf32>
    %1017 = math.exp %1016 : vector<2x32xf32>
    %cst_342 = arith.constant 1.000000e+00 : f32
    %1018 = vector.broadcast %cst_342 : f32 to vector<2x32xf32>
    %1019 = arith.addf %1018, %1017 : vector<2x32xf32>
    %1020 = arith.divf %1018, %1019 : vector<2x32xf32>
    %1021 = vector.extract_strided_slice %980 {offsets = [0, 128], sizes = [2, 32], strides = [1, 1]} : vector<2x384xf32> to vector<2x32xf32>
    %1022 = vector.extract_strided_slice %984 {offsets = [0, 128], sizes = [2, 32], strides = [1, 1]} : vector<2x384xf32> to vector<2x32xf32>
    %1023 = arith.addf %1021, %1022 : vector<2x32xf32>
    %1024 = arith.negf %1023 : vector<2x32xf32>
    %1025 = math.exp %1024 : vector<2x32xf32>
    %cst_343 = arith.constant 1.000000e+00 : f32
    %1026 = vector.broadcast %cst_343 : f32 to vector<2x32xf32>
    %1027 = arith.addf %1026, %1025 : vector<2x32xf32>
    %1028 = arith.divf %1026, %1027 : vector<2x32xf32>
    %1029 = vector.extract_strided_slice %980 {offsets = [0, 256], sizes = [2, 32], strides = [1, 1]} : vector<2x384xf32> to vector<2x32xf32>
    %1030 = vector.extract_strided_slice %984 {offsets = [0, 256], sizes = [2, 32], strides = [1, 1]} : vector<2x384xf32> to vector<2x32xf32>
    %1031 = arith.mulf %1020, %1030 : vector<2x32xf32>
    %1032 = arith.addf %1029, %1031 : vector<2x32xf32>
    %1033 = math.tanh %1032 : vector<2x32xf32>
    %cst_344 = arith.constant 1.000000e+00 : f32
    %1034 = vector.broadcast %cst_344 : f32 to vector<2x32xf32>
    %1035 = arith.subf %1034, %1028 : vector<2x32xf32>
    %1036 = arith.mulf %1035, %1033 : vector<2x32xf32>
    %1037 = arith.mulf %1028, %972 : vector<2x32xf32>
    %1038 = arith.addf %1036, %1037 : vector<2x32xf32>
    %cst_345 = arith.constant dense<0.000000e+00> : vector<2x384xf32>
    %1039 = tpu.matmul %1012, %800, %cst_345 {dimension_numbers = #tpu.dot_dimension_numbers<[1], [0], [0], [1], [0, 0, 1, 1], [], []>} : vector<2x32xf32>, vector<32x384xf32>, vector<2x384xf32> -> vector<2x384xf32>
    %1040 = vector.shape_cast %804 : vector<384xf32> to vector<1x384xf32>
    %1041 = vector.broadcast %1040 : vector<1x384xf32> to vector<2x384xf32>
    %1042 = arith.addf %1039, %1041 : vector<2x384xf32>
    %cst_346 = arith.constant dense<0.000000e+00> : vector<2x384xf32>
    %1043 = tpu.matmul %1012, %801, %cst_346 {dimension_numbers = #tpu.dot_dimension_numbers<[1], [0], [0], [1], [0, 0, 1, 1], [], []>} : vector<2x32xf32>, vector<32x384xf32>, vector<2x384xf32> -> vector<2x384xf32>
    %1044 = vector.shape_cast %806 : vector<384xf32> to vector<1x384xf32>
    %1045 = vector.broadcast %1044 : vector<1x384xf32> to vector<2x384xf32>
    %1046 = arith.addf %1043, %1045 : vector<2x384xf32>
    %cst_347 = arith.constant dense<0.000000e+00> : vector<2x384xf32>
    %1047 = tpu.matmul %1038, %802, %cst_347 {dimension_numbers = #tpu.dot_dimension_numbers<[1], [0], [0], [1], [0, 0, 1, 1], [], []>} : vector<2x32xf32>, vector<32x384xf32>, vector<2x384xf32> -> vector<2x384xf32>
    %1048 = vector.shape_cast %808 : vector<384xf32> to vector<1x384xf32>
    %1049 = vector.broadcast %1048 : vector<1x384xf32> to vector<2x384xf32>
    %1050 = arith.addf %1047, %1049 : vector<2x384xf32>
    %c4_348 = arith.constant 4 : index
    %c0_349 = arith.constant 0 : index
    %c0_350 = arith.constant 0 : index
    %1051 = vector.load %arg7[%c4_348, %c0_349, %c0_350] : memref<6x2x384xf32, #tpu.memory_space<vmem>>, vector<1x2x384xf32>
    %1052 = vector.shape_cast %1051 : vector<1x2x384xf32> to vector<2x384xf32>
    %1053 = vector.extract_strided_slice %1052 {offsets = [0, 0], sizes = [2, 32], strides = [1, 1]} : vector<2x384xf32> to vector<2x32xf32>
    %1054 = vector.extract_strided_slice %1042 {offsets = [0, 0], sizes = [2, 32], strides = [1, 1]} : vector<2x384xf32> to vector<2x32xf32>
    %1055 = arith.addf %1053, %1054 : vector<2x32xf32>
    %1056 = arith.negf %1055 : vector<2x32xf32>
    %1057 = math.exp %1056 : vector<2x32xf32>
    %cst_351 = arith.constant 1.000000e+00 : f32
    %1058 = vector.broadcast %cst_351 : f32 to vector<2x32xf32>
    %1059 = arith.addf %1058, %1057 : vector<2x32xf32>
    %1060 = arith.divf %1058, %1059 : vector<2x32xf32>
    %1061 = vector.extract_strided_slice %1052 {offsets = [0, 128], sizes = [2, 32], strides = [1, 1]} : vector<2x384xf32> to vector<2x32xf32>
    %1062 = vector.extract_strided_slice %1042 {offsets = [0, 128], sizes = [2, 32], strides = [1, 1]} : vector<2x384xf32> to vector<2x32xf32>
    %1063 = arith.addf %1061, %1062 : vector<2x32xf32>
    %1064 = arith.negf %1063 : vector<2x32xf32>
    %1065 = math.exp %1064 : vector<2x32xf32>
    %cst_352 = arith.constant 1.000000e+00 : f32
    %1066 = vector.broadcast %cst_352 : f32 to vector<2x32xf32>
    %1067 = arith.addf %1066, %1065 : vector<2x32xf32>
    %1068 = arith.divf %1066, %1067 : vector<2x32xf32>
    %1069 = vector.extract_strided_slice %1052 {offsets = [0, 256], sizes = [2, 32], strides = [1, 1]} : vector<2x384xf32> to vector<2x32xf32>
    %1070 = vector.extract_strided_slice %1042 {offsets = [0, 256], sizes = [2, 32], strides = [1, 1]} : vector<2x384xf32> to vector<2x32xf32>
    %1071 = arith.mulf %1060, %1070 : vector<2x32xf32>
    %1072 = arith.addf %1069, %1071 : vector<2x32xf32>
    %1073 = math.tanh %1072 : vector<2x32xf32>
    %cst_353 = arith.constant 1.000000e+00 : f32
    %1074 = vector.broadcast %cst_353 : f32 to vector<2x32xf32>
    %1075 = arith.subf %1074, %1068 : vector<2x32xf32>
    %1076 = arith.mulf %1075, %1073 : vector<2x32xf32>
    %1077 = arith.mulf %1068, %1012 : vector<2x32xf32>
    %1078 = arith.addf %1076, %1077 : vector<2x32xf32>
    %1079 = vector.extract_strided_slice %1046 {offsets = [0, 0], sizes = [2, 32], strides = [1, 1]} : vector<2x384xf32> to vector<2x32xf32>
    %1080 = vector.extract_strided_slice %1050 {offsets = [0, 0], sizes = [2, 32], strides = [1, 1]} : vector<2x384xf32> to vector<2x32xf32>
    %1081 = arith.addf %1079, %1080 : vector<2x32xf32>
    %1082 = arith.negf %1081 : vector<2x32xf32>
    %1083 = math.exp %1082 : vector<2x32xf32>
    %cst_354 = arith.constant 1.000000e+00 : f32
    %1084 = vector.broadcast %cst_354 : f32 to vector<2x32xf32>
    %1085 = arith.addf %1084, %1083 : vector<2x32xf32>
    %1086 = arith.divf %1084, %1085 : vector<2x32xf32>
    %1087 = vector.extract_strided_slice %1046 {offsets = [0, 128], sizes = [2, 32], strides = [1, 1]} : vector<2x384xf32> to vector<2x32xf32>
    %1088 = vector.extract_strided_slice %1050 {offsets = [0, 128], sizes = [2, 32], strides = [1, 1]} : vector<2x384xf32> to vector<2x32xf32>
    %1089 = arith.addf %1087, %1088 : vector<2x32xf32>
    %1090 = arith.negf %1089 : vector<2x32xf32>
    %1091 = math.exp %1090 : vector<2x32xf32>
    %cst_355 = arith.constant 1.000000e+00 : f32
    %1092 = vector.broadcast %cst_355 : f32 to vector<2x32xf32>
    %1093 = arith.addf %1092, %1091 : vector<2x32xf32>
    %1094 = arith.divf %1092, %1093 : vector<2x32xf32>
    %1095 = vector.extract_strided_slice %1046 {offsets = [0, 256], sizes = [2, 32], strides = [1, 1]} : vector<2x384xf32> to vector<2x32xf32>
    %1096 = vector.extract_strided_slice %1050 {offsets = [0, 256], sizes = [2, 32], strides = [1, 1]} : vector<2x384xf32> to vector<2x32xf32>
    %1097 = arith.mulf %1086, %1096 : vector<2x32xf32>
    %1098 = arith.addf %1095, %1097 : vector<2x32xf32>
    %1099 = math.tanh %1098 : vector<2x32xf32>
    %cst_356 = arith.constant 1.000000e+00 : f32
    %1100 = vector.broadcast %cst_356 : f32 to vector<2x32xf32>
    %1101 = arith.subf %1100, %1094 : vector<2x32xf32>
    %1102 = arith.mulf %1101, %1099 : vector<2x32xf32>
    %1103 = arith.mulf %1094, %1038 : vector<2x32xf32>
    %1104 = arith.addf %1102, %1103 : vector<2x32xf32>
    %cst_357 = arith.constant dense<0.000000e+00> : vector<2x384xf32>
    %1105 = tpu.matmul %1078, %800, %cst_357 {dimension_numbers = #tpu.dot_dimension_numbers<[1], [0], [0], [1], [0, 0, 1, 1], [], []>} : vector<2x32xf32>, vector<32x384xf32>, vector<2x384xf32> -> vector<2x384xf32>
    %1106 = vector.shape_cast %804 : vector<384xf32> to vector<1x384xf32>
    %1107 = vector.broadcast %1106 : vector<1x384xf32> to vector<2x384xf32>
    %1108 = arith.addf %1105, %1107 : vector<2x384xf32>
    %cst_358 = arith.constant dense<0.000000e+00> : vector<2x384xf32>
    %1109 = tpu.matmul %1078, %801, %cst_358 {dimension_numbers = #tpu.dot_dimension_numbers<[1], [0], [0], [1], [0, 0, 1, 1], [], []>} : vector<2x32xf32>, vector<32x384xf32>, vector<2x384xf32> -> vector<2x384xf32>
    %1110 = vector.shape_cast %806 : vector<384xf32> to vector<1x384xf32>
    %1111 = vector.broadcast %1110 : vector<1x384xf32> to vector<2x384xf32>
    %1112 = arith.addf %1109, %1111 : vector<2x384xf32>
    %cst_359 = arith.constant dense<0.000000e+00> : vector<2x384xf32>
    %1113 = tpu.matmul %1104, %802, %cst_359 {dimension_numbers = #tpu.dot_dimension_numbers<[1], [0], [0], [1], [0, 0, 1, 1], [], []>} : vector<2x32xf32>, vector<32x384xf32>, vector<2x384xf32> -> vector<2x384xf32>
    %1114 = vector.shape_cast %808 : vector<384xf32> to vector<1x384xf32>
    %1115 = vector.broadcast %1114 : vector<1x384xf32> to vector<2x384xf32>
    %1116 = arith.addf %1113, %1115 : vector<2x384xf32>
    %c5_360 = arith.constant 5 : index
    %c0_361 = arith.constant 0 : index
    %c0_362 = arith.constant 0 : index
    %1117 = vector.load %arg7[%c5_360, %c0_361, %c0_362] : memref<6x2x384xf32, #tpu.memory_space<vmem>>, vector<1x2x384xf32>
    %1118 = vector.shape_cast %1117 : vector<1x2x384xf32> to vector<2x384xf32>
    %1119 = vector.extract_strided_slice %1118 {offsets = [0, 0], sizes = [2, 32], strides = [1, 1]} : vector<2x384xf32> to vector<2x32xf32>
    %1120 = vector.extract_strided_slice %1108 {offsets = [0, 0], sizes = [2, 32], strides = [1, 1]} : vector<2x384xf32> to vector<2x32xf32>
    %1121 = arith.addf %1119, %1120 : vector<2x32xf32>
    %1122 = arith.negf %1121 : vector<2x32xf32>
    %1123 = math.exp %1122 : vector<2x32xf32>
    %cst_363 = arith.constant 1.000000e+00 : f32
    %1124 = vector.broadcast %cst_363 : f32 to vector<2x32xf32>
    %1125 = arith.addf %1124, %1123 : vector<2x32xf32>
    %1126 = arith.divf %1124, %1125 : vector<2x32xf32>
    %1127 = vector.extract_strided_slice %1118 {offsets = [0, 128], sizes = [2, 32], strides = [1, 1]} : vector<2x384xf32> to vector<2x32xf32>
    %1128 = vector.extract_strided_slice %1108 {offsets = [0, 128], sizes = [2, 32], strides = [1, 1]} : vector<2x384xf32> to vector<2x32xf32>
    %1129 = arith.addf %1127, %1128 : vector<2x32xf32>
    %1130 = arith.negf %1129 : vector<2x32xf32>
    %1131 = math.exp %1130 : vector<2x32xf32>
    %cst_364 = arith.constant 1.000000e+00 : f32
    %1132 = vector.broadcast %cst_364 : f32 to vector<2x32xf32>
    %1133 = arith.addf %1132, %1131 : vector<2x32xf32>
    %1134 = arith.divf %1132, %1133 : vector<2x32xf32>
    %1135 = vector.extract_strided_slice %1118 {offsets = [0, 256], sizes = [2, 32], strides = [1, 1]} : vector<2x384xf32> to vector<2x32xf32>
    %1136 = vector.extract_strided_slice %1108 {offsets = [0, 256], sizes = [2, 32], strides = [1, 1]} : vector<2x384xf32> to vector<2x32xf32>
    %1137 = arith.mulf %1126, %1136 : vector<2x32xf32>
    %1138 = arith.addf %1135, %1137 : vector<2x32xf32>
    %1139 = math.tanh %1138 : vector<2x32xf32>
    %cst_365 = arith.constant 1.000000e+00 : f32
    %1140 = vector.broadcast %cst_365 : f32 to vector<2x32xf32>
    %1141 = arith.subf %1140, %1134 : vector<2x32xf32>
    %1142 = arith.mulf %1141, %1139 : vector<2x32xf32>
    %1143 = arith.mulf %1134, %1078 : vector<2x32xf32>
    %1144 = arith.addf %1142, %1143 : vector<2x32xf32>
    %1145 = vector.extract_strided_slice %1112 {offsets = [0, 0], sizes = [2, 32], strides = [1, 1]} : vector<2x384xf32> to vector<2x32xf32>
    %1146 = vector.extract_strided_slice %1116 {offsets = [0, 0], sizes = [2, 32], strides = [1, 1]} : vector<2x384xf32> to vector<2x32xf32>
    %1147 = arith.addf %1145, %1146 : vector<2x32xf32>
    %1148 = arith.negf %1147 : vector<2x32xf32>
    %1149 = math.exp %1148 : vector<2x32xf32>
    %cst_366 = arith.constant 1.000000e+00 : f32
    %1150 = vector.broadcast %cst_366 : f32 to vector<2x32xf32>
    %1151 = arith.addf %1150, %1149 : vector<2x32xf32>
    %1152 = arith.divf %1150, %1151 : vector<2x32xf32>
    %1153 = vector.extract_strided_slice %1112 {offsets = [0, 128], sizes = [2, 32], strides = [1, 1]} : vector<2x384xf32> to vector<2x32xf32>
    %1154 = vector.extract_strided_slice %1116 {offsets = [0, 128], sizes = [2, 32], strides = [1, 1]} : vector<2x384xf32> to vector<2x32xf32>
    %1155 = arith.addf %1153, %1154 : vector<2x32xf32>
    %1156 = arith.negf %1155 : vector<2x32xf32>
    %1157 = math.exp %1156 : vector<2x32xf32>
    %cst_367 = arith.constant 1.000000e+00 : f32
    %1158 = vector.broadcast %cst_367 : f32 to vector<2x32xf32>
    %1159 = arith.addf %1158, %1157 : vector<2x32xf32>
    %1160 = arith.divf %1158, %1159 : vector<2x32xf32>
    %1161 = vector.extract_strided_slice %1112 {offsets = [0, 256], sizes = [2, 32], strides = [1, 1]} : vector<2x384xf32> to vector<2x32xf32>
    %1162 = vector.extract_strided_slice %1116 {offsets = [0, 256], sizes = [2, 32], strides = [1, 1]} : vector<2x384xf32> to vector<2x32xf32>
    %1163 = arith.mulf %1152, %1162 : vector<2x32xf32>
    %1164 = arith.addf %1161, %1163 : vector<2x32xf32>
    %1165 = math.tanh %1164 : vector<2x32xf32>
    %cst_368 = arith.constant 1.000000e+00 : f32
    %1166 = vector.broadcast %cst_368 : f32 to vector<2x32xf32>
    %1167 = arith.subf %1166, %1160 : vector<2x32xf32>
    %1168 = arith.mulf %1167, %1165 : vector<2x32xf32>
    %1169 = arith.mulf %1160, %1104 : vector<2x32xf32>
    %1170 = arith.addf %1168, %1169 : vector<2x32xf32>
    %cst_369 = arith.constant dense<0.000000e+00> : vector<2x384xf32>
    %1171 = tpu.matmul %1144, %801, %cst_369 {dimension_numbers = #tpu.dot_dimension_numbers<[1], [0], [0], [1], [0, 0, 1, 1], [], []>} : vector<2x32xf32>, vector<32x384xf32>, vector<2x384xf32> -> vector<2x384xf32>
    %1172 = vector.shape_cast %806 : vector<384xf32> to vector<1x384xf32>
    %1173 = vector.broadcast %1172 : vector<1x384xf32> to vector<2x384xf32>
    %1174 = arith.addf %1171, %1173 : vector<2x384xf32>
    %cst_370 = arith.constant dense<0.000000e+00> : vector<2x384xf32>
    %1175 = tpu.matmul %1170, %802, %cst_370 {dimension_numbers = #tpu.dot_dimension_numbers<[1], [0], [0], [1], [0, 0, 1, 1], [], []>} : vector<2x32xf32>, vector<32x384xf32>, vector<2x384xf32> -> vector<2x384xf32>
    %1176 = vector.shape_cast %808 : vector<384xf32> to vector<1x384xf32>
    %1177 = vector.broadcast %1176 : vector<1x384xf32> to vector<2x384xf32>
    %1178 = arith.addf %1175, %1177 : vector<2x384xf32>
    %1179 = vector.extract_strided_slice %1174 {offsets = [0, 0], sizes = [2, 32], strides = [1, 1]} : vector<2x384xf32> to vector<2x32xf32>
    %1180 = vector.extract_strided_slice %1178 {offsets = [0, 0], sizes = [2, 32], strides = [1, 1]} : vector<2x384xf32> to vector<2x32xf32>
    %1181 = arith.addf %1179, %1180 : vector<2x32xf32>
    %1182 = arith.negf %1181 : vector<2x32xf32>
    %1183 = math.exp %1182 : vector<2x32xf32>
    %cst_371 = arith.constant 1.000000e+00 : f32
    %1184 = vector.broadcast %cst_371 : f32 to vector<2x32xf32>
    %1185 = arith.addf %1184, %1183 : vector<2x32xf32>
    %1186 = arith.divf %1184, %1185 : vector<2x32xf32>
    %1187 = vector.extract_strided_slice %1174 {offsets = [0, 128], sizes = [2, 32], strides = [1, 1]} : vector<2x384xf32> to vector<2x32xf32>
    %1188 = vector.extract_strided_slice %1178 {offsets = [0, 128], sizes = [2, 32], strides = [1, 1]} : vector<2x384xf32> to vector<2x32xf32>
    %1189 = arith.addf %1187, %1188 : vector<2x32xf32>
    %1190 = arith.negf %1189 : vector<2x32xf32>
    %1191 = math.exp %1190 : vector<2x32xf32>
    %cst_372 = arith.constant 1.000000e+00 : f32
    %1192 = vector.broadcast %cst_372 : f32 to vector<2x32xf32>
    %1193 = arith.addf %1192, %1191 : vector<2x32xf32>
    %1194 = arith.divf %1192, %1193 : vector<2x32xf32>
    %1195 = vector.extract_strided_slice %1174 {offsets = [0, 256], sizes = [2, 32], strides = [1, 1]} : vector<2x384xf32> to vector<2x32xf32>
    %1196 = vector.extract_strided_slice %1178 {offsets = [0, 256], sizes = [2, 32], strides = [1, 1]} : vector<2x384xf32> to vector<2x32xf32>
    %1197 = arith.mulf %1186, %1196 : vector<2x32xf32>
    %1198 = arith.addf %1195, %1197 : vector<2x32xf32>
    %1199 = math.tanh %1198 : vector<2x32xf32>
    %cst_373 = arith.constant 1.000000e+00 : f32
    %1200 = vector.broadcast %cst_373 : f32 to vector<2x32xf32>
    %1201 = arith.subf %1200, %1194 : vector<2x32xf32>
    %1202 = arith.mulf %1201, %1199 : vector<2x32xf32>
    %1203 = arith.mulf %1194, %1170 : vector<2x32xf32>
    %1204 = arith.addf %1202, %1203 : vector<2x32xf32>
    %c304 = arith.constant 304 : index
    %c0_374 = arith.constant 0 : index
    %1205 = vector.load %arg2[%c304, %c0_374] : memref<336x384xf32, #tpu.memory_space<vmem>>, vector<32x384xf32>
    %1206 = vector.extract_strided_slice %1205 {offsets = [0, 0], sizes = [32, 128], strides = [1, 1]} : vector<32x384xf32> to vector<32x128xf32>
    %c6_375 = arith.constant 6 : index
    %c0_376 = arith.constant 0 : index
    %1207 = vector.load %arg3[%c6_375, %c0_376] : memref<8x384xf32, #tpu.memory_space<vmem>>, vector<1x384xf32>
    %1208 = vector.shape_cast %1207 : vector<1x384xf32> to vector<384xf32>
    %1209 = vector.extract_strided_slice %1208 {offsets = [0], sizes = [128], strides = [1]} : vector<384xf32> to vector<128xf32>
    %1210 = vector.extract_strided_slice %906 {offsets = [0, 0], sizes = [1, 32], strides = [1, 1]} : vector<2x32xf32> to vector<1x32xf32>
    %1211 = vector.shape_cast %1210 : vector<1x32xf32> to vector<32xf32>
    %1212 = vector.extract_strided_slice %972 {offsets = [0, 0], sizes = [1, 32], strides = [1, 1]} : vector<2x32xf32> to vector<1x32xf32>
    %1213 = vector.shape_cast %1212 : vector<1x32xf32> to vector<32xf32>
    %1214 = vector.extract_strided_slice %1038 {offsets = [0, 0], sizes = [1, 32], strides = [1, 1]} : vector<2x32xf32> to vector<1x32xf32>
    %1215 = vector.shape_cast %1214 : vector<1x32xf32> to vector<32xf32>
    %1216 = vector.extract_strided_slice %1104 {offsets = [0, 0], sizes = [1, 32], strides = [1, 1]} : vector<2x32xf32> to vector<1x32xf32>
    %1217 = vector.shape_cast %1216 : vector<1x32xf32> to vector<32xf32>
    %1218 = vector.extract_strided_slice %1170 {offsets = [0, 0], sizes = [1, 32], strides = [1, 1]} : vector<2x32xf32> to vector<1x32xf32>
    %1219 = vector.shape_cast %1218 : vector<1x32xf32> to vector<32xf32>
    %1220 = vector.extract_strided_slice %1204 {offsets = [0, 0], sizes = [1, 32], strides = [1, 1]} : vector<2x32xf32> to vector<1x32xf32>
    %1221 = vector.shape_cast %1220 : vector<1x32xf32> to vector<32xf32>
    %1222 = vector.shape_cast %1211 : vector<32xf32> to vector<1x32xf32>
    %1223 = vector.shape_cast %1213 : vector<32xf32> to vector<1x32xf32>
    %1224 = vector.shape_cast %1215 : vector<32xf32> to vector<1x32xf32>
    %1225 = vector.shape_cast %1217 : vector<32xf32> to vector<1x32xf32>
    %1226 = vector.shape_cast %1219 : vector<32xf32> to vector<1x32xf32>
    %1227 = vector.shape_cast %1221 : vector<32xf32> to vector<1x32xf32>
    %1228 = tpu.concatenate %1222, %1223, %1224, %1225, %1226, %1227 in 0 : vector<1x32xf32>, vector<1x32xf32>, vector<1x32xf32>, vector<1x32xf32>, vector<1x32xf32>, vector<1x32xf32> -> vector<6x32xf32>
    %cst_377 = arith.constant dense<0.000000e+00> : vector<6x128xf32>
    %1229 = tpu.matmul %1228, %1206, %cst_377 {dimension_numbers = #tpu.dot_dimension_numbers<[1], [0], [0], [1], [0, 0, 1, 1], [], []>} : vector<6x32xf32>, vector<32x128xf32>, vector<6x128xf32> -> vector<6x128xf32>
    %1230 = vector.shape_cast %1209 : vector<128xf32> to vector<1x128xf32>
    %1231 = vector.broadcast %1230 : vector<1x128xf32> to vector<6x128xf32>
    %1232 = arith.addf %1229, %1231 : vector<6x128xf32>
    %c0_378 = arith.constant 0 : index
    %c0_379 = arith.constant 0 : index
    %c0_380 = arith.constant 0 : index
    %1233 = vector.load %arg4[%c0_378, %c0_379, %c0_380] : memref<2x6x128xf32, #tpu.memory_space<vmem>>, vector<1x6x128xf32>
    %1234 = vector.shape_cast %1233 : vector<1x6x128xf32> to vector<6x128xf32>
    %1235 = vector.shape_cast %1232 : vector<6x128xf32> to vector<1x6x128xf32>
    tpu.vector_store %arg4[%c0_378, %c0_379, %c0_380], %1235 {strides = array<i32>} : memref<2x6x128xf32, #tpu.memory_space<vmem>>, vector<1x6x128xf32>,
    %1236 = vector.extract_strided_slice %906 {offsets = [1, 0], sizes = [1, 32], strides = [1, 1]} : vector<2x32xf32> to vector<1x32xf32>
    %1237 = vector.shape_cast %1236 : vector<1x32xf32> to vector<32xf32>
    %1238 = vector.extract_strided_slice %972 {offsets = [1, 0], sizes = [1, 32], strides = [1, 1]} : vector<2x32xf32> to vector<1x32xf32>
    %1239 = vector.shape_cast %1238 : vector<1x32xf32> to vector<32xf32>
    %1240 = vector.extract_strided_slice %1038 {offsets = [1, 0], sizes = [1, 32], strides = [1, 1]} : vector<2x32xf32> to vector<1x32xf32>
    %1241 = vector.shape_cast %1240 : vector<1x32xf32> to vector<32xf32>
    %1242 = vector.extract_strided_slice %1104 {offsets = [1, 0], sizes = [1, 32], strides = [1, 1]} : vector<2x32xf32> to vector<1x32xf32>
    %1243 = vector.shape_cast %1242 : vector<1x32xf32> to vector<32xf32>
    %1244 = vector.extract_strided_slice %1170 {offsets = [1, 0], sizes = [1, 32], strides = [1, 1]} : vector<2x32xf32> to vector<1x32xf32>
    %1245 = vector.shape_cast %1244 : vector<1x32xf32> to vector<32xf32>
    %1246 = vector.extract_strided_slice %1204 {offsets = [1, 0], sizes = [1, 32], strides = [1, 1]} : vector<2x32xf32> to vector<1x32xf32>
    %1247 = vector.shape_cast %1246 : vector<1x32xf32> to vector<32xf32>
    %1248 = vector.shape_cast %1237 : vector<32xf32> to vector<1x32xf32>
    %1249 = vector.shape_cast %1239 : vector<32xf32> to vector<1x32xf32>
    %1250 = vector.shape_cast %1241 : vector<32xf32> to vector<1x32xf32>
    %1251 = vector.shape_cast %1243 : vector<32xf32> to vector<1x32xf32>
    %1252 = vector.shape_cast %1245 : vector<32xf32> to vector<1x32xf32>
    %1253 = vector.shape_cast %1247 : vector<32xf32> to vector<1x32xf32>
    %1254 = tpu.concatenate %1248, %1249, %1250, %1251, %1252, %1253 in 0 : vector<1x32xf32>, vector<1x32xf32>, vector<1x32xf32>, vector<1x32xf32>, vector<1x32xf32>, vector<1x32xf32> -> vector<6x32xf32>
    %cst_381 = arith.constant dense<0.000000e+00> : vector<6x128xf32>
    %1255 = tpu.matmul %1254, %1206, %cst_381 {dimension_numbers = #tpu.dot_dimension_numbers<[1], [0], [0], [1], [0, 0, 1, 1], [], []>} : vector<6x32xf32>, vector<32x128xf32>, vector<6x128xf32> -> vector<6x128xf32>
    %1256 = vector.shape_cast %1209 : vector<128xf32> to vector<1x128xf32>
    %1257 = vector.broadcast %1256 : vector<1x128xf32> to vector<6x128xf32>
    %1258 = arith.addf %1255, %1257 : vector<6x128xf32>
    %c1_382 = arith.constant 1 : index
    %c0_383 = arith.constant 0 : index
    %c0_384 = arith.constant 0 : index
    %1259 = vector.load %arg4[%c1_382, %c0_383, %c0_384] : memref<2x6x128xf32, #tpu.memory_space<vmem>>, vector<1x6x128xf32>
    %1260 = vector.shape_cast %1259 : vector<1x6x128xf32> to vector<6x128xf32>
    %1261 = vector.shape_cast %1258 : vector<6x128xf32> to vector<1x6x128xf32>
    tpu.vector_store %arg4[%c1_382, %c0_383, %c0_384], %1261 {strides = array<i32>} : memref<2x6x128xf32, #tpu.memory_space<vmem>>, vector<1x6x128xf32>,
    %c0_385 = arith.constant 0 : index
    %c0_386 = arith.constant 0 : index
    %c0_387 = arith.constant 0 : index
    %1262 = vector.load %arg5[%c0_385, %c0_386, %c0_387] : memref<2x2x32xf32, #tpu.memory_space<vmem>>, vector<1x2x32xf32>
    %1263 = vector.shape_cast %1262 : vector<1x2x32xf32> to vector<2x32xf32>
    %1264 = vector.shape_cast %1144 : vector<2x32xf32> to vector<1x2x32xf32>
    tpu.vector_store %arg5[%c0_385, %c0_386, %c0_387], %1264 {strides = array<i32>} : memref<2x2x32xf32, #tpu.memory_space<vmem>>, vector<1x2x32xf32>,
    %c1_388 = arith.constant 1 : index
    %c0_389 = arith.constant 0 : index
    %c0_390 = arith.constant 0 : index
    %1265 = vector.load %arg5[%c1_388, %c0_389, %c0_390] : memref<2x2x32xf32, #tpu.memory_space<vmem>>, vector<1x2x32xf32>
    %1266 = vector.shape_cast %1265 : vector<1x2x32xf32> to vector<2x32xf32>
    %1267 = vector.shape_cast %1204 : vector<2x32xf32> to vector<1x2x32xf32>
    tpu.vector_store %arg5[%c1_388, %c0_389, %c0_390], %1267 {strides = array<i32>} : memref<2x2x32xf32, #tpu.memory_space<vmem>>, vector<1x2x32xf32>,
    return
  }
}

</mosaic_0001>

<llo_original>
// kernel: seq2seq_pallas.1
$region0: #{seq2seq_pallas.1}
  #allocation0 [shape = 'u32[]', space=smem, size = 0x4, offset = 0x4, fixed_abs, tag = 'smem constant byte address 0x4 - core index']
  #allocation1 [shape = 'u32[144,128]{1,0:T(1,128)}', space=vmem, size = 0x12000, scoped, tag = 'internal scratch']
  #allocation2 [shape = 'f32[8,2,384]{2,1,0:T(2,128)}', space=vmem, size = 0x6000, scoped, tag = 'scratch operand']
  #allocation3 [shape = 'f32[6,2,384]{2,1,0:T(2,128)}', space=vmem, size = 0x4800, scoped, tag = 'scratch operand']
  %s0 = inlined_call_operand.vmem [shape: s32[2,8], index: 0, kind: input, shape index: {}]
  %s1 = inlined_call_operand.vmem [shape: s32[2,6], index: 1, kind: input, shape index: {}]
  %s2 = inlined_call_operand.hbm [shape: f32[336,384], index: 2, kind: input, shape index: {}]
  %s3 = inlined_call_operand.hbm [shape: f32[8,384], index: 3, kind: input, shape index: {}]
  %s4 = inlined_call_operand.vmem [shape: f32[2,6,128], index: 4, kind: output, shape index: {0}]
  %s5 = inlined_call_operand.hbm [shape: f32[2,2,32], index: 5, kind: output, shape index: {1}]
  %6 = xla_tuple %s4, %s5
  %s7 = sld [smem:[#allocation0]]
  $region50: #{seq2seq_pallas.1} parent=0
    _
  %s9 = ssub.s32 1, %s7
  %s10 = scalar_select 0, %s9, %s7
  $region1: #{seq2seq_pallas.1} parent=0
    #allocation4 [shape = 'u8[1024]{0}', space=smem, size = 0x400, scoped, tag = 'input window, operand 0, single buffered']
    #allocation5 [shape = 's32[1]{0}', space=sflag, size = 0x4, scoped, tag = 'scoped memory for seq2seq_pallas.1']
    #allocation6 [shape = 's32[1]{0}', space=sflag, size = 0x4, scoped, tag = 'scoped memory for seq2seq_pallas.1']
    #allocation7 [shape = 's32[1]{0}', space=sflag, size = 0x4, scoped, tag = 'scoped memory for seq2seq_pallas.1']
    #allocation8 [shape = 'u8[1024]{0}', space=smem, size = 0x400, scoped, tag = 'input window, operand 1, single buffered']
    #allocation9 [shape = 's32[1]{0}', space=sflag, size = 0x4, scoped, tag = 'scoped memory for seq2seq_pallas.1']
    #allocation10 [shape = 'u8[516096]{0}', space=vmem, size = 0x7e000, scoped, tag = 'input window, operand 2, single buffered']
    #allocation11 [shape = 'u8[12288]{0}', space=vmem, size = 0x3000, scoped, tag = 'input window, operand 3, single buffered']
    #allocation12 [shape = 's32[1]{0}', space=sflag, size = 0x4, scoped, tag = 'scoped memory for seq2seq_pallas.1']
    #allocation13 [shape = 'u8[2048]{0}', space=vmem, size = 0x800, scoped, tag = 'output window, operand 1, single buffered']
    %11 = vsyncpa [#allocation7], 0
    %12 = vsyncpa [#allocation9], 0
    %13 = vsyncpa [#allocation5], 0
    %14 = vsyncpa [#allocation12], 0
    %15 = vsyncpa [#allocation6], 0
    // Predicated region
    $region2: #{seq2seq_pallas.1} parent=1 // pred_check
      _
    $region3: #{seq2seq_pallas.1} parent=1 // pred_check_branch
      %17 = sbr.rel (0) target = $region5
    $region4: #{seq2seq_pallas.1} parent=1 // pred_region
      %s19 = ssub.s32 32, 32
      %20 = vsyncadd [#allocation7], %s19
      %s22 = sshll.u32 %s0, 4
      %s23 = int_to_ptr.vmem [resolvable:$true] %s22
      %25 = dma.vmem_to_smem %s23, 32, [#allocation4], [#allocation7]
    $region5: #{seq2seq_pallas.1} parent=1 // pred_fallthru
      _
    // Predicated region
    $region6: #{seq2seq_pallas.1} parent=1 // pred_check
      _
    $region7: #{seq2seq_pallas.1} parent=1 // pred_check_branch
      %27 = sbr.rel (0) target = $region9
    $region8: #{seq2seq_pallas.1} parent=1 // pred_region
      %s29 = ssub.s32 32, 32
      %30 = vsyncadd [#allocation9], %s29
      %s32 = sshll.u32 %s1, 4
      %s33 = int_to_ptr.vmem [resolvable:$true] %s32
      %35 = dma.vmem_to_smem %s33, 32, [#allocation8], [#allocation9]
    $region9: #{seq2seq_pallas.1} parent=1 // pred_fallthru
      _
    // Predicated region
    $region10: #{seq2seq_pallas.1} parent=1 // pred_check
      _
    $region11: #{seq2seq_pallas.1} parent=1 // pred_check_branch
      %37 = sbr.rel (0) target = $region13
    $region12: #{seq2seq_pallas.1} parent=1 // pred_region
      %s39 = ssub.s32 16128, 16128
      %40 = vsyncadd [#allocation5], %s39
      %s41 = sshll.u32 [#allocation10], 4
      %s42 = int_to_ptr.vmem [resolvable:$true] %s41
      %47 = dma.hbm_to_vmem [thread:$0]  %s2, 16128, %s42, [#allocation5], 384, 384, 24
    $region13: #{seq2seq_pallas.1} parent=1 // pred_fallthru
      _
    // Predicated region
    $region14: #{seq2seq_pallas.1} parent=1 // pred_check
      _
    $region15: #{seq2seq_pallas.1} parent=1 // pred_check_branch
      %49 = sbr.rel (0) target = $region17
    $region16: #{seq2seq_pallas.1} parent=1 // pred_region
      %s51 = ssub.s32 384, 384
      %52 = vsyncadd [#allocation12], %s51
      %s54 = sshll.u32 [#allocation11], 4
      %s55 = int_to_ptr.vmem [resolvable:$true] %s54
      %57 = dma.hbm_to_vmem [thread:$0]  %s3, 384, %s55, [#allocation12]
    $region17: #{seq2seq_pallas.1} parent=1 // pred_fallthru
      _
    // Predicated region
    $region18: #{seq2seq_pallas.1} parent=1 // pred_check
      _
    $region19: #{seq2seq_pallas.1} parent=1 // pred_check_branch
      %59 = sbr.rel (0) target = $region21
    $region20: #{seq2seq_pallas.1} parent=1 // pred_region
      %60 = dma.done [#allocation7], 32
    $region21: #{seq2seq_pallas.1} parent=1 // pred_fallthru
      _
    // Predicated region
    $region22: #{seq2seq_pallas.1} parent=1 // pred_check
      _
    $region23: #{seq2seq_pallas.1} parent=1 // pred_check_branch
      %62 = sbr.rel (0) target = $region25
    $region24: #{seq2seq_pallas.1} parent=1 // pred_region
      %63 = dma.done [#allocation9], 32
    $region25: #{seq2seq_pallas.1} parent=1 // pred_fallthru
      _
    // Predicated region
    $region26: #{seq2seq_pallas.1} parent=1 // pred_check
      _
    $region27: #{seq2seq_pallas.1} parent=1 // pred_check_branch
      %65 = sbr.rel (0) target = $region29
    $region28: #{seq2seq_pallas.1} parent=1 // pred_region
      %66 = dma.done [#allocation5], 16128
    $region29: #{seq2seq_pallas.1} parent=1 // pred_fallthru
      _
    // Predicated region
    $region30: #{seq2seq_pallas.1} parent=1 // pred_check
      _
    $region31: #{seq2seq_pallas.1} parent=1 // pred_check_branch
      %68 = sbr.rel (0) target = $region33
    $region32: #{seq2seq_pallas.1} parent=1 // pred_region
      %69 = dma.done [#allocation12], 384
    $region33: #{seq2seq_pallas.1} parent=1 // pred_fallthru
      _
    %70 = sfence
    %s71 = sld [smem:[#allocation4]]
    %s72 = sshra.s32 %s71, 3
    %s73 = sand.u32 %s71, 7
    %s74 = sshra.s32 %s71, 3
    %s75 = sand.u32 %s71, 7
    %s76 = smul.u32 %s72, 3
    %s77 = smul.u32 %s76, 8
    %s78 = sadd.s32 %s77, %s75
    %s79 = scalar_lea.vmem [#allocation10], %s78
    %v80 = vld [vmem:[%s79] ss:$8 sm:$0x7]
    %v81 = vlaneseq
    %vm82 = vcmp.ge.s32.totalorder %v81, 0
    %vm83 = vcmp.lt.s32.totalorder %v81, 384
    %vm84 = vmand %vm82, %vm83
    %85 = vst.msk [vmem:[#allocation2] ss:$2 sm:$0x7] %vm84, %v80
    %s86 = sld [smem:[#allocation4 + $0x80]]
    %s87 = sshra.s32 %s86, 3
    %s88 = sand.u32 %s86, 7
    %s89 = sshra.s32 %s86, 3
    %s90 = sand.u32 %s86, 7
    %s91 = smul.u32 %s87, 3
    %s92 = smul.u32 %s91, 8
    %s93 = sadd.s32 %s92, %s90
    %s94 = scalar_lea.vmem [#allocation10], %s93
    %v95 = vld [vmem:[%s94] ss:$8 sm:$0x7]
    %s96 = scalar_lea.vmem [#allocation2], 1
    %97 = vst.msk [vmem:[%s96] ss:$2 sm:$0x7] %vm84, %v95
    %s98 = sld [smem:[#allocation4 + $0x1]]
    %s99 = sshra.s32 %s98, 3
    %s100 = sand.u32 %s98, 7
    %s101 = sshra.s32 %s98, 3
    %s102 = sand.u32 %s98, 7
    %s103 = smul.u32 %s99, 3
    %s104 = smul.u32 %s103, 8
    %s105 = sadd.s32 %s104, %s102
    %s106 = scalar_lea.vmem [#allocation10], %s105
    %v107 = vld [vmem:[%s106] ss:$8 sm:$0x7]
    %s108 = scalar_lea.vmem [#allocation2], 6
    %109 = vst.msk [vmem:[%s108] ss:$2 sm:$0x7] %vm84, %v107
    %s110 = sld [smem:[#allocation4 + $0x81]]
    %s111 = sshra.s32 %s110, 3
    %s112 = sand.u32 %s110, 7
    %s113 = sshra.s32 %s110, 3
    %s114 = sand.u32 %s110, 7
    %s115 = smul.u32 %s111, 3
    %s116 = smul.u32 %s115, 8
    %s117 = sadd.s32 %s116, %s114
    %s118 = scalar_lea.vmem [#allocation10], %s117
    %v119 = vld [vmem:[%s118] ss:$8 sm:$0x7]
    %s120 = scalar_lea.vmem %s108, 1 [#allocation2]
    %121 = vst.msk [vmem:[%s120] ss:$2 sm:$0x7] %vm84, %v119
    %s122 = sld [smem:[#allocation4 + $0x2]]
    %s123 = sshra.s32 %s122, 3
    %s124 = sand.u32 %s122, 7
    %s125 = sshra.s32 %s122, 3
    %s126 = sand.u32 %s122, 7
    %s127 = smul.u32 %s123, 3
    %s128 = smul.u32 %s127, 8
    %s129 = sadd.s32 %s128, %s126
    %s130 = scalar_lea.vmem [#allocation10], %s129
    %v131 = vld [vmem:[%s130] ss:$8 sm:$0x7]
    %s132 = scalar_lea.vmem [#allocation2], 12
    %133 = vst.msk [vmem:[%s132] ss:$2 sm:$0x7] %vm84, %v131
    %s134 = sld [smem:[#allocation4 + $0x82]]
    %s135 = sshra.s32 %s134, 3
    %s136 = sand.u32 %s134, 7
    %s137 = sshra.s32 %s134, 3
    %s138 = sand.u32 %s134, 7
    %s139 = smul.u32 %s135, 3
    %s140 = smul.u32 %s139, 8
    %s141 = sadd.s32 %s140, %s138
    %s142 = scalar_lea.vmem [#allocation10], %s141
    %v143 = vld [vmem:[%s142] ss:$8 sm:$0x7]
    %s144 = scalar_lea.vmem %s132, 1 [#allocation2]
    %145 = vst.msk [vmem:[%s144] ss:$2 sm:$0x7] %vm84, %v143
    %s146 = sld [smem:[#allocation4 + $0x3]]
    %s147 = sshra.s32 %s146, 3
    %s148 = sand.u32 %s146, 7
    %s149 = sshra.s32 %s146, 3
    %s150 = sand.u32 %s146, 7
    %s151 = smul.u32 %s147, 3
    %s152 = smul.u32 %s151, 8
    %s153 = sadd.s32 %s152, %s150
    %s154 = scalar_lea.vmem [#allocation10], %s153
    %v155 = vld [vmem:[%s154] ss:$8 sm:$0x7]
    %s156 = scalar_lea.vmem [#allocation2], 18
    %157 = vst.msk [vmem:[%s156] ss:$2 sm:$0x7] %vm84, %v155
    %s158 = sld [smem:[#allocation4 + $0x83]]
    %s159 = sshra.s32 %s158, 3
    %s160 = sand.u32 %s158, 7
    %s161 = sshra.s32 %s158, 3
    %s162 = sand.u32 %s158, 7
    %s163 = smul.u32 %s159, 3
    %s164 = smul.u32 %s163, 8
    %s165 = sadd.s32 %s164, %s162
    %s166 = scalar_lea.vmem [#allocation10], %s165
    %v167 = vld [vmem:[%s166] ss:$8 sm:$0x7]
    %s168 = scalar_lea.vmem %s156, 1 [#allocation2]
    %169 = vst.msk [vmem:[%s168] ss:$2 sm:$0x7] %vm84, %v167
    %s170 = sld [smem:[#allocation4 + $0x4]]
    %s171 = sshra.s32 %s170, 3
    %s172 = sand.u32 %s170, 7
    %s173 = sshra.s32 %s170, 3
    %s174 = sand.u32 %s170, 7
    %s175 = smul.u32 %s171, 3
    %s176 = smul.u32 %s175, 8
    %s177 = sadd.s32 %s176, %s174
    %s178 = scalar_lea.vmem [#allocation10], %s177
    %v179 = vld [vmem:[%s178] ss:$8 sm:$0x7]
    %s180 = scalar_lea.vmem [#allocation2], 24
    %181 = vst.msk [vmem:[%s180] ss:$2 sm:$0x7] %vm84, %v179
    %s182 = sld [smem:[#allocation4 + $0x84]]
    %s183 = sshra.s32 %s182, 3
    %s184 = sand.u32 %s182, 7
    %s185 = sshra.s32 %s182, 3
    %s186 = sand.u32 %s182, 7
    %s187 = smul.u32 %s183, 3
    %s188 = smul.u32 %s187, 8
    %s189 = sadd.s32 %s188, %s186
    %s190 = scalar_lea.vmem [#allocation10], %s189
    %v191 = vld [vmem:[%s190] ss:$8 sm:$0x7]
    %s192 = scalar_lea.vmem %s180, 1 [#allocation2]
    %193 = vst.msk [vmem:[%s192] ss:$2 sm:$0x7] %vm84, %v191
    %s194 = sld [smem:[#allocation4 + $0x5]]
    %s195 = sshra.s32 %s194, 3
    %s196 = sand.u32 %s194, 7
    %s197 = sshra.s32 %s194, 3
    %s198 = sand.u32 %s194, 7
    %s199 = smul.u32 %s195, 3
    %s200 = smul.u32 %s199, 8
    %s201 = sadd.s32 %s200, %s198
    %s202 = scalar_lea.vmem [#allocation10], %s201
    %v203 = vld [vmem:[%s202] ss:$8 sm:$0x7]
    %s204 = scalar_lea.vmem [#allocation2], 30
    %205 = vst.msk [vmem:[%s204] ss:$2 sm:$0x7] %vm84, %v203
    %s206 = sld [smem:[#allocation4 + $0x85]]
    %s207 = sshra.s32 %s206, 3
    %s208 = sand.u32 %s206, 7
    %s209 = sshra.s32 %s206, 3
    %s210 = sand.u32 %s206, 7
    %s211 = smul.u32 %s207, 3
    %s212 = smul.u32 %s211, 8
    %s213 = sadd.s32 %s212, %s210
    %s214 = scalar_lea.vmem [#allocation10], %s213
    %v215 = vld [vmem:[%s214] ss:$8 sm:$0x7]
    %s216 = scalar_lea.vmem %s204, 1 [#allocation2]
    %217 = vst.msk [vmem:[%s216] ss:$2 sm:$0x7] %vm84, %v215
    %s218 = sld [smem:[#allocation4 + $0x6]]
    %s219 = sshra.s32 %s218, 3
    %s220 = sand.u32 %s218, 7
    %s221 = sshra.s32 %s218, 3
    %s222 = sand.u32 %s218, 7
    %s223 = smul.u32 %s219, 3
    %s224 = smul.u32 %s223, 8
    %s225 = sadd.s32 %s224, %s222
    %s226 = scalar_lea.vmem [#allocation10], %s225
    %v227 = vld [vmem:[%s226] ss:$8 sm:$0x7]
    %s228 = scalar_lea.vmem [#allocation2], 36
    %229 = vst.msk [vmem:[%s228] ss:$2 sm:$0x7] %vm84, %v227
    %s230 = sld [smem:[#allocation4 + $0x86]]
    %s231 = sshra.s32 %s230, 3
    %s232 = sand.u32 %s230, 7
    %s233 = sshra.s32 %s230, 3
    %s234 = sand.u32 %s230, 7
    %s235 = smul.u32 %s231, 3
    %s236 = smul.u32 %s235, 8
    %s237 = sadd.s32 %s236, %s234
    %s238 = scalar_lea.vmem [#allocation10], %s237
    %v239 = vld [vmem:[%s238] ss:$8 sm:$0x7]
    %s240 = scalar_lea.vmem %s228, 1 [#allocation2]
    %241 = vst.msk [vmem:[%s240] ss:$2 sm:$0x7] %vm84, %v239
    %s242 = sld [smem:[#allocation4 + $0x7]]
    %s243 = sshra.s32 %s242, 3
    %s244 = sand.u32 %s242, 7
    %s245 = sshra.s32 %s242, 3
    %s246 = sand.u32 %s242, 7
    %s247 = smul.u32 %s243, 3
    %s248 = smul.u32 %s247, 8
    %s249 = sadd.s32 %s248, %s246
    %s250 = scalar_lea.vmem [#allocation10], %s249
    %v251 = vld [vmem:[%s250] ss:$8 sm:$0x7]
    %s252 = scalar_lea.vmem [#allocation2], 42
    %253 = vst.msk [vmem:[%s252] ss:$2 sm:$0x7] %vm84, %v251
    %s254 = sld [smem:[#allocation4 + $0x87]]
    %s255 = sshra.s32 %s254, 3
    %s256 = sand.u32 %s254, 7
    %s257 = sshra.s32 %s254, 3
    %s258 = sand.u32 %s254, 7
    %s259 = smul.u32 %s255, 3
    %s260 = smul.u32 %s259, 8
    %s261 = sadd.s32 %s260, %s258
    %s262 = scalar_lea.vmem [#allocation10], %s261
    %v263 = vld [vmem:[%s262] ss:$8 sm:$0x7]
    %s264 = scalar_lea.vmem %s252, 1 [#allocation2]
    %265 = vst.msk [vmem:[%s264] ss:$2 sm:$0x7] %vm84, %v263
    %v266 = vld [vmem:[#allocation10 + $0x78] sm:$0xff]
    %v267 = vld [vmem:[#allocation10 + $0x80] sm:$0xff]
    %v268 = vld [vmem:[#allocation10 + $0x88] sm:$0xff]
    %v269 = vld [vmem:[#allocation10 + $0x90] sm:$0xff]
    %v270 = vld [vmem:[#allocation10 + $0x98] sm:$0xff]
    %v271 = vld [vmem:[#allocation10 + $0xa0] sm:$0xff]
    %v272 = vld [vmem:[#allocation10 + $0xa8] sm:$0xff]
    %v273 = vld [vmem:[#allocation10 + $0xb0] sm:$0xff]
    %v274 = vld [vmem:[#allocation10 + $0xb8] sm:$0xff]
    %v275 = vld [vmem:[#allocation10 + $0xc0] sm:$0xff]
    %v276 = vld [vmem:[#allocation10 + $0xc8] sm:$0xff]
    %v277 = vld [vmem:[#allocation10 + $0xd0] sm:$0xff]
    %v278 = vld [vmem:[#allocation10 + $0xd8] sm:$0xff]
    %v279 = vld [vmem:[#allocation10 + $0xe0] sm:$0xff]
    %v280 = vld [vmem:[#allocation10 + $0xe8] sm:$0xff]
    %v281 = vld [vmem:[#allocation10 + $0xf0] sm:$0xff]
    %v282 = vld [vmem:[#allocation10 + $0xf8] sm:$0xff]
    %v283 = vld [vmem:[#allocation10 + $0x100] sm:$0xff]
    %v284 = vld [vmem:[#allocation10 + $0x108] sm:$0xff]
    %v285 = vld [vmem:[#allocation10 + $0x110] sm:$0xff]
    %v286 = vld [vmem:[#allocation10 + $0x118] sm:$0xff]
    %v287 = vld [vmem:[#allocation10 + $0x120] sm:$0xff]
    %v288 = vld [vmem:[#allocation10 + $0x128] sm:$0xff]
    %v289 = vld [vmem:[#allocation10 + $0x130] sm:$0xff]
    %v290 = vld [vmem:[#allocation10 + $0x138] sm:$0xff]
    %v291 = vld [vmem:[#allocation10 + $0x140] sm:$0xff]
    %v292 = vld [vmem:[#allocation10 + $0x148] sm:$0xff]
    %v293 = vld [vmem:[#allocation10 + $0x150] sm:$0xff]
    %v294 = vld [vmem:[#allocation10 + $0x158] sm:$0xff]
    %v295 = vld [vmem:[#allocation10 + $0x160] sm:$0xff]
    %v296 = vld [vmem:[#allocation10 + $0x168] sm:$0xff]
    %v297 = vld [vmem:[#allocation10 + $0x170] sm:$0xff]
    %v298 = vld [vmem:[#allocation10 + $0x178] sm:$0xff]
    %v299 = vld [vmem:[#allocation10 + $0x180] sm:$0xff]
    %v300 = vld [vmem:[#allocation10 + $0x188] sm:$0xff]
    %v301 = vld [vmem:[#allocation10 + $0x190] sm:$0xff]
    %v302 = vld [vmem:[#allocation11] ss:$8 sm:$0x7]
    %s303 = scalar_lea.vmem [#allocation11], 1
    %v304 = vld [vmem:[%s303] ss:$8 sm:$0x7]
    %s305 = scalar_lea.vmem [#allocation11], 2
    %v306 = vld [vmem:[%s305] ss:$8 sm:$0x7]
    %v308 = vlaneseq
    %v309 = vshrl.u32 %v308, 7
    %v310 = vsub.s32 0, %v309
    %v311 = vrot.slane %v302, %v310
    %v312 = vlaneseq
    %v313 = vshrl.u32 %v312, 7
    %v314 = vsub.s32 1, %v313
    %v315 = vrot.slane %v302, %v314
    %v316 = vlaneseq
    %v317 = vshrl.u32 %v316, 7
    %v318 = vsub.s32 2, %v317
    %v319 = vrot.slane %v302, %v318
    %vm323 = vcmask 261120
    %v325 = vsel %vm323, 0.0, 0
    %327 = vmatprep.subr.mxu0 %v267
    %328 = vmatpush1.msra.mxu0 %v266
    %329 = vmatprep.subr.mxu0 %v270
    %330 = vmatpush1.msra.mxu0 %v269
    %331 = vmatprep.subr.mxu0 %v273
    %332 = vmatpush1.msra.mxu0 %v272
    %333 = vmatprep.subr.mxu0 %v276
    %334 = vmatpush1.msra.mxu0 %v275
    %335 = vmatprep.subr.mxu0 0.0
    %336 = vmatpush1.msra.mxu0 0.0
    %337 = vmatprep.subr.mxu0 0.0
    %338 = vmatpush1.msra.mxu0 0.0
    %339 = vmatprep.subr.mxu0 0.0
    %340 = vmatpush1.msra.mxu0 0.0
    %341 = vmatprep.subr.mxu0 0.0
    %342 = vmatpush1.msra.mxu0 0.0
    %343 = vmatprep.subr.mxu0 0.0
    %344 = vmatpush1.msra.mxu0 0.0
    %345 = vmatprep.subr.mxu0 0.0
    %346 = vmatpush1.msra.mxu0 0.0
    %347 = vmatprep.subr.mxu0 0.0
    %348 = vmatpush1.msra.mxu0 0.0
    %349 = vmatprep.subr.mxu0 0.0
    %350 = vmatpush1.msra.mxu0 0.0
    %351 = vmatprep.subr.mxu0 0.0
    %352 = vmatpush1.msra.mxu0 0.0
    %353 = vmatprep.subr.mxu0 0.0
    %354 = vmatpush1.msra.mxu0 0.0
    %355 = vmatprep.subr.mxu0 0.0
    %356 = vmatpush1.msra.mxu0 0.0
    %357 = vmatprep.subr.mxu0 0.0
    %358 = vmatpush1.msra.mxu0 0.0
    %359 = vmatprep.subr.mxu0 0.0
    %360 = vmatpush1.msra.mxu0 0.0
    %361 = vmatprep.subr.mxu0 0.0
    %362 = vmatpush1.msra.mxu0 0.0
    %363 = vmatprep.subr.mxu0 0.0
    %364 = vmatpush1.msra.mxu0 0.0
    %365 = vmatprep.subr.mxu0 0.0
    %366 = vmatpush1.msra.mxu0 0.0
    %367 = vmatprep.subr.mxu0 0.0
    %368 = vmatpush1.msra.mxu0 0.0
    %369 = vmatprep.subr.mxu0 0.0
    %370 = vmatpush1.msra.mxu0 0.0
    %371 = vmatprep.subr.mxu0 0.0
    %372 = vmatpush1.msra.mxu0 0.0
    %373 = vmatprep.subr.mxu0 0.0
    %374 = vmatpush1.msra.mxu0 0.0
    %375 = vmatprep.subr.mxu0 0.0
    %376 = vmatpush1.msra.mxu0 0.0
    %377 = vmatprep.subr.mxu0 0.0
    %378 = vmatpush1.msra.mxu0 0.0
    %379 = vmatprep.subr.mxu0 0.0
    %380 = vmatpush1.msra.mxu0 0.0
    %381 = vmatprep.subr.mxu0 0.0
    %382 = vmatpush1.msra.mxu0 0.0
    %383 = vmatprep.subr.mxu0 0.0
    %384 = vmatpush1.msra.mxu0 0.0
    %385 = vmatprep.subr.mxu0 0.0
    %386 = vmatpush1.msra.mxu0 0.0
    %387 = vmatprep.subr.mxu0 0.0
    %388 = vmatpush1.msra.mxu0 0.0
    %389 = vmatprep.subr.mxu0 0.0
    %390 = vmatpush1.msra.mxu0 0.0
    %391 = vmatprep.mubr.f32.mxu0 0.0
    %392 = vmatmul.mubr.f32.gmra.mrb[0].mxu0 %v325
    %v393 = vpop.f32.mrb[0].mxu0
    %v394 = vadd.f32 %v311, %v393
    %v395 = vpop.f32.mrb[0].mxu0
    %v396 = vadd.f32 %v315, %v395
    %397 = vdwg.mxu0
    %398 = vmatprep.subr.mxu0 0.0
    %399 = vmatpush1.msra.mxu0 %v268
    %400 = vmatprep.subr.mxu0 0.0
    %401 = vmatpush1.msra.mxu0 %v271
    %402 = vmatprep.subr.mxu0 0.0
    %403 = vmatpush1.msra.mxu0 %v274
    %404 = vmatprep.subr.mxu0 0.0
    %405 = vmatpush1.msra.mxu0 %v277
    %406 = vmatprep.subr.mxu0 0.0
    %407 = vmatpush1.msra.mxu0 0.0
    %408 = vmatprep.subr.mxu0 0.0
    %409 = vmatpush1.msra.mxu0 0.0
    %410 = vmatprep.subr.mxu0 0.0
    %411 = vmatpush1.msra.mxu0 0.0
    %412 = vmatprep.subr.mxu0 0.0
    %413 = vmatpush1.msra.mxu0 0.0
    %414 = vmatprep.subr.mxu0 0.0
    %415 = vmatpush1.msra.mxu0 0.0
    %416 = vmatprep.subr.mxu0 0.0
    %417 = vmatpush1.msra.mxu0 0.0
    %418 = vmatprep.subr.mxu0 0.0
    %419 = vmatpush1.msra.mxu0 0.0
    %420 = vmatprep.subr.mxu0 0.0
    %421 = vmatpush1.msra.mxu0 0.0
    %422 = vmatprep.subr.mxu0 0.0
    %423 = vmatpush1.msra.mxu0 0.0
    %424 = vmatprep.subr.mxu0 0.0
    %425 = vmatpush1.msra.mxu0 0.0
    %426 = vmatprep.subr.mxu0 0.0
    %427 = vmatpush1.msra.mxu0 0.0
    %428 = vmatprep.subr.mxu0 0.0
    %429 = vmatpush1.msra.mxu0 0.0
    %430 = vmatprep.subr.mxu0 0.0
    %431 = vmatpush1.msra.mxu0 0.0
    %432 = vmatprep.subr.mxu0 0.0
    %433 = vmatpush1.msra.mxu0 0.0
    %434 = vmatprep.subr.mxu0 0.0
    %435 = vmatpush1.msra.mxu0 0.0
    %436 = vmatprep.subr.mxu0 0.0
    %437 = vmatpush1.msra.mxu0 0.0
    %438 = vmatprep.subr.mxu0 0.0
    %439 = vmatpush1.msra.mxu0 0.0
    %440 = vmatprep.subr.mxu0 0.0
    %441 = vmatpush1.msra.mxu0 0.0
    %442 = vmatprep.subr.mxu0 0.0
    %443 = vmatpush1.msra.mxu0 0.0
    %444 = vmatprep.subr.mxu0 0.0
    %445 = vmatpush1.msra.mxu0 0.0
    %446 = vmatprep.subr.mxu0 0.0
    %447 = vmatpush1.msra.mxu0 0.0
    %448 = vmatprep.subr.mxu0 0.0
    %449 = vmatpush1.msra.mxu0 0.0
    %450 = vmatprep.subr.mxu0 0.0
    %451 = vmatpush1.msra.mxu0 0.0
    %452 = vmatprep.subr.mxu0 0.0
    %453 = vmatpush1.msra.mxu0 0.0
    %454 = vmatprep.subr.mxu0 0.0
    %455 = vmatpush1.msra.mxu0 0.0
    %456 = vmatprep.subr.mxu0 0.0
    %457 = vmatpush1.msra.mxu0 0.0
    %458 = vmatprep.subr.mxu0 0.0
    %459 = vmatpush1.msra.mxu0 0.0
    %460 = vmatprep.subr.mxu0 0.0
    %461 = vmatpush1.msra.mxu0 0.0
    %462 = vmatprep.mubr.f32.mxu0 0.0
    %463 = vmatmul.mubr.f32.gmra.mrb[0].mxu0 %v325
    %v464 = vpop.f32.mrb[0].mxu0
    %v465 = vadd.f32 %v319, %v464
    %v466 = vpop.f32.mrb[0].mxu0
    %467 = vdwg.mxu0
    %v468 = vld [vmem:[#allocation2] sm:$0x3f]
    %v469 = vadd.f32 %v468, %v394
    %v470 = vxor.u32 %v469, 2147483648
    %v471 = vmul.f32 %v470, 1.442695
    %v472 = vpow.pop %v471
    %v473 = vadd.f32 %v472, 1.0
    %v474 = vrcp.pop %v473
    %v475 = vmul.f32 1.0, %v474
    %v477 = vrot.slane %v468, 2
    %v479 = vadd.f32 %v477, %v396
    %v480 = vxor.u32 %v479, 2147483648
    %v481 = vmul.f32 %v480, 1.442695
    %v482 = vpow.pop %v481
    %v483 = vadd.f32 %v482, 1.0
    %v484 = vrcp.pop %v483
    %v485 = vmul.f32 1.0, %v484
    %v486 = vmul.f32 %v475, %v465
    %v487 = vrot.slane %v468, 4
    %v489 = vadd.f32 %v487, %v486
    %v490 = vtanh.pop %v489
    %v491 = vsub.f32 1.0, %v485
    %v492 = vmul.f32 %v491, %v490
    %v493 = vmul.f32 %v485, 0.0
    %v494 = vadd.f32 %v492, %v493
    %v496 = vsel %vm323, %v494, 0
    %498 = vmatprep.subr.mxu0 %v267
    %499 = vmatpush1.msra.mxu0 %v266
    %500 = vmatprep.subr.mxu0 %v270
    %501 = vmatpush1.msra.mxu0 %v269
    %502 = vmatprep.subr.mxu0 %v273
    %503 = vmatpush1.msra.mxu0 %v272
    %504 = vmatprep.subr.mxu0 %v276
    %505 = vmatpush1.msra.mxu0 %v275
    %506 = vmatprep.subr.mxu0 0.0
    %507 = vmatpush1.msra.mxu0 0.0
    %508 = vmatprep.subr.mxu0 0.0
    %509 = vmatpush1.msra.mxu0 0.0
    %510 = vmatprep.subr.mxu0 0.0
    %511 = vmatpush1.msra.mxu0 0.0
    %512 = vmatprep.subr.mxu0 0.0
    %513 = vmatpush1.msra.mxu0 0.0
    %514 = vmatprep.subr.mxu0 0.0
    %515 = vmatpush1.msra.mxu0 0.0
    %516 = vmatprep.subr.mxu0 0.0
    %517 = vmatpush1.msra.mxu0 0.0
    %518 = vmatprep.subr.mxu0 0.0
    %519 = vmatpush1.msra.mxu0 0.0
    %520 = vmatprep.subr.mxu0 0.0
    %521 = vmatpush1.msra.mxu0 0.0
    %522 = vmatprep.subr.mxu0 0.0
    %523 = vmatpush1.msra.mxu0 0.0
    %524 = vmatprep.subr.mxu0 0.0
    %525 = vmatpush1.msra.mxu0 0.0
    %526 = vmatprep.subr.mxu0 0.0
    %527 = vmatpush1.msra.mxu0 0.0
    %528 = vmatprep.subr.mxu0 0.0
    %529 = vmatpush1.msra.mxu0 0.0
    %530 = vmatprep.subr.mxu0 0.0
    %531 = vmatpush1.msra.mxu0 0.0
    %532 = vmatprep.subr.mxu0 0.0
    %533 = vmatpush1.msra.mxu0 0.0
    %534 = vmatprep.subr.mxu0 0.0
    %535 = vmatpush1.msra.mxu0 0.0
    %536 = vmatprep.subr.mxu0 0.0
    %537 = vmatpush1.msra.mxu0 0.0
    %538 = vmatprep.subr.mxu0 0.0
    %539 = vmatpush1.msra.mxu0 0.0
    %540 = vmatprep.subr.mxu0 0.0
    %541 = vmatpush1.msra.mxu0 0.0
    %542 = vmatprep.subr.mxu0 0.0
    %543 = vmatpush1.msra.mxu0 0.0
    %544 = vmatprep.subr.mxu0 0.0
    %545 = vmatpush1.msra.mxu0 0.0
    %546 = vmatprep.subr.mxu0 0.0
    %547 = vmatpush1.msra.mxu0 0.0
    %548 = vmatprep.subr.mxu0 0.0
    %549 = vmatpush1.msra.mxu0 0.0
    %550 = vmatprep.subr.mxu0 0.0
    %551 = vmatpush1.msra.mxu0 0.0
    %552 = vmatprep.subr.mxu0 0.0
    %553 = vmatpush1.msra.mxu0 0.0
    %554 = vmatprep.subr.mxu0 0.0
    %555 = vmatpush1.msra.mxu0 0.0
    %556 = vmatprep.subr.mxu0 0.0
    %557 = vmatpush1.msra.mxu0 0.0
    %558 = vmatprep.subr.mxu0 0.0
    %559 = vmatpush1.msra.mxu0 0.0
    %560 = vmatprep.subr.mxu0 0.0
    %561 = vmatpush1.msra.mxu0 0.0
    %562 = vmatprep.mubr.f32.mxu0 0.0
    %563 = vmatmul.mubr.f32.gmra.mrb[0].mxu0 %v496
    %v564 = vpop.f32.mrb[0].mxu0
    %v565 = vadd.f32 %v311, %v564
    %v566 = vpop.f32.mrb[0].mxu0
    %v567 = vadd.f32 %v315, %v566
    %568 = vdwg.mxu0
    %569 = vmatprep.subr.mxu0 0.0
    %570 = vmatpush1.msra.mxu0 %v268
    %571 = vmatprep.subr.mxu0 0.0
    %572 = vmatpush1.msra.mxu0 %v271
    %573 = vmatprep.subr.mxu0 0.0
    %574 = vmatpush1.msra.mxu0 %v274
    %575 = vmatprep.subr.mxu0 0.0
    %576 = vmatpush1.msra.mxu0 %v277
    %577 = vmatprep.subr.mxu0 0.0
    %578 = vmatpush1.msra.mxu0 0.0
    %579 = vmatprep.subr.mxu0 0.0
    %580 = vmatpush1.msra.mxu0 0.0
    %581 = vmatprep.subr.mxu0 0.0
    %582 = vmatpush1.msra.mxu0 0.0
    %583 = vmatprep.subr.mxu0 0.0
    %584 = vmatpush1.msra.mxu0 0.0
    %585 = vmatprep.subr.mxu0 0.0
    %586 = vmatpush1.msra.mxu0 0.0
    %587 = vmatprep.subr.mxu0 0.0
    %588 = vmatpush1.msra.mxu0 0.0
    %589 = vmatprep.subr.mxu0 0.0
    %590 = vmatpush1.msra.mxu0 0.0
    %591 = vmatprep.subr.mxu0 0.0
    %592 = vmatpush1.msra.mxu0 0.0
    %593 = vmatprep.subr.mxu0 0.0
    %594 = vmatpush1.msra.mxu0 0.0
    %595 = vmatprep.subr.mxu0 0.0
    %596 = vmatpush1.msra.mxu0 0.0
    %597 = vmatprep.subr.mxu0 0.0
    %598 = vmatpush1.msra.mxu0 0.0
    %599 = vmatprep.subr.mxu0 0.0
    %600 = vmatpush1.msra.mxu0 0.0
    %601 = vmatprep.subr.mxu0 0.0
    %602 = vmatpush1.msra.mxu0 0.0
    %603 = vmatprep.subr.mxu0 0.0
    %604 = vmatpush1.msra.mxu0 0.0
    %605 = vmatprep.subr.mxu0 0.0
    %606 = vmatpush1.msra.mxu0 0.0
    %607 = vmatprep.subr.mxu0 0.0
    %608 = vmatpush1.msra.mxu0 0.0
    %609 = vmatprep.subr.mxu0 0.0
    %610 = vmatpush1.msra.mxu0 0.0
    %611 = vmatprep.subr.mxu0 0.0
    %612 = vmatpush1.msra.mxu0 0.0
    %613 = vmatprep.subr.mxu0 0.0
    %614 = vmatpush1.msra.mxu0 0.0
    %615 = vmatprep.subr.mxu0 0.0
    %616 = vmatpush1.msra.mxu0 0.0
    %617 = vmatprep.subr.mxu0 0.0
    %618 = vmatpush1.msra.mxu0 0.0
    %619 = vmatprep.subr.mxu0 0.0
    %620 = vmatpush1.msra.mxu0 0.0
    %621 = vmatprep.subr.mxu0 0.0
    %622 = vmatpush1.msra.mxu0 0.0
    %623 = vmatprep.subr.mxu0 0.0
    %624 = vmatpush1.msra.mxu0 0.0
    %625 = vmatprep.subr.mxu0 0.0
    %626 = vmatpush1.msra.mxu0 0.0
    %627 = vmatprep.subr.mxu0 0.0
    %628 = vmatpush1.msra.mxu0 0.0
    %629 = vmatprep.subr.mxu0 0.0
    %630 = vmatpush1.msra.mxu0 0.0
    %631 = vmatprep.subr.mxu0 0.0
    %632 = vmatpush1.msra.mxu0 0.0
    %633 = vmatprep.mubr.f32.mxu0 0.0
    %634 = vmatmul.mubr.f32.gmra.mrb[0].mxu0 %v496
    %v635 = vpop.f32.mrb[0].mxu0
    %v636 = vadd.f32 %v319, %v635
    %v637 = vpop.f32.mrb[0].mxu0
    %638 = vdwg.mxu0
    %v640 = vlaneseq
    %v641 = vshrl.u32 %v640, 7
    %v642 = vsub.s32 0, %v641
    %v643 = vrot.slane %v304, %v642
    %v644 = vlaneseq
    %v645 = vshrl.u32 %v644, 7
    %v646 = vsub.s32 1, %v645
    %v647 = vrot.slane %v304, %v646
    %v648 = vlaneseq
    %v649 = vshrl.u32 %v648, 7
    %v650 = vsub.s32 2, %v649
    %v651 = vrot.slane %v304, %v650
    %655 = vmatprep.subr.mxu0 %v279
    %656 = vmatpush1.msra.mxu0 %v278
    %657 = vmatprep.subr.mxu0 %v282
    %658 = vmatpush1.msra.mxu0 %v281
    %659 = vmatprep.subr.mxu0 %v285
    %660 = vmatpush1.msra.mxu0 %v284
    %661 = vmatprep.subr.mxu0 %v288
    %662 = vmatpush1.msra.mxu0 %v287
    %663 = vmatprep.subr.mxu0 0.0
    %664 = vmatpush1.msra.mxu0 0.0
    %665 = vmatprep.subr.mxu0 0.0
    %666 = vmatpush1.msra.mxu0 0.0
    %667 = vmatprep.subr.mxu0 0.0
    %668 = vmatpush1.msra.mxu0 0.0
    %669 = vmatprep.subr.mxu0 0.0
    %670 = vmatpush1.msra.mxu0 0.0
    %671 = vmatprep.subr.mxu0 0.0
    %672 = vmatpush1.msra.mxu0 0.0
    %673 = vmatprep.subr.mxu0 0.0
    %674 = vmatpush1.msra.mxu0 0.0
    %675 = vmatprep.subr.mxu0 0.0
    %676 = vmatpush1.msra.mxu0 0.0
    %677 = vmatprep.subr.mxu0 0.0
    %678 = vmatpush1.msra.mxu0 0.0
    %679 = vmatprep.subr.mxu0 0.0
    %680 = vmatpush1.msra.mxu0 0.0
    %681 = vmatprep.subr.mxu0 0.0
    %682 = vmatpush1.msra.mxu0 0.0
    %683 = vmatprep.subr.mxu0 0.0
    %684 = vmatpush1.msra.mxu0 0.0
    %685 = vmatprep.subr.mxu0 0.0
    %686 = vmatpush1.msra.mxu0 0.0
    %687 = vmatprep.subr.mxu0 0.0
    %688 = vmatpush1.msra.mxu0 0.0
    %689 = vmatprep.subr.mxu0 0.0
    %690 = vmatpush1.msra.mxu0 0.0
    %691 = vmatprep.subr.mxu0 0.0
    %692 = vmatpush1.msra.mxu0 0.0
    %693 = vmatprep.subr.mxu0 0.0
    %694 = vmatpush1.msra.mxu0 0.0
    %695 = vmatprep.subr.mxu0 0.0
    %696 = vmatpush1.msra.mxu0 0.0
    %697 = vmatprep.subr.mxu0 0.0
    %698 = vmatpush1.msra.mxu0 0.0
    %699 = vmatprep.subr.mxu0 0.0
    %700 = vmatpush1.msra.mxu0 0.0
    %701 = vmatprep.subr.mxu0 0.0
    %702 = vmatpush1.msra.mxu0 0.0
    %703 = vmatprep.subr.mxu0 0.0
    %704 = vmatpush1.msra.mxu0 0.0
    %705 = vmatprep.subr.mxu0 0.0
    %706 = vmatpush1.msra.mxu0 0.0
    %707 = vmatprep.subr.mxu0 0.0
    %708 = vmatpush1.msra.mxu0 0.0
    %709 = vmatprep.subr.mxu0 0.0
    %710 = vmatpush1.msra.mxu0 0.0
    %711 = vmatprep.subr.mxu0 0.0
    %712 = vmatpush1.msra.mxu0 0.0
    %713 = vmatprep.subr.mxu0 0.0
    %714 = vmatpush1.msra.mxu0 0.0
    %715 = vmatprep.subr.mxu0 0.0
    %716 = vmatpush1.msra.mxu0 0.0
    %717 = vmatprep.subr.mxu0 0.0
    %718 = vmatpush1.msra.mxu0 0.0
    %719 = vmatprep.mubr.f32.mxu0 0.0
    %720 = vmatmul.mubr.f32.gmra.mrb[0].mxu0 %v496
    %v721 = vpop.f32.mrb[0].mxu0
    %v722 = vadd.f32 %v643, %v721
    %v723 = vpop.f32.mrb[0].mxu0
    %v724 = vadd.f32 %v647, %v723
    %725 = vdwg.mxu0
    %726 = vmatprep.subr.mxu0 0.0
    %727 = vmatpush1.msra.mxu0 %v280
    %728 = vmatprep.subr.mxu0 0.0
    %729 = vmatpush1.msra.mxu0 %v283
    %730 = vmatprep.subr.mxu0 0.0
    %731 = vmatpush1.msra.mxu0 %v286
    %732 = vmatprep.subr.mxu0 0.0
    %733 = vmatpush1.msra.mxu0 %v289
    %734 = vmatprep.subr.mxu0 0.0
    %735 = vmatpush1.msra.mxu0 0.0
    %736 = vmatprep.subr.mxu0 0.0
    %737 = vmatpush1.msra.mxu0 0.0
    %738 = vmatprep.subr.mxu0 0.0
    %739 = vmatpush1.msra.mxu0 0.0
    %740 = vmatprep.subr.mxu0 0.0
    %741 = vmatpush1.msra.mxu0 0.0
    %742 = vmatprep.subr.mxu0 0.0
    %743 = vmatpush1.msra.mxu0 0.0
    %744 = vmatprep.subr.mxu0 0.0
    %745 = vmatpush1.msra.mxu0 0.0
    %746 = vmatprep.subr.mxu0 0.0
    %747 = vmatpush1.msra.mxu0 0.0
    %748 = vmatprep.subr.mxu0 0.0
    %749 = vmatpush1.msra.mxu0 0.0
    %750 = vmatprep.subr.mxu0 0.0
    %751 = vmatpush1.msra.mxu0 0.0
    %752 = vmatprep.subr.mxu0 0.0
    %753 = vmatpush1.msra.mxu0 0.0
    %754 = vmatprep.subr.mxu0 0.0
    %755 = vmatpush1.msra.mxu0 0.0
    %756 = vmatprep.subr.mxu0 0.0
    %757 = vmatpush1.msra.mxu0 0.0
    %758 = vmatprep.subr.mxu0 0.0
    %759 = vmatpush1.msra.mxu0 0.0
    %760 = vmatprep.subr.mxu0 0.0
    %761 = vmatpush1.msra.mxu0 0.0
    %762 = vmatprep.subr.mxu0 0.0
    %763 = vmatpush1.msra.mxu0 0.0
    %764 = vmatprep.subr.mxu0 0.0
    %765 = vmatpush1.msra.mxu0 0.0
    %766 = vmatprep.subr.mxu0 0.0
    %767 = vmatpush1.msra.mxu0 0.0
    %768 = vmatprep.subr.mxu0 0.0
    %769 = vmatpush1.msra.mxu0 0.0
    %770 = vmatprep.subr.mxu0 0.0
    %771 = vmatpush1.msra.mxu0 0.0
    %772 = vmatprep.subr.mxu0 0.0
    %773 = vmatpush1.msra.mxu0 0.0
    %774 = vmatprep.subr.mxu0 0.0
    %775 = vmatpush1.msra.mxu0 0.0
    %776 = vmatprep.subr.mxu0 0.0
    %777 = vmatpush1.msra.mxu0 0.0
    %778 = vmatprep.subr.mxu0 0.0
    %779 = vmatpush1.msra.mxu0 0.0
    %780 = vmatprep.subr.mxu0 0.0
    %781 = vmatpush1.msra.mxu0 0.0
    %782 = vmatprep.subr.mxu0 0.0
    %783 = vmatpush1.msra.mxu0 0.0
    %784 = vmatprep.subr.mxu0 0.0
    %785 = vmatpush1.msra.mxu0 0.0
    %786 = vmatprep.subr.mxu0 0.0
    %787 = vmatpush1.msra.mxu0 0.0
    %788 = vmatprep.subr.mxu0 0.0
    %789 = vmatpush1.msra.mxu0 0.0
    %790 = vmatprep.mubr.f32.mxu0 0.0
    %791 = vmatmul.mubr.f32.gmra.mrb[0].mxu0 %v496
    %v792 = vpop.f32.mrb[0].mxu0
    %v793 = vadd.f32 %v651, %v792
    %v794 = vpop.f32.mrb[0].mxu0
    %795 = vdwg.mxu0
    %v797 = vlaneseq
    %v798 = vshrl.u32 %v797, 7
    %v799 = vsub.s32 0, %v798
    %v800 = vrot.slane %v306, %v799
    %v801 = vlaneseq
    %v802 = vshrl.u32 %v801, 7
    %v803 = vsub.s32 1, %v802
    %v804 = vrot.slane %v306, %v803
    %v805 = vlaneseq
    %v806 = vshrl.u32 %v805, 7
    %v807 = vsub.s32 2, %v806
    %v808 = vrot.slane %v306, %v807
    %812 = vmatprep.subr.mxu0 %v291
    %813 = vmatpush1.msra.mxu0 %v290
    %814 = vmatprep.subr.mxu0 %v294
    %815 = vmatpush1.msra.mxu0 %v293
    %816 = vmatprep.subr.mxu0 %v297
    %817 = vmatpush1.msra.mxu0 %v296
    %818 = vmatprep.subr.mxu0 %v300
    %819 = vmatpush1.msra.mxu0 %v299
    %820 = vmatprep.subr.mxu0 0.0
    %821 = vmatpush1.msra.mxu0 0.0
    %822 = vmatprep.subr.mxu0 0.0
    %823 = vmatpush1.msra.mxu0 0.0
    %824 = vmatprep.subr.mxu0 0.0
    %825 = vmatpush1.msra.mxu0 0.0
    %826 = vmatprep.subr.mxu0 0.0
    %827 = vmatpush1.msra.mxu0 0.0
    %828 = vmatprep.subr.mxu0 0.0
    %829 = vmatpush1.msra.mxu0 0.0
    %830 = vmatprep.subr.mxu0 0.0
    %831 = vmatpush1.msra.mxu0 0.0
    %832 = vmatprep.subr.mxu0 0.0
    %833 = vmatpush1.msra.mxu0 0.0
    %834 = vmatprep.subr.mxu0 0.0
    %835 = vmatpush1.msra.mxu0 0.0
    %836 = vmatprep.subr.mxu0 0.0
    %837 = vmatpush1.msra.mxu0 0.0
    %838 = vmatprep.subr.mxu0 0.0
    %839 = vmatpush1.msra.mxu0 0.0
    %840 = vmatprep.subr.mxu0 0.0
    %841 = vmatpush1.msra.mxu0 0.0
    %842 = vmatprep.subr.mxu0 0.0
    %843 = vmatpush1.msra.mxu0 0.0
    %844 = vmatprep.subr.mxu0 0.0
    %845 = vmatpush1.msra.mxu0 0.0
    %846 = vmatprep.subr.mxu0 0.0
    %847 = vmatpush1.msra.mxu0 0.0
    %848 = vmatprep.subr.mxu0 0.0
    %849 = vmatpush1.msra.mxu0 0.0
    %850 = vmatprep.subr.mxu0 0.0
    %851 = vmatpush1.msra.mxu0 0.0
    %852 = vmatprep.subr.mxu0 0.0
    %853 = vmatpush1.msra.mxu0 0.0
    %854 = vmatprep.subr.mxu0 0.0
    %855 = vmatpush1.msra.mxu0 0.0
    %856 = vmatprep.subr.mxu0 0.0
    %857 = vmatpush1.msra.mxu0 0.0
    %858 = vmatprep.subr.mxu0 0.0
    %859 = vmatpush1.msra.mxu0 0.0
    %860 = vmatprep.subr.mxu0 0.0
    %861 = vmatpush1.msra.mxu0 0.0
    %862 = vmatprep.subr.mxu0 0.0
    %863 = vmatpush1.msra.mxu0 0.0
    %864 = vmatprep.subr.mxu0 0.0
    %865 = vmatpush1.msra.mxu0 0.0
    %866 = vmatprep.subr.mxu0 0.0
    %867 = vmatpush1.msra.mxu0 0.0
    %868 = vmatprep.subr.mxu0 0.0
    %869 = vmatpush1.msra.mxu0 0.0
    %870 = vmatprep.subr.mxu0 0.0
    %871 = vmatpush1.msra.mxu0 0.0
    %872 = vmatprep.subr.mxu0 0.0
    %873 = vmatpush1.msra.mxu0 0.0
    %874 = vmatprep.subr.mxu0 0.0
    %875 = vmatpush1.msra.mxu0 0.0
    %876 = vmatprep.mubr.f32.mxu0 0.0
    %877 = vmatmul.mubr.f32.gmra.mrb[0].mxu0 %v325
    %v878 = vpop.f32.mrb[0].mxu0
    %v879 = vadd.f32 %v800, %v878
    %v880 = vpop.f32.mrb[0].mxu0
    %v881 = vadd.f32 %v804, %v880
    %882 = vdwg.mxu0
    %883 = vmatprep.subr.mxu0 0.0
    %884 = vmatpush1.msra.mxu0 %v292
    %885 = vmatprep.subr.mxu0 0.0
    %886 = vmatpush1.msra.mxu0 %v295
    %887 = vmatprep.subr.mxu0 0.0
    %888 = vmatpush1.msra.mxu0 %v298
    %889 = vmatprep.subr.mxu0 0.0
    %890 = vmatpush1.msra.mxu0 %v301
    %891 = vmatprep.subr.mxu0 0.0
    %892 = vmatpush1.msra.mxu0 0.0
    %893 = vmatprep.subr.mxu0 0.0
    %894 = vmatpush1.msra.mxu0 0.0
    %895 = vmatprep.subr.mxu0 0.0
    %896 = vmatpush1.msra.mxu0 0.0
    %897 = vmatprep.subr.mxu0 0.0
    %898 = vmatpush1.msra.mxu0 0.0
    %899 = vmatprep.subr.mxu0 0.0
    %900 = vmatpush1.msra.mxu0 0.0
    %901 = vmatprep.subr.mxu0 0.0
    %902 = vmatpush1.msra.mxu0 0.0
    %903 = vmatprep.subr.mxu0 0.0
    %904 = vmatpush1.msra.mxu0 0.0
    %905 = vmatprep.subr.mxu0 0.0
    %906 = vmatpush1.msra.mxu0 0.0
    %907 = vmatprep.subr.mxu0 0.0
    %908 = vmatpush1.msra.mxu0 0.0
    %909 = vmatprep.subr.mxu0 0.0
    %910 = vmatpush1.msra.mxu0 0.0
    %911 = vmatprep.subr.mxu0 0.0
    %912 = vmatpush1.msra.mxu0 0.0
    %913 = vmatprep.subr.mxu0 0.0
    %914 = vmatpush1.msra.mxu0 0.0
    %915 = vmatprep.subr.mxu0 0.0
    %916 = vmatpush1.msra.mxu0 0.0
    %917 = vmatprep.subr.mxu0 0.0
    %918 = vmatpush1.msra.mxu0 0.0
    %919 = vmatprep.subr.mxu0 0.0
    %920 = vmatpush1.msra.mxu0 0.0
    %921 = vmatprep.subr.mxu0 0.0
    %922 = vmatpush1.msra.mxu0 0.0
    %923 = vmatprep.subr.mxu0 0.0
    %924 = vmatpush1.msra.mxu0 0.0
    %925 = vmatprep.subr.mxu0 0.0
    %926 = vmatpush1.msra.mxu0 0.0
    %927 = vmatprep.subr.mxu0 0.0
    %928 = vmatpush1.msra.mxu0 0.0
    %929 = vmatprep.subr.mxu0 0.0
    %930 = vmatpush1.msra.mxu0 0.0
    %931 = vmatprep.subr.mxu0 0.0
    %932 = vmatpush1.msra.mxu0 0.0
    %933 = vmatprep.subr.mxu0 0.0
    %934 = vmatpush1.msra.mxu0 0.0
    %935 = vmatprep.subr.mxu0 0.0
    %936 = vmatpush1.msra.mxu0 0.0
    %937 = vmatprep.subr.mxu0 0.0
    %938 = vmatpush1.msra.mxu0 0.0
    %939 = vmatprep.subr.mxu0 0.0
    %940 = vmatpush1.msra.mxu0 0.0
    %941 = vmatprep.subr.mxu0 0.0
    %942 = vmatpush1.msra.mxu0 0.0
    %943 = vmatprep.subr.mxu0 0.0
    %944 = vmatpush1.msra.mxu0 0.0
    %945 = vmatprep.subr.mxu0 0.0
    %946 = vmatpush1.msra.mxu0 0.0
    %947 = vmatprep.mubr.f32.mxu0 0.0
    %948 = vmatmul.mubr.f32.gmra.mrb[0].mxu0 %v325
    %v949 = vpop.f32.mrb[0].mxu0
    %v950 = vadd.f32 %v808, %v949
    %v951 = vpop.f32.mrb[0].mxu0
    %952 = vdwg.mxu0
    %v953 = vld [vmem:[%s108] sm:$0x3f]
    %v954 = vadd.f32 %v953, %v565
    %v955 = vxor.u32 %v954, 2147483648
    %v956 = vmul.f32 %v955, 1.442695
    %v957 = vpow.pop %v956
    %v958 = vadd.f32 %v957, 1.0
    %v959 = vrcp.pop %v958
    %v960 = vmul.f32 1.0, %v959
    %v962 = vrot.slane %v953, 2
    %v964 = vadd.f32 %v962, %v567
    %v965 = vxor.u32 %v964, 2147483648
    %v966 = vmul.f32 %v965, 1.442695
    %v967 = vpow.pop %v966
    %v968 = vadd.f32 %v967, 1.0
    %v969 = vrcp.pop %v968
    %v970 = vmul.f32 1.0, %v969
    %v971 = vmul.f32 %v960, %v636
    %v972 = vrot.slane %v953, 4
    %v974 = vadd.f32 %v972, %v971
    %v975 = vtanh.pop %v974
    %v976 = vsub.f32 1.0, %v970
    %v977 = vmul.f32 %v976, %v975
    %v978 = vmul.f32 %v970, %v494
    %v979 = vadd.f32 %v977, %v978
    %v980 = vadd.f32 %v722, %v879
    %v981 = vxor.u32 %v980, 2147483648
    %v982 = vmul.f32 %v981, 1.442695
    %v983 = vpow.pop %v982
    %v984 = vadd.f32 %v983, 1.0
    %v985 = vrcp.pop %v984
    %v986 = vmul.f32 1.0, %v985
    %v987 = vadd.f32 %v724, %v881
    %v988 = vxor.u32 %v987, 2147483648
    %v989 = vmul.f32 %v988, 1.442695
    %v990 = vpow.pop %v989
    %v991 = vadd.f32 %v990, 1.0
    %v992 = vrcp.pop %v991
    %v993 = vmul.f32 1.0, %v992
    %v994 = vmul.f32 %v986, %v950
    %v995 = vadd.f32 %v793, %v994
    %v996 = vtanh.pop %v995
    %v997 = vsub.f32 1.0, %v993
    %v998 = vmul.f32 %v997, %v996
    %v999 = vmul.f32 %v993, 0.0
    %v1000 = vadd.f32 %v998, %v999
    %v1002 = vsel %vm323, %v979, 0
    %1004 = vmatprep.subr.mxu0 %v267
    %1005 = vmatpush1.msra.mxu0 %v266
    %1006 = vmatprep.subr.mxu0 %v270
    %1007 = vmatpush1.msra.mxu0 %v269
    %1008 = vmatprep.subr.mxu0 %v273
    %1009 = vmatpush1.msra.mxu0 %v272
    %1010 = vmatprep.subr.mxu0 %v276
    %1011 = vmatpush1.msra.mxu0 %v275
    %1012 = vmatprep.subr.mxu0 0.0
    %1013 = vmatpush1.msra.mxu0 0.0
    %1014 = vmatprep.subr.mxu0 0.0
    %1015 = vmatpush1.msra.mxu0 0.0
    %1016 = vmatprep.subr.mxu0 0.0
    %1017 = vmatpush1.msra.mxu0 0.0
    %1018 = vmatprep.subr.mxu0 0.0
    %1019 = vmatpush1.msra.mxu0 0.0
    %1020 = vmatprep.subr.mxu0 0.0
    %1021 = vmatpush1.msra.mxu0 0.0
    %1022 = vmatprep.subr.mxu0 0.0
    %1023 = vmatpush1.msra.mxu0 0.0
    %1024 = vmatprep.subr.mxu0 0.0
    %1025 = vmatpush1.msra.mxu0 0.0
    %1026 = vmatprep.subr.mxu0 0.0
    %1027 = vmatpush1.msra.mxu0 0.0
    %1028 = vmatprep.subr.mxu0 0.0
    %1029 = vmatpush1.msra.mxu0 0.0
    %1030 = vmatprep.subr.mxu0 0.0
    %1031 = vmatpush1.msra.mxu0 0.0
    %1032 = vmatprep.subr.mxu0 0.0
    %1033 = vmatpush1.msra.mxu0 0.0
    %1034 = vmatprep.subr.mxu0 0.0
    %1035 = vmatpush1.msra.mxu0 0.0
    %1036 = vmatprep.subr.mxu0 0.0
    %1037 = vmatpush1.msra.mxu0 0.0
    %1038 = vmatprep.subr.mxu0 0.0
    %1039 = vmatpush1.msra.mxu0 0.0
    %1040 = vmatprep.subr.mxu0 0.0
    %1041 = vmatpush1.msra.mxu0 0.0
    %1042 = vmatprep.subr.mxu0 0.0
    %1043 = vmatpush1.msra.mxu0 0.0
    %1044 = vmatprep.subr.mxu0 0.0
    %1045 = vmatpush1.msra.mxu0 0.0
    %1046 = vmatprep.subr.mxu0 0.0
    %1047 = vmatpush1.msra.mxu0 0.0
    %1048 = vmatprep.subr.mxu0 0.0
    %1049 = vmatpush1.msra.mxu0 0.0
    %1050 = vmatprep.subr.mxu0 0.0
    %1051 = vmatpush1.msra.mxu0 0.0
    %1052 = vmatprep.subr.mxu0 0.0
    %1053 = vmatpush1.msra.mxu0 0.0
    %1054 = vmatprep.subr.mxu0 0.0
    %1055 = vmatpush1.msra.mxu0 0.0
    %1056 = vmatprep.subr.mxu0 0.0
    %1057 = vmatpush1.msra.mxu0 0.0
    %1058 = vmatprep.subr.mxu0 0.0
    %1059 = vmatpush1.msra.mxu0 0.0
    %1060 = vmatprep.subr.mxu0 0.0
    %1061 = vmatpush1.msra.mxu0 0.0
    %1062 = vmatprep.subr.mxu0 0.0
    %1063 = vmatpush1.msra.mxu0 0.0
    %1064 = vmatprep.subr.mxu0 0.0
    %1065 = vmatpush1.msra.mxu0 0.0
    %1066 = vmatprep.subr.mxu0 0.0
    %1067 = vmatpush1.msra.mxu0 0.0
    %1068 = vmatprep.mubr.f32.mxu0 0.0
    %1069 = vmatmul.mubr.f32.gmra.mrb[0].mxu0 %v1002
    %v1070 = vpop.f32.mrb[0].mxu0
    %v1071 = vadd.f32 %v311, %v1070
    %v1072 = vpop.f32.mrb[0].mxu0
    %v1073 = vadd.f32 %v315, %v1072
    %1074 = vdwg.mxu0
    %1075 = vmatprep.subr.mxu0 0.0
    %1076 = vmatpush1.msra.mxu0 %v268
    %1077 = vmatprep.subr.mxu0 0.0
    %1078 = vmatpush1.msra.mxu0 %v271
    %1079 = vmatprep.subr.mxu0 0.0
    %1080 = vmatpush1.msra.mxu0 %v274
    %1081 = vmatprep.subr.mxu0 0.0
    %1082 = vmatpush1.msra.mxu0 %v277
    %1083 = vmatprep.subr.mxu0 0.0
    %1084 = vmatpush1.msra.mxu0 0.0
    %1085 = vmatprep.subr.mxu0 0.0
    %1086 = vmatpush1.msra.mxu0 0.0
    %1087 = vmatprep.subr.mxu0 0.0
    %1088 = vmatpush1.msra.mxu0 0.0
    %1089 = vmatprep.subr.mxu0 0.0
    %1090 = vmatpush1.msra.mxu0 0.0
    %1091 = vmatprep.subr.mxu0 0.0
    %1092 = vmatpush1.msra.mxu0 0.0
    %1093 = vmatprep.subr.mxu0 0.0
    %1094 = vmatpush1.msra.mxu0 0.0
    %1095 = vmatprep.subr.mxu0 0.0
    %1096 = vmatpush1.msra.mxu0 0.0
    %1097 = vmatprep.subr.mxu0 0.0
    %1098 = vmatpush1.msra.mxu0 0.0
    %1099 = vmatprep.subr.mxu0 0.0
    %1100 = vmatpush1.msra.mxu0 0.0
    %1101 = vmatprep.subr.mxu0 0.0
    %1102 = vmatpush1.msra.mxu0 0.0
    %1103 = vmatprep.subr.mxu0 0.0
    %1104 = vmatpush1.msra.mxu0 0.0
    %1105 = vmatprep.subr.mxu0 0.0
    %1106 = vmatpush1.msra.mxu0 0.0
    %1107 = vmatprep.subr.mxu0 0.0
    %1108 = vmatpush1.msra.mxu0 0.0
    %1109 = vmatprep.subr.mxu0 0.0
    %1110 = vmatpush1.msra.mxu0 0.0
    %1111 = vmatprep.subr.mxu0 0.0
    %1112 = vmatpush1.msra.mxu0 0.0
    %1113 = vmatprep.subr.mxu0 0.0
    %1114 = vmatpush1.msra.mxu0 0.0
    %1115 = vmatprep.subr.mxu0 0.0
    %1116 = vmatpush1.msra.mxu0 0.0
    %1117 = vmatprep.subr.mxu0 0.0
    %1118 = vmatpush1.msra.mxu0 0.0
    %1119 = vmatprep.subr.mxu0 0.0
    %1120 = vmatpush1.msra.mxu0 0.0
    %1121 = vmatprep.subr.mxu0 0.0
    %1122 = vmatpush1.msra.mxu0 0.0
    %1123 = vmatprep.subr.mxu0 0.0
    %1124 = vmatpush1.msra.mxu0 0.0
    %1125 = vmatprep.subr.mxu0 0.0
    %1126 = vmatpush1.msra.mxu0 0.0
    %1127 = vmatprep.subr.mxu0 0.0
    %1128 = vmatpush1.msra.mxu0 0.0
    %1129 = vmatprep.subr.mxu0 0.0
    %1130 = vmatpush1.msra.mxu0 0.0
    %1131 = vmatprep.subr.mxu0 0.0
    %1132 = vmatpush1.msra.mxu0 0.0
    %1133 = vmatprep.subr.mxu0 0.0
    %1134 = vmatpush1.msra.mxu0 0.0
    %1135 = vmatprep.subr.mxu0 0.0
    %1136 = vmatpush1.msra.mxu0 0.0
    %1137 = vmatprep.subr.mxu0 0.0
    %1138 = vmatpush1.msra.mxu0 0.0
    %1139 = vmatprep.mubr.f32.mxu0 0.0
    %1140 = vmatmul.mubr.f32.gmra.mrb[0].mxu0 %v1002
    %v1141 = vpop.f32.mrb[0].mxu0
    %v1142 = vadd.f32 %v319, %v1141
    %v1143 = vpop.f32.mrb[0].mxu0
    %1144 = vdwg.mxu0
    %1145 = vmatprep.subr.mxu0 %v279
    %1146 = vmatpush1.msra.mxu0 %v278
    %1147 = vmatprep.subr.mxu0 %v282
    %1148 = vmatpush1.msra.mxu0 %v281
    %1149 = vmatprep.subr.mxu0 %v285
    %1150 = vmatpush1.msra.mxu0 %v284
    %1151 = vmatprep.subr.mxu0 %v288
    %1152 = vmatpush1.msra.mxu0 %v287
    %1153 = vmatprep.subr.mxu0 0.0
    %1154 = vmatpush1.msra.mxu0 0.0
    %1155 = vmatprep.subr.mxu0 0.0
    %1156 = vmatpush1.msra.mxu0 0.0
    %1157 = vmatprep.subr.mxu0 0.0
    %1158 = vmatpush1.msra.mxu0 0.0
    %1159 = vmatprep.subr.mxu0 0.0
    %1160 = vmatpush1.msra.mxu0 0.0
    %1161 = vmatprep.subr.mxu0 0.0
    %1162 = vmatpush1.msra.mxu0 0.0
    %1163 = vmatprep.subr.mxu0 0.0
    %1164 = vmatpush1.msra.mxu0 0.0
    %1165 = vmatprep.subr.mxu0 0.0
    %1166 = vmatpush1.msra.mxu0 0.0
    %1167 = vmatprep.subr.mxu0 0.0
    %1168 = vmatpush1.msra.mxu0 0.0
    %1169 = vmatprep.subr.mxu0 0.0
    %1170 = vmatpush1.msra.mxu0 0.0
    %1171 = vmatprep.subr.mxu0 0.0
    %1172 = vmatpush1.msra.mxu0 0.0
    %1173 = vmatprep.subr.mxu0 0.0
    %1174 = vmatpush1.msra.mxu0 0.0
    %1175 = vmatprep.subr.mxu0 0.0
    %1176 = vmatpush1.msra.mxu0 0.0
    %1177 = vmatprep.subr.mxu0 0.0
    %1178 = vmatpush1.msra.mxu0 0.0
    %1179 = vmatprep.subr.mxu0 0.0
    %1180 = vmatpush1.msra.mxu0 0.0
    %1181 = vmatprep.subr.mxu0 0.0
    %1182 = vmatpush1.msra.mxu0 0.0
    %1183 = vmatprep.subr.mxu0 0.0
    %1184 = vmatpush1.msra.mxu0 0.0
    %1185 = vmatprep.subr.mxu0 0.0
    %1186 = vmatpush1.msra.mxu0 0.0
    %1187 = vmatprep.subr.mxu0 0.0
    %1188 = vmatpush1.msra.mxu0 0.0
    %1189 = vmatprep.subr.mxu0 0.0
    %1190 = vmatpush1.msra.mxu0 0.0
    %1191 = vmatprep.subr.mxu0 0.0
    %1192 = vmatpush1.msra.mxu0 0.0
    %1193 = vmatprep.subr.mxu0 0.0
    %1194 = vmatpush1.msra.mxu0 0.0
    %1195 = vmatprep.subr.mxu0 0.0
    %1196 = vmatpush1.msra.mxu0 0.0
    %1197 = vmatprep.subr.mxu0 0.0
    %1198 = vmatpush1.msra.mxu0 0.0
    %1199 = vmatprep.subr.mxu0 0.0
    %1200 = vmatpush1.msra.mxu0 0.0
    %1201 = vmatprep.subr.mxu0 0.0
    %1202 = vmatpush1.msra.mxu0 0.0
    %1203 = vmatprep.subr.mxu0 0.0
    %1204 = vmatpush1.msra.mxu0 0.0
    %1205 = vmatprep.subr.mxu0 0.0
    %1206 = vmatpush1.msra.mxu0 0.0
    %1207 = vmatprep.subr.mxu0 0.0
    %1208 = vmatpush1.msra.mxu0 0.0
    %1209 = vmatprep.mubr.f32.mxu0 0.0
    %1210 = vmatmul.mubr.f32.gmra.mrb[0].mxu0 %v1002
    %v1211 = vpop.f32.mrb[0].mxu0
    %v1212 = vadd.f32 %v643, %v1211
    %v1213 = vpop.f32.mrb[0].mxu0
    %v1214 = vadd.f32 %v647, %v1213
    %1215 = vdwg.mxu0
    %1216 = vmatprep.subr.mxu0 0.0
    %1217 = vmatpush1.msra.mxu0 %v280
    %1218 = vmatprep.subr.mxu0 0.0
    %1219 = vmatpush1.msra.mxu0 %v283
    %1220 = vmatprep.subr.mxu0 0.0
    %1221 = vmatpush1.msra.mxu0 %v286
    %1222 = vmatprep.subr.mxu0 0.0
    %1223 = vmatpush1.msra.mxu0 %v289
    %1224 = vmatprep.subr.mxu0 0.0
    %1225 = vmatpush1.msra.mxu0 0.0
    %1226 = vmatprep.subr.mxu0 0.0
    %1227 = vmatpush1.msra.mxu0 0.0
    %1228 = vmatprep.subr.mxu0 0.0
    %1229 = vmatpush1.msra.mxu0 0.0
    %1230 = vmatprep.subr.mxu0 0.0
    %1231 = vmatpush1.msra.mxu0 0.0
    %1232 = vmatprep.subr.mxu0 0.0
    %1233 = vmatpush1.msra.mxu0 0.0
    %1234 = vmatprep.subr.mxu0 0.0
    %1235 = vmatpush1.msra.mxu0 0.0
    %1236 = vmatprep.subr.mxu0 0.0
    %1237 = vmatpush1.msra.mxu0 0.0
    %1238 = vmatprep.subr.mxu0 0.0
    %1239 = vmatpush1.msra.mxu0 0.0
    %1240 = vmatprep.subr.mxu0 0.0
    %1241 = vmatpush1.msra.mxu0 0.0
    %1242 = vmatprep.subr.mxu0 0.0
    %1243 = vmatpush1.msra.mxu0 0.0
    %1244 = vmatprep.subr.mxu0 0.0
    %1245 = vmatpush1.msra.mxu0 0.0
    %1246 = vmatprep.subr.mxu0 0.0
    %1247 = vmatpush1.msra.mxu0 0.0
    %1248 = vmatprep.subr.mxu0 0.0
    %1249 = vmatpush1.msra.mxu0 0.0
    %1250 = vmatprep.subr.mxu0 0.0
    %1251 = vmatpush1.msra.mxu0 0.0
    %1252 = vmatprep.subr.mxu0 0.0
    %1253 = vmatpush1.msra.mxu0 0.0
    %1254 = vmatprep.subr.mxu0 0.0
    %1255 = vmatpush1.msra.mxu0 0.0
    %1256 = vmatprep.subr.mxu0 0.0
    %1257 = vmatpush1.msra.mxu0 0.0
    %1258 = vmatprep.subr.mxu0 0.0
    %1259 = vmatpush1.msra.mxu0 0.0
    %1260 = vmatprep.subr.mxu0 0.0
    %1261 = vmatpush1.msra.mxu0 0.0
    %1262 = vmatprep.subr.mxu0 0.0
    %1263 = vmatpush1.msra.mxu0 0.0
    %1264 = vmatprep.subr.mxu0 0.0
    %1265 = vmatpush1.msra.mxu0 0.0
    %1266 = vmatprep.subr.mxu0 0.0
    %1267 = vmatpush1.msra.mxu0 0.0
    %1268 = vmatprep.subr.mxu0 0.0
    %1269 = vmatpush1.msra.mxu0 0.0
    %1270 = vmatprep.subr.mxu0 0.0
    %1271 = vmatpush1.msra.mxu0 0.0
    %1272 = vmatprep.subr.mxu0 0.0
    %1273 = vmatpush1.msra.mxu0 0.0
    %1274 = vmatprep.subr.mxu0 0.0
    %1275 = vmatpush1.msra.mxu0 0.0
    %1276 = vmatprep.subr.mxu0 0.0
    %1277 = vmatpush1.msra.mxu0 0.0
    %1278 = vmatprep.subr.mxu0 0.0
    %1279 = vmatpush1.msra.mxu0 0.0
    %1280 = vmatprep.mubr.f32.mxu0 0.0
    %1281 = vmatmul.mubr.f32.gmra.mrb[0].mxu0 %v1002
    %v1282 = vpop.f32.mrb[0].mxu0
    %v1283 = vadd.f32 %v651, %v1282
    %v1284 = vpop.f32.mrb[0].mxu0
    %1285 = vdwg.mxu0
    %v1287 = vsel %vm323, %v1000, 0
    %1289 = vmatprep.subr.mxu0 %v291
    %1290 = vmatpush1.msra.mxu0 %v290
    %1291 = vmatprep.subr.mxu0 %v294
    %1292 = vmatpush1.msra.mxu0 %v293
    %1293 = vmatprep.subr.mxu0 %v297
    %1294 = vmatpush1.msra.mxu0 %v296
    %1295 = vmatprep.subr.mxu0 %v300
    %1296 = vmatpush1.msra.mxu0 %v299
    %1297 = vmatprep.subr.mxu0 0.0
    %1298 = vmatpush1.msra.mxu0 0.0
    %1299 = vmatprep.subr.mxu0 0.0
    %1300 = vmatpush1.msra.mxu0 0.0
    %1301 = vmatprep.subr.mxu0 0.0
    %1302 = vmatpush1.msra.mxu0 0.0
    %1303 = vmatprep.subr.mxu0 0.0
    %1304 = vmatpush1.msra.mxu0 0.0
    %1305 = vmatprep.subr.mxu0 0.0
    %1306 = vmatpush1.msra.mxu0 0.0
    %1307 = vmatprep.subr.mxu0 0.0
    %1308 = vmatpush1.msra.mxu0 0.0
    %1309 = vmatprep.subr.mxu0 0.0
    %1310 = vmatpush1.msra.mxu0 0.0
    %1311 = vmatprep.subr.mxu0 0.0
    %1312 = vmatpush1.msra.mxu0 0.0
    %1313 = vmatprep.subr.mxu0 0.0
    %1314 = vmatpush1.msra.mxu0 0.0
    %1315 = vmatprep.subr.mxu0 0.0
    %1316 = vmatpush1.msra.mxu0 0.0
    %1317 = vmatprep.subr.mxu0 0.0
    %1318 = vmatpush1.msra.mxu0 0.0
    %1319 = vmatprep.subr.mxu0 0.0
    %1320 = vmatpush1.msra.mxu0 0.0
    %1321 = vmatprep.subr.mxu0 0.0
    %1322 = vmatpush1.msra.mxu0 0.0
    %1323 = vmatprep.subr.mxu0 0.0
    %1324 = vmatpush1.msra.mxu0 0.0
    %1325 = vmatprep.subr.mxu0 0.0
    %1326 = vmatpush1.msra.mxu0 0.0
    %1327 = vmatprep.subr.mxu0 0.0
    %1328 = vmatpush1.msra.mxu0 0.0
    %1329 = vmatprep.subr.mxu0 0.0
    %1330 = vmatpush1.msra.mxu0 0.0
    %1331 = vmatprep.subr.mxu0 0.0
    %1332 = vmatpush1.msra.mxu0 0.0
    %1333 = vmatprep.subr.mxu0 0.0
    %1334 = vmatpush1.msra.mxu0 0.0
    %1335 = vmatprep.subr.mxu0 0.0
    %1336 = vmatpush1.msra.mxu0 0.0
    %1337 = vmatprep.subr.mxu0 0.0
    %1338 = vmatpush1.msra.mxu0 0.0
    %1339 = vmatprep.subr.mxu0 0.0
    %1340 = vmatpush1.msra.mxu0 0.0
    %1341 = vmatprep.subr.mxu0 0.0
    %1342 = vmatpush1.msra.mxu0 0.0
    %1343 = vmatprep.subr.mxu0 0.0
    %1344 = vmatpush1.msra.mxu0 0.0
    %1345 = vmatprep.subr.mxu0 0.0
    %1346 = vmatpush1.msra.mxu0 0.0
    %1347 = vmatprep.subr.mxu0 0.0
    %1348 = vmatpush1.msra.mxu0 0.0
    %1349 = vmatprep.subr.mxu0 0.0
    %1350 = vmatpush1.msra.mxu0 0.0
    %1351 = vmatprep.subr.mxu0 0.0
    %1352 = vmatpush1.msra.mxu0 0.0
    %1353 = vmatprep.mubr.f32.mxu0 0.0
    %1354 = vmatmul.mubr.f32.gmra.mrb[0].mxu0 %v1287
    %v1355 = vpop.f32.mrb[0].mxu0
    %v1356 = vadd.f32 %v800, %v1355
    %v1357 = vpop.f32.mrb[0].mxu0
    %v1358 = vadd.f32 %v804, %v1357
    %1359 = vdwg.mxu0
    %1360 = vmatprep.subr.mxu0 0.0
    %1361 = vmatpush1.msra.mxu0 %v292
    %1362 = vmatprep.subr.mxu0 0.0
    %1363 = vmatpush1.msra.mxu0 %v295
    %1364 = vmatprep.subr.mxu0 0.0
    %1365 = vmatpush1.msra.mxu0 %v298
    %1366 = vmatprep.subr.mxu0 0.0
    %1367 = vmatpush1.msra.mxu0 %v301
    %1368 = vmatprep.subr.mxu0 0.0
    %1369 = vmatpush1.msra.mxu0 0.0
    %1370 = vmatprep.subr.mxu0 0.0
    %1371 = vmatpush1.msra.mxu0 0.0
    %1372 = vmatprep.subr.mxu0 0.0
    %1373 = vmatpush1.msra.mxu0 0.0
    %1374 = vmatprep.subr.mxu0 0.0
    %1375 = vmatpush1.msra.mxu0 0.0
    %1376 = vmatprep.subr.mxu0 0.0
    %1377 = vmatpush1.msra.mxu0 0.0
    %1378 = vmatprep.subr.mxu0 0.0
    %1379 = vmatpush1.msra.mxu0 0.0
    %1380 = vmatprep.subr.mxu0 0.0
    %1381 = vmatpush1.msra.mxu0 0.0
    %1382 = vmatprep.subr.mxu0 0.0
    %1383 = vmatpush1.msra.mxu0 0.0
    %1384 = vmatprep.subr.mxu0 0.0
    %1385 = vmatpush1.msra.mxu0 0.0
    %1386 = vmatprep.subr.mxu0 0.0
    %1387 = vmatpush1.msra.mxu0 0.0
    %1388 = vmatprep.subr.mxu0 0.0
    %1389 = vmatpush1.msra.mxu0 0.0
    %1390 = vmatprep.subr.mxu0 0.0
    %1391 = vmatpush1.msra.mxu0 0.0
    %1392 = vmatprep.subr.mxu0 0.0
    %1393 = vmatpush1.msra.mxu0 0.0
    %1394 = vmatprep.subr.mxu0 0.0
    %1395 = vmatpush1.msra.mxu0 0.0
    %1396 = vmatprep.subr.mxu0 0.0
    %1397 = vmatpush1.msra.mxu0 0.0
    %1398 = vmatprep.subr.mxu0 0.0
    %1399 = vmatpush1.msra.mxu0 0.0
    %1400 = vmatprep.subr.mxu0 0.0
    %1401 = vmatpush1.msra.mxu0 0.0
    %1402 = vmatprep.subr.mxu0 0.0
    %1403 = vmatpush1.msra.mxu0 0.0
    %1404 = vmatprep.subr.mxu0 0.0
    %1405 = vmatpush1.msra.mxu0 0.0
    %1406 = vmatprep.subr.mxu0 0.0
    %1407 = vmatpush1.msra.mxu0 0.0
    %1408 = vmatprep.subr.mxu0 0.0
    %1409 = vmatpush1.msra.mxu0 0.0
    %1410 = vmatprep.subr.mxu0 0.0
    %1411 = vmatpush1.msra.mxu0 0.0
    %1412 = vmatprep.subr.mxu0 0.0
    %1413 = vmatpush1.msra.mxu0 0.0
    %1414 = vmatprep.subr.mxu0 0.0
    %1415 = vmatpush1.msra.mxu0 0.0
    %1416 = vmatprep.subr.mxu0 0.0
    %1417 = vmatpush1.msra.mxu0 0.0
    %1418 = vmatprep.subr.mxu0 0.0
    %1419 = vmatpush1.msra.mxu0 0.0
    %1420 = vmatprep.subr.mxu0 0.0
    %1421 = vmatpush1.msra.mxu0 0.0
    %1422 = vmatprep.subr.mxu0 0.0
    %1423 = vmatpush1.msra.mxu0 0.0
    %1424 = vmatprep.mubr.f32.mxu0 0.0
    %1425 = vmatmul.mubr.f32.gmra.mrb[0].mxu0 %v1287
    %v1426 = vpop.f32.mrb[0].mxu0
    %v1427 = vadd.f32 %v808, %v1426
    %v1428 = vpop.f32.mrb[0].mxu0
    %1429 = vdwg.mxu0
    %v1430 = vld [vmem:[%s132] sm:$0x3f]
    %v1431 = vadd.f32 %v1430, %v1071
    %v1432 = vxor.u32 %v1431, 2147483648
    %v1433 = vmul.f32 %v1432, 1.442695
    %v1434 = vpow.pop %v1433
    %v1435 = vadd.f32 %v1434, 1.0
    %v1436 = vrcp.pop %v1435
    %v1437 = vmul.f32 1.0, %v1436
    %v1439 = vrot.slane %v1430, 2
    %v1441 = vadd.f32 %v1439, %v1073
    %v1442 = vxor.u32 %v1441, 2147483648
    %v1443 = vmul.f32 %v1442, 1.442695
    %v1444 = vpow.pop %v1443
    %v1445 = vadd.f32 %v1444, 1.0
    %v1446 = vrcp.pop %v1445
    %v1447 = vmul.f32 1.0, %v1446
    %v1448 = vmul.f32 %v1437, %v1142
    %v1449 = vrot.slane %v1430, 4
    %v1451 = vadd.f32 %v1449, %v1448
    %v1452 = vtanh.pop %v1451
    %v1453 = vsub.f32 1.0, %v1447
    %v1454 = vmul.f32 %v1453, %v1452
    %v1455 = vmul.f32 %v1447, %v979
    %v1456 = vadd.f32 %v1454, %v1455
    %v1457 = vadd.f32 %v1212, %v1356
    %v1458 = vxor.u32 %v1457, 2147483648
    %v1459 = vmul.f32 %v1458, 1.442695
    %v1460 = vpow.pop %v1459
    %v1461 = vadd.f32 %v1460, 1.0
    %v1462 = vrcp.pop %v1461
    %v1463 = vmul.f32 1.0, %v1462
    %v1464 = vadd.f32 %v1214, %v1358
    %v1465 = vxor.u32 %v1464, 2147483648
    %v1466 = vmul.f32 %v1465, 1.442695
    %v1467 = vpow.pop %v1466
    %v1468 = vadd.f32 %v1467, 1.0
    %v1469 = vrcp.pop %v1468
    %v1470 = vmul.f32 1.0, %v1469
    %v1471 = vmul.f32 %v1463, %v1427
    %v1472 = vadd.f32 %v1283, %v1471
    %v1473 = vtanh.pop %v1472
    %v1474 = vsub.f32 1.0, %v1470
    %v1475 = vmul.f32 %v1474, %v1473
    %v1476 = vmul.f32 %v1470, %v1000
    %v1477 = vadd.f32 %v1475, %v1476
    %v1479 = vsel %vm323, %v1456, 0
    %1481 = vmatprep.subr.mxu0 %v267
    %1482 = vmatpush1.msra.mxu0 %v266
    %1483 = vmatprep.subr.mxu0 %v270
    %1484 = vmatpush1.msra.mxu0 %v269
    %1485 = vmatprep.subr.mxu0 %v273
    %1486 = vmatpush1.msra.mxu0 %v272
    %1487 = vmatprep.subr.mxu0 %v276
    %1488 = vmatpush1.msra.mxu0 %v275
    %1489 = vmatprep.subr.mxu0 0.0
    %1490 = vmatpush1.msra.mxu0 0.0
    %1491 = vmatprep.subr.mxu0 0.0
    %1492 = vmatpush1.msra.mxu0 0.0
    %1493 = vmatprep.subr.mxu0 0.0
    %1494 = vmatpush1.msra.mxu0 0.0
    %1495 = vmatprep.subr.mxu0 0.0
    %1496 = vmatpush1.msra.mxu0 0.0
    %1497 = vmatprep.subr.mxu0 0.0
    %1498 = vmatpush1.msra.mxu0 0.0
    %1499 = vmatprep.subr.mxu0 0.0
    %1500 = vmatpush1.msra.mxu0 0.0
    %1501 = vmatprep.subr.mxu0 0.0
    %1502 = vmatpush1.msra.mxu0 0.0
    %1503 = vmatprep.subr.mxu0 0.0
    %1504 = vmatpush1.msra.mxu0 0.0
    %1505 = vmatprep.subr.mxu0 0.0
    %1506 = vmatpush1.msra.mxu0 0.0
    %1507 = vmatprep.subr.mxu0 0.0
    %1508 = vmatpush1.msra.mxu0 0.0
    %1509 = vmatprep.subr.mxu0 0.0
    %1510 = vmatpush1.msra.mxu0 0.0
    %1511 = vmatprep.subr.mxu0 0.0
    %1512 = vmatpush1.msra.mxu0 0.0
    %1513 = vmatprep.subr.mxu0 0.0
    %1514 = vmatpush1.msra.mxu0 0.0
    %1515 = vmatprep.subr.mxu0 0.0
    %1516 = vmatpush1.msra.mxu0 0.0
    %1517 = vmatprep.subr.mxu0 0.0
    %1518 = vmatpush1.msra.mxu0 0.0
    %1519 = vmatprep.subr.mxu0 0.0
    %1520 = vmatpush1.msra.mxu0 0.0
    %1521 = vmatprep.subr.mxu0 0.0
    %1522 = vmatpush1.msra.mxu0 0.0
    %1523 = vmatprep.subr.mxu0 0.0
    %1524 = vmatpush1.msra.mxu0 0.0
    %1525 = vmatprep.subr.mxu0 0.0
    %1526 = vmatpush1.msra.mxu0 0.0
    %1527 = vmatprep.subr.mxu0 0.0
    %1528 = vmatpush1.msra.mxu0 0.0
    %1529 = vmatprep.subr.mxu0 0.0
    %1530 = vmatpush1.msra.mxu0 0.0
    %1531 = vmatprep.subr.mxu0 0.0
    %1532 = vmatpush1.msra.mxu0 0.0
    %1533 = vmatprep.subr.mxu0 0.0
    %1534 = vmatpush1.msra.mxu0 0.0
    %1535 = vmatprep.subr.mxu0 0.0
    %1536 = vmatpush1.msra.mxu0 0.0
    %1537 = vmatprep.subr.mxu0 0.0
    %1538 = vmatpush1.msra.mxu0 0.0
    %1539 = vmatprep.subr.mxu0 0.0
    %1540 = vmatpush1.msra.mxu0 0.0
    %1541 = vmatprep.subr.mxu0 0.0
    %1542 = vmatpush1.msra.mxu0 0.0
    %1543 = vmatprep.subr.mxu0 0.0
    %1544 = vmatpush1.msra.mxu0 0.0
    %1545 = vmatprep.mubr.f32.mxu0 0.0
    %1546 = vmatmul.mubr.f32.gmra.mrb[0].mxu0 %v1479
    %v1547 = vpop.f32.mrb[0].mxu0
    %v1548 = vadd.f32 %v311, %v1547
    %v1549 = vpop.f32.mrb[0].mxu0
    %v1550 = vadd.f32 %v315, %v1549
    %1551 = vdwg.mxu0
    %1552 = vmatprep.subr.mxu0 0.0
    %1553 = vmatpush1.msra.mxu0 %v268
    %1554 = vmatprep.subr.mxu0 0.0
    %1555 = vmatpush1.msra.mxu0 %v271
    %1556 = vmatprep.subr.mxu0 0.0
    %1557 = vmatpush1.msra.mxu0 %v274
    %1558 = vmatprep.subr.mxu0 0.0
    %1559 = vmatpush1.msra.mxu0 %v277
    %1560 = vmatprep.subr.mxu0 0.0
    %1561 = vmatpush1.msra.mxu0 0.0
    %1562 = vmatprep.subr.mxu0 0.0
    %1563 = vmatpush1.msra.mxu0 0.0
    %1564 = vmatprep.subr.mxu0 0.0
    %1565 = vmatpush1.msra.mxu0 0.0
    %1566 = vmatprep.subr.mxu0 0.0
    %1567 = vmatpush1.msra.mxu0 0.0
    %1568 = vmatprep.subr.mxu0 0.0
    %1569 = vmatpush1.msra.mxu0 0.0
    %1570 = vmatprep.subr.mxu0 0.0
    %1571 = vmatpush1.msra.mxu0 0.0
    %1572 = vmatprep.subr.mxu0 0.0
    %1573 = vmatpush1.msra.mxu0 0.0
    %1574 = vmatprep.subr.mxu0 0.0
    %1575 = vmatpush1.msra.mxu0 0.0
    %1576 = vmatprep.subr.mxu0 0.0
    %1577 = vmatpush1.msra.mxu0 0.0
    %1578 = vmatprep.subr.mxu0 0.0
    %1579 = vmatpush1.msra.mxu0 0.0
    %1580 = vmatprep.subr.mxu0 0.0
    %1581 = vmatpush1.msra.mxu0 0.0
    %1582 = vmatprep.subr.mxu0 0.0
    %1583 = vmatpush1.msra.mxu0 0.0
    %1584 = vmatprep.subr.mxu0 0.0
    %1585 = vmatpush1.msra.mxu0 0.0
    %1586 = vmatprep.subr.mxu0 0.0
    %1587 = vmatpush1.msra.mxu0 0.0
    %1588 = vmatprep.subr.mxu0 0.0
    %1589 = vmatpush1.msra.mxu0 0.0
    %1590 = vmatprep.subr.mxu0 0.0
    %1591 = vmatpush1.msra.mxu0 0.0
    %1592 = vmatprep.subr.mxu0 0.0
    %1593 = vmatpush1.msra.mxu0 0.0
    %1594 = vmatprep.subr.mxu0 0.0
    %1595 = vmatpush1.msra.mxu0 0.0
    %1596 = vmatprep.subr.mxu0 0.0
    %1597 = vmatpush1.msra.mxu0 0.0
    %1598 = vmatprep.subr.mxu0 0.0
    %1599 = vmatpush1.msra.mxu0 0.0
    %1600 = vmatprep.subr.mxu0 0.0
    %1601 = vmatpush1.msra.mxu0 0.0
    %1602 = vmatprep.subr.mxu0 0.0
    %1603 = vmatpush1.msra.mxu0 0.0
    %1604 = vmatprep.subr.mxu0 0.0
    %1605 = vmatpush1.msra.mxu0 0.0
    %1606 = vmatprep.subr.mxu0 0.0
    %1607 = vmatpush1.msra.mxu0 0.0
    %1608 = vmatprep.subr.mxu0 0.0
    %1609 = vmatpush1.msra.mxu0 0.0
    %1610 = vmatprep.subr.mxu0 0.0
    %1611 = vmatpush1.msra.mxu0 0.0
    %1612 = vmatprep.subr.mxu0 0.0
    %1613 = vmatpush1.msra.mxu0 0.0
    %1614 = vmatprep.subr.mxu0 0.0
    %1615 = vmatpush1.msra.mxu0 0.0
    %1616 = vmatprep.mubr.f32.mxu0 0.0
    %1617 = vmatmul.mubr.f32.gmra.mrb[0].mxu0 %v1479
    %v1618 = vpop.f32.mrb[0].mxu0
    %v1619 = vadd.f32 %v319, %v1618
    %v1620 = vpop.f32.mrb[0].mxu0
    %1621 = vdwg.mxu0
    %1622 = vmatprep.subr.mxu0 %v279
    %1623 = vmatpush1.msra.mxu0 %v278
    %1624 = vmatprep.subr.mxu0 %v282
    %1625 = vmatpush1.msra.mxu0 %v281
    %1626 = vmatprep.subr.mxu0 %v285
    %1627 = vmatpush1.msra.mxu0 %v284
    %1628 = vmatprep.subr.mxu0 %v288
    %1629 = vmatpush1.msra.mxu0 %v287
    %1630 = vmatprep.subr.mxu0 0.0
    %1631 = vmatpush1.msra.mxu0 0.0
    %1632 = vmatprep.subr.mxu0 0.0
    %1633 = vmatpush1.msra.mxu0 0.0
    %1634 = vmatprep.subr.mxu0 0.0
    %1635 = vmatpush1.msra.mxu0 0.0
    %1636 = vmatprep.subr.mxu0 0.0
    %1637 = vmatpush1.msra.mxu0 0.0
    %1638 = vmatprep.subr.mxu0 0.0
    %1639 = vmatpush1.msra.mxu0 0.0
    %1640 = vmatprep.subr.mxu0 0.0
    %1641 = vmatpush1.msra.mxu0 0.0
    %1642 = vmatprep.subr.mxu0 0.0
    %1643 = vmatpush1.msra.mxu0 0.0
    %1644 = vmatprep.subr.mxu0 0.0
    %1645 = vmatpush1.msra.mxu0 0.0
    %1646 = vmatprep.subr.mxu0 0.0
    %1647 = vmatpush1.msra.mxu0 0.0
    %1648 = vmatprep.subr.mxu0 0.0
    %1649 = vmatpush1.msra.mxu0 0.0
    %1650 = vmatprep.subr.mxu0 0.0
    %1651 = vmatpush1.msra.mxu0 0.0
    %1652 = vmatprep.subr.mxu0 0.0
    %1653 = vmatpush1.msra.mxu0 0.0
    %1654 = vmatprep.subr.mxu0 0.0
    %1655 = vmatpush1.msra.mxu0 0.0
    %1656 = vmatprep.subr.mxu0 0.0
    %1657 = vmatpush1.msra.mxu0 0.0
    %1658 = vmatprep.subr.mxu0 0.0
    %1659 = vmatpush1.msra.mxu0 0.0
    %1660 = vmatprep.subr.mxu0 0.0
    %1661 = vmatpush1.msra.mxu0 0.0
    %1662 = vmatprep.subr.mxu0 0.0
    %1663 = vmatpush1.msra.mxu0 0.0
    %1664 = vmatprep.subr.mxu0 0.0
    %1665 = vmatpush1.msra.mxu0 0.0
    %1666 = vmatprep.subr.mxu0 0.0
    %1667 = vmatpush1.msra.mxu0 0.0
    %1668 = vmatprep.subr.mxu0 0.0
    %1669 = vmatpush1.msra.mxu0 0.0
    %1670 = vmatprep.subr.mxu0 0.0
    %1671 = vmatpush1.msra.mxu0 0.0
    %1672 = vmatprep.subr.mxu0 0.0
    %1673 = vmatpush1.msra.mxu0 0.0
    %1674 = vmatprep.subr.mxu0 0.0
    %1675 = vmatpush1.msra.mxu0 0.0
    %1676 = vmatprep.subr.mxu0 0.0
    %1677 = vmatpush1.msra.mxu0 0.0
    %1678 = vmatprep.subr.mxu0 0.0
    %1679 = vmatpush1.msra.mxu0 0.0
    %1680 = vmatprep.subr.mxu0 0.0
    %1681 = vmatpush1.msra.mxu0 0.0
    %1682 = vmatprep.subr.mxu0 0.0
    %1683 = vmatpush1.msra.mxu0 0.0
    %1684 = vmatprep.subr.mxu0 0.0
    %1685 = vmatpush1.msra.mxu0 0.0
    %1686 = vmatprep.mubr.f32.mxu0 0.0
    %1687 = vmatmul.mubr.f32.gmra.mrb[0].mxu0 %v1479
    %v1688 = vpop.f32.mrb[0].mxu0
    %v1689 = vadd.f32 %v643, %v1688
    %v1690 = vpop.f32.mrb[0].mxu0
    %v1691 = vadd.f32 %v647, %v1690
    %1692 = vdwg.mxu0
    %1693 = vmatprep.subr.mxu0 0.0
    %1694 = vmatpush1.msra.mxu0 %v280
    %1695 = vmatprep.subr.mxu0 0.0
    %1696 = vmatpush1.msra.mxu0 %v283
    %1697 = vmatprep.subr.mxu0 0.0
    %1698 = vmatpush1.msra.mxu0 %v286
    %1699 = vmatprep.subr.mxu0 0.0
    %1700 = vmatpush1.msra.mxu0 %v289
    %1701 = vmatprep.subr.mxu0 0.0
    %1702 = vmatpush1.msra.mxu0 0.0
    %1703 = vmatprep.subr.mxu0 0.0
    %1704 = vmatpush1.msra.mxu0 0.0
    %1705 = vmatprep.subr.mxu0 0.0
    %1706 = vmatpush1.msra.mxu0 0.0
    %1707 = vmatprep.subr.mxu0 0.0
    %1708 = vmatpush1.msra.mxu0 0.0
    %1709 = vmatprep.subr.mxu0 0.0
    %1710 = vmatpush1.msra.mxu0 0.0
    %1711 = vmatprep.subr.mxu0 0.0
    %1712 = vmatpush1.msra.mxu0 0.0
    %1713 = vmatprep.subr.mxu0 0.0
    %1714 = vmatpush1.msra.mxu0 0.0
    %1715 = vmatprep.subr.mxu0 0.0
    %1716 = vmatpush1.msra.mxu0 0.0
    %1717 = vmatprep.subr.mxu0 0.0
    %1718 = vmatpush1.msra.mxu0 0.0
    %1719 = vmatprep.subr.mxu0 0.0
    %1720 = vmatpush1.msra.mxu0 0.0
    %1721 = vmatprep.subr.mxu0 0.0
    %1722 = vmatpush1.msra.mxu0 0.0
    %1723 = vmatprep.subr.mxu0 0.0
    %1724 = vmatpush1.msra.mxu0 0.0
    %1725 = vmatprep.subr.mxu0 0.0
    %1726 = vmatpush1.msra.mxu0 0.0
    %1727 = vmatprep.subr.mxu0 0.0
    %1728 = vmatpush1.msra.mxu0 0.0
    %1729 = vmatprep.subr.mxu0 0.0
    %1730 = vmatpush1.msra.mxu0 0.0
    %1731 = vmatprep.subr.mxu0 0.0
    %1732 = vmatpush1.msra.mxu0 0.0
    %1733 = vmatprep.subr.mxu0 0.0
    %1734 = vmatpush1.msra.mxu0 0.0
    %1735 = vmatprep.subr.mxu0 0.0
    %1736 = vmatpush1.msra.mxu0 0.0
    %1737 = vmatprep.subr.mxu0 0.0
    %1738 = vmatpush1.msra.mxu0 0.0
    %1739 = vmatprep.subr.mxu0 0.0
    %1740 = vmatpush1.msra.mxu0 0.0
    %1741 = vmatprep.subr.mxu0 0.0
    %1742 = vmatpush1.msra.mxu0 0.0
    %1743 = vmatprep.subr.mxu0 0.0
    %1744 = vmatpush1.msra.mxu0 0.0
    %1745 = vmatprep.subr.mxu0 0.0
    %1746 = vmatpush1.msra.mxu0 0.0
    %1747 = vmatprep.subr.mxu0 0.0
    %1748 = vmatpush1.msra.mxu0 0.0
    %1749 = vmatprep.subr.mxu0 0.0
    %1750 = vmatpush1.msra.mxu0 0.0
    %1751 = vmatprep.subr.mxu0 0.0
    %1752 = vmatpush1.msra.mxu0 0.0
    %1753 = vmatprep.subr.mxu0 0.0
    %1754 = vmatpush1.msra.mxu0 0.0
    %1755 = vmatprep.subr.mxu0 0.0
    %1756 = vmatpush1.msra.mxu0 0.0
    %1757 = vmatprep.mubr.f32.mxu0 0.0
    %1758 = vmatmul.mubr.f32.gmra.mrb[0].mxu0 %v1479
    %v1759 = vpop.f32.mrb[0].mxu0
    %v1760 = vadd.f32 %v651, %v1759
    %v1761 = vpop.f32.mrb[0].mxu0
    %1762 = vdwg.mxu0
    %v1764 = vsel %vm323, %v1477, 0
    %1766 = vmatprep.subr.mxu0 %v291
    %1767 = vmatpush1.msra.mxu0 %v290
    %1768 = vmatprep.subr.mxu0 %v294
    %1769 = vmatpush1.msra.mxu0 %v293
    %1770 = vmatprep.subr.mxu0 %v297
    %1771 = vmatpush1.msra.mxu0 %v296
    %1772 = vmatprep.subr.mxu0 %v300
    %1773 = vmatpush1.msra.mxu0 %v299
    %1774 = vmatprep.subr.mxu0 0.0
    %1775 = vmatpush1.msra.mxu0 0.0
    %1776 = vmatprep.subr.mxu0 0.0
    %1777 = vmatpush1.msra.mxu0 0.0
    %1778 = vmatprep.subr.mxu0 0.0
    %1779 = vmatpush1.msra.mxu0 0.0
    %1780 = vmatprep.subr.mxu0 0.0
    %1781 = vmatpush1.msra.mxu0 0.0
    %1782 = vmatprep.subr.mxu0 0.0
    %1783 = vmatpush1.msra.mxu0 0.0
    %1784 = vmatprep.subr.mxu0 0.0
    %1785 = vmatpush1.msra.mxu0 0.0
    %1786 = vmatprep.subr.mxu0 0.0
    %1787 = vmatpush1.msra.mxu0 0.0
    %1788 = vmatprep.subr.mxu0 0.0
    %1789 = vmatpush1.msra.mxu0 0.0
    %1790 = vmatprep.subr.mxu0 0.0
    %1791 = vmatpush1.msra.mxu0 0.0
    %1792 = vmatprep.subr.mxu0 0.0
    %1793 = vmatpush1.msra.mxu0 0.0
    %1794 = vmatprep.subr.mxu0 0.0
    %1795 = vmatpush1.msra.mxu0 0.0
    %1796 = vmatprep.subr.mxu0 0.0
    %1797 = vmatpush1.msra.mxu0 0.0
    %1798 = vmatprep.subr.mxu0 0.0
    %1799 = vmatpush1.msra.mxu0 0.0
    %1800 = vmatprep.subr.mxu0 0.0
    %1801 = vmatpush1.msra.mxu0 0.0
    %1802 = vmatprep.subr.mxu0 0.0
    %1803 = vmatpush1.msra.mxu0 0.0
    %1804 = vmatprep.subr.mxu0 0.0
    %1805 = vmatpush1.msra.mxu0 0.0
    %1806 = vmatprep.subr.mxu0 0.0
    %1807 = vmatpush1.msra.mxu0 0.0
    %1808 = vmatprep.subr.mxu0 0.0
    %1809 = vmatpush1.msra.mxu0 0.0
    %1810 = vmatprep.subr.mxu0 0.0
    %1811 = vmatpush1.msra.mxu0 0.0
    %1812 = vmatprep.subr.mxu0 0.0
    %1813 = vmatpush1.msra.mxu0 0.0
    %1814 = vmatprep.subr.mxu0 0.0
    %1815 = vmatpush1.msra.mxu0 0.0
    %1816 = vmatprep.subr.mxu0 0.0
    %1817 = vmatpush1.msra.mxu0 0.0
    %1818 = vmatprep.subr.mxu0 0.0
    %1819 = vmatpush1.msra.mxu0 0.0
    %1820 = vmatprep.subr.mxu0 0.0
    %1821 = vmatpush1.msra.mxu0 0.0
    %1822 = vmatprep.subr.mxu0 0.0
    %1823 = vmatpush1.msra.mxu0 0.0
    %1824 = vmatprep.subr.mxu0 0.0
    %1825 = vmatpush1.msra.mxu0 0.0
    %1826 = vmatprep.subr.mxu0 0.0
    %1827 = vmatpush1.msra.mxu0 0.0
    %1828 = vmatprep.subr.mxu0 0.0
    %1829 = vmatpush1.msra.mxu0 0.0
    %1830 = vmatprep.mubr.f32.mxu0 0.0
    %1831 = vmatmul.mubr.f32.gmra.mrb[0].mxu0 %v1764
    %v1832 = vpop.f32.mrb[0].mxu0
    %v1833 = vadd.f32 %v800, %v1832
    %v1834 = vpop.f32.mrb[0].mxu0
    %v1835 = vadd.f32 %v804, %v1834
    %1836 = vdwg.mxu0
    %1837 = vmatprep.subr.mxu0 0.0
    %1838 = vmatpush1.msra.mxu0 %v292
    %1839 = vmatprep.subr.mxu0 0.0
    %1840 = vmatpush1.msra.mxu0 %v295
    %1841 = vmatprep.subr.mxu0 0.0
    %1842 = vmatpush1.msra.mxu0 %v298
    %1843 = vmatprep.subr.mxu0 0.0
    %1844 = vmatpush1.msra.mxu0 %v301
    %1845 = vmatprep.subr.mxu0 0.0
    %1846 = vmatpush1.msra.mxu0 0.0
    %1847 = vmatprep.subr.mxu0 0.0
    %1848 = vmatpush1.msra.mxu0 0.0
    %1849 = vmatprep.subr.mxu0 0.0
    %1850 = vmatpush1.msra.mxu0 0.0
    %1851 = vmatprep.subr.mxu0 0.0
    %1852 = vmatpush1.msra.mxu0 0.0
    %1853 = vmatprep.subr.mxu0 0.0
    %1854 = vmatpush1.msra.mxu0 0.0
    %1855 = vmatprep.subr.mxu0 0.0
    %1856 = vmatpush1.msra.mxu0 0.0
    %1857 = vmatprep.subr.mxu0 0.0
    %1858 = vmatpush1.msra.mxu0 0.0
    %1859 = vmatprep.subr.mxu0 0.0
    %1860 = vmatpush1.msra.mxu0 0.0
    %1861 = vmatprep.subr.mxu0 0.0
    %1862 = vmatpush1.msra.mxu0 0.0
    %1863 = vmatprep.subr.mxu0 0.0
    %1864 = vmatpush1.msra.mxu0 0.0
    %1865 = vmatprep.subr.mxu0 0.0
    %1866 = vmatpush1.msra.mxu0 0.0
    %1867 = vmatprep.subr.mxu0 0.0
    %1868 = vmatpush1.msra.mxu0 0.0
    %1869 = vmatprep.subr.mxu0 0.0
    %1870 = vmatpush1.msra.mxu0 0.0
    %1871 = vmatprep.subr.mxu0 0.0
    %1872 = vmatpush1.msra.mxu0 0.0
    %1873 = vmatprep.subr.mxu0 0.0
    %1874 = vmatpush1.msra.mxu0 0.0
    %1875 = vmatprep.subr.mxu0 0.0
    %1876 = vmatpush1.msra.mxu0 0.0
    %1877 = vmatprep.subr.mxu0 0.0
    %1878 = vmatpush1.msra.mxu0 0.0
    %1879 = vmatprep.subr.mxu0 0.0
    %1880 = vmatpush1.msra.mxu0 0.0
    %1881 = vmatprep.subr.mxu0 0.0
    %1882 = vmatpush1.msra.mxu0 0.0
    %1883 = vmatprep.subr.mxu0 0.0
    %1884 = vmatpush1.msra.mxu0 0.0
    %1885 = vmatprep.subr.mxu0 0.0
    %1886 = vmatpush1.msra.mxu0 0.0
    %1887 = vmatprep.subr.mxu0 0.0
    %1888 = vmatpush1.msra.mxu0 0.0
    %1889 = vmatprep.subr.mxu0 0.0
    %1890 = vmatpush1.msra.mxu0 0.0
    %1891 = vmatprep.subr.mxu0 0.0
    %1892 = vmatpush1.msra.mxu0 0.0
    %1893 = vmatprep.subr.mxu0 0.0
    %1894 = vmatpush1.msra.mxu0 0.0
    %1895 = vmatprep.subr.mxu0 0.0
    %1896 = vmatpush1.msra.mxu0 0.0
    %1897 = vmatprep.subr.mxu0 0.0
    %1898 = vmatpush1.msra.mxu0 0.0
    %1899 = vmatprep.subr.mxu0 0.0
    %1900 = vmatpush1.msra.mxu0 0.0
    %1901 = vmatprep.mubr.f32.mxu0 0.0
    %1902 = vmatmul.mubr.f32.gmra.mrb[0].mxu0 %v1764
    %v1903 = vpop.f32.mrb[0].mxu0
    %v1904 = vadd.f32 %v808, %v1903
    %v1905 = vpop.f32.mrb[0].mxu0
    %1906 = vdwg.mxu0
    %v1907 = vld [vmem:[%s156] sm:$0x3f]
    %v1908 = vadd.f32 %v1907, %v1548
    %v1909 = vxor.u32 %v1908, 2147483648
    %v1910 = vmul.f32 %v1909, 1.442695
    %v1911 = vpow.pop %v1910
    %v1912 = vadd.f32 %v1911, 1.0
    %v1913 = vrcp.pop %v1912
    %v1914 = vmul.f32 1.0, %v1913
    %v1916 = vrot.slane %v1907, 2
    %v1918 = vadd.f32 %v1916, %v1550
    %v1919 = vxor.u32 %v1918, 2147483648
    %v1920 = vmul.f32 %v1919, 1.442695
    %v1921 = vpow.pop %v1920
    %v1922 = vadd.f32 %v1921, 1.0
    %v1923 = vrcp.pop %v1922
    %v1924 = vmul.f32 1.0, %v1923
    %v1925 = vmul.f32 %v1914, %v1619
    %v1926 = vrot.slane %v1907, 4
    %v1928 = vadd.f32 %v1926, %v1925
    %v1929 = vtanh.pop %v1928
    %v1930 = vsub.f32 1.0, %v1924
    %v1931 = vmul.f32 %v1930, %v1929
    %v1932 = vmul.f32 %v1924, %v1456
    %v1933 = vadd.f32 %v1931, %v1932
    %v1934 = vadd.f32 %v1689, %v1833
    %v1935 = vxor.u32 %v1934, 2147483648
    %v1936 = vmul.f32 %v1935, 1.442695
    %v1937 = vpow.pop %v1936
    %v1938 = vadd.f32 %v1937, 1.0
    %v1939 = vrcp.pop %v1938
    %v1940 = vmul.f32 1.0, %v1939
    %v1941 = vadd.f32 %v1691, %v1835
    %v1942 = vxor.u32 %v1941, 2147483648
    %v1943 = vmul.f32 %v1942, 1.442695
    %v1944 = vpow.pop %v1943
    %v1945 = vadd.f32 %v1944, 1.0
    %v1946 = vrcp.pop %v1945
    %v1947 = vmul.f32 1.0, %v1946
    %v1948 = vmul.f32 %v1940, %v1904
    %v1949 = vadd.f32 %v1760, %v1948
    %v1950 = vtanh.pop %v1949
    %v1951 = vsub.f32 1.0, %v1947
    %v1952 = vmul.f32 %v1951, %v1950
    %v1953 = vmul.f32 %v1947, %v1477
    %v1954 = vadd.f32 %v1952, %v1953
    %v1956 = vsel %vm323, %v1933, 0
    %1958 = vmatprep.subr.mxu0 %v267
    %1959 = vmatpush1.msra.mxu0 %v266
    %1960 = vmatprep.subr.mxu0 %v270
    %1961 = vmatpush1.msra.mxu0 %v269
    %1962 = vmatprep.subr.mxu0 %v273
    %1963 = vmatpush1.msra.mxu0 %v272
    %1964 = vmatprep.subr.mxu0 %v276
    %1965 = vmatpush1.msra.mxu0 %v275
    %1966 = vmatprep.subr.mxu0 0.0
    %1967 = vmatpush1.msra.mxu0 0.0
    %1968 = vmatprep.subr.mxu0 0.0
    %1969 = vmatpush1.msra.mxu0 0.0
    %1970 = vmatprep.subr.mxu0 0.0
    %1971 = vmatpush1.msra.mxu0 0.0
    %1972 = vmatprep.subr.mxu0 0.0
    %1973 = vmatpush1.msra.mxu0 0.0
    %1974 = vmatprep.subr.mxu0 0.0
    %1975 = vmatpush1.msra.mxu0 0.0
    %1976 = vmatprep.subr.mxu0 0.0
    %1977 = vmatpush1.msra.mxu0 0.0
    %1978 = vmatprep.subr.mxu0 0.0
    %1979 = vmatpush1.msra.mxu0 0.0
    %1980 = vmatprep.subr.mxu0 0.0
    %1981 = vmatpush1.msra.mxu0 0.0
    %1982 = vmatprep.subr.mxu0 0.0
    %1983 = vmatpush1.msra.mxu0 0.0
    %1984 = vmatprep.subr.mxu0 0.0
    %1985 = vmatpush1.msra.mxu0 0.0
    %1986 = vmatprep.subr.mxu0 0.0
    %1987 = vmatpush1.msra.mxu0 0.0
    %1988 = vmatprep.subr.mxu0 0.0
    %1989 = vmatpush1.msra.mxu0 0.0
    %1990 = vmatprep.subr.mxu0 0.0
    %1991 = vmatpush1.msra.mxu0 0.0
    %1992 = vmatprep.subr.mxu0 0.0
    %1993 = vmatpush1.msra.mxu0 0.0
    %1994 = vmatprep.subr.mxu0 0.0
    %1995 = vmatpush1.msra.mxu0 0.0
    %1996 = vmatprep.subr.mxu0 0.0
    %1997 = vmatpush1.msra.mxu0 0.0
    %1998 = vmatprep.subr.mxu0 0.0
    %1999 = vmatpush1.msra.mxu0 0.0
    %2000 = vmatprep.subr.mxu0 0.0
    %2001 = vmatpush1.msra.mxu0 0.0
    %2002 = vmatprep.subr.mxu0 0.0
    %2003 = vmatpush1.msra.mxu0 0.0
    %2004 = vmatprep.subr.mxu0 0.0
    %2005 = vmatpush1.msra.mxu0 0.0
    %2006 = vmatprep.subr.mxu0 0.0
    %2007 = vmatpush1.msra.mxu0 0.0
    %2008 = vmatprep.subr.mxu0 0.0
    %2009 = vmatpush1.msra.mxu0 0.0
    %2010 = vmatprep.subr.mxu0 0.0
    %2011 = vmatpush1.msra.mxu0 0.0
    %2012 = vmatprep.subr.mxu0 0.0
    %2013 = vmatpush1.msra.mxu0 0.0
    %2014 = vmatprep.subr.mxu0 0.0
    %2015 = vmatpush1.msra.mxu0 0.0
    %2016 = vmatprep.subr.mxu0 0.0
    %2017 = vmatpush1.msra.mxu0 0.0
    %2018 = vmatprep.subr.mxu0 0.0
    %2019 = vmatpush1.msra.mxu0 0.0
    %2020 = vmatprep.subr.mxu0 0.0
    %2021 = vmatpush1.msra.mxu0 0.0
    %2022 = vmatprep.mubr.f32.mxu0 0.0
    %2023 = vmatmul.mubr.f32.gmra.mrb[0].mxu0 %v1956
    %v2024 = vpop.f32.mrb[0].mxu0
    %v2025 = vadd.f32 %v311, %v2024
    %v2026 = vpop.f32.mrb[0].mxu0
    %v2027 = vadd.f32 %v315, %v2026
    %2028 = vdwg.mxu0
    %2029 = vmatprep.subr.mxu0 0.0
    %2030 = vmatpush1.msra.mxu0 %v268
    %2031 = vmatprep.subr.mxu0 0.0
    %2032 = vmatpush1.msra.mxu0 %v271
    %2033 = vmatprep.subr.mxu0 0.0
    %2034 = vmatpush1.msra.mxu0 %v274
    %2035 = vmatprep.subr.mxu0 0.0
    %2036 = vmatpush1.msra.mxu0 %v277
    %2037 = vmatprep.subr.mxu0 0.0
    %2038 = vmatpush1.msra.mxu0 0.0
    %2039 = vmatprep.subr.mxu0 0.0
    %2040 = vmatpush1.msra.mxu0 0.0
    %2041 = vmatprep.subr.mxu0 0.0
    %2042 = vmatpush1.msra.mxu0 0.0
    %2043 = vmatprep.subr.mxu0 0.0
    %2044 = vmatpush1.msra.mxu0 0.0
    %2045 = vmatprep.subr.mxu0 0.0
    %2046 = vmatpush1.msra.mxu0 0.0
    %2047 = vmatprep.subr.mxu0 0.0
    %2048 = vmatpush1.msra.mxu0 0.0
    %2049 = vmatprep.subr.mxu0 0.0
    %2050 = vmatpush1.msra.mxu0 0.0
    %2051 = vmatprep.subr.mxu0 0.0
    %2052 = vmatpush1.msra.mxu0 0.0
    %2053 = vmatprep.subr.mxu0 0.0
    %2054 = vmatpush1.msra.mxu0 0.0
    %2055 = vmatprep.subr.mxu0 0.0
    %2056 = vmatpush1.msra.mxu0 0.0
    %2057 = vmatprep.subr.mxu0 0.0
    %2058 = vmatpush1.msra.mxu0 0.0
    %2059 = vmatprep.subr.mxu0 0.0
    %2060 = vmatpush1.msra.mxu0 0.0
    %2061 = vmatprep.subr.mxu0 0.0
    %2062 = vmatpush1.msra.mxu0 0.0
    %2063 = vmatprep.subr.mxu0 0.0
    %2064 = vmatpush1.msra.mxu0 0.0
    %2065 = vmatprep.subr.mxu0 0.0
    %2066 = vmatpush1.msra.mxu0 0.0
    %2067 = vmatprep.subr.mxu0 0.0
    %2068 = vmatpush1.msra.mxu0 0.0
    %2069 = vmatprep.subr.mxu0 0.0
    %2070 = vmatpush1.msra.mxu0 0.0
    %2071 = vmatprep.subr.mxu0 0.0
    %2072 = vmatpush1.msra.mxu0 0.0
    %2073 = vmatprep.subr.mxu0 0.0
    %2074 = vmatpush1.msra.mxu0 0.0
    %2075 = vmatprep.subr.mxu0 0.0
    %2076 = vmatpush1.msra.mxu0 0.0
    %2077 = vmatprep.subr.mxu0 0.0
    %2078 = vmatpush1.msra.mxu0 0.0
    %2079 = vmatprep.subr.mxu0 0.0
    %2080 = vmatpush1.msra.mxu0 0.0
    %2081 = vmatprep.subr.mxu0 0.0
    %2082 = vmatpush1.msra.mxu0 0.0
    %2083 = vmatprep.subr.mxu0 0.0
    %2084 = vmatpush1.msra.mxu0 0.0
    %2085 = vmatprep.subr.mxu0 0.0
    %2086 = vmatpush1.msra.mxu0 0.0
    %2087 = vmatprep.subr.mxu0 0.0
    %2088 = vmatpush1.msra.mxu0 0.0
    %2089 = vmatprep.subr.mxu0 0.0
    %2090 = vmatpush1.msra.mxu0 0.0
    %2091 = vmatprep.subr.mxu0 0.0
    %2092 = vmatpush1.msra.mxu0 0.0
    %2093 = vmatprep.mubr.f32.mxu0 0.0
    %2094 = vmatmul.mubr.f32.gmra.mrb[0].mxu0 %v1956
    %v2095 = vpop.f32.mrb[0].mxu0
    %v2096 = vadd.f32 %v319, %v2095
    %v2097 = vpop.f32.mrb[0].mxu0
    %2098 = vdwg.mxu0
    %2099 = vmatprep.subr.mxu0 %v279
    %2100 = vmatpush1.msra.mxu0 %v278
    %2101 = vmatprep.subr.mxu0 %v282
    %2102 = vmatpush1.msra.mxu0 %v281
    %2103 = vmatprep.subr.mxu0 %v285
    %2104 = vmatpush1.msra.mxu0 %v284
    %2105 = vmatprep.subr.mxu0 %v288
    %2106 = vmatpush1.msra.mxu0 %v287
    %2107 = vmatprep.subr.mxu0 0.0
    %2108 = vmatpush1.msra.mxu0 0.0
    %2109 = vmatprep.subr.mxu0 0.0
    %2110 = vmatpush1.msra.mxu0 0.0
    %2111 = vmatprep.subr.mxu0 0.0
    %2112 = vmatpush1.msra.mxu0 0.0
    %2113 = vmatprep.subr.mxu0 0.0
    %2114 = vmatpush1.msra.mxu0 0.0
    %2115 = vmatprep.subr.mxu0 0.0
    %2116 = vmatpush1.msra.mxu0 0.0
    %2117 = vmatprep.subr.mxu0 0.0
    %2118 = vmatpush1.msra.mxu0 0.0
    %2119 = vmatprep.subr.mxu0 0.0
    %2120 = vmatpush1.msra.mxu0 0.0
    %2121 = vmatprep.subr.mxu0 0.0
    %2122 = vmatpush1.msra.mxu0 0.0
    %2123 = vmatprep.subr.mxu0 0.0
    %2124 = vmatpush1.msra.mxu0 0.0
    %2125 = vmatprep.subr.mxu0 0.0
    %2126 = vmatpush1.msra.mxu0 0.0
    %2127 = vmatprep.subr.mxu0 0.0
    %2128 = vmatpush1.msra.mxu0 0.0
    %2129 = vmatprep.subr.mxu0 0.0
    %2130 = vmatpush1.msra.mxu0 0.0
    %2131 = vmatprep.subr.mxu0 0.0
    %2132 = vmatpush1.msra.mxu0 0.0
    %2133 = vmatprep.subr.mxu0 0.0
    %2134 = vmatpush1.msra.mxu0 0.0
    %2135 = vmatprep.subr.mxu0 0.0
    %2136 = vmatpush1.msra.mxu0 0.0
    %2137 = vmatprep.subr.mxu0 0.0
    %2138 = vmatpush1.msra.mxu0 0.0
    %2139 = vmatprep.subr.mxu0 0.0
    %2140 = vmatpush1.msra.mxu0 0.0
    %2141 = vmatprep.subr.mxu0 0.0
    %2142 = vmatpush1.msra.mxu0 0.0
    %2143 = vmatprep.subr.mxu0 0.0
    %2144 = vmatpush1.msra.mxu0 0.0
    %2145 = vmatprep.subr.mxu0 0.0
    %2146 = vmatpush1.msra.mxu0 0.0
    %2147 = vmatprep.subr.mxu0 0.0
    %2148 = vmatpush1.msra.mxu0 0.0
    %2149 = vmatprep.subr.mxu0 0.0
    %2150 = vmatpush1.msra.mxu0 0.0
    %2151 = vmatprep.subr.mxu0 0.0
    %2152 = vmatpush1.msra.mxu0 0.0
    %2153 = vmatprep.subr.mxu0 0.0
    %2154 = vmatpush1.msra.mxu0 0.0
    %2155 = vmatprep.subr.mxu0 0.0
    %2156 = vmatpush1.msra.mxu0 0.0
    %2157 = vmatprep.subr.mxu0 0.0
    %2158 = vmatpush1.msra.mxu0 0.0
    %2159 = vmatprep.subr.mxu0 0.0
    %2160 = vmatpush1.msra.mxu0 0.0
    %2161 = vmatprep.subr.mxu0 0.0
    %2162 = vmatpush1.msra.mxu0 0.0
    %2163 = vmatprep.mubr.f32.mxu0 0.0
    %2164 = vmatmul.mubr.f32.gmra.mrb[0].mxu0 %v1956
    %v2165 = vpop.f32.mrb[0].mxu0
    %v2166 = vadd.f32 %v643, %v2165
    %v2167 = vpop.f32.mrb[0].mxu0
    %v2168 = vadd.f32 %v647, %v2167
    %2169 = vdwg.mxu0
    %2170 = vmatprep.subr.mxu0 0.0
    %2171 = vmatpush1.msra.mxu0 %v280
    %2172 = vmatprep.subr.mxu0 0.0
    %2173 = vmatpush1.msra.mxu0 %v283
    %2174 = vmatprep.subr.mxu0 0.0
    %2175 = vmatpush1.msra.mxu0 %v286
    %2176 = vmatprep.subr.mxu0 0.0
    %2177 = vmatpush1.msra.mxu0 %v289
    %2178 = vmatprep.subr.mxu0 0.0
    %2179 = vmatpush1.msra.mxu0 0.0
    %2180 = vmatprep.subr.mxu0 0.0
    %2181 = vmatpush1.msra.mxu0 0.0
    %2182 = vmatprep.subr.mxu0 0.0
    %2183 = vmatpush1.msra.mxu0 0.0
    %2184 = vmatprep.subr.mxu0 0.0
    %2185 = vmatpush1.msra.mxu0 0.0
    %2186 = vmatprep.subr.mxu0 0.0
    %2187 = vmatpush1.msra.mxu0 0.0
    %2188 = vmatprep.subr.mxu0 0.0
    %2189 = vmatpush1.msra.mxu0 0.0
    %2190 = vmatprep.subr.mxu0 0.0
    %2191 = vmatpush1.msra.mxu0 0.0
    %2192 = vmatprep.subr.mxu0 0.0
    %2193 = vmatpush1.msra.mxu0 0.0
    %2194 = vmatprep.subr.mxu0 0.0
    %2195 = vmatpush1.msra.mxu0 0.0
    %2196 = vmatprep.subr.mxu0 0.0
    %2197 = vmatpush1.msra.mxu0 0.0
    %2198 = vmatprep.subr.mxu0 0.0
    %2199 = vmatpush1.msra.mxu0 0.0
    %2200 = vmatprep.subr.mxu0 0.0
    %2201 = vmatpush1.msra.mxu0 0.0
    %2202 = vmatprep.subr.mxu0 0.0
    %2203 = vmatpush1.msra.mxu0 0.0
    %2204 = vmatprep.subr.mxu0 0.0
    %2205 = vmatpush1.msra.mxu0 0.0
    %2206 = vmatprep.subr.mxu0 0.0
    %2207 = vmatpush1.msra.mxu0 0.0
    %2208 = vmatprep.subr.mxu0 0.0
    %2209 = vmatpush1.msra.mxu0 0.0
    %2210 = vmatprep.subr.mxu0 0.0
    %2211 = vmatpush1.msra.mxu0 0.0
    %2212 = vmatprep.subr.mxu0 0.0
    %2213 = vmatpush1.msra.mxu0 0.0
    %2214 = vmatprep.subr.mxu0 0.0
    %2215 = vmatpush1.msra.mxu0 0.0
    %2216 = vmatprep.subr.mxu0 0.0
    %2217 = vmatpush1.msra.mxu0 0.0
    %2218 = vmatprep.subr.mxu0 0.0
    %2219 = vmatpush1.msra.mxu0 0.0
    %2220 = vmatprep.subr.mxu0 0.0
    %2221 = vmatpush1.msra.mxu0 0.0
    %2222 = vmatprep.subr.mxu0 0.0
    %2223 = vmatpush1.msra.mxu0 0.0
    %2224 = vmatprep.subr.mxu0 0.0
    %2225 = vmatpush1.msra.mxu0 0.0
    %2226 = vmatprep.subr.mxu0 0.0
    %2227 = vmatpush1.msra.mxu0 0.0
    %2228 = vmatprep.subr.mxu0 0.0
    %2229 = vmatpush1.msra.mxu0 0.0
    %2230 = vmatprep.subr.mxu0 0.0
    %2231 = vmatpush1.msra.mxu0 0.0
    %2232 = vmatprep.subr.mxu0 0.0
    %2233 = vmatpush1.msra.mxu0 0.0
    %2234 = vmatprep.mubr.f32.mxu0 0.0
    %2235 = vmatmul.mubr.f32.gmra.mrb[0].mxu0 %v1956
    %v2236 = vpop.f32.mrb[0].mxu0
    %v2237 = vadd.f32 %v651, %v2236
    %v2238 = vpop.f32.mrb[0].mxu0
    %2239 = vdwg.mxu0
    %v2241 = vsel %vm323, %v1954, 0
    %2243 = vmatprep.subr.mxu0 %v291
    %2244 = vmatpush1.msra.mxu0 %v290
    %2245 = vmatprep.subr.mxu0 %v294
    %2246 = vmatpush1.msra.mxu0 %v293
    %2247 = vmatprep.subr.mxu0 %v297
    %2248 = vmatpush1.msra.mxu0 %v296
    %2249 = vmatprep.subr.mxu0 %v300
    %2250 = vmatpush1.msra.mxu0 %v299
    %2251 = vmatprep.subr.mxu0 0.0
    %2252 = vmatpush1.msra.mxu0 0.0
    %2253 = vmatprep.subr.mxu0 0.0
    %2254 = vmatpush1.msra.mxu0 0.0
    %2255 = vmatprep.subr.mxu0 0.0
    %2256 = vmatpush1.msra.mxu0 0.0
    %2257 = vmatprep.subr.mxu0 0.0
    %2258 = vmatpush1.msra.mxu0 0.0
    %2259 = vmatprep.subr.mxu0 0.0
    %2260 = vmatpush1.msra.mxu0 0.0
    %2261 = vmatprep.subr.mxu0 0.0
    %2262 = vmatpush1.msra.mxu0 0.0
    %2263 = vmatprep.subr.mxu0 0.0
    %2264 = vmatpush1.msra.mxu0 0.0
    %2265 = vmatprep.subr.mxu0 0.0
    %2266 = vmatpush1.msra.mxu0 0.0
    %2267 = vmatprep.subr.mxu0 0.0
    %2268 = vmatpush1.msra.mxu0 0.0
    %2269 = vmatprep.subr.mxu0 0.0
    %2270 = vmatpush1.msra.mxu0 0.0
    %2271 = vmatprep.subr.mxu0 0.0
    %2272 = vmatpush1.msra.mxu0 0.0
    %2273 = vmatprep.subr.mxu0 0.0
    %2274 = vmatpush1.msra.mxu0 0.0
    %2275 = vmatprep.subr.mxu0 0.0
    %2276 = vmatpush1.msra.mxu0 0.0
    %2277 = vmatprep.subr.mxu0 0.0
    %2278 = vmatpush1.msra.mxu0 0.0
    %2279 = vmatprep.subr.mxu0 0.0
    %2280 = vmatpush1.msra.mxu0 0.0
    %2281 = vmatprep.subr.mxu0 0.0
    %2282 = vmatpush1.msra.mxu0 0.0
    %2283 = vmatprep.subr.mxu0 0.0
    %2284 = vmatpush1.msra.mxu0 0.0
    %2285 = vmatprep.subr.mxu0 0.0
    %2286 = vmatpush1.msra.mxu0 0.0
    %2287 = vmatprep.subr.mxu0 0.0
    %2288 = vmatpush1.msra.mxu0 0.0
    %2289 = vmatprep.subr.mxu0 0.0
    %2290 = vmatpush1.msra.mxu0 0.0
    %2291 = vmatprep.subr.mxu0 0.0
    %2292 = vmatpush1.msra.mxu0 0.0
    %2293 = vmatprep.subr.mxu0 0.0
    %2294 = vmatpush1.msra.mxu0 0.0
    %2295 = vmatprep.subr.mxu0 0.0
    %2296 = vmatpush1.msra.mxu0 0.0
    %2297 = vmatprep.subr.mxu0 0.0
    %2298 = vmatpush1.msra.mxu0 0.0
    %2299 = vmatprep.subr.mxu0 0.0
    %2300 = vmatpush1.msra.mxu0 0.0
    %2301 = vmatprep.subr.mxu0 0.0
    %2302 = vmatpush1.msra.mxu0 0.0
    %2303 = vmatprep.subr.mxu0 0.0
    %2304 = vmatpush1.msra.mxu0 0.0
    %2305 = vmatprep.subr.mxu0 0.0
    %2306 = vmatpush1.msra.mxu0 0.0
    %2307 = vmatprep.mubr.f32.mxu0 0.0
    %2308 = vmatmul.mubr.f32.gmra.mrb[0].mxu0 %v2241
    %v2309 = vpop.f32.mrb[0].mxu0
    %v2310 = vadd.f32 %v800, %v2309
    %v2311 = vpop.f32.mrb[0].mxu0
    %v2312 = vadd.f32 %v804, %v2311
    %2313 = vdwg.mxu0
    %2314 = vmatprep.subr.mxu0 0.0
    %2315 = vmatpush1.msra.mxu0 %v292
    %2316 = vmatprep.subr.mxu0 0.0
    %2317 = vmatpush1.msra.mxu0 %v295
    %2318 = vmatprep.subr.mxu0 0.0
    %2319 = vmatpush1.msra.mxu0 %v298
    %2320 = vmatprep.subr.mxu0 0.0
    %2321 = vmatpush1.msra.mxu0 %v301
    %2322 = vmatprep.subr.mxu0 0.0
    %2323 = vmatpush1.msra.mxu0 0.0
    %2324 = vmatprep.subr.mxu0 0.0
    %2325 = vmatpush1.msra.mxu0 0.0
    %2326 = vmatprep.subr.mxu0 0.0
    %2327 = vmatpush1.msra.mxu0 0.0
    %2328 = vmatprep.subr.mxu0 0.0
    %2329 = vmatpush1.msra.mxu0 0.0
    %2330 = vmatprep.subr.mxu0 0.0
    %2331 = vmatpush1.msra.mxu0 0.0
    %2332 = vmatprep.subr.mxu0 0.0
    %2333 = vmatpush1.msra.mxu0 0.0
    %2334 = vmatprep.subr.mxu0 0.0
    %2335 = vmatpush1.msra.mxu0 0.0
    %2336 = vmatprep.subr.mxu0 0.0
    %2337 = vmatpush1.msra.mxu0 0.0
    %2338 = vmatprep.subr.mxu0 0.0
    %2339 = vmatpush1.msra.mxu0 0.0
    %2340 = vmatprep.subr.mxu0 0.0
    %2341 = vmatpush1.msra.mxu0 0.0
    %2342 = vmatprep.subr.mxu0 0.0
    %2343 = vmatpush1.msra.mxu0 0.0
    %2344 = vmatprep.subr.mxu0 0.0
    %2345 = vmatpush1.msra.mxu0 0.0
    %2346 = vmatprep.subr.mxu0 0.0
    %2347 = vmatpush1.msra.mxu0 0.0
    %2348 = vmatprep.subr.mxu0 0.0
    %2349 = vmatpush1.msra.mxu0 0.0
    %2350 = vmatprep.subr.mxu0 0.0
    %2351 = vmatpush1.msra.mxu0 0.0
    %2352 = vmatprep.subr.mxu0 0.0
    %2353 = vmatpush1.msra.mxu0 0.0
    %2354 = vmatprep.subr.mxu0 0.0
    %2355 = vmatpush1.msra.mxu0 0.0
    %2356 = vmatprep.subr.mxu0 0.0
    %2357 = vmatpush1.msra.mxu0 0.0
    %2358 = vmatprep.subr.mxu0 0.0
    %2359 = vmatpush1.msra.mxu0 0.0
    %2360 = vmatprep.subr.mxu0 0.0
    %2361 = vmatpush1.msra.mxu0 0.0
    %2362 = vmatprep.subr.mxu0 0.0
    %2363 = vmatpush1.msra.mxu0 0.0
    %2364 = vmatprep.subr.mxu0 0.0
    %2365 = vmatpush1.msra.mxu0 0.0
    %2366 = vmatprep.subr.mxu0 0.0
    %2367 = vmatpush1.msra.mxu0 0.0
    %2368 = vmatprep.subr.mxu0 0.0
    %2369 = vmatpush1.msra.mxu0 0.0
    %2370 = vmatprep.subr.mxu0 0.0
    %2371 = vmatpush1.msra.mxu0 0.0
    %2372 = vmatprep.subr.mxu0 0.0
    %2373 = vmatpush1.msra.mxu0 0.0
    %2374 = vmatprep.subr.mxu0 0.0
    %2375 = vmatpush1.msra.mxu0 0.0
    %2376 = vmatprep.subr.mxu0 0.0
    %2377 = vmatpush1.msra.mxu0 0.0
    %2378 = vmatprep.mubr.f32.mxu0 0.0
    %2379 = vmatmul.mubr.f32.gmra.mrb[0].mxu0 %v2241
    %v2380 = vpop.f32.mrb[0].mxu0
    %v2381 = vadd.f32 %v808, %v2380
    %v2382 = vpop.f32.mrb[0].mxu0
    %2383 = vdwg.mxu0
    %v2384 = vld [vmem:[%s180] sm:$0x3f]
    %v2385 = vadd.f32 %v2384, %v2025
    %v2386 = vxor.u32 %v2385, 2147483648
    %v2387 = vmul.f32 %v2386, 1.442695
    %v2388 = vpow.pop %v2387
    %v2389 = vadd.f32 %v2388, 1.0
    %v2390 = vrcp.pop %v2389
    %v2391 = vmul.f32 1.0, %v2390
    %v2393 = vrot.slane %v2384, 2
    %v2395 = vadd.f32 %v2393, %v2027
    %v2396 = vxor.u32 %v2395, 2147483648
    %v2397 = vmul.f32 %v2396, 1.442695
    %v2398 = vpow.pop %v2397
    %v2399 = vadd.f32 %v2398, 1.0
    %v2400 = vrcp.pop %v2399
    %v2401 = vmul.f32 1.0, %v2400
    %v2402 = vmul.f32 %v2391, %v2096
    %v2403 = vrot.slane %v2384, 4
    %v2405 = vadd.f32 %v2403, %v2402
    %v2406 = vtanh.pop %v2405
    %v2407 = vsub.f32 1.0, %v2401
    %v2408 = vmul.f32 %v2407, %v2406
    %v2409 = vmul.f32 %v2401, %v1933
    %v2410 = vadd.f32 %v2408, %v2409
    %v2411 = vadd.f32 %v2166, %v2310
    %v2412 = vxor.u32 %v2411, 2147483648
    %v2413 = vmul.f32 %v2412, 1.442695
    %v2414 = vpow.pop %v2413
    %v2415 = vadd.f32 %v2414, 1.0
    %v2416 = vrcp.pop %v2415
    %v2417 = vmul.f32 1.0, %v2416
    %v2418 = vadd.f32 %v2168, %v2312
    %v2419 = vxor.u32 %v2418, 2147483648
    %v2420 = vmul.f32 %v2419, 1.442695
    %v2421 = vpow.pop %v2420
    %v2422 = vadd.f32 %v2421, 1.0
    %v2423 = vrcp.pop %v2422
    %v2424 = vmul.f32 1.0, %v2423
    %v2425 = vmul.f32 %v2417, %v2381
    %v2426 = vadd.f32 %v2237, %v2425
    %v2427 = vtanh.pop %v2426
    %v2428 = vsub.f32 1.0, %v2424
    %v2429 = vmul.f32 %v2428, %v2427
    %v2430 = vmul.f32 %v2424, %v1954
    %v2431 = vadd.f32 %v2429, %v2430
    %v2433 = vsel %vm323, %v2410, 0
    %2435 = vmatprep.subr.mxu0 %v267
    %2436 = vmatpush1.msra.mxu0 %v266
    %2437 = vmatprep.subr.mxu0 %v270
    %2438 = vmatpush1.msra.mxu0 %v269
    %2439 = vmatprep.subr.mxu0 %v273
    %2440 = vmatpush1.msra.mxu0 %v272
    %2441 = vmatprep.subr.mxu0 %v276
    %2442 = vmatpush1.msra.mxu0 %v275
    %2443 = vmatprep.subr.mxu0 0.0
    %2444 = vmatpush1.msra.mxu0 0.0
    %2445 = vmatprep.subr.mxu0 0.0
    %2446 = vmatpush1.msra.mxu0 0.0
    %2447 = vmatprep.subr.mxu0 0.0
    %2448 = vmatpush1.msra.mxu0 0.0
    %2449 = vmatprep.subr.mxu0 0.0
    %2450 = vmatpush1.msra.mxu0 0.0
    %2451 = vmatprep.subr.mxu0 0.0
    %2452 = vmatpush1.msra.mxu0 0.0
    %2453 = vmatprep.subr.mxu0 0.0
    %2454 = vmatpush1.msra.mxu0 0.0
    %2455 = vmatprep.subr.mxu0 0.0
    %2456 = vmatpush1.msra.mxu0 0.0
    %2457 = vmatprep.subr.mxu0 0.0
    %2458 = vmatpush1.msra.mxu0 0.0
    %2459 = vmatprep.subr.mxu0 0.0
    %2460 = vmatpush1.msra.mxu0 0.0
    %2461 = vmatprep.subr.mxu0 0.0
    %2462 = vmatpush1.msra.mxu0 0.0
    %2463 = vmatprep.subr.mxu0 0.0
    %2464 = vmatpush1.msra.mxu0 0.0
    %2465 = vmatprep.subr.mxu0 0.0
    %2466 = vmatpush1.msra.mxu0 0.0
    %2467 = vmatprep.subr.mxu0 0.0
    %2468 = vmatpush1.msra.mxu0 0.0
    %2469 = vmatprep.subr.mxu0 0.0
    %2470 = vmatpush1.msra.mxu0 0.0
    %2471 = vmatprep.subr.mxu0 0.0
    %2472 = vmatpush1.msra.mxu0 0.0
    %2473 = vmatprep.subr.mxu0 0.0
    %2474 = vmatpush1.msra.mxu0 0.0
    %2475 = vmatprep.subr.mxu0 0.0
    %2476 = vmatpush1.msra.mxu0 0.0
    %2477 = vmatprep.subr.mxu0 0.0
    %2478 = vmatpush1.msra.mxu0 0.0
    %2479 = vmatprep.subr.mxu0 0.0
    %2480 = vmatpush1.msra.mxu0 0.0
    %2481 = vmatprep.subr.mxu0 0.0
    %2482 = vmatpush1.msra.mxu0 0.0
    %2483 = vmatprep.subr.mxu0 0.0
    %2484 = vmatpush1.msra.mxu0 0.0
    %2485 = vmatprep.subr.mxu0 0.0
    %2486 = vmatpush1.msra.mxu0 0.0
    %2487 = vmatprep.subr.mxu0 0.0
    %2488 = vmatpush1.msra.mxu0 0.0
    %2489 = vmatprep.subr.mxu0 0.0
    %2490 = vmatpush1.msra.mxu0 0.0
    %2491 = vmatprep.subr.mxu0 0.0
    %2492 = vmatpush1.msra.mxu0 0.0
    %2493 = vmatprep.subr.mxu0 0.0
    %2494 = vmatpush1.msra.mxu0 0.0
    %2495 = vmatprep.subr.mxu0 0.0
    %2496 = vmatpush1.msra.mxu0 0.0
    %2497 = vmatprep.subr.mxu0 0.0
    %2498 = vmatpush1.msra.mxu0 0.0
    %2499 = vmatprep.mubr.f32.mxu0 0.0
    %2500 = vmatmul.mubr.f32.gmra.mrb[0].mxu0 %v2433
    %v2501 = vpop.f32.mrb[0].mxu0
    %v2502 = vadd.f32 %v311, %v2501
    %v2503 = vpop.f32.mrb[0].mxu0
    %v2504 = vadd.f32 %v315, %v2503
    %2505 = vdwg.mxu0
    %2506 = vmatprep.subr.mxu0 0.0
    %2507 = vmatpush1.msra.mxu0 %v268
    %2508 = vmatprep.subr.mxu0 0.0
    %2509 = vmatpush1.msra.mxu0 %v271
    %2510 = vmatprep.subr.mxu0 0.0
    %2511 = vmatpush1.msra.mxu0 %v274
    %2512 = vmatprep.subr.mxu0 0.0
    %2513 = vmatpush1.msra.mxu0 %v277
    %2514 = vmatprep.subr.mxu0 0.0
    %2515 = vmatpush1.msra.mxu0 0.0
    %2516 = vmatprep.subr.mxu0 0.0
    %2517 = vmatpush1.msra.mxu0 0.0
    %2518 = vmatprep.subr.mxu0 0.0
    %2519 = vmatpush1.msra.mxu0 0.0
    %2520 = vmatprep.subr.mxu0 0.0
    %2521 = vmatpush1.msra.mxu0 0.0
    %2522 = vmatprep.subr.mxu0 0.0
    %2523 = vmatpush1.msra.mxu0 0.0
    %2524 = vmatprep.subr.mxu0 0.0
    %2525 = vmatpush1.msra.mxu0 0.0
    %2526 = vmatprep.subr.mxu0 0.0
    %2527 = vmatpush1.msra.mxu0 0.0
    %2528 = vmatprep.subr.mxu0 0.0
    %2529 = vmatpush1.msra.mxu0 0.0
    %2530 = vmatprep.subr.mxu0 0.0
    %2531 = vmatpush1.msra.mxu0 0.0
    %2532 = vmatprep.subr.mxu0 0.0
    %2533 = vmatpush1.msra.mxu0 0.0
    %2534 = vmatprep.subr.mxu0 0.0
    %2535 = vmatpush1.msra.mxu0 0.0
    %2536 = vmatprep.subr.mxu0 0.0
    %2537 = vmatpush1.msra.mxu0 0.0
    %2538 = vmatprep.subr.mxu0 0.0
    %2539 = vmatpush1.msra.mxu0 0.0
    %2540 = vmatprep.subr.mxu0 0.0
    %2541 = vmatpush1.msra.mxu0 0.0
    %2542 = vmatprep.subr.mxu0 0.0
    %2543 = vmatpush1.msra.mxu0 0.0
    %2544 = vmatprep.subr.mxu0 0.0
    %2545 = vmatpush1.msra.mxu0 0.0
    %2546 = vmatprep.subr.mxu0 0.0
    %2547 = vmatpush1.msra.mxu0 0.0
    %2548 = vmatprep.subr.mxu0 0.0
    %2549 = vmatpush1.msra.mxu0 0.0
    %2550 = vmatprep.subr.mxu0 0.0
    %2551 = vmatpush1.msra.mxu0 0.0
    %2552 = vmatprep.subr.mxu0 0.0
    %2553 = vmatpush1.msra.mxu0 0.0
    %2554 = vmatprep.subr.mxu0 0.0
    %2555 = vmatpush1.msra.mxu0 0.0
    %2556 = vmatprep.subr.mxu0 0.0
    %2557 = vmatpush1.msra.mxu0 0.0
    %2558 = vmatprep.subr.mxu0 0.0
    %2559 = vmatpush1.msra.mxu0 0.0
    %2560 = vmatprep.subr.mxu0 0.0
    %2561 = vmatpush1.msra.mxu0 0.0
    %2562 = vmatprep.subr.mxu0 0.0
    %2563 = vmatpush1.msra.mxu0 0.0
    %2564 = vmatprep.subr.mxu0 0.0
    %2565 = vmatpush1.msra.mxu0 0.0
    %2566 = vmatprep.subr.mxu0 0.0
    %2567 = vmatpush1.msra.mxu0 0.0
    %2568 = vmatprep.subr.mxu0 0.0
    %2569 = vmatpush1.msra.mxu0 0.0
    %2570 = vmatprep.mubr.f32.mxu0 0.0
    %2571 = vmatmul.mubr.f32.gmra.mrb[0].mxu0 %v2433
    %v2572 = vpop.f32.mrb[0].mxu0
    %v2573 = vadd.f32 %v319, %v2572
    %v2574 = vpop.f32.mrb[0].mxu0
    %2575 = vdwg.mxu0
    %2576 = vmatprep.subr.mxu0 %v279
    %2577 = vmatpush1.msra.mxu0 %v278
    %2578 = vmatprep.subr.mxu0 %v282
    %2579 = vmatpush1.msra.mxu0 %v281
    %2580 = vmatprep.subr.mxu0 %v285
    %2581 = vmatpush1.msra.mxu0 %v284
    %2582 = vmatprep.subr.mxu0 %v288
    %2583 = vmatpush1.msra.mxu0 %v287
    %2584 = vmatprep.subr.mxu0 0.0
    %2585 = vmatpush1.msra.mxu0 0.0
    %2586 = vmatprep.subr.mxu0 0.0
    %2587 = vmatpush1.msra.mxu0 0.0
    %2588 = vmatprep.subr.mxu0 0.0
    %2589 = vmatpush1.msra.mxu0 0.0
    %2590 = vmatprep.subr.mxu0 0.0
    %2591 = vmatpush1.msra.mxu0 0.0
    %2592 = vmatprep.subr.mxu0 0.0
    %2593 = vmatpush1.msra.mxu0 0.0
    %2594 = vmatprep.subr.mxu0 0.0
    %2595 = vmatpush1.msra.mxu0 0.0
    %2596 = vmatprep.subr.mxu0 0.0
    %2597 = vmatpush1.msra.mxu0 0.0
    %2598 = vmatprep.subr.mxu0 0.0
    %2599 = vmatpush1.msra.mxu0 0.0
    %2600 = vmatprep.subr.mxu0 0.0
    %2601 = vmatpush1.msra.mxu0 0.0
    %2602 = vmatprep.subr.mxu0 0.0
    %2603 = vmatpush1.msra.mxu0 0.0
    %2604 = vmatprep.subr.mxu0 0.0
    %2605 = vmatpush1.msra.mxu0 0.0
    %2606 = vmatprep.subr.mxu0 0.0
    %2607 = vmatpush1.msra.mxu0 0.0
    %2608 = vmatprep.subr.mxu0 0.0
    %2609 = vmatpush1.msra.mxu0 0.0
    %2610 = vmatprep.subr.mxu0 0.0
    %2611 = vmatpush1.msra.mxu0 0.0
    %2612 = vmatprep.subr.mxu0 0.0
    %2613 = vmatpush1.msra.mxu0 0.0
    %2614 = vmatprep.subr.mxu0 0.0
    %2615 = vmatpush1.msra.mxu0 0.0
    %2616 = vmatprep.subr.mxu0 0.0
    %2617 = vmatpush1.msra.mxu0 0.0
    %2618 = vmatprep.subr.mxu0 0.0
    %2619 = vmatpush1.msra.mxu0 0.0
    %2620 = vmatprep.subr.mxu0 0.0
    %2621 = vmatpush1.msra.mxu0 0.0
    %2622 = vmatprep.subr.mxu0 0.0
    %2623 = vmatpush1.msra.mxu0 0.0
    %2624 = vmatprep.subr.mxu0 0.0
    %2625 = vmatpush1.msra.mxu0 0.0
    %2626 = vmatprep.subr.mxu0 0.0
    %2627 = vmatpush1.msra.mxu0 0.0
    %2628 = vmatprep.subr.mxu0 0.0
    %2629 = vmatpush1.msra.mxu0 0.0
    %2630 = vmatprep.subr.mxu0 0.0
    %2631 = vmatpush1.msra.mxu0 0.0
    %2632 = vmatprep.subr.mxu0 0.0
    %2633 = vmatpush1.msra.mxu0 0.0
    %2634 = vmatprep.subr.mxu0 0.0
    %2635 = vmatpush1.msra.mxu0 0.0
    %2636 = vmatprep.subr.mxu0 0.0
    %2637 = vmatpush1.msra.mxu0 0.0
    %2638 = vmatprep.subr.mxu0 0.0
    %2639 = vmatpush1.msra.mxu0 0.0
    %2640 = vmatprep.mubr.f32.mxu0 0.0
    %2641 = vmatmul.mubr.f32.gmra.mrb[0].mxu0 %v2433
    %v2642 = vpop.f32.mrb[0].mxu0
    %v2643 = vadd.f32 %v643, %v2642
    %v2644 = vpop.f32.mrb[0].mxu0
    %v2645 = vadd.f32 %v647, %v2644
    %2646 = vdwg.mxu0
    %2647 = vmatprep.subr.mxu0 0.0
    %2648 = vmatpush1.msra.mxu0 %v280
    %2649 = vmatprep.subr.mxu0 0.0
    %2650 = vmatpush1.msra.mxu0 %v283
    %2651 = vmatprep.subr.mxu0 0.0
    %2652 = vmatpush1.msra.mxu0 %v286
    %2653 = vmatprep.subr.mxu0 0.0
    %2654 = vmatpush1.msra.mxu0 %v289
    %2655 = vmatprep.subr.mxu0 0.0
    %2656 = vmatpush1.msra.mxu0 0.0
    %2657 = vmatprep.subr.mxu0 0.0
    %2658 = vmatpush1.msra.mxu0 0.0
    %2659 = vmatprep.subr.mxu0 0.0
    %2660 = vmatpush1.msra.mxu0 0.0
    %2661 = vmatprep.subr.mxu0 0.0
    %2662 = vmatpush1.msra.mxu0 0.0
    %2663 = vmatprep.subr.mxu0 0.0
    %2664 = vmatpush1.msra.mxu0 0.0
    %2665 = vmatprep.subr.mxu0 0.0
    %2666 = vmatpush1.msra.mxu0 0.0
    %2667 = vmatprep.subr.mxu0 0.0
    %2668 = vmatpush1.msra.mxu0 0.0
    %2669 = vmatprep.subr.mxu0 0.0
    %2670 = vmatpush1.msra.mxu0 0.0
    %2671 = vmatprep.subr.mxu0 0.0
    %2672 = vmatpush1.msra.mxu0 0.0
    %2673 = vmatprep.subr.mxu0 0.0
    %2674 = vmatpush1.msra.mxu0 0.0
    %2675 = vmatprep.subr.mxu0 0.0
    %2676 = vmatpush1.msra.mxu0 0.0
    %2677 = vmatprep.subr.mxu0 0.0
    %2678 = vmatpush1.msra.mxu0 0.0
    %2679 = vmatprep.subr.mxu0 0.0
    %2680 = vmatpush1.msra.mxu0 0.0
    %2681 = vmatprep.subr.mxu0 0.0
    %2682 = vmatpush1.msra.mxu0 0.0
    %2683 = vmatprep.subr.mxu0 0.0
    %2684 = vmatpush1.msra.mxu0 0.0
    %2685 = vmatprep.subr.mxu0 0.0
    %2686 = vmatpush1.msra.mxu0 0.0
    %2687 = vmatprep.subr.mxu0 0.0
    %2688 = vmatpush1.msra.mxu0 0.0
    %2689 = vmatprep.subr.mxu0 0.0
    %2690 = vmatpush1.msra.mxu0 0.0
    %2691 = vmatprep.subr.mxu0 0.0
    %2692 = vmatpush1.msra.mxu0 0.0
    %2693 = vmatprep.subr.mxu0 0.0
    %2694 = vmatpush1.msra.mxu0 0.0
    %2695 = vmatprep.subr.mxu0 0.0
    %2696 = vmatpush1.msra.mxu0 0.0
    %2697 = vmatprep.subr.mxu0 0.0
    %2698 = vmatpush1.msra.mxu0 0.0
    %2699 = vmatprep.subr.mxu0 0.0
    %2700 = vmatpush1.msra.mxu0 0.0
    %2701 = vmatprep.subr.mxu0 0.0
    %2702 = vmatpush1.msra.mxu0 0.0
    %2703 = vmatprep.subr.mxu0 0.0
    %2704 = vmatpush1.msra.mxu0 0.0
    %2705 = vmatprep.subr.mxu0 0.0
    %2706 = vmatpush1.msra.mxu0 0.0
    %2707 = vmatprep.subr.mxu0 0.0
    %2708 = vmatpush1.msra.mxu0 0.0
    %2709 = vmatprep.subr.mxu0 0.0
    %2710 = vmatpush1.msra.mxu0 0.0
    %2711 = vmatprep.mubr.f32.mxu0 0.0
    %2712 = vmatmul.mubr.f32.gmra.mrb[0].mxu0 %v2433
    %v2713 = vpop.f32.mrb[0].mxu0
    %v2714 = vadd.f32 %v651, %v2713
    %v2715 = vpop.f32.mrb[0].mxu0
    %2716 = vdwg.mxu0
    %v2718 = vsel %vm323, %v2431, 0
    %2720 = vmatprep.subr.mxu0 %v291
    %2721 = vmatpush1.msra.mxu0 %v290
    %2722 = vmatprep.subr.mxu0 %v294
    %2723 = vmatpush1.msra.mxu0 %v293
    %2724 = vmatprep.subr.mxu0 %v297
    %2725 = vmatpush1.msra.mxu0 %v296
    %2726 = vmatprep.subr.mxu0 %v300
    %2727 = vmatpush1.msra.mxu0 %v299
    %2728 = vmatprep.subr.mxu0 0.0
    %2729 = vmatpush1.msra.mxu0 0.0
    %2730 = vmatprep.subr.mxu0 0.0
    %2731 = vmatpush1.msra.mxu0 0.0
    %2732 = vmatprep.subr.mxu0 0.0
    %2733 = vmatpush1.msra.mxu0 0.0
    %2734 = vmatprep.subr.mxu0 0.0
    %2735 = vmatpush1.msra.mxu0 0.0
    %2736 = vmatprep.subr.mxu0 0.0
    %2737 = vmatpush1.msra.mxu0 0.0
    %2738 = vmatprep.subr.mxu0 0.0
    %2739 = vmatpush1.msra.mxu0 0.0
    %2740 = vmatprep.subr.mxu0 0.0
    %2741 = vmatpush1.msra.mxu0 0.0
    %2742 = vmatprep.subr.mxu0 0.0
    %2743 = vmatpush1.msra.mxu0 0.0
    %2744 = vmatprep.subr.mxu0 0.0
    %2745 = vmatpush1.msra.mxu0 0.0
    %2746 = vmatprep.subr.mxu0 0.0
    %2747 = vmatpush1.msra.mxu0 0.0
    %2748 = vmatprep.subr.mxu0 0.0
    %2749 = vmatpush1.msra.mxu0 0.0
    %2750 = vmatprep.subr.mxu0 0.0
    %2751 = vmatpush1.msra.mxu0 0.0
    %2752 = vmatprep.subr.mxu0 0.0
    %2753 = vmatpush1.msra.mxu0 0.0
    %2754 = vmatprep.subr.mxu0 0.0
    %2755 = vmatpush1.msra.mxu0 0.0
    %2756 = vmatprep.subr.mxu0 0.0
    %2757 = vmatpush1.msra.mxu0 0.0
    %2758 = vmatprep.subr.mxu0 0.0
    %2759 = vmatpush1.msra.mxu0 0.0
    %2760 = vmatprep.subr.mxu0 0.0
    %2761 = vmatpush1.msra.mxu0 0.0
    %2762 = vmatprep.subr.mxu0 0.0
    %2763 = vmatpush1.msra.mxu0 0.0
    %2764 = vmatprep.subr.mxu0 0.0
    %2765 = vmatpush1.msra.mxu0 0.0
    %2766 = vmatprep.subr.mxu0 0.0
    %2767 = vmatpush1.msra.mxu0 0.0
    %2768 = vmatprep.subr.mxu0 0.0
    %2769 = vmatpush1.msra.mxu0 0.0
    %2770 = vmatprep.subr.mxu0 0.0
    %2771 = vmatpush1.msra.mxu0 0.0
    %2772 = vmatprep.subr.mxu0 0.0
    %2773 = vmatpush1.msra.mxu0 0.0
    %2774 = vmatprep.subr.mxu0 0.0
    %2775 = vmatpush1.msra.mxu0 0.0
    %2776 = vmatprep.subr.mxu0 0.0
    %2777 = vmatpush1.msra.mxu0 0.0
    %2778 = vmatprep.subr.mxu0 0.0
    %2779 = vmatpush1.msra.mxu0 0.0
    %2780 = vmatprep.subr.mxu0 0.0
    %2781 = vmatpush1.msra.mxu0 0.0
    %2782 = vmatprep.subr.mxu0 0.0
    %2783 = vmatpush1.msra.mxu0 0.0
    %2784 = vmatprep.mubr.f32.mxu0 0.0
    %2785 = vmatmul.mubr.f32.gmra.mrb[0].mxu0 %v2718
    %v2786 = vpop.f32.mrb[0].mxu0
    %v2787 = vadd.f32 %v800, %v2786
    %v2788 = vpop.f32.mrb[0].mxu0
    %v2789 = vadd.f32 %v804, %v2788
    %2790 = vdwg.mxu0
    %2791 = vmatprep.subr.mxu0 0.0
    %2792 = vmatpush1.msra.mxu0 %v292
    %2793 = vmatprep.subr.mxu0 0.0
    %2794 = vmatpush1.msra.mxu0 %v295
    %2795 = vmatprep.subr.mxu0 0.0
    %2796 = vmatpush1.msra.mxu0 %v298
    %2797 = vmatprep.subr.mxu0 0.0
    %2798 = vmatpush1.msra.mxu0 %v301
    %2799 = vmatprep.subr.mxu0 0.0
    %2800 = vmatpush1.msra.mxu0 0.0
    %2801 = vmatprep.subr.mxu0 0.0
    %2802 = vmatpush1.msra.mxu0 0.0
    %2803 = vmatprep.subr.mxu0 0.0
    %2804 = vmatpush1.msra.mxu0 0.0
    %2805 = vmatprep.subr.mxu0 0.0
    %2806 = vmatpush1.msra.mxu0 0.0
    %2807 = vmatprep.subr.mxu0 0.0
    %2808 = vmatpush1.msra.mxu0 0.0
    %2809 = vmatprep.subr.mxu0 0.0
    %2810 = vmatpush1.msra.mxu0 0.0
    %2811 = vmatprep.subr.mxu0 0.0
    %2812 = vmatpush1.msra.mxu0 0.0
    %2813 = vmatprep.subr.mxu0 0.0
    %2814 = vmatpush1.msra.mxu0 0.0
    %2815 = vmatprep.subr.mxu0 0.0
    %2816 = vmatpush1.msra.mxu0 0.0
    %2817 = vmatprep.subr.mxu0 0.0
    %2818 = vmatpush1.msra.mxu0 0.0
    %2819 = vmatprep.subr.mxu0 0.0
    %2820 = vmatpush1.msra.mxu0 0.0
    %2821 = vmatprep.subr.mxu0 0.0
    %2822 = vmatpush1.msra.mxu0 0.0
    %2823 = vmatprep.subr.mxu0 0.0
    %2824 = vmatpush1.msra.mxu0 0.0
    %2825 = vmatprep.subr.mxu0 0.0
    %2826 = vmatpush1.msra.mxu0 0.0
    %2827 = vmatprep.subr.mxu0 0.0
    %2828 = vmatpush1.msra.mxu0 0.0
    %2829 = vmatprep.subr.mxu0 0.0
    %2830 = vmatpush1.msra.mxu0 0.0
    %2831 = vmatprep.subr.mxu0 0.0
    %2832 = vmatpush1.msra.mxu0 0.0
    %2833 = vmatprep.subr.mxu0 0.0
    %2834 = vmatpush1.msra.mxu0 0.0
    %2835 = vmatprep.subr.mxu0 0.0
    %2836 = vmatpush1.msra.mxu0 0.0
    %2837 = vmatprep.subr.mxu0 0.0
    %2838 = vmatpush1.msra.mxu0 0.0
    %2839 = vmatprep.subr.mxu0 0.0
    %2840 = vmatpush1.msra.mxu0 0.0
    %2841 = vmatprep.subr.mxu0 0.0
    %2842 = vmatpush1.msra.mxu0 0.0
    %2843 = vmatprep.subr.mxu0 0.0
    %2844 = vmatpush1.msra.mxu0 0.0
    %2845 = vmatprep.subr.mxu0 0.0
    %2846 = vmatpush1.msra.mxu0 0.0
    %2847 = vmatprep.subr.mxu0 0.0
    %2848 = vmatpush1.msra.mxu0 0.0
    %2849 = vmatprep.subr.mxu0 0.0
    %2850 = vmatpush1.msra.mxu0 0.0
    %2851 = vmatprep.subr.mxu0 0.0
    %2852 = vmatpush1.msra.mxu0 0.0
    %2853 = vmatprep.subr.mxu0 0.0
    %2854 = vmatpush1.msra.mxu0 0.0
    %2855 = vmatprep.mubr.f32.mxu0 0.0
    %2856 = vmatmul.mubr.f32.gmra.mrb[0].mxu0 %v2718
    %v2857 = vpop.f32.mrb[0].mxu0
    %v2858 = vadd.f32 %v808, %v2857
    %v2859 = vpop.f32.mrb[0].mxu0
    %2860 = vdwg.mxu0
    %v2861 = vld [vmem:[%s204] sm:$0x3f]
    %v2862 = vadd.f32 %v2861, %v2502
    %v2863 = vxor.u32 %v2862, 2147483648
    %v2864 = vmul.f32 %v2863, 1.442695
    %v2865 = vpow.pop %v2864
    %v2866 = vadd.f32 %v2865, 1.0
    %v2867 = vrcp.pop %v2866
    %v2868 = vmul.f32 1.0, %v2867
    %v2870 = vrot.slane %v2861, 2
    %v2872 = vadd.f32 %v2870, %v2504
    %v2873 = vxor.u32 %v2872, 2147483648
    %v2874 = vmul.f32 %v2873, 1.442695
    %v2875 = vpow.pop %v2874
    %v2876 = vadd.f32 %v2875, 1.0
    %v2877 = vrcp.pop %v2876
    %v2878 = vmul.f32 1.0, %v2877
    %v2879 = vmul.f32 %v2868, %v2573
    %v2880 = vrot.slane %v2861, 4
    %v2882 = vadd.f32 %v2880, %v2879
    %v2883 = vtanh.pop %v2882
    %v2884 = vsub.f32 1.0, %v2878
    %v2885 = vmul.f32 %v2884, %v2883
    %v2886 = vmul.f32 %v2878, %v2410
    %v2887 = vadd.f32 %v2885, %v2886
    %v2888 = vadd.f32 %v2643, %v2787
    %v2889 = vxor.u32 %v2888, 2147483648
    %v2890 = vmul.f32 %v2889, 1.442695
    %v2891 = vpow.pop %v2890
    %v2892 = vadd.f32 %v2891, 1.0
    %v2893 = vrcp.pop %v2892
    %v2894 = vmul.f32 1.0, %v2893
    %v2895 = vadd.f32 %v2645, %v2789
    %v2896 = vxor.u32 %v2895, 2147483648
    %v2897 = vmul.f32 %v2896, 1.442695
    %v2898 = vpow.pop %v2897
    %v2899 = vadd.f32 %v2898, 1.0
    %v2900 = vrcp.pop %v2899
    %v2901 = vmul.f32 1.0, %v2900
    %v2902 = vmul.f32 %v2894, %v2858
    %v2903 = vadd.f32 %v2714, %v2902
    %v2904 = vtanh.pop %v2903
    %v2905 = vsub.f32 1.0, %v2901
    %v2906 = vmul.f32 %v2905, %v2904
    %v2907 = vmul.f32 %v2901, %v2431
    %v2908 = vadd.f32 %v2906, %v2907
    %v2910 = vsel %vm323, %v2887, 0
    %2912 = vmatprep.subr.mxu0 %v267
    %2913 = vmatpush1.msra.mxu0 %v266
    %2914 = vmatprep.subr.mxu0 %v270
    %2915 = vmatpush1.msra.mxu0 %v269
    %2916 = vmatprep.subr.mxu0 %v273
    %2917 = vmatpush1.msra.mxu0 %v272
    %2918 = vmatprep.subr.mxu0 %v276
    %2919 = vmatpush1.msra.mxu0 %v275
    %2920 = vmatprep.subr.mxu0 0.0
    %2921 = vmatpush1.msra.mxu0 0.0
    %2922 = vmatprep.subr.mxu0 0.0
    %2923 = vmatpush1.msra.mxu0 0.0
    %2924 = vmatprep.subr.mxu0 0.0
    %2925 = vmatpush1.msra.mxu0 0.0
    %2926 = vmatprep.subr.mxu0 0.0
    %2927 = vmatpush1.msra.mxu0 0.0
    %2928 = vmatprep.subr.mxu0 0.0
    %2929 = vmatpush1.msra.mxu0 0.0
    %2930 = vmatprep.subr.mxu0 0.0
    %2931 = vmatpush1.msra.mxu0 0.0
    %2932 = vmatprep.subr.mxu0 0.0
    %2933 = vmatpush1.msra.mxu0 0.0
    %2934 = vmatprep.subr.mxu0 0.0
    %2935 = vmatpush1.msra.mxu0 0.0
    %2936 = vmatprep.subr.mxu0 0.0
    %2937 = vmatpush1.msra.mxu0 0.0
    %2938 = vmatprep.subr.mxu0 0.0
    %2939 = vmatpush1.msra.mxu0 0.0
    %2940 = vmatprep.subr.mxu0 0.0
    %2941 = vmatpush1.msra.mxu0 0.0
    %2942 = vmatprep.subr.mxu0 0.0
    %2943 = vmatpush1.msra.mxu0 0.0
    %2944 = vmatprep.subr.mxu0 0.0
    %2945 = vmatpush1.msra.mxu0 0.0
    %2946 = vmatprep.subr.mxu0 0.0
    %2947 = vmatpush1.msra.mxu0 0.0
    %2948 = vmatprep.subr.mxu0 0.0
    %2949 = vmatpush1.msra.mxu0 0.0
    %2950 = vmatprep.subr.mxu0 0.0
    %2951 = vmatpush1.msra.mxu0 0.0
    %2952 = vmatprep.subr.mxu0 0.0
    %2953 = vmatpush1.msra.mxu0 0.0
    %2954 = vmatprep.subr.mxu0 0.0
    %2955 = vmatpush1.msra.mxu0 0.0
    %2956 = vmatprep.subr.mxu0 0.0
    %2957 = vmatpush1.msra.mxu0 0.0
    %2958 = vmatprep.subr.mxu0 0.0
    %2959 = vmatpush1.msra.mxu0 0.0
    %2960 = vmatprep.subr.mxu0 0.0
    %2961 = vmatpush1.msra.mxu0 0.0
    %2962 = vmatprep.subr.mxu0 0.0
    %2963 = vmatpush1.msra.mxu0 0.0
    %2964 = vmatprep.subr.mxu0 0.0
    %2965 = vmatpush1.msra.mxu0 0.0
    %2966 = vmatprep.subr.mxu0 0.0
    %2967 = vmatpush1.msra.mxu0 0.0
    %2968 = vmatprep.subr.mxu0 0.0
    %2969 = vmatpush1.msra.mxu0 0.0
    %2970 = vmatprep.subr.mxu0 0.0
    %2971 = vmatpush1.msra.mxu0 0.0
    %2972 = vmatprep.subr.mxu0 0.0
    %2973 = vmatpush1.msra.mxu0 0.0
    %2974 = vmatprep.subr.mxu0 0.0
    %2975 = vmatpush1.msra.mxu0 0.0
    %2976 = vmatprep.mubr.f32.mxu0 0.0
    %2977 = vmatmul.mubr.f32.gmra.mrb[0].mxu0 %v2910
    %v2978 = vpop.f32.mrb[0].mxu0
    %v2979 = vadd.f32 %v311, %v2978
    %v2980 = vpop.f32.mrb[0].mxu0
    %v2981 = vadd.f32 %v315, %v2980
    %2982 = vdwg.mxu0
    %2983 = vmatprep.subr.mxu0 0.0
    %2984 = vmatpush1.msra.mxu0 %v268
    %2985 = vmatprep.subr.mxu0 0.0
    %2986 = vmatpush1.msra.mxu0 %v271
    %2987 = vmatprep.subr.mxu0 0.0
    %2988 = vmatpush1.msra.mxu0 %v274
    %2989 = vmatprep.subr.mxu0 0.0
    %2990 = vmatpush1.msra.mxu0 %v277
    %2991 = vmatprep.subr.mxu0 0.0
    %2992 = vmatpush1.msra.mxu0 0.0
    %2993 = vmatprep.subr.mxu0 0.0
    %2994 = vmatpush1.msra.mxu0 0.0
    %2995 = vmatprep.subr.mxu0 0.0
    %2996 = vmatpush1.msra.mxu0 0.0
    %2997 = vmatprep.subr.mxu0 0.0
    %2998 = vmatpush1.msra.mxu0 0.0
    %2999 = vmatprep.subr.mxu0 0.0
    %3000 = vmatpush1.msra.mxu0 0.0
    %3001 = vmatprep.subr.mxu0 0.0
    %3002 = vmatpush1.msra.mxu0 0.0
    %3003 = vmatprep.subr.mxu0 0.0
    %3004 = vmatpush1.msra.mxu0 0.0
    %3005 = vmatprep.subr.mxu0 0.0
    %3006 = vmatpush1.msra.mxu0 0.0
    %3007 = vmatprep.subr.mxu0 0.0
    %3008 = vmatpush1.msra.mxu0 0.0
    %3009 = vmatprep.subr.mxu0 0.0
    %3010 = vmatpush1.msra.mxu0 0.0
    %3011 = vmatprep.subr.mxu0 0.0
    %3012 = vmatpush1.msra.mxu0 0.0
    %3013 = vmatprep.subr.mxu0 0.0
    %3014 = vmatpush1.msra.mxu0 0.0
    %3015 = vmatprep.subr.mxu0 0.0
    %3016 = vmatpush1.msra.mxu0 0.0
    %3017 = vmatprep.subr.mxu0 0.0
    %3018 = vmatpush1.msra.mxu0 0.0
    %3019 = vmatprep.subr.mxu0 0.0
    %3020 = vmatpush1.msra.mxu0 0.0
    %3021 = vmatprep.subr.mxu0 0.0
    %3022 = vmatpush1.msra.mxu0 0.0
    %3023 = vmatprep.subr.mxu0 0.0
    %3024 = vmatpush1.msra.mxu0 0.0
    %3025 = vmatprep.subr.mxu0 0.0
    %3026 = vmatpush1.msra.mxu0 0.0
    %3027 = vmatprep.subr.mxu0 0.0
    %3028 = vmatpush1.msra.mxu0 0.0
    %3029 = vmatprep.subr.mxu0 0.0
    %3030 = vmatpush1.msra.mxu0 0.0
    %3031 = vmatprep.subr.mxu0 0.0
    %3032 = vmatpush1.msra.mxu0 0.0
    %3033 = vmatprep.subr.mxu0 0.0
    %3034 = vmatpush1.msra.mxu0 0.0
    %3035 = vmatprep.subr.mxu0 0.0
    %3036 = vmatpush1.msra.mxu0 0.0
    %3037 = vmatprep.subr.mxu0 0.0
    %3038 = vmatpush1.msra.mxu0 0.0
    %3039 = vmatprep.subr.mxu0 0.0
    %3040 = vmatpush1.msra.mxu0 0.0
    %3041 = vmatprep.subr.mxu0 0.0
    %3042 = vmatpush1.msra.mxu0 0.0
    %3043 = vmatprep.subr.mxu0 0.0
    %3044 = vmatpush1.msra.mxu0 0.0
    %3045 = vmatprep.subr.mxu0 0.0
    %3046 = vmatpush1.msra.mxu0 0.0
    %3047 = vmatprep.mubr.f32.mxu0 0.0
    %3048 = vmatmul.mubr.f32.gmra.mrb[0].mxu0 %v2910
    %v3049 = vpop.f32.mrb[0].mxu0
    %v3050 = vadd.f32 %v319, %v3049
    %v3051 = vpop.f32.mrb[0].mxu0
    %3052 = vdwg.mxu0
    %3053 = vmatprep.subr.mxu0 %v279
    %3054 = vmatpush1.msra.mxu0 %v278
    %3055 = vmatprep.subr.mxu0 %v282
    %3056 = vmatpush1.msra.mxu0 %v281
    %3057 = vmatprep.subr.mxu0 %v285
    %3058 = vmatpush1.msra.mxu0 %v284
    %3059 = vmatprep.subr.mxu0 %v288
    %3060 = vmatpush1.msra.mxu0 %v287
    %3061 = vmatprep.subr.mxu0 0.0
    %3062 = vmatpush1.msra.mxu0 0.0
    %3063 = vmatprep.subr.mxu0 0.0
    %3064 = vmatpush1.msra.mxu0 0.0
    %3065 = vmatprep.subr.mxu0 0.0
    %3066 = vmatpush1.msra.mxu0 0.0
    %3067 = vmatprep.subr.mxu0 0.0
    %3068 = vmatpush1.msra.mxu0 0.0
    %3069 = vmatprep.subr.mxu0 0.0
    %3070 = vmatpush1.msra.mxu0 0.0
    %3071 = vmatprep.subr.mxu0 0.0
    %3072 = vmatpush1.msra.mxu0 0.0
    %3073 = vmatprep.subr.mxu0 0.0
    %3074 = vmatpush1.msra.mxu0 0.0
    %3075 = vmatprep.subr.mxu0 0.0
    %3076 = vmatpush1.msra.mxu0 0.0
    %3077 = vmatprep.subr.mxu0 0.0
    %3078 = vmatpush1.msra.mxu0 0.0
    %3079 = vmatprep.subr.mxu0 0.0
    %3080 = vmatpush1.msra.mxu0 0.0
    %3081 = vmatprep.subr.mxu0 0.0
    %3082 = vmatpush1.msra.mxu0 0.0
    %3083 = vmatprep.subr.mxu0 0.0
    %3084 = vmatpush1.msra.mxu0 0.0
    %3085 = vmatprep.subr.mxu0 0.0
    %3086 = vmatpush1.msra.mxu0 0.0
    %3087 = vmatprep.subr.mxu0 0.0
    %3088 = vmatpush1.msra.mxu0 0.0
    %3089 = vmatprep.subr.mxu0 0.0
    %3090 = vmatpush1.msra.mxu0 0.0
    %3091 = vmatprep.subr.mxu0 0.0
    %3092 = vmatpush1.msra.mxu0 0.0
    %3093 = vmatprep.subr.mxu0 0.0
    %3094 = vmatpush1.msra.mxu0 0.0
    %3095 = vmatprep.subr.mxu0 0.0
    %3096 = vmatpush1.msra.mxu0 0.0
    %3097 = vmatprep.subr.mxu0 0.0
    %3098 = vmatpush1.msra.mxu0 0.0
    %3099 = vmatprep.subr.mxu0 0.0
    %3100 = vmatpush1.msra.mxu0 0.0
    %3101 = vmatprep.subr.mxu0 0.0
    %3102 = vmatpush1.msra.mxu0 0.0
    %3103 = vmatprep.subr.mxu0 0.0
    %3104 = vmatpush1.msra.mxu0 0.0
    %3105 = vmatprep.subr.mxu0 0.0
    %3106 = vmatpush1.msra.mxu0 0.0
    %3107 = vmatprep.subr.mxu0 0.0
    %3108 = vmatpush1.msra.mxu0 0.0
    %3109 = vmatprep.subr.mxu0 0.0
    %3110 = vmatpush1.msra.mxu0 0.0
    %3111 = vmatprep.subr.mxu0 0.0
    %3112 = vmatpush1.msra.mxu0 0.0
    %3113 = vmatprep.subr.mxu0 0.0
    %3114 = vmatpush1.msra.mxu0 0.0
    %3115 = vmatprep.subr.mxu0 0.0
    %3116 = vmatpush1.msra.mxu0 0.0
    %3117 = vmatprep.mubr.f32.mxu0 0.0
    %3118 = vmatmul.mubr.f32.gmra.mrb[0].mxu0 %v2910
    %v3119 = vpop.f32.mrb[0].mxu0
    %v3120 = vadd.f32 %v643, %v3119
    %v3121 = vpop.f32.mrb[0].mxu0
    %v3122 = vadd.f32 %v647, %v3121
    %3123 = vdwg.mxu0
    %3124 = vmatprep.subr.mxu0 0.0
    %3125 = vmatpush1.msra.mxu0 %v280
    %3126 = vmatprep.subr.mxu0 0.0
    %3127 = vmatpush1.msra.mxu0 %v283
    %3128 = vmatprep.subr.mxu0 0.0
    %3129 = vmatpush1.msra.mxu0 %v286
    %3130 = vmatprep.subr.mxu0 0.0
    %3131 = vmatpush1.msra.mxu0 %v289
    %3132 = vmatprep.subr.mxu0 0.0
    %3133 = vmatpush1.msra.mxu0 0.0
    %3134 = vmatprep.subr.mxu0 0.0
    %3135 = vmatpush1.msra.mxu0 0.0
    %3136 = vmatprep.subr.mxu0 0.0
    %3137 = vmatpush1.msra.mxu0 0.0
    %3138 = vmatprep.subr.mxu0 0.0
    %3139 = vmatpush1.msra.mxu0 0.0
    %3140 = vmatprep.subr.mxu0 0.0
    %3141 = vmatpush1.msra.mxu0 0.0
    %3142 = vmatprep.subr.mxu0 0.0
    %3143 = vmatpush1.msra.mxu0 0.0
    %3144 = vmatprep.subr.mxu0 0.0
    %3145 = vmatpush1.msra.mxu0 0.0
    %3146 = vmatprep.subr.mxu0 0.0
    %3147 = vmatpush1.msra.mxu0 0.0
    %3148 = vmatprep.subr.mxu0 0.0
    %3149 = vmatpush1.msra.mxu0 0.0
    %3150 = vmatprep.subr.mxu0 0.0
    %3151 = vmatpush1.msra.mxu0 0.0
    %3152 = vmatprep.subr.mxu0 0.0
    %3153 = vmatpush1.msra.mxu0 0.0
    %3154 = vmatprep.subr.mxu0 0.0
    %3155 = vmatpush1.msra.mxu0 0.0
    %3156 = vmatprep.subr.mxu0 0.0
    %3157 = vmatpush1.msra.mxu0 0.0
    %3158 = vmatprep.subr.mxu0 0.0
    %3159 = vmatpush1.msra.mxu0 0.0
    %3160 = vmatprep.subr.mxu0 0.0
    %3161 = vmatpush1.msra.mxu0 0.0
    %3162 = vmatprep.subr.mxu0 0.0
    %3163 = vmatpush1.msra.mxu0 0.0
    %3164 = vmatprep.subr.mxu0 0.0
    %3165 = vmatpush1.msra.mxu0 0.0
    %3166 = vmatprep.subr.mxu0 0.0
    %3167 = vmatpush1.msra.mxu0 0.0
    %3168 = vmatprep.subr.mxu0 0.0
    %3169 = vmatpush1.msra.mxu0 0.0
    %3170 = vmatprep.subr.mxu0 0.0
    %3171 = vmatpush1.msra.mxu0 0.0
    %3172 = vmatprep.subr.mxu0 0.0
    %3173 = vmatpush1.msra.mxu0 0.0
    %3174 = vmatprep.subr.mxu0 0.0
    %3175 = vmatpush1.msra.mxu0 0.0
    %3176 = vmatprep.subr.mxu0 0.0
    %3177 = vmatpush1.msra.mxu0 0.0
    %3178 = vmatprep.subr.mxu0 0.0
    %3179 = vmatpush1.msra.mxu0 0.0
    %3180 = vmatprep.subr.mxu0 0.0
    %3181 = vmatpush1.msra.mxu0 0.0
    %3182 = vmatprep.subr.mxu0 0.0
    %3183 = vmatpush1.msra.mxu0 0.0
    %3184 = vmatprep.subr.mxu0 0.0
    %3185 = vmatpush1.msra.mxu0 0.0
    %3186 = vmatprep.subr.mxu0 0.0
    %3187 = vmatpush1.msra.mxu0 0.0
    %3188 = vmatprep.mubr.f32.mxu0 0.0
    %3189 = vmatmul.mubr.f32.gmra.mrb[0].mxu0 %v2910
    %v3190 = vpop.f32.mrb[0].mxu0
    %v3191 = vadd.f32 %v651, %v3190
    %v3192 = vpop.f32.mrb[0].mxu0
    %3193 = vdwg.mxu0
    %v3195 = vsel %vm323, %v2908, 0
    %3197 = vmatprep.subr.mxu0 %v291
    %3198 = vmatpush1.msra.mxu0 %v290
    %3199 = vmatprep.subr.mxu0 %v294
    %3200 = vmatpush1.msra.mxu0 %v293
    %3201 = vmatprep.subr.mxu0 %v297
    %3202 = vmatpush1.msra.mxu0 %v296
    %3203 = vmatprep.subr.mxu0 %v300
    %3204 = vmatpush1.msra.mxu0 %v299
    %3205 = vmatprep.subr.mxu0 0.0
    %3206 = vmatpush1.msra.mxu0 0.0
    %3207 = vmatprep.subr.mxu0 0.0
    %3208 = vmatpush1.msra.mxu0 0.0
    %3209 = vmatprep.subr.mxu0 0.0
    %3210 = vmatpush1.msra.mxu0 0.0
    %3211 = vmatprep.subr.mxu0 0.0
    %3212 = vmatpush1.msra.mxu0 0.0
    %3213 = vmatprep.subr.mxu0 0.0
    %3214 = vmatpush1.msra.mxu0 0.0
    %3215 = vmatprep.subr.mxu0 0.0
    %3216 = vmatpush1.msra.mxu0 0.0
    %3217 = vmatprep.subr.mxu0 0.0
    %3218 = vmatpush1.msra.mxu0 0.0
    %3219 = vmatprep.subr.mxu0 0.0
    %3220 = vmatpush1.msra.mxu0 0.0
    %3221 = vmatprep.subr.mxu0 0.0
    %3222 = vmatpush1.msra.mxu0 0.0
    %3223 = vmatprep.subr.mxu0 0.0
    %3224 = vmatpush1.msra.mxu0 0.0
    %3225 = vmatprep.subr.mxu0 0.0
    %3226 = vmatpush1.msra.mxu0 0.0
    %3227 = vmatprep.subr.mxu0 0.0
    %3228 = vmatpush1.msra.mxu0 0.0
    %3229 = vmatprep.subr.mxu0 0.0
    %3230 = vmatpush1.msra.mxu0 0.0
    %3231 = vmatprep.subr.mxu0 0.0
    %3232 = vmatpush1.msra.mxu0 0.0
    %3233 = vmatprep.subr.mxu0 0.0
    %3234 = vmatpush1.msra.mxu0 0.0
    %3235 = vmatprep.subr.mxu0 0.0
    %3236 = vmatpush1.msra.mxu0 0.0
    %3237 = vmatprep.subr.mxu0 0.0
    %3238 = vmatpush1.msra.mxu0 0.0
    %3239 = vmatprep.subr.mxu0 0.0
    %3240 = vmatpush1.msra.mxu0 0.0
    %3241 = vmatprep.subr.mxu0 0.0
    %3242 = vmatpush1.msra.mxu0 0.0
    %3243 = vmatprep.subr.mxu0 0.0
    %3244 = vmatpush1.msra.mxu0 0.0
    %3245 = vmatprep.subr.mxu0 0.0
    %3246 = vmatpush1.msra.mxu0 0.0
    %3247 = vmatprep.subr.mxu0 0.0
    %3248 = vmatpush1.msra.mxu0 0.0
    %3249 = vmatprep.subr.mxu0 0.0
    %3250 = vmatpush1.msra.mxu0 0.0
    %3251 = vmatprep.subr.mxu0 0.0
    %3252 = vmatpush1.msra.mxu0 0.0
    %3253 = vmatprep.subr.mxu0 0.0
    %3254 = vmatpush1.msra.mxu0 0.0
    %3255 = vmatprep.subr.mxu0 0.0
    %3256 = vmatpush1.msra.mxu0 0.0
    %3257 = vmatprep.subr.mxu0 0.0
    %3258 = vmatpush1.msra.mxu0 0.0
    %3259 = vmatprep.subr.mxu0 0.0
    %3260 = vmatpush1.msra.mxu0 0.0
    %3261 = vmatprep.mubr.f32.mxu0 0.0
    %3262 = vmatmul.mubr.f32.gmra.mrb[0].mxu0 %v3195
    %v3263 = vpop.f32.mrb[0].mxu0
    %v3264 = vadd.f32 %v800, %v3263
    %v3265 = vpop.f32.mrb[0].mxu0
    %v3266 = vadd.f32 %v804, %v3265
    %3267 = vdwg.mxu0
    %3268 = vmatprep.subr.mxu0 0.0
    %3269 = vmatpush1.msra.mxu0 %v292
    %3270 = vmatprep.subr.mxu0 0.0
    %3271 = vmatpush1.msra.mxu0 %v295
    %3272 = vmatprep.subr.mxu0 0.0
    %3273 = vmatpush1.msra.mxu0 %v298
    %3274 = vmatprep.subr.mxu0 0.0
    %3275 = vmatpush1.msra.mxu0 %v301
    %3276 = vmatprep.subr.mxu0 0.0
    %3277 = vmatpush1.msra.mxu0 0.0
    %3278 = vmatprep.subr.mxu0 0.0
    %3279 = vmatpush1.msra.mxu0 0.0
    %3280 = vmatprep.subr.mxu0 0.0
    %3281 = vmatpush1.msra.mxu0 0.0
    %3282 = vmatprep.subr.mxu0 0.0
    %3283 = vmatpush1.msra.mxu0 0.0
    %3284 = vmatprep.subr.mxu0 0.0
    %3285 = vmatpush1.msra.mxu0 0.0
    %3286 = vmatprep.subr.mxu0 0.0
    %3287 = vmatpush1.msra.mxu0 0.0
    %3288 = vmatprep.subr.mxu0 0.0
    %3289 = vmatpush1.msra.mxu0 0.0
    %3290 = vmatprep.subr.mxu0 0.0
    %3291 = vmatpush1.msra.mxu0 0.0
    %3292 = vmatprep.subr.mxu0 0.0
    %3293 = vmatpush1.msra.mxu0 0.0
    %3294 = vmatprep.subr.mxu0 0.0
    %3295 = vmatpush1.msra.mxu0 0.0
    %3296 = vmatprep.subr.mxu0 0.0
    %3297 = vmatpush1.msra.mxu0 0.0
    %3298 = vmatprep.subr.mxu0 0.0
    %3299 = vmatpush1.msra.mxu0 0.0
    %3300 = vmatprep.subr.mxu0 0.0
    %3301 = vmatpush1.msra.mxu0 0.0
    %3302 = vmatprep.subr.mxu0 0.0
    %3303 = vmatpush1.msra.mxu0 0.0
    %3304 = vmatprep.subr.mxu0 0.0
    %3305 = vmatpush1.msra.mxu0 0.0
    %3306 = vmatprep.subr.mxu0 0.0
    %3307 = vmatpush1.msra.mxu0 0.0
    %3308 = vmatprep.subr.mxu0 0.0
    %3309 = vmatpush1.msra.mxu0 0.0
    %3310 = vmatprep.subr.mxu0 0.0
    %3311 = vmatpush1.msra.mxu0 0.0
    %3312 = vmatprep.subr.mxu0 0.0
    %3313 = vmatpush1.msra.mxu0 0.0
    %3314 = vmatprep.subr.mxu0 0.0
    %3315 = vmatpush1.msra.mxu0 0.0
    %3316 = vmatprep.subr.mxu0 0.0
    %3317 = vmatpush1.msra.mxu0 0.0
    %3318 = vmatprep.subr.mxu0 0.0
    %3319 = vmatpush1.msra.mxu0 0.0
    %3320 = vmatprep.subr.mxu0 0.0
    %3321 = vmatpush1.msra.mxu0 0.0
    %3322 = vmatprep.subr.mxu0 0.0
    %3323 = vmatpush1.msra.mxu0 0.0
    %3324 = vmatprep.subr.mxu0 0.0
    %3325 = vmatpush1.msra.mxu0 0.0
    %3326 = vmatprep.subr.mxu0 0.0
    %3327 = vmatpush1.msra.mxu0 0.0
    %3328 = vmatprep.subr.mxu0 0.0
    %3329 = vmatpush1.msra.mxu0 0.0
    %3330 = vmatprep.subr.mxu0 0.0
    %3331 = vmatpush1.msra.mxu0 0.0
    %3332 = vmatprep.mubr.f32.mxu0 0.0
    %3333 = vmatmul.mubr.f32.gmra.mrb[0].mxu0 %v3195
    %v3334 = vpop.f32.mrb[0].mxu0
    %v3335 = vadd.f32 %v808, %v3334
    %v3336 = vpop.f32.mrb[0].mxu0
    %3337 = vdwg.mxu0
    %v3338 = vld [vmem:[%s228] sm:$0x3f]
    %v3339 = vadd.f32 %v3338, %v2979
    %v3340 = vxor.u32 %v3339, 2147483648
    %v3341 = vmul.f32 %v3340, 1.442695
    %v3342 = vpow.pop %v3341
    %v3343 = vadd.f32 %v3342, 1.0
    %v3344 = vrcp.pop %v3343
    %v3345 = vmul.f32 1.0, %v3344
    %v3347 = vrot.slane %v3338, 2
    %v3349 = vadd.f32 %v3347, %v2981
    %v3350 = vxor.u32 %v3349, 2147483648
    %v3351 = vmul.f32 %v3350, 1.442695
    %v3352 = vpow.pop %v3351
    %v3353 = vadd.f32 %v3352, 1.0
    %v3354 = vrcp.pop %v3353
    %v3355 = vmul.f32 1.0, %v3354
    %v3356 = vmul.f32 %v3345, %v3050
    %v3357 = vrot.slane %v3338, 4
    %v3359 = vadd.f32 %v3357, %v3356
    %v3360 = vtanh.pop %v3359
    %v3361 = vsub.f32 1.0, %v3355
    %v3362 = vmul.f32 %v3361, %v3360
    %v3363 = vmul.f32 %v3355, %v2887
    %v3364 = vadd.f32 %v3362, %v3363
    %v3365 = vadd.f32 %v3120, %v3264
    %v3366 = vxor.u32 %v3365, 2147483648
    %v3367 = vmul.f32 %v3366, 1.442695
    %v3368 = vpow.pop %v3367
    %v3369 = vadd.f32 %v3368, 1.0
    %v3370 = vrcp.pop %v3369
    %v3371 = vmul.f32 1.0, %v3370
    %v3372 = vadd.f32 %v3122, %v3266
    %v3373 = vxor.u32 %v3372, 2147483648
    %v3374 = vmul.f32 %v3373, 1.442695
    %v3375 = vpow.pop %v3374
    %v3376 = vadd.f32 %v3375, 1.0
    %v3377 = vrcp.pop %v3376
    %v3378 = vmul.f32 1.0, %v3377
    %v3379 = vmul.f32 %v3371, %v3335
    %v3380 = vadd.f32 %v3191, %v3379
    %v3381 = vtanh.pop %v3380
    %v3382 = vsub.f32 1.0, %v3378
    %v3383 = vmul.f32 %v3382, %v3381
    %v3384 = vmul.f32 %v3378, %v2908
    %v3385 = vadd.f32 %v3383, %v3384
    %v3387 = vsel %vm323, %v3364, 0
    %3389 = vmatprep.subr.mxu0 %v267
    %3390 = vmatpush1.msra.mxu0 %v266
    %3391 = vmatprep.subr.mxu0 %v270
    %3392 = vmatpush1.msra.mxu0 %v269
    %3393 = vmatprep.subr.mxu0 %v273
    %3394 = vmatpush1.msra.mxu0 %v272
    %3395 = vmatprep.subr.mxu0 %v276
    %3396 = vmatpush1.msra.mxu0 %v275
    %3397 = vmatprep.subr.mxu0 0.0
    %3398 = vmatpush1.msra.mxu0 0.0
    %3399 = vmatprep.subr.mxu0 0.0
    %3400 = vmatpush1.msra.mxu0 0.0
    %3401 = vmatprep.subr.mxu0 0.0
    %3402 = vmatpush1.msra.mxu0 0.0
    %3403 = vmatprep.subr.mxu0 0.0
    %3404 = vmatpush1.msra.mxu0 0.0
    %3405 = vmatprep.subr.mxu0 0.0
    %3406 = vmatpush1.msra.mxu0 0.0
    %3407 = vmatprep.subr.mxu0 0.0
    %3408 = vmatpush1.msra.mxu0 0.0
    %3409 = vmatprep.subr.mxu0 0.0
    %3410 = vmatpush1.msra.mxu0 0.0
    %3411 = vmatprep.subr.mxu0 0.0
    %3412 = vmatpush1.msra.mxu0 0.0
    %3413 = vmatprep.subr.mxu0 0.0
    %3414 = vmatpush1.msra.mxu0 0.0
    %3415 = vmatprep.subr.mxu0 0.0
    %3416 = vmatpush1.msra.mxu0 0.0
    %3417 = vmatprep.subr.mxu0 0.0
    %3418 = vmatpush1.msra.mxu0 0.0
    %3419 = vmatprep.subr.mxu0 0.0
    %3420 = vmatpush1.msra.mxu0 0.0
    %3421 = vmatprep.subr.mxu0 0.0
    %3422 = vmatpush1.msra.mxu0 0.0
    %3423 = vmatprep.subr.mxu0 0.0
    %3424 = vmatpush1.msra.mxu0 0.0
    %3425 = vmatprep.subr.mxu0 0.0
    %3426 = vmatpush1.msra.mxu0 0.0
    %3427 = vmatprep.subr.mxu0 0.0
    %3428 = vmatpush1.msra.mxu0 0.0
    %3429 = vmatprep.subr.mxu0 0.0
    %3430 = vmatpush1.msra.mxu0 0.0
    %3431 = vmatprep.subr.mxu0 0.0
    %3432 = vmatpush1.msra.mxu0 0.0
    %3433 = vmatprep.subr.mxu0 0.0
    %3434 = vmatpush1.msra.mxu0 0.0
    %3435 = vmatprep.subr.mxu0 0.0
    %3436 = vmatpush1.msra.mxu0 0.0
    %3437 = vmatprep.subr.mxu0 0.0
    %3438 = vmatpush1.msra.mxu0 0.0
    %3439 = vmatprep.subr.mxu0 0.0
    %3440 = vmatpush1.msra.mxu0 0.0
    %3441 = vmatprep.subr.mxu0 0.0
    %3442 = vmatpush1.msra.mxu0 0.0
    %3443 = vmatprep.subr.mxu0 0.0
    %3444 = vmatpush1.msra.mxu0 0.0
    %3445 = vmatprep.subr.mxu0 0.0
    %3446 = vmatpush1.msra.mxu0 0.0
    %3447 = vmatprep.subr.mxu0 0.0
    %3448 = vmatpush1.msra.mxu0 0.0
    %3449 = vmatprep.subr.mxu0 0.0
    %3450 = vmatpush1.msra.mxu0 0.0
    %3451 = vmatprep.subr.mxu0 0.0
    %3452 = vmatpush1.msra.mxu0 0.0
    %3453 = vmatprep.mubr.f32.mxu0 0.0
    %3454 = vmatmul.mubr.f32.gmra.mrb[0].mxu0 %v3387
    %v3455 = vpop.f32.mrb[0].mxu0
    %v3456 = vadd.f32 %v311, %v3455
    %v3457 = vpop.f32.mrb[0].mxu0
    %v3458 = vadd.f32 %v315, %v3457
    %3459 = vdwg.mxu0
    %3460 = vmatprep.subr.mxu0 0.0
    %3461 = vmatpush1.msra.mxu0 %v268
    %3462 = vmatprep.subr.mxu0 0.0
    %3463 = vmatpush1.msra.mxu0 %v271
    %3464 = vmatprep.subr.mxu0 0.0
    %3465 = vmatpush1.msra.mxu0 %v274
    %3466 = vmatprep.subr.mxu0 0.0
    %3467 = vmatpush1.msra.mxu0 %v277
    %3468 = vmatprep.subr.mxu0 0.0
    %3469 = vmatpush1.msra.mxu0 0.0
    %3470 = vmatprep.subr.mxu0 0.0
    %3471 = vmatpush1.msra.mxu0 0.0
    %3472 = vmatprep.subr.mxu0 0.0
    %3473 = vmatpush1.msra.mxu0 0.0
    %3474 = vmatprep.subr.mxu0 0.0
    %3475 = vmatpush1.msra.mxu0 0.0
    %3476 = vmatprep.subr.mxu0 0.0
    %3477 = vmatpush1.msra.mxu0 0.0
    %3478 = vmatprep.subr.mxu0 0.0
    %3479 = vmatpush1.msra.mxu0 0.0
    %3480 = vmatprep.subr.mxu0 0.0
    %3481 = vmatpush1.msra.mxu0 0.0
    %3482 = vmatprep.subr.mxu0 0.0
    %3483 = vmatpush1.msra.mxu0 0.0
    %3484 = vmatprep.subr.mxu0 0.0
    %3485 = vmatpush1.msra.mxu0 0.0
    %3486 = vmatprep.subr.mxu0 0.0
    %3487 = vmatpush1.msra.mxu0 0.0
    %3488 = vmatprep.subr.mxu0 0.0
    %3489 = vmatpush1.msra.mxu0 0.0
    %3490 = vmatprep.subr.mxu0 0.0
    %3491 = vmatpush1.msra.mxu0 0.0
    %3492 = vmatprep.subr.mxu0 0.0
    %3493 = vmatpush1.msra.mxu0 0.0
    %3494 = vmatprep.subr.mxu0 0.0
    %3495 = vmatpush1.msra.mxu0 0.0
    %3496 = vmatprep.subr.mxu0 0.0
    %3497 = vmatpush1.msra.mxu0 0.0
    %3498 = vmatprep.subr.mxu0 0.0
    %3499 = vmatpush1.msra.mxu0 0.0
    %3500 = vmatprep.subr.mxu0 0.0
    %3501 = vmatpush1.msra.mxu0 0.0
    %3502 = vmatprep.subr.mxu0 0.0
    %3503 = vmatpush1.msra.mxu0 0.0
    %3504 = vmatprep.subr.mxu0 0.0
    %3505 = vmatpush1.msra.mxu0 0.0
    %3506 = vmatprep.subr.mxu0 0.0
    %3507 = vmatpush1.msra.mxu0 0.0
    %3508 = vmatprep.subr.mxu0 0.0
    %3509 = vmatpush1.msra.mxu0 0.0
    %3510 = vmatprep.subr.mxu0 0.0
    %3511 = vmatpush1.msra.mxu0 0.0
    %3512 = vmatprep.subr.mxu0 0.0
    %3513 = vmatpush1.msra.mxu0 0.0
    %3514 = vmatprep.subr.mxu0 0.0
    %3515 = vmatpush1.msra.mxu0 0.0
    %3516 = vmatprep.subr.mxu0 0.0
    %3517 = vmatpush1.msra.mxu0 0.0
    %3518 = vmatprep.subr.mxu0 0.0
    %3519 = vmatpush1.msra.mxu0 0.0
    %3520 = vmatprep.subr.mxu0 0.0
    %3521 = vmatpush1.msra.mxu0 0.0
    %3522 = vmatprep.subr.mxu0 0.0
    %3523 = vmatpush1.msra.mxu0 0.0
    %3524 = vmatprep.mubr.f32.mxu0 0.0
    %3525 = vmatmul.mubr.f32.gmra.mrb[0].mxu0 %v3387
    %v3526 = vpop.f32.mrb[0].mxu0
    %v3527 = vadd.f32 %v319, %v3526
    %v3528 = vpop.f32.mrb[0].mxu0
    %3529 = vdwg.mxu0
    %3530 = vmatprep.subr.mxu0 %v279
    %3531 = vmatpush1.msra.mxu0 %v278
    %3532 = vmatprep.subr.mxu0 %v282
    %3533 = vmatpush1.msra.mxu0 %v281
    %3534 = vmatprep.subr.mxu0 %v285
    %3535 = vmatpush1.msra.mxu0 %v284
    %3536 = vmatprep.subr.mxu0 %v288
    %3537 = vmatpush1.msra.mxu0 %v287
    %3538 = vmatprep.subr.mxu0 0.0
    %3539 = vmatpush1.msra.mxu0 0.0
    %3540 = vmatprep.subr.mxu0 0.0
    %3541 = vmatpush1.msra.mxu0 0.0
    %3542 = vmatprep.subr.mxu0 0.0
    %3543 = vmatpush1.msra.mxu0 0.0
    %3544 = vmatprep.subr.mxu0 0.0
    %3545 = vmatpush1.msra.mxu0 0.0
    %3546 = vmatprep.subr.mxu0 0.0
    %3547 = vmatpush1.msra.mxu0 0.0
    %3548 = vmatprep.subr.mxu0 0.0
    %3549 = vmatpush1.msra.mxu0 0.0
    %3550 = vmatprep.subr.mxu0 0.0
    %3551 = vmatpush1.msra.mxu0 0.0
    %3552 = vmatprep.subr.mxu0 0.0
    %3553 = vmatpush1.msra.mxu0 0.0
    %3554 = vmatprep.subr.mxu0 0.0
    %3555 = vmatpush1.msra.mxu0 0.0
    %3556 = vmatprep.subr.mxu0 0.0
    %3557 = vmatpush1.msra.mxu0 0.0
    %3558 = vmatprep.subr.mxu0 0.0
    %3559 = vmatpush1.msra.mxu0 0.0
    %3560 = vmatprep.subr.mxu0 0.0
    %3561 = vmatpush1.msra.mxu0 0.0
    %3562 = vmatprep.subr.mxu0 0.0
    %3563 = vmatpush1.msra.mxu0 0.0
    %3564 = vmatprep.subr.mxu0 0.0
    %3565 = vmatpush1.msra.mxu0 0.0
    %3566 = vmatprep.subr.mxu0 0.0
    %3567 = vmatpush1.msra.mxu0 0.0
    %3568 = vmatprep.subr.mxu0 0.0
    %3569 = vmatpush1.msra.mxu0 0.0
    %3570 = vmatprep.subr.mxu0 0.0
    %3571 = vmatpush1.msra.mxu0 0.0
    %3572 = vmatprep.subr.mxu0 0.0
    %3573 = vmatpush1.msra.mxu0 0.0
    %3574 = vmatprep.subr.mxu0 0.0
    %3575 = vmatpush1.msra.mxu0 0.0
    %3576 = vmatprep.subr.mxu0 0.0
    %3577 = vmatpush1.msra.mxu0 0.0
    %3578 = vmatprep.subr.mxu0 0.0
    %3579 = vmatpush1.msra.mxu0 0.0
    %3580 = vmatprep.subr.mxu0 0.0
    %3581 = vmatpush1.msra.mxu0 0.0
    %3582 = vmatprep.subr.mxu0 0.0
    %3583 = vmatpush1.msra.mxu0 0.0
    %3584 = vmatprep.subr.mxu0 0.0
    %3585 = vmatpush1.msra.mxu0 0.0
    %3586 = vmatprep.subr.mxu0 0.0
    %3587 = vmatpush1.msra.mxu0 0.0
    %3588 = vmatprep.subr.mxu0 0.0
    %3589 = vmatpush1.msra.mxu0 0.0
    %3590 = vmatprep.subr.mxu0 0.0
    %3591 = vmatpush1.msra.mxu0 0.0
    %3592 = vmatprep.subr.mxu0 0.0
    %3593 = vmatpush1.msra.mxu0 0.0
    %3594 = vmatprep.mubr.f32.mxu0 0.0
    %3595 = vmatmul.mubr.f32.gmra.mrb[0].mxu0 %v3387
    %v3596 = vpop.f32.mrb[0].mxu0
    %v3597 = vadd.f32 %v643, %v3596
    %v3598 = vpop.f32.mrb[0].mxu0
    %v3599 = vadd.f32 %v647, %v3598
    %3600 = vdwg.mxu0
    %3601 = vmatprep.subr.mxu0 0.0
    %3602 = vmatpush1.msra.mxu0 %v280
    %3603 = vmatprep.subr.mxu0 0.0
    %3604 = vmatpush1.msra.mxu0 %v283
    %3605 = vmatprep.subr.mxu0 0.0
    %3606 = vmatpush1.msra.mxu0 %v286
    %3607 = vmatprep.subr.mxu0 0.0
    %3608 = vmatpush1.msra.mxu0 %v289
    %3609 = vmatprep.subr.mxu0 0.0
    %3610 = vmatpush1.msra.mxu0 0.0
    %3611 = vmatprep.subr.mxu0 0.0
    %3612 = vmatpush1.msra.mxu0 0.0
    %3613 = vmatprep.subr.mxu0 0.0
    %3614 = vmatpush1.msra.mxu0 0.0
    %3615 = vmatprep.subr.mxu0 0.0
    %3616 = vmatpush1.msra.mxu0 0.0
    %3617 = vmatprep.subr.mxu0 0.0
    %3618 = vmatpush1.msra.mxu0 0.0
    %3619 = vmatprep.subr.mxu0 0.0
    %3620 = vmatpush1.msra.mxu0 0.0
    %3621 = vmatprep.subr.mxu0 0.0
    %3622 = vmatpush1.msra.mxu0 0.0
    %3623 = vmatprep.subr.mxu0 0.0
    %3624 = vmatpush1.msra.mxu0 0.0
    %3625 = vmatprep.subr.mxu0 0.0
    %3626 = vmatpush1.msra.mxu0 0.0
    %3627 = vmatprep.subr.mxu0 0.0
    %3628 = vmatpush1.msra.mxu0 0.0
    %3629 = vmatprep.subr.mxu0 0.0
    %3630 = vmatpush1.msra.mxu0 0.0
    %3631 = vmatprep.subr.mxu0 0.0
    %3632 = vmatpush1.msra.mxu0 0.0
    %3633 = vmatprep.subr.mxu0 0.0
    %3634 = vmatpush1.msra.mxu0 0.0
    %3635 = vmatprep.subr.mxu0 0.0
    %3636 = vmatpush1.msra.mxu0 0.0
    %3637 = vmatprep.subr.mxu0 0.0
    %3638 = vmatpush1.msra.mxu0 0.0
    %3639 = vmatprep.subr.mxu0 0.0
    %3640 = vmatpush1.msra.mxu0 0.0
    %3641 = vmatprep.subr.mxu0 0.0
    %3642 = vmatpush1.msra.mxu0 0.0
    %3643 = vmatprep.subr.mxu0 0.0
    %3644 = vmatpush1.msra.mxu0 0.0
    %3645 = vmatprep.subr.mxu0 0.0
    %3646 = vmatpush1.msra.mxu0 0.0
    %3647 = vmatprep.subr.mxu0 0.0
    %3648 = vmatpush1.msra.mxu0 0.0
    %3649 = vmatprep.subr.mxu0 0.0
    %3650 = vmatpush1.msra.mxu0 0.0
    %3651 = vmatprep.subr.mxu0 0.0
    %3652 = vmatpush1.msra.mxu0 0.0
    %3653 = vmatprep.subr.mxu0 0.0
    %3654 = vmatpush1.msra.mxu0 0.0
    %3655 = vmatprep.subr.mxu0 0.0
    %3656 = vmatpush1.msra.mxu0 0.0
    %3657 = vmatprep.subr.mxu0 0.0
    %3658 = vmatpush1.msra.mxu0 0.0
    %3659 = vmatprep.subr.mxu0 0.0
    %3660 = vmatpush1.msra.mxu0 0.0
    %3661 = vmatprep.subr.mxu0 0.0
    %3662 = vmatpush1.msra.mxu0 0.0
    %3663 = vmatprep.subr.mxu0 0.0
    %3664 = vmatpush1.msra.mxu0 0.0
    %3665 = vmatprep.mubr.f32.mxu0 0.0
    %3666 = vmatmul.mubr.f32.gmra.mrb[0].mxu0 %v3387
    %v3667 = vpop.f32.mrb[0].mxu0
    %v3668 = vadd.f32 %v651, %v3667
    %v3669 = vpop.f32.mrb[0].mxu0
    %3670 = vdwg.mxu0
    %v3672 = vsel %vm323, %v3385, 0
    %3674 = vmatprep.subr.mxu0 %v291
    %3675 = vmatpush1.msra.mxu0 %v290
    %3676 = vmatprep.subr.mxu0 %v294
    %3677 = vmatpush1.msra.mxu0 %v293
    %3678 = vmatprep.subr.mxu0 %v297
    %3679 = vmatpush1.msra.mxu0 %v296
    %3680 = vmatprep.subr.mxu0 %v300
    %3681 = vmatpush1.msra.mxu0 %v299
    %3682 = vmatprep.subr.mxu0 0.0
    %3683 = vmatpush1.msra.mxu0 0.0
    %3684 = vmatprep.subr.mxu0 0.0
    %3685 = vmatpush1.msra.mxu0 0.0
    %3686 = vmatprep.subr.mxu0 0.0
    %3687 = vmatpush1.msra.mxu0 0.0
    %3688 = vmatprep.subr.mxu0 0.0
    %3689 = vmatpush1.msra.mxu0 0.0
    %3690 = vmatprep.subr.mxu0 0.0
    %3691 = vmatpush1.msra.mxu0 0.0
    %3692 = vmatprep.subr.mxu0 0.0
    %3693 = vmatpush1.msra.mxu0 0.0
    %3694 = vmatprep.subr.mxu0 0.0
    %3695 = vmatpush1.msra.mxu0 0.0
    %3696 = vmatprep.subr.mxu0 0.0
    %3697 = vmatpush1.msra.mxu0 0.0
    %3698 = vmatprep.subr.mxu0 0.0
    %3699 = vmatpush1.msra.mxu0 0.0
    %3700 = vmatprep.subr.mxu0 0.0
    %3701 = vmatpush1.msra.mxu0 0.0
    %3702 = vmatprep.subr.mxu0 0.0
    %3703 = vmatpush1.msra.mxu0 0.0
    %3704 = vmatprep.subr.mxu0 0.0
    %3705 = vmatpush1.msra.mxu0 0.0
    %3706 = vmatprep.subr.mxu0 0.0
    %3707 = vmatpush1.msra.mxu0 0.0
    %3708 = vmatprep.subr.mxu0 0.0
    %3709 = vmatpush1.msra.mxu0 0.0
    %3710 = vmatprep.subr.mxu0 0.0
    %3711 = vmatpush1.msra.mxu0 0.0
    %3712 = vmatprep.subr.mxu0 0.0
    %3713 = vmatpush1.msra.mxu0 0.0
    %3714 = vmatprep.subr.mxu0 0.0
    %3715 = vmatpush1.msra.mxu0 0.0
    %3716 = vmatprep.subr.mxu0 0.0
    %3717 = vmatpush1.msra.mxu0 0.0
    %3718 = vmatprep.subr.mxu0 0.0
    %3719 = vmatpush1.msra.mxu0 0.0
    %3720 = vmatprep.subr.mxu0 0.0
    %3721 = vmatpush1.msra.mxu0 0.0
    %3722 = vmatprep.subr.mxu0 0.0
    %3723 = vmatpush1.msra.mxu0 0.0
    %3724 = vmatprep.subr.mxu0 0.0
    %3725 = vmatpush1.msra.mxu0 0.0
    %3726 = vmatprep.subr.mxu0 0.0
    %3727 = vmatpush1.msra.mxu0 0.0
    %3728 = vmatprep.subr.mxu0 0.0
    %3729 = vmatpush1.msra.mxu0 0.0
    %3730 = vmatprep.subr.mxu0 0.0
    %3731 = vmatpush1.msra.mxu0 0.0
    %3732 = vmatprep.subr.mxu0 0.0
    %3733 = vmatpush1.msra.mxu0 0.0
    %3734 = vmatprep.subr.mxu0 0.0
    %3735 = vmatpush1.msra.mxu0 0.0
    %3736 = vmatprep.subr.mxu0 0.0
    %3737 = vmatpush1.msra.mxu0 0.0
    %3738 = vmatprep.mubr.f32.mxu0 0.0
    %3739 = vmatmul.mubr.f32.gmra.mrb[0].mxu0 %v3672
    %v3740 = vpop.f32.mrb[0].mxu0
    %v3741 = vadd.f32 %v800, %v3740
    %v3742 = vpop.f32.mrb[0].mxu0
    %v3743 = vadd.f32 %v804, %v3742
    %3744 = vdwg.mxu0
    %3745 = vmatprep.subr.mxu0 0.0
    %3746 = vmatpush1.msra.mxu0 %v292
    %3747 = vmatprep.subr.mxu0 0.0
    %3748 = vmatpush1.msra.mxu0 %v295
    %3749 = vmatprep.subr.mxu0 0.0
    %3750 = vmatpush1.msra.mxu0 %v298
    %3751 = vmatprep.subr.mxu0 0.0
    %3752 = vmatpush1.msra.mxu0 %v301
    %3753 = vmatprep.subr.mxu0 0.0
    %3754 = vmatpush1.msra.mxu0 0.0
    %3755 = vmatprep.subr.mxu0 0.0
    %3756 = vmatpush1.msra.mxu0 0.0
    %3757 = vmatprep.subr.mxu0 0.0
    %3758 = vmatpush1.msra.mxu0 0.0
    %3759 = vmatprep.subr.mxu0 0.0
    %3760 = vmatpush1.msra.mxu0 0.0
    %3761 = vmatprep.subr.mxu0 0.0
    %3762 = vmatpush1.msra.mxu0 0.0
    %3763 = vmatprep.subr.mxu0 0.0
    %3764 = vmatpush1.msra.mxu0 0.0
    %3765 = vmatprep.subr.mxu0 0.0
    %3766 = vmatpush1.msra.mxu0 0.0
    %3767 = vmatprep.subr.mxu0 0.0
    %3768 = vmatpush1.msra.mxu0 0.0
    %3769 = vmatprep.subr.mxu0 0.0
    %3770 = vmatpush1.msra.mxu0 0.0
    %3771 = vmatprep.subr.mxu0 0.0
    %3772 = vmatpush1.msra.mxu0 0.0
    %3773 = vmatprep.subr.mxu0 0.0
    %3774 = vmatpush1.msra.mxu0 0.0
    %3775 = vmatprep.subr.mxu0 0.0
    %3776 = vmatpush1.msra.mxu0 0.0
    %3777 = vmatprep.subr.mxu0 0.0
    %3778 = vmatpush1.msra.mxu0 0.0
    %3779 = vmatprep.subr.mxu0 0.0
    %3780 = vmatpush1.msra.mxu0 0.0
    %3781 = vmatprep.subr.mxu0 0.0
    %3782 = vmatpush1.msra.mxu0 0.0
    %3783 = vmatprep.subr.mxu0 0.0
    %3784 = vmatpush1.msra.mxu0 0.0
    %3785 = vmatprep.subr.mxu0 0.0
    %3786 = vmatpush1.msra.mxu0 0.0
    %3787 = vmatprep.subr.mxu0 0.0
    %3788 = vmatpush1.msra.mxu0 0.0
    %3789 = vmatprep.subr.mxu0 0.0
    %3790 = vmatpush1.msra.mxu0 0.0
    %3791 = vmatprep.subr.mxu0 0.0
    %3792 = vmatpush1.msra.mxu0 0.0
    %3793 = vmatprep.subr.mxu0 0.0
    %3794 = vmatpush1.msra.mxu0 0.0
    %3795 = vmatprep.subr.mxu0 0.0
    %3796 = vmatpush1.msra.mxu0 0.0
    %3797 = vmatprep.subr.mxu0 0.0
    %3798 = vmatpush1.msra.mxu0 0.0
    %3799 = vmatprep.subr.mxu0 0.0
    %3800 = vmatpush1.msra.mxu0 0.0
    %3801 = vmatprep.subr.mxu0 0.0
    %3802 = vmatpush1.msra.mxu0 0.0
    %3803 = vmatprep.subr.mxu0 0.0
    %3804 = vmatpush1.msra.mxu0 0.0
    %3805 = vmatprep.subr.mxu0 0.0
    %3806 = vmatpush1.msra.mxu0 0.0
    %3807 = vmatprep.subr.mxu0 0.0
    %3808 = vmatpush1.msra.mxu0 0.0
    %3809 = vmatprep.mubr.f32.mxu0 0.0
    %3810 = vmatmul.mubr.f32.gmra.mrb[0].mxu0 %v3672
    %v3811 = vpop.f32.mrb[0].mxu0
    %v3812 = vadd.f32 %v808, %v3811
    %v3813 = vpop.f32.mrb[0].mxu0
    %3814 = vdwg.mxu0
    %v3815 = vld [vmem:[%s252] sm:$0x3f]
    %v3816 = vadd.f32 %v3815, %v3456
    %v3817 = vxor.u32 %v3816, 2147483648
    %v3818 = vmul.f32 %v3817, 1.442695
    %v3819 = vpow.pop %v3818
    %v3820 = vadd.f32 %v3819, 1.0
    %v3821 = vrcp.pop %v3820
    %v3822 = vmul.f32 1.0, %v3821
    %v3824 = vrot.slane %v3815, 2
    %v3826 = vadd.f32 %v3824, %v3458
    %v3827 = vxor.u32 %v3826, 2147483648
    %v3828 = vmul.f32 %v3827, 1.442695
    %v3829 = vpow.pop %v3828
    %v3830 = vadd.f32 %v3829, 1.0
    %v3831 = vrcp.pop %v3830
    %v3832 = vmul.f32 1.0, %v3831
    %v3833 = vmul.f32 %v3822, %v3527
    %v3834 = vrot.slane %v3815, 4
    %v3836 = vadd.f32 %v3834, %v3833
    %v3837 = vtanh.pop %v3836
    %v3838 = vsub.f32 1.0, %v3832
    %v3839 = vmul.f32 %v3838, %v3837
    %v3840 = vmul.f32 %v3832, %v3364
    %v3841 = vadd.f32 %v3839, %v3840
    %v3842 = vadd.f32 %v3597, %v3741
    %v3843 = vxor.u32 %v3842, 2147483648
    %v3844 = vmul.f32 %v3843, 1.442695
    %v3845 = vpow.pop %v3844
    %v3846 = vadd.f32 %v3845, 1.0
    %v3847 = vrcp.pop %v3846
    %v3848 = vmul.f32 1.0, %v3847
    %v3849 = vadd.f32 %v3599, %v3743
    %v3850 = vxor.u32 %v3849, 2147483648
    %v3851 = vmul.f32 %v3850, 1.442695
    %v3852 = vpow.pop %v3851
    %v3853 = vadd.f32 %v3852, 1.0
    %v3854 = vrcp.pop %v3853
    %v3855 = vmul.f32 1.0, %v3854
    %v3856 = vmul.f32 %v3848, %v3812
    %v3857 = vadd.f32 %v3668, %v3856
    %v3858 = vtanh.pop %v3857
    %v3859 = vsub.f32 1.0, %v3855
    %v3860 = vmul.f32 %v3859, %v3858
    %v3861 = vmul.f32 %v3855, %v3385
    %v3862 = vadd.f32 %v3860, %v3861
    %v3864 = vsel %vm323, %v3841, 0
    %3866 = vmatprep.subr.mxu0 %v279
    %3867 = vmatpush1.msra.mxu0 %v278
    %3868 = vmatprep.subr.mxu0 %v282
    %3869 = vmatpush1.msra.mxu0 %v281
    %3870 = vmatprep.subr.mxu0 %v285
    %3871 = vmatpush1.msra.mxu0 %v284
    %3872 = vmatprep.subr.mxu0 %v288
    %3873 = vmatpush1.msra.mxu0 %v287
    %3874 = vmatprep.subr.mxu0 0.0
    %3875 = vmatpush1.msra.mxu0 0.0
    %3876 = vmatprep.subr.mxu0 0.0
    %3877 = vmatpush1.msra.mxu0 0.0
    %3878 = vmatprep.subr.mxu0 0.0
    %3879 = vmatpush1.msra.mxu0 0.0
    %3880 = vmatprep.subr.mxu0 0.0
    %3881 = vmatpush1.msra.mxu0 0.0
    %3882 = vmatprep.subr.mxu0 0.0
    %3883 = vmatpush1.msra.mxu0 0.0
    %3884 = vmatprep.subr.mxu0 0.0
    %3885 = vmatpush1.msra.mxu0 0.0
    %3886 = vmatprep.subr.mxu0 0.0
    %3887 = vmatpush1.msra.mxu0 0.0
    %3888 = vmatprep.subr.mxu0 0.0
    %3889 = vmatpush1.msra.mxu0 0.0
    %3890 = vmatprep.subr.mxu0 0.0
    %3891 = vmatpush1.msra.mxu0 0.0
    %3892 = vmatprep.subr.mxu0 0.0
    %3893 = vmatpush1.msra.mxu0 0.0
    %3894 = vmatprep.subr.mxu0 0.0
    %3895 = vmatpush1.msra.mxu0 0.0
    %3896 = vmatprep.subr.mxu0 0.0
    %3897 = vmatpush1.msra.mxu0 0.0
    %3898 = vmatprep.subr.mxu0 0.0
    %3899 = vmatpush1.msra.mxu0 0.0
    %3900 = vmatprep.subr.mxu0 0.0
    %3901 = vmatpush1.msra.mxu0 0.0
    %3902 = vmatprep.subr.mxu0 0.0
    %3903 = vmatpush1.msra.mxu0 0.0
    %3904 = vmatprep.subr.mxu0 0.0
    %3905 = vmatpush1.msra.mxu0 0.0
    %3906 = vmatprep.subr.mxu0 0.0
    %3907 = vmatpush1.msra.mxu0 0.0
    %3908 = vmatprep.subr.mxu0 0.0
    %3909 = vmatpush1.msra.mxu0 0.0
    %3910 = vmatprep.subr.mxu0 0.0
    %3911 = vmatpush1.msra.mxu0 0.0
    %3912 = vmatprep.subr.mxu0 0.0
    %3913 = vmatpush1.msra.mxu0 0.0
    %3914 = vmatprep.subr.mxu0 0.0
    %3915 = vmatpush1.msra.mxu0 0.0
    %3916 = vmatprep.subr.mxu0 0.0
    %3917 = vmatpush1.msra.mxu0 0.0
    %3918 = vmatprep.subr.mxu0 0.0
    %3919 = vmatpush1.msra.mxu0 0.0
    %3920 = vmatprep.subr.mxu0 0.0
    %3921 = vmatpush1.msra.mxu0 0.0
    %3922 = vmatprep.subr.mxu0 0.0
    %3923 = vmatpush1.msra.mxu0 0.0
    %3924 = vmatprep.subr.mxu0 0.0
    %3925 = vmatpush1.msra.mxu0 0.0
    %3926 = vmatprep.subr.mxu0 0.0
    %3927 = vmatpush1.msra.mxu0 0.0
    %3928 = vmatprep.subr.mxu0 0.0
    %3929 = vmatpush1.msra.mxu0 0.0
    %3930 = vmatprep.mubr.f32.mxu0 0.0
    %3931 = vmatmul.mubr.f32.gmra.mrb[0].mxu0 %v3864
    %v3932 = vpop.f32.mrb[0].mxu0
    %v3933 = vadd.f32 %v643, %v3932
    %v3934 = vpop.f32.mrb[0].mxu0
    %v3935 = vadd.f32 %v647, %v3934
    %3936 = vdwg.mxu0
    %3937 = vmatprep.subr.mxu0 0.0
    %3938 = vmatpush1.msra.mxu0 %v280
    %3939 = vmatprep.subr.mxu0 0.0
    %3940 = vmatpush1.msra.mxu0 %v283
    %3941 = vmatprep.subr.mxu0 0.0
    %3942 = vmatpush1.msra.mxu0 %v286
    %3943 = vmatprep.subr.mxu0 0.0
    %3944 = vmatpush1.msra.mxu0 %v289
    %3945 = vmatprep.subr.mxu0 0.0
    %3946 = vmatpush1.msra.mxu0 0.0
    %3947 = vmatprep.subr.mxu0 0.0
    %3948 = vmatpush1.msra.mxu0 0.0
    %3949 = vmatprep.subr.mxu0 0.0
    %3950 = vmatpush1.msra.mxu0 0.0
    %3951 = vmatprep.subr.mxu0 0.0
    %3952 = vmatpush1.msra.mxu0 0.0
    %3953 = vmatprep.subr.mxu0 0.0
    %3954 = vmatpush1.msra.mxu0 0.0
    %3955 = vmatprep.subr.mxu0 0.0
    %3956 = vmatpush1.msra.mxu0 0.0
    %3957 = vmatprep.subr.mxu0 0.0
    %3958 = vmatpush1.msra.mxu0 0.0
    %3959 = vmatprep.subr.mxu0 0.0
    %3960 = vmatpush1.msra.mxu0 0.0
    %3961 = vmatprep.subr.mxu0 0.0
    %3962 = vmatpush1.msra.mxu0 0.0
    %3963 = vmatprep.subr.mxu0 0.0
    %3964 = vmatpush1.msra.mxu0 0.0
    %3965 = vmatprep.subr.mxu0 0.0
    %3966 = vmatpush1.msra.mxu0 0.0
    %3967 = vmatprep.subr.mxu0 0.0
    %3968 = vmatpush1.msra.mxu0 0.0
    %3969 = vmatprep.subr.mxu0 0.0
    %3970 = vmatpush1.msra.mxu0 0.0
    %3971 = vmatprep.subr.mxu0 0.0
    %3972 = vmatpush1.msra.mxu0 0.0
    %3973 = vmatprep.subr.mxu0 0.0
    %3974 = vmatpush1.msra.mxu0 0.0
    %3975 = vmatprep.subr.mxu0 0.0
    %3976 = vmatpush1.msra.mxu0 0.0
    %3977 = vmatprep.subr.mxu0 0.0
    %3978 = vmatpush1.msra.mxu0 0.0
    %3979 = vmatprep.subr.mxu0 0.0
    %3980 = vmatpush1.msra.mxu0 0.0
    %3981 = vmatprep.subr.mxu0 0.0
    %3982 = vmatpush1.msra.mxu0 0.0
    %3983 = vmatprep.subr.mxu0 0.0
    %3984 = vmatpush1.msra.mxu0 0.0
    %3985 = vmatprep.subr.mxu0 0.0
    %3986 = vmatpush1.msra.mxu0 0.0
    %3987 = vmatprep.subr.mxu0 0.0
    %3988 = vmatpush1.msra.mxu0 0.0
    %3989 = vmatprep.subr.mxu0 0.0
    %3990 = vmatpush1.msra.mxu0 0.0
    %3991 = vmatprep.subr.mxu0 0.0
    %3992 = vmatpush1.msra.mxu0 0.0
    %3993 = vmatprep.subr.mxu0 0.0
    %3994 = vmatpush1.msra.mxu0 0.0
    %3995 = vmatprep.subr.mxu0 0.0
    %3996 = vmatpush1.msra.mxu0 0.0
    %3997 = vmatprep.subr.mxu0 0.0
    %3998 = vmatpush1.msra.mxu0 0.0
    %3999 = vmatprep.subr.mxu0 0.0
    %4000 = vmatpush1.msra.mxu0 0.0
    %4001 = vmatprep.mubr.f32.mxu0 0.0
    %4002 = vmatmul.mubr.f32.gmra.mrb[0].mxu0 %v3864
    %v4003 = vpop.f32.mrb[0].mxu0
    %v4004 = vadd.f32 %v651, %v4003
    %v4005 = vpop.f32.mrb[0].mxu0
    %4006 = vdwg.mxu0
    %v4008 = vsel %vm323, %v3862, 0
    %4010 = vmatprep.subr.mxu0 %v291
    %4011 = vmatpush1.msra.mxu0 %v290
    %4012 = vmatprep.subr.mxu0 %v294
    %4013 = vmatpush1.msra.mxu0 %v293
    %4014 = vmatprep.subr.mxu0 %v297
    %4015 = vmatpush1.msra.mxu0 %v296
    %4016 = vmatprep.subr.mxu0 %v300
    %4017 = vmatpush1.msra.mxu0 %v299
    %4018 = vmatprep.subr.mxu0 0.0
    %4019 = vmatpush1.msra.mxu0 0.0
    %4020 = vmatprep.subr.mxu0 0.0
    %4021 = vmatpush1.msra.mxu0 0.0
    %4022 = vmatprep.subr.mxu0 0.0
    %4023 = vmatpush1.msra.mxu0 0.0
    %4024 = vmatprep.subr.mxu0 0.0
    %4025 = vmatpush1.msra.mxu0 0.0
    %4026 = vmatprep.subr.mxu0 0.0
    %4027 = vmatpush1.msra.mxu0 0.0
    %4028 = vmatprep.subr.mxu0 0.0
    %4029 = vmatpush1.msra.mxu0 0.0
    %4030 = vmatprep.subr.mxu0 0.0
    %4031 = vmatpush1.msra.mxu0 0.0
    %4032 = vmatprep.subr.mxu0 0.0
    %4033 = vmatpush1.msra.mxu0 0.0
    %4034 = vmatprep.subr.mxu0 0.0
    %4035 = vmatpush1.msra.mxu0 0.0
    %4036 = vmatprep.subr.mxu0 0.0
    %4037 = vmatpush1.msra.mxu0 0.0
    %4038 = vmatprep.subr.mxu0 0.0
    %4039 = vmatpush1.msra.mxu0 0.0
    %4040 = vmatprep.subr.mxu0 0.0
    %4041 = vmatpush1.msra.mxu0 0.0
    %4042 = vmatprep.subr.mxu0 0.0
    %4043 = vmatpush1.msra.mxu0 0.0
    %4044 = vmatprep.subr.mxu0 0.0
    %4045 = vmatpush1.msra.mxu0 0.0
    %4046 = vmatprep.subr.mxu0 0.0
    %4047 = vmatpush1.msra.mxu0 0.0
    %4048 = vmatprep.subr.mxu0 0.0
    %4049 = vmatpush1.msra.mxu0 0.0
    %4050 = vmatprep.subr.mxu0 0.0
    %4051 = vmatpush1.msra.mxu0 0.0
    %4052 = vmatprep.subr.mxu0 0.0
    %4053 = vmatpush1.msra.mxu0 0.0
    %4054 = vmatprep.subr.mxu0 0.0
    %4055 = vmatpush1.msra.mxu0 0.0
    %4056 = vmatprep.subr.mxu0 0.0
    %4057 = vmatpush1.msra.mxu0 0.0
    %4058 = vmatprep.subr.mxu0 0.0
    %4059 = vmatpush1.msra.mxu0 0.0
    %4060 = vmatprep.subr.mxu0 0.0
    %4061 = vmatpush1.msra.mxu0 0.0
    %4062 = vmatprep.subr.mxu0 0.0
    %4063 = vmatpush1.msra.mxu0 0.0
    %4064 = vmatprep.subr.mxu0 0.0
    %4065 = vmatpush1.msra.mxu0 0.0
    %4066 = vmatprep.subr.mxu0 0.0
    %4067 = vmatpush1.msra.mxu0 0.0
    %4068 = vmatprep.subr.mxu0 0.0
    %4069 = vmatpush1.msra.mxu0 0.0
    %4070 = vmatprep.subr.mxu0 0.0
    %4071 = vmatpush1.msra.mxu0 0.0
    %4072 = vmatprep.subr.mxu0 0.0
    %4073 = vmatpush1.msra.mxu0 0.0
    %4074 = vmatprep.mubr.f32.mxu0 0.0
    %4075 = vmatmul.mubr.f32.gmra.mrb[0].mxu0 %v4008
    %v4076 = vpop.f32.mrb[0].mxu0
    %v4077 = vadd.f32 %v800, %v4076
    %v4078 = vpop.f32.mrb[0].mxu0
    %v4079 = vadd.f32 %v804, %v4078
    %4080 = vdwg.mxu0
    %4081 = vmatprep.subr.mxu0 0.0
    %4082 = vmatpush1.msra.mxu0 %v292
    %4083 = vmatprep.subr.mxu0 0.0
    %4084 = vmatpush1.msra.mxu0 %v295
    %4085 = vmatprep.subr.mxu0 0.0
    %4086 = vmatpush1.msra.mxu0 %v298
    %4087 = vmatprep.subr.mxu0 0.0
    %4088 = vmatpush1.msra.mxu0 %v301
    %4089 = vmatprep.subr.mxu0 0.0
    %4090 = vmatpush1.msra.mxu0 0.0
    %4091 = vmatprep.subr.mxu0 0.0
    %4092 = vmatpush1.msra.mxu0 0.0
    %4093 = vmatprep.subr.mxu0 0.0
    %4094 = vmatpush1.msra.mxu0 0.0
    %4095 = vmatprep.subr.mxu0 0.0
    %4096 = vmatpush1.msra.mxu0 0.0
    %4097 = vmatprep.subr.mxu0 0.0
    %4098 = vmatpush1.msra.mxu0 0.0
    %4099 = vmatprep.subr.mxu0 0.0
    %4100 = vmatpush1.msra.mxu0 0.0
    %4101 = vmatprep.subr.mxu0 0.0
    %4102 = vmatpush1.msra.mxu0 0.0
    %4103 = vmatprep.subr.mxu0 0.0
    %4104 = vmatpush1.msra.mxu0 0.0
    %4105 = vmatprep.subr.mxu0 0.0
    %4106 = vmatpush1.msra.mxu0 0.0
    %4107 = vmatprep.subr.mxu0 0.0
    %4108 = vmatpush1.msra.mxu0 0.0
    %4109 = vmatprep.subr.mxu0 0.0
    %4110 = vmatpush1.msra.mxu0 0.0
    %4111 = vmatprep.subr.mxu0 0.0
    %4112 = vmatpush1.msra.mxu0 0.0
    %4113 = vmatprep.subr.mxu0 0.0
    %4114 = vmatpush1.msra.mxu0 0.0
    %4115 = vmatprep.subr.mxu0 0.0
    %4116 = vmatpush1.msra.mxu0 0.0
    %4117 = vmatprep.subr.mxu0 0.0
    %4118 = vmatpush1.msra.mxu0 0.0
    %4119 = vmatprep.subr.mxu0 0.0
    %4120 = vmatpush1.msra.mxu0 0.0
    %4121 = vmatprep.subr.mxu0 0.0
    %4122 = vmatpush1.msra.mxu0 0.0
    %4123 = vmatprep.subr.mxu0 0.0
    %4124 = vmatpush1.msra.mxu0 0.0
    %4125 = vmatprep.subr.mxu0 0.0
    %4126 = vmatpush1.msra.mxu0 0.0
    %4127 = vmatprep.subr.mxu0 0.0
    %4128 = vmatpush1.msra.mxu0 0.0
    %4129 = vmatprep.subr.mxu0 0.0
    %4130 = vmatpush1.msra.mxu0 0.0
    %4131 = vmatprep.subr.mxu0 0.0
    %4132 = vmatpush1.msra.mxu0 0.0
    %4133 = vmatprep.subr.mxu0 0.0
    %4134 = vmatpush1.msra.mxu0 0.0
    %4135 = vmatprep.subr.mxu0 0.0
    %4136 = vmatpush1.msra.mxu0 0.0
    %4137 = vmatprep.subr.mxu0 0.0
    %4138 = vmatpush1.msra.mxu0 0.0
    %4139 = vmatprep.subr.mxu0 0.0
    %4140 = vmatpush1.msra.mxu0 0.0
    %4141 = vmatprep.subr.mxu0 0.0
    %4142 = vmatpush1.msra.mxu0 0.0
    %4143 = vmatprep.subr.mxu0 0.0
    %4144 = vmatpush1.msra.mxu0 0.0
    %4145 = vmatprep.mubr.f32.mxu0 0.0
    %4146 = vmatmul.mubr.f32.gmra.mrb[0].mxu0 %v4008
    %v4147 = vpop.f32.mrb[0].mxu0
    %v4148 = vadd.f32 %v808, %v4147
    %v4149 = vpop.f32.mrb[0].mxu0
    %4150 = vdwg.mxu0
    %v4151 = vadd.f32 %v3933, %v4077
    %v4152 = vxor.u32 %v4151, 2147483648
    %v4153 = vmul.f32 %v4152, 1.442695
    %v4154 = vpow.pop %v4153
    %v4155 = vadd.f32 %v4154, 1.0
    %v4156 = vrcp.pop %v4155
    %v4157 = vmul.f32 1.0, %v4156
    %v4158 = vadd.f32 %v3935, %v4079
    %v4159 = vxor.u32 %v4158, 2147483648
    %v4160 = vmul.f32 %v4159, 1.442695
    %v4161 = vpow.pop %v4160
    %v4162 = vadd.f32 %v4161, 1.0
    %v4163 = vrcp.pop %v4162
    %v4164 = vmul.f32 1.0, %v4163
    %v4165 = vmul.f32 %v4157, %v4148
    %v4166 = vadd.f32 %v4004, %v4165
    %v4167 = vtanh.pop %v4166
    %v4168 = vsub.f32 1.0, %v4164
    %v4169 = vmul.f32 %v4168, %v4167
    %v4170 = vmul.f32 %v4164, %v3862
    %v4171 = vadd.f32 %v4169, %v4170
    %v4172 = vld [vmem:[#allocation10 + $0x210] sm:$0xff]
    %v4173 = vld [vmem:[#allocation10 + $0x218] sm:$0xff]
    %v4174 = vld [vmem:[#allocation10 + $0x220] sm:$0xff]
    %v4175 = vld [vmem:[#allocation10 + $0x228] sm:$0xff]
    %v4176 = vld [vmem:[#allocation10 + $0x230] sm:$0xff]
    %v4177 = vld [vmem:[#allocation10 + $0x238] sm:$0xff]
    %v4178 = vld [vmem:[#allocation10 + $0x240] sm:$0xff]
    %v4179 = vld [vmem:[#allocation10 + $0x248] sm:$0xff]
    %v4180 = vld [vmem:[#allocation10 + $0x250] sm:$0xff]
    %v4181 = vld [vmem:[#allocation10 + $0x258] sm:$0xff]
    %v4182 = vld [vmem:[#allocation10 + $0x260] sm:$0xff]
    %v4183 = vld [vmem:[#allocation10 + $0x268] sm:$0xff]
    %v4185 = vsel %vm323, %v4171, 0
    %4187 = vmatprep.subr.mxu0 %v4173
    %4188 = vmatpush1.msra.mxu0 %v4172
    %4189 = vmatprep.subr.mxu0 %v4176
    %4190 = vmatpush1.msra.mxu0 %v4175
    %4191 = vmatprep.subr.mxu0 %v4179
    %4192 = vmatpush1.msra.mxu0 %v4178
    %4193 = vmatprep.subr.mxu0 %v4182
    %4194 = vmatpush1.msra.mxu0 %v4181
    %4195 = vmatprep.subr.mxu0 0.0
    %4196 = vmatpush1.msra.mxu0 0.0
    %4197 = vmatprep.subr.mxu0 0.0
    %4198 = vmatpush1.msra.mxu0 0.0
    %4199 = vmatprep.subr.mxu0 0.0
    %4200 = vmatpush1.msra.mxu0 0.0
    %4201 = vmatprep.subr.mxu0 0.0
    %4202 = vmatpush1.msra.mxu0 0.0
    %4203 = vmatprep.subr.mxu0 0.0
    %4204 = vmatpush1.msra.mxu0 0.0
    %4205 = vmatprep.subr.mxu0 0.0
    %4206 = vmatpush1.msra.mxu0 0.0
    %4207 = vmatprep.subr.mxu0 0.0
    %4208 = vmatpush1.msra.mxu0 0.0
    %4209 = vmatprep.subr.mxu0 0.0
    %4210 = vmatpush1.msra.mxu0 0.0
    %4211 = vmatprep.subr.mxu0 0.0
    %4212 = vmatpush1.msra.mxu0 0.0
    %4213 = vmatprep.subr.mxu0 0.0
    %4214 = vmatpush1.msra.mxu0 0.0
    %4215 = vmatprep.subr.mxu0 0.0
    %4216 = vmatpush1.msra.mxu0 0.0
    %4217 = vmatprep.subr.mxu0 0.0
    %4218 = vmatpush1.msra.mxu0 0.0
    %4219 = vmatprep.subr.mxu0 0.0
    %4220 = vmatpush1.msra.mxu0 0.0
    %4221 = vmatprep.subr.mxu0 0.0
    %4222 = vmatpush1.msra.mxu0 0.0
    %4223 = vmatprep.subr.mxu0 0.0
    %4224 = vmatpush1.msra.mxu0 0.0
    %4225 = vmatprep.subr.mxu0 0.0
    %4226 = vmatpush1.msra.mxu0 0.0
    %4227 = vmatprep.subr.mxu0 0.0
    %4228 = vmatpush1.msra.mxu0 0.0
    %4229 = vmatprep.subr.mxu0 0.0
    %4230 = vmatpush1.msra.mxu0 0.0
    %4231 = vmatprep.subr.mxu0 0.0
    %4232 = vmatpush1.msra.mxu0 0.0
    %4233 = vmatprep.subr.mxu0 0.0
    %4234 = vmatpush1.msra.mxu0 0.0
    %4235 = vmatprep.subr.mxu0 0.0
    %4236 = vmatpush1.msra.mxu0 0.0
    %4237 = vmatprep.subr.mxu0 0.0
    %4238 = vmatpush1.msra.mxu0 0.0
    %4239 = vmatprep.subr.mxu0 0.0
    %4240 = vmatpush1.msra.mxu0 0.0
    %4241 = vmatprep.subr.mxu0 0.0
    %4242 = vmatpush1.msra.mxu0 0.0
    %4243 = vmatprep.subr.mxu0 0.0
    %4244 = vmatpush1.msra.mxu0 0.0
    %4245 = vmatprep.subr.mxu0 0.0
    %4246 = vmatpush1.msra.mxu0 0.0
    %4247 = vmatprep.subr.mxu0 0.0
    %4248 = vmatpush1.msra.mxu0 0.0
    %4249 = vmatprep.subr.mxu0 0.0
    %4250 = vmatpush1.msra.mxu0 0.0
    %4251 = vmatprep.mubr.f32.mxu0 0.0
    %4252 = vmatmul.mubr.f32.gmra.mrb[0].mxu0 %v4185
    %v4253 = vpop.f32.mrb[0].mxu0
    %v4254 = vadd.f32 0.0, %v4253
    %v4255 = vpop.f32.mrb[0].mxu0
    %v4256 = vadd.f32 0.0, %v4255
    %4257 = vdwg.mxu0
    %4258 = vmatprep.subr.mxu0 0.0
    %4259 = vmatpush1.msra.mxu0 %v4174
    %4260 = vmatprep.subr.mxu0 0.0
    %4261 = vmatpush1.msra.mxu0 %v4177
    %4262 = vmatprep.subr.mxu0 0.0
    %4263 = vmatpush1.msra.mxu0 %v4180
    %4264 = vmatprep.subr.mxu0 0.0
    %4265 = vmatpush1.msra.mxu0 %v4183
    %4266 = vmatprep.subr.mxu0 0.0
    %4267 = vmatpush1.msra.mxu0 0.0
    %4268 = vmatprep.subr.mxu0 0.0
    %4269 = vmatpush1.msra.mxu0 0.0
    %4270 = vmatprep.subr.mxu0 0.0
    %4271 = vmatpush1.msra.mxu0 0.0
    %4272 = vmatprep.subr.mxu0 0.0
    %4273 = vmatpush1.msra.mxu0 0.0
    %4274 = vmatprep.subr.mxu0 0.0
    %4275 = vmatpush1.msra.mxu0 0.0
    %4276 = vmatprep.subr.mxu0 0.0
    %4277 = vmatpush1.msra.mxu0 0.0
    %4278 = vmatprep.subr.mxu0 0.0
    %4279 = vmatpush1.msra.mxu0 0.0
    %4280 = vmatprep.subr.mxu0 0.0
    %4281 = vmatpush1.msra.mxu0 0.0
    %4282 = vmatprep.subr.mxu0 0.0
    %4283 = vmatpush1.msra.mxu0 0.0
    %4284 = vmatprep.subr.mxu0 0.0
    %4285 = vmatpush1.msra.mxu0 0.0
    %4286 = vmatprep.subr.mxu0 0.0
    %4287 = vmatpush1.msra.mxu0 0.0
    %4288 = vmatprep.subr.mxu0 0.0
    %4289 = vmatpush1.msra.mxu0 0.0
    %4290 = vmatprep.subr.mxu0 0.0
    %4291 = vmatpush1.msra.mxu0 0.0
    %4292 = vmatprep.subr.mxu0 0.0
    %4293 = vmatpush1.msra.mxu0 0.0
    %4294 = vmatprep.subr.mxu0 0.0
    %4295 = vmatpush1.msra.mxu0 0.0
    %4296 = vmatprep.subr.mxu0 0.0
    %4297 = vmatpush1.msra.mxu0 0.0
    %4298 = vmatprep.subr.mxu0 0.0
    %4299 = vmatpush1.msra.mxu0 0.0
    %4300 = vmatprep.subr.mxu0 0.0
    %4301 = vmatpush1.msra.mxu0 0.0
    %4302 = vmatprep.subr.mxu0 0.0
    %4303 = vmatpush1.msra.mxu0 0.0
    %4304 = vmatprep.subr.mxu0 0.0
    %4305 = vmatpush1.msra.mxu0 0.0
    %4306 = vmatprep.subr.mxu0 0.0
    %4307 = vmatpush1.msra.mxu0 0.0
    %4308 = vmatprep.subr.mxu0 0.0
    %4309 = vmatpush1.msra.mxu0 0.0
    %4310 = vmatprep.subr.mxu0 0.0
    %4311 = vmatpush1.msra.mxu0 0.0
    %4312 = vmatprep.subr.mxu0 0.0
    %4313 = vmatpush1.msra.mxu0 0.0
    %4314 = vmatprep.subr.mxu0 0.0
    %4315 = vmatpush1.msra.mxu0 0.0
    %4316 = vmatprep.subr.mxu0 0.0
    %4317 = vmatpush1.msra.mxu0 0.0
    %4318 = vmatprep.subr.mxu0 0.0
    %4319 = vmatpush1.msra.mxu0 0.0
    %4320 = vmatprep.subr.mxu0 0.0
    %4321 = vmatpush1.msra.mxu0 0.0
    %4322 = vmatprep.mubr.f32.mxu0 0.0
    %4323 = vmatmul.mubr.f32.gmra.mrb[0].mxu0 %v4185
    %v4324 = vpop.f32.mrb[0].mxu0
    %v4325 = vadd.f32 0.0, %v4324
    %v4326 = vpop.f32.mrb[0].mxu0
    %4327 = vdwg.mxu0
    %s4328 = sld [smem:[#allocation8]]
    %s4329 = sadd.s32 %s4328, 136
    %s4330 = sshra.s32 %s4329, 3
    %s4331 = sand.u32 %s4329, 7
    %s4332 = sshra.s32 %s4329, 3
    %s4333 = sand.u32 %s4329, 7
    %s4334 = smul.u32 %s4330, 3
    %s4335 = smul.u32 %s4334, 8
    %s4336 = sadd.s32 %s4335, %s4333
    %s4337 = scalar_lea.vmem [#allocation10], %s4336
    %v4338 = vld [vmem:[%s4337] ss:$8 sm:$0x7]
    %v4342 = vcombine.low %v4254, %v4256
    %v4344 = vunpack.c.l.s4 1966171168
    %v4345 = vunpack.c.0.s8 %v4344
    %v4346 = vlaneseq
    %v4347 = vshrl.u32 %v4346, 7
    %v4348 = vsub.s32 %v4345, %v4347
    %v4349 = vrot.slane %v4342, %v4348
    %v4351 = vunpack.c.l.s4 1966171168
    %v4352 = vunpack.c.0.s8 %v4351
    %v4353 = vlaneseq
    %v4354 = vshrl.u32 %v4353, 7
    %v4355 = vsub.s32 %v4352, %v4354
    %v4356 = vrot.slane %v4325, %v4355
    %v4357 = vcombine.low %v4349, %v4356
    %v4359 = vunpack.c.l.s4 1966171168
    %v4360 = vunpack.c.0.s8 %v4359
    %v4361 = vlaneseq
    %v4362 = vshrl.u32 %v4361, 7
    %v4363 = vsub.s32 %v4360, %v4362
    %v4364 = vrot.slane %v4357, %v4363
    %v4366 = vadd.f32 %v4338, %v4364
    %4367 = vst.msk [vmem:[#allocation3] ss:$2 sm:$0x7] %vm84, %v4366
    %s4368 = sld [smem:[#allocation8 + $0x80]]
    %s4369 = sadd.s32 %s4368, 136
    %s4370 = sshra.s32 %s4369, 3
    %s4371 = sand.u32 %s4369, 7
    %s4372 = sshra.s32 %s4369, 3
    %s4373 = sand.u32 %s4369, 7
    %s4374 = smul.u32 %s4370, 3
    %s4375 = smul.u32 %s4374, 8
    %s4376 = sadd.s32 %s4375, %s4373
    %s4377 = scalar_lea.vmem [#allocation10], %s4376
    %v4378 = vld [vmem:[%s4377] ss:$8 sm:$0x7]
    %v4379 = vcombine.high %v4349, %v4356
    %v4381 = vunpack.c.l.s4 1966171168
    %v4382 = vunpack.c.0.s8 %v4381
    %v4383 = vlaneseq
    %v4384 = vshrl.u32 %v4383, 7
    %v4385 = vsub.s32 %v4382, %v4384
    %v4386 = vrot.slane %v4379, %v4385
    %v4388 = vadd.f32 %v4378, %v4386
    %s4389 = scalar_lea.vmem [#allocation3], 1
    %4390 = vst.msk [vmem:[%s4389] ss:$2 sm:$0x7] %vm84, %v4388
    %s4391 = sld [smem:[#allocation8 + $0x1]]
    %s4392 = sadd.s32 %s4391, 136
    %s4393 = sshra.s32 %s4392, 3
    %s4394 = sand.u32 %s4392, 7
    %s4395 = sshra.s32 %s4392, 3
    %s4396 = sand.u32 %s4392, 7
    %s4397 = smul.u32 %s4393, 3
    %s4398 = smul.u32 %s4397, 8
    %s4399 = sadd.s32 %s4398, %s4396
    %s4400 = scalar_lea.vmem [#allocation10], %s4399
    %v4401 = vld [vmem:[%s4400] ss:$8 sm:$0x7]
    %v4402 = vadd.f32 %v4401, %v4364
    %s4403 = scalar_lea.vmem [#allocation3], 6
    %4404 = vst.msk [vmem:[%s4403] ss:$2 sm:$0x7] %vm84, %v4402
    %s4405 = sld [smem:[#allocation8 + $0x81]]
    %s4406 = sadd.s32 %s4405, 136
    %s4407 = sshra.s32 %s4406, 3
    %s4408 = sand.u32 %s4406, 7
    %s4409 = sshra.s32 %s4406, 3
    %s4410 = sand.u32 %s4406, 7
    %s4411 = smul.u32 %s4407, 3
    %s4412 = smul.u32 %s4411, 8
    %s4413 = sadd.s32 %s4412, %s4410
    %s4414 = scalar_lea.vmem [#allocation10], %s4413
    %v4415 = vld [vmem:[%s4414] ss:$8 sm:$0x7]
    %v4416 = vadd.f32 %v4415, %v4386
    %s4417 = scalar_lea.vmem %s4403, 1 [#allocation3]
    %4418 = vst.msk [vmem:[%s4417] ss:$2 sm:$0x7] %vm84, %v4416
    %s4419 = sld [smem:[#allocation8 + $0x2]]
    %s4420 = sadd.s32 %s4419, 136
    %s4421 = sshra.s32 %s4420, 3
    %s4422 = sand.u32 %s4420, 7
    %s4423 = sshra.s32 %s4420, 3
    %s4424 = sand.u32 %s4420, 7
    %s4425 = smul.u32 %s4421, 3
    %s4426 = smul.u32 %s4425, 8
    %s4427 = sadd.s32 %s4426, %s4424
    %s4428 = scalar_lea.vmem [#allocation10], %s4427
    %v4429 = vld [vmem:[%s4428] ss:$8 sm:$0x7]
    %v4430 = vadd.f32 %v4429, %v4364
    %s4431 = scalar_lea.vmem [#allocation3], 12
    %4432 = vst.msk [vmem:[%s4431] ss:$2 sm:$0x7] %vm84, %v4430
    %s4433 = sld [smem:[#allocation8 + $0x82]]
    %s4434 = sadd.s32 %s4433, 136
    %s4435 = sshra.s32 %s4434, 3
    %s4436 = sand.u32 %s4434, 7
    %s4437 = sshra.s32 %s4434, 3
    %s4438 = sand.u32 %s4434, 7
    %s4439 = smul.u32 %s4435, 3
    %s4440 = smul.u32 %s4439, 8
    %s4441 = sadd.s32 %s4440, %s4438
    %s4442 = scalar_lea.vmem [#allocation10], %s4441
    %v4443 = vld [vmem:[%s4442] ss:$8 sm:$0x7]
    %v4444 = vadd.f32 %v4443, %v4386
    %s4445 = scalar_lea.vmem %s4431, 1 [#allocation3]
    %4446 = vst.msk [vmem:[%s4445] ss:$2 sm:$0x7] %vm84, %v4444
    %s4447 = sld [smem:[#allocation8 + $0x3]]
    %s4448 = sadd.s32 %s4447, 136
    %s4449 = sshra.s32 %s4448, 3
    %s4450 = sand.u32 %s4448, 7
    %s4451 = sshra.s32 %s4448, 3
    %s4452 = sand.u32 %s4448, 7
    %s4453 = smul.u32 %s4449, 3
    %s4454 = smul.u32 %s4453, 8
    %s4455 = sadd.s32 %s4454, %s4452
    %s4456 = scalar_lea.vmem [#allocation10], %s4455
    %v4457 = vld [vmem:[%s4456] ss:$8 sm:$0x7]
    %v4458 = vadd.f32 %v4457, %v4364
    %s4459 = scalar_lea.vmem [#allocation3], 18
    %4460 = vst.msk [vmem:[%s4459] ss:$2 sm:$0x7] %vm84, %v4458
    %s4461 = sld [smem:[#allocation8 + $0x83]]
    %s4462 = sadd.s32 %s4461, 136
    %s4463 = sshra.s32 %s4462, 3
    %s4464 = sand.u32 %s4462, 7
    %s4465 = sshra.s32 %s4462, 3
    %s4466 = sand.u32 %s4462, 7
    %s4467 = smul.u32 %s4463, 3
    %s4468 = smul.u32 %s4467, 8
    %s4469 = sadd.s32 %s4468, %s4466
    %s4470 = scalar_lea.vmem [#allocation10], %s4469
    %v4471 = vld [vmem:[%s4470] ss:$8 sm:$0x7]
    %v4472 = vadd.f32 %v4471, %v4386
    %s4473 = scalar_lea.vmem %s4459, 1 [#allocation3]
    %4474 = vst.msk [vmem:[%s4473] ss:$2 sm:$0x7] %vm84, %v4472
    %s4475 = sld [smem:[#allocation8 + $0x4]]
    %s4476 = sadd.s32 %s4475, 136
    %s4477 = sshra.s32 %s4476, 3
    %s4478 = sand.u32 %s4476, 7
    %s4479 = sshra.s32 %s4476, 3
    %s4480 = sand.u32 %s4476, 7
    %s4481 = smul.u32 %s4477, 3
    %s4482 = smul.u32 %s4481, 8
    %s4483 = sadd.s32 %s4482, %s4480
    %s4484 = scalar_lea.vmem [#allocation10], %s4483
    %v4485 = vld [vmem:[%s4484] ss:$8 sm:$0x7]
    %v4486 = vadd.f32 %v4485, %v4364
    %s4487 = scalar_lea.vmem [#allocation3], 24
    %4488 = vst.msk [vmem:[%s4487] ss:$2 sm:$0x7] %vm84, %v4486
    %s4489 = sld [smem:[#allocation8 + $0x84]]
    %s4490 = sadd.s32 %s4489, 136
    %s4491 = sshra.s32 %s4490, 3
    %s4492 = sand.u32 %s4490, 7
    %s4493 = sshra.s32 %s4490, 3
    %s4494 = sand.u32 %s4490, 7
    %s4495 = smul.u32 %s4491, 3
    %s4496 = smul.u32 %s4495, 8
    %s4497 = sadd.s32 %s4496, %s4494
    %s4498 = scalar_lea.vmem [#allocation10], %s4497
    %v4499 = vld [vmem:[%s4498] ss:$8 sm:$0x7]
    %v4500 = vadd.f32 %v4499, %v4386
    %s4501 = scalar_lea.vmem %s4487, 1 [#allocation3]
    %4502 = vst.msk [vmem:[%s4501] ss:$2 sm:$0x7] %vm84, %v4500
    %s4503 = sld [smem:[#allocation8 + $0x5]]
    %s4504 = sadd.s32 %s4503, 136
    %s4505 = sshra.s32 %s4504, 3
    %s4506 = sand.u32 %s4504, 7
    %s4507 = sshra.s32 %s4504, 3
    %s4508 = sand.u32 %s4504, 7
    %s4509 = smul.u32 %s4505, 3
    %s4510 = smul.u32 %s4509, 8
    %s4511 = sadd.s32 %s4510, %s4508
    %s4512 = scalar_lea.vmem [#allocation10], %s4511
    %v4513 = vld [vmem:[%s4512] ss:$8 sm:$0x7]
    %v4514 = vadd.f32 %v4513, %v4364
    %s4515 = scalar_lea.vmem [#allocation3], 30
    %4516 = vst.msk [vmem:[%s4515] ss:$2 sm:$0x7] %vm84, %v4514
    %s4517 = sld [smem:[#allocation8 + $0x85]]
    %s4518 = sadd.s32 %s4517, 136
    %s4519 = sshra.s32 %s4518, 3
    %s4520 = sand.u32 %s4518, 7
    %s4521 = sshra.s32 %s4518, 3
    %s4522 = sand.u32 %s4518, 7
    %s4523 = smul.u32 %s4519, 3
    %s4524 = smul.u32 %s4523, 8
    %s4525 = sadd.s32 %s4524, %s4522
    %s4526 = scalar_lea.vmem [#allocation10], %s4525
    %v4527 = vld [vmem:[%s4526] ss:$8 sm:$0x7]
    %v4528 = vadd.f32 %v4527, %v4386
    %s4529 = scalar_lea.vmem %s4515, 1 [#allocation3]
    %4530 = vst.msk [vmem:[%s4529] ss:$2 sm:$0x7] %vm84, %v4528
    %v4531 = vld [vmem:[#allocation10 + $0x270] sm:$0xff]
    %v4532 = vld [vmem:[#allocation10 + $0x278] sm:$0xff]
    %v4533 = vld [vmem:[#allocation10 + $0x280] sm:$0xff]
    %v4534 = vld [vmem:[#allocation10 + $0x288] sm:$0xff]
    %v4535 = vld [vmem:[#allocation10 + $0x290] sm:$0xff]
    %v4536 = vld [vmem:[#allocation10 + $0x298] sm:$0xff]
    %v4537 = vld [vmem:[#allocation10 + $0x2a0] sm:$0xff]
    %v4538 = vld [vmem:[#allocation10 + $0x2a8] sm:$0xff]
    %v4539 = vld [vmem:[#allocation10 + $0x2b0] sm:$0xff]
    %v4540 = vld [vmem:[#allocation10 + $0x2b8] sm:$0xff]
    %v4541 = vld [vmem:[#allocation10 + $0x2c0] sm:$0xff]
    %v4542 = vld [vmem:[#allocation10 + $0x2c8] sm:$0xff]
    %v4543 = vld [vmem:[#allocation10 + $0x2d0] sm:$0xff]
    %v4544 = vld [vmem:[#allocation10 + $0x2d8] sm:$0xff]
    %v4545 = vld [vmem:[#allocation10 + $0x2e0] sm:$0xff]
    %v4546 = vld [vmem:[#allocation10 + $0x2e8] sm:$0xff]
    %v4547 = vld [vmem:[#allocation10 + $0x2f0] sm:$0xff]
    %v4548 = vld [vmem:[#allocation10 + $0x2f8] sm:$0xff]
    %v4549 = vld [vmem:[#allocation10 + $0x300] sm:$0xff]
    %v4550 = vld [vmem:[#allocation10 + $0x308] sm:$0xff]
    %v4551 = vld [vmem:[#allocation10 + $0x310] sm:$0xff]
    %v4552 = vld [vmem:[#allocation10 + $0x318] sm:$0xff]
    %v4553 = vld [vmem:[#allocation10 + $0x320] sm:$0xff]
    %v4554 = vld [vmem:[#allocation10 + $0x328] sm:$0xff]
    %v4555 = vld [vmem:[#allocation10 + $0x330] sm:$0xff]
    %v4556 = vld [vmem:[#allocation10 + $0x338] sm:$0xff]
    %v4557 = vld [vmem:[#allocation10 + $0x340] sm:$0xff]
    %v4558 = vld [vmem:[#allocation10 + $0x348] sm:$0xff]
    %v4559 = vld [vmem:[#allocation10 + $0x350] sm:$0xff]
    %v4560 = vld [vmem:[#allocation10 + $0x358] sm:$0xff]
    %v4561 = vld [vmem:[#allocation10 + $0x360] sm:$0xff]
    %v4562 = vld [vmem:[#allocation10 + $0x368] sm:$0xff]
    %v4563 = vld [vmem:[#allocation10 + $0x370] sm:$0xff]
    %v4564 = vld [vmem:[#allocation10 + $0x378] sm:$0xff]
    %v4565 = vld [vmem:[#allocation10 + $0x380] sm:$0xff]
    %v4566 = vld [vmem:[#allocation10 + $0x388] sm:$0xff]
    %s4567 = scalar_lea.vmem [#allocation11], 3
    %v4568 = vld [vmem:[%s4567] ss:$8 sm:$0x7]
    %s4569 = scalar_lea.vmem [#allocation11], 4
    %v4570 = vld [vmem:[%s4569] ss:$8 sm:$0x7]
    %s4571 = scalar_lea.vmem [#allocation11], 5
    %v4572 = vld [vmem:[%s4571] ss:$8 sm:$0x7]
    %v4574 = vlaneseq
    %v4575 = vshrl.u32 %v4574, 7
    %v4576 = vsub.s32 0, %v4575
    %v4577 = vrot.slane %v4568, %v4576
    %v4578 = vlaneseq
    %v4579 = vshrl.u32 %v4578, 7
    %v4580 = vsub.s32 1, %v4579
    %v4581 = vrot.slane %v4568, %v4580
    %v4582 = vlaneseq
    %v4583 = vshrl.u32 %v4582, 7
    %v4584 = vsub.s32 2, %v4583
    %v4585 = vrot.slane %v4568, %v4584
    %4589 = vmatprep.subr.mxu0 %v4532
    %4590 = vmatpush1.msra.mxu0 %v4531
    %4591 = vmatprep.subr.mxu0 %v4535
    %4592 = vmatpush1.msra.mxu0 %v4534
    %4593 = vmatprep.subr.mxu0 %v4538
    %4594 = vmatpush1.msra.mxu0 %v4537
    %4595 = vmatprep.subr.mxu0 %v4541
    %4596 = vmatpush1.msra.mxu0 %v4540
    %4597 = vmatprep.subr.mxu0 0.0
    %4598 = vmatpush1.msra.mxu0 0.0
    %4599 = vmatprep.subr.mxu0 0.0
    %4600 = vmatpush1.msra.mxu0 0.0
    %4601 = vmatprep.subr.mxu0 0.0
    %4602 = vmatpush1.msra.mxu0 0.0
    %4603 = vmatprep.subr.mxu0 0.0
    %4604 = vmatpush1.msra.mxu0 0.0
    %4605 = vmatprep.subr.mxu0 0.0
    %4606 = vmatpush1.msra.mxu0 0.0
    %4607 = vmatprep.subr.mxu0 0.0
    %4608 = vmatpush1.msra.mxu0 0.0
    %4609 = vmatprep.subr.mxu0 0.0
    %4610 = vmatpush1.msra.mxu0 0.0
    %4611 = vmatprep.subr.mxu0 0.0
    %4612 = vmatpush1.msra.mxu0 0.0
    %4613 = vmatprep.subr.mxu0 0.0
    %4614 = vmatpush1.msra.mxu0 0.0
    %4615 = vmatprep.subr.mxu0 0.0
    %4616 = vmatpush1.msra.mxu0 0.0
    %4617 = vmatprep.subr.mxu0 0.0
    %4618 = vmatpush1.msra.mxu0 0.0
    %4619 = vmatprep.subr.mxu0 0.0
    %4620 = vmatpush1.msra.mxu0 0.0
    %4621 = vmatprep.subr.mxu0 0.0
    %4622 = vmatpush1.msra.mxu0 0.0
    %4623 = vmatprep.subr.mxu0 0.0
    %4624 = vmatpush1.msra.mxu0 0.0
    %4625 = vmatprep.subr.mxu0 0.0
    %4626 = vmatpush1.msra.mxu0 0.0
    %4627 = vmatprep.subr.mxu0 0.0
    %4628 = vmatpush1.msra.mxu0 0.0
    %4629 = vmatprep.subr.mxu0 0.0
    %4630 = vmatpush1.msra.mxu0 0.0
    %4631 = vmatprep.subr.mxu0 0.0
    %4632 = vmatpush1.msra.mxu0 0.0
    %4633 = vmatprep.subr.mxu0 0.0
    %4634 = vmatpush1.msra.mxu0 0.0
    %4635 = vmatprep.subr.mxu0 0.0
    %4636 = vmatpush1.msra.mxu0 0.0
    %4637 = vmatprep.subr.mxu0 0.0
    %4638 = vmatpush1.msra.mxu0 0.0
    %4639 = vmatprep.subr.mxu0 0.0
    %4640 = vmatpush1.msra.mxu0 0.0
    %4641 = vmatprep.subr.mxu0 0.0
    %4642 = vmatpush1.msra.mxu0 0.0
    %4643 = vmatprep.subr.mxu0 0.0
    %4644 = vmatpush1.msra.mxu0 0.0
    %4645 = vmatprep.subr.mxu0 0.0
    %4646 = vmatpush1.msra.mxu0 0.0
    %4647 = vmatprep.subr.mxu0 0.0
    %4648 = vmatpush1.msra.mxu0 0.0
    %4649 = vmatprep.subr.mxu0 0.0
    %4650 = vmatpush1.msra.mxu0 0.0
    %4651 = vmatprep.subr.mxu0 0.0
    %4652 = vmatpush1.msra.mxu0 0.0
    %4653 = vmatprep.mubr.f32.mxu0 0.0
    %4654 = vmatmul.mubr.f32.gmra.mrb[0].mxu0 %v3864
    %v4655 = vpop.f32.mrb[0].mxu0
    %v4656 = vadd.f32 %v4577, %v4655
    %v4657 = vpop.f32.mrb[0].mxu0
    %v4658 = vadd.f32 %v4581, %v4657
    %4659 = vdwg.mxu0
    %4660 = vmatprep.subr.mxu0 0.0
    %4661 = vmatpush1.msra.mxu0 %v4533
    %4662 = vmatprep.subr.mxu0 0.0
    %4663 = vmatpush1.msra.mxu0 %v4536
    %4664 = vmatprep.subr.mxu0 0.0
    %4665 = vmatpush1.msra.mxu0 %v4539
    %4666 = vmatprep.subr.mxu0 0.0
    %4667 = vmatpush1.msra.mxu0 %v4542
    %4668 = vmatprep.subr.mxu0 0.0
    %4669 = vmatpush1.msra.mxu0 0.0
    %4670 = vmatprep.subr.mxu0 0.0
    %4671 = vmatpush1.msra.mxu0 0.0
    %4672 = vmatprep.subr.mxu0 0.0
    %4673 = vmatpush1.msra.mxu0 0.0
    %4674 = vmatprep.subr.mxu0 0.0
    %4675 = vmatpush1.msra.mxu0 0.0
    %4676 = vmatprep.subr.mxu0 0.0
    %4677 = vmatpush1.msra.mxu0 0.0
    %4678 = vmatprep.subr.mxu0 0.0
    %4679 = vmatpush1.msra.mxu0 0.0
    %4680 = vmatprep.subr.mxu0 0.0
    %4681 = vmatpush1.msra.mxu0 0.0
    %4682 = vmatprep.subr.mxu0 0.0
    %4683 = vmatpush1.msra.mxu0 0.0
    %4684 = vmatprep.subr.mxu0 0.0
    %4685 = vmatpush1.msra.mxu0 0.0
    %4686 = vmatprep.subr.mxu0 0.0
    %4687 = vmatpush1.msra.mxu0 0.0
    %4688 = vmatprep.subr.mxu0 0.0
    %4689 = vmatpush1.msra.mxu0 0.0
    %4690 = vmatprep.subr.mxu0 0.0
    %4691 = vmatpush1.msra.mxu0 0.0
    %4692 = vmatprep.subr.mxu0 0.0
    %4693 = vmatpush1.msra.mxu0 0.0
    %4694 = vmatprep.subr.mxu0 0.0
    %4695 = vmatpush1.msra.mxu0 0.0
    %4696 = vmatprep.subr.mxu0 0.0
    %4697 = vmatpush1.msra.mxu0 0.0
    %4698 = vmatprep.subr.mxu0 0.0
    %4699 = vmatpush1.msra.mxu0 0.0
    %4700 = vmatprep.subr.mxu0 0.0
    %4701 = vmatpush1.msra.mxu0 0.0
    %4702 = vmatprep.subr.mxu0 0.0
    %4703 = vmatpush1.msra.mxu0 0.0
    %4704 = vmatprep.subr.mxu0 0.0
    %4705 = vmatpush1.msra.mxu0 0.0
    %4706 = vmatprep.subr.mxu0 0.0
    %4707 = vmatpush1.msra.mxu0 0.0
    %4708 = vmatprep.subr.mxu0 0.0
    %4709 = vmatpush1.msra.mxu0 0.0
    %4710 = vmatprep.subr.mxu0 0.0
    %4711 = vmatpush1.msra.mxu0 0.0
    %4712 = vmatprep.subr.mxu0 0.0
    %4713 = vmatpush1.msra.mxu0 0.0
    %4714 = vmatprep.subr.mxu0 0.0
    %4715 = vmatpush1.msra.mxu0 0.0
    %4716 = vmatprep.subr.mxu0 0.0
    %4717 = vmatpush1.msra.mxu0 0.0
    %4718 = vmatprep.subr.mxu0 0.0
    %4719 = vmatpush1.msra.mxu0 0.0
    %4720 = vmatprep.subr.mxu0 0.0
    %4721 = vmatpush1.msra.mxu0 0.0
    %4722 = vmatprep.subr.mxu0 0.0
    %4723 = vmatpush1.msra.mxu0 0.0
    %4724 = vmatprep.mubr.f32.mxu0 0.0
    %4725 = vmatmul.mubr.f32.gmra.mrb[0].mxu0 %v3864
    %v4726 = vpop.f32.mrb[0].mxu0
    %v4727 = vadd.f32 %v4585, %v4726
    %v4728 = vpop.f32.mrb[0].mxu0
    %4729 = vdwg.mxu0
    %v4730 = vld [vmem:[#allocation3] sm:$0x3f]
    %v4731 = vadd.f32 %v4730, %v4656
    %v4732 = vxor.u32 %v4731, 2147483648
    %v4733 = vmul.f32 %v4732, 1.442695
    %v4734 = vpow.pop %v4733
    %v4735 = vadd.f32 %v4734, 1.0
    %v4736 = vrcp.pop %v4735
    %v4737 = vmul.f32 1.0, %v4736
    %v4739 = vrot.slane %v4730, 2
    %v4741 = vadd.f32 %v4739, %v4658
    %v4742 = vxor.u32 %v4741, 2147483648
    %v4743 = vmul.f32 %v4742, 1.442695
    %v4744 = vpow.pop %v4743
    %v4745 = vadd.f32 %v4744, 1.0
    %v4746 = vrcp.pop %v4745
    %v4747 = vmul.f32 1.0, %v4746
    %v4748 = vmul.f32 %v4737, %v4727
    %v4749 = vrot.slane %v4730, 4
    %v4751 = vadd.f32 %v4749, %v4748
    %v4752 = vtanh.pop %v4751
    %v4753 = vsub.f32 1.0, %v4747
    %v4754 = vmul.f32 %v4753, %v4752
    %v4755 = vmul.f32 %v4747, %v3841
    %v4756 = vadd.f32 %v4754, %v4755
    %v4758 = vsel %vm323, %v4756, 0
    %4760 = vmatprep.subr.mxu0 %v4532
    %4761 = vmatpush1.msra.mxu0 %v4531
    %4762 = vmatprep.subr.mxu0 %v4535
    %4763 = vmatpush1.msra.mxu0 %v4534
    %4764 = vmatprep.subr.mxu0 %v4538
    %4765 = vmatpush1.msra.mxu0 %v4537
    %4766 = vmatprep.subr.mxu0 %v4541
    %4767 = vmatpush1.msra.mxu0 %v4540
    %4768 = vmatprep.subr.mxu0 0.0
    %4769 = vmatpush1.msra.mxu0 0.0
    %4770 = vmatprep.subr.mxu0 0.0
    %4771 = vmatpush1.msra.mxu0 0.0
    %4772 = vmatprep.subr.mxu0 0.0
    %4773 = vmatpush1.msra.mxu0 0.0
    %4774 = vmatprep.subr.mxu0 0.0
    %4775 = vmatpush1.msra.mxu0 0.0
    %4776 = vmatprep.subr.mxu0 0.0
    %4777 = vmatpush1.msra.mxu0 0.0
    %4778 = vmatprep.subr.mxu0 0.0
    %4779 = vmatpush1.msra.mxu0 0.0
    %4780 = vmatprep.subr.mxu0 0.0
    %4781 = vmatpush1.msra.mxu0 0.0
    %4782 = vmatprep.subr.mxu0 0.0
    %4783 = vmatpush1.msra.mxu0 0.0
    %4784 = vmatprep.subr.mxu0 0.0
    %4785 = vmatpush1.msra.mxu0 0.0
    %4786 = vmatprep.subr.mxu0 0.0
    %4787 = vmatpush1.msra.mxu0 0.0
    %4788 = vmatprep.subr.mxu0 0.0
    %4789 = vmatpush1.msra.mxu0 0.0
    %4790 = vmatprep.subr.mxu0 0.0
    %4791 = vmatpush1.msra.mxu0 0.0
    %4792 = vmatprep.subr.mxu0 0.0
    %4793 = vmatpush1.msra.mxu0 0.0
    %4794 = vmatprep.subr.mxu0 0.0
    %4795 = vmatpush1.msra.mxu0 0.0
    %4796 = vmatprep.subr.mxu0 0.0
    %4797 = vmatpush1.msra.mxu0 0.0
    %4798 = vmatprep.subr.mxu0 0.0
    %4799 = vmatpush1.msra.mxu0 0.0
    %4800 = vmatprep.subr.mxu0 0.0
    %4801 = vmatpush1.msra.mxu0 0.0
    %4802 = vmatprep.subr.mxu0 0.0
    %4803 = vmatpush1.msra.mxu0 0.0
    %4804 = vmatprep.subr.mxu0 0.0
    %4805 = vmatpush1.msra.mxu0 0.0
    %4806 = vmatprep.subr.mxu0 0.0
    %4807 = vmatpush1.msra.mxu0 0.0
    %4808 = vmatprep.subr.mxu0 0.0
    %4809 = vmatpush1.msra.mxu0 0.0
    %4810 = vmatprep.subr.mxu0 0.0
    %4811 = vmatpush1.msra.mxu0 0.0
    %4812 = vmatprep.subr.mxu0 0.0
    %4813 = vmatpush1.msra.mxu0 0.0
    %4814 = vmatprep.subr.mxu0 0.0
    %4815 = vmatpush1.msra.mxu0 0.0
    %4816 = vmatprep.subr.mxu0 0.0
    %4817 = vmatpush1.msra.mxu0 0.0
    %4818 = vmatprep.subr.mxu0 0.0
    %4819 = vmatpush1.msra.mxu0 0.0
    %4820 = vmatprep.subr.mxu0 0.0
    %4821 = vmatpush1.msra.mxu0 0.0
    %4822 = vmatprep.subr.mxu0 0.0
    %4823 = vmatpush1.msra.mxu0 0.0
    %4824 = vmatprep.mubr.f32.mxu0 0.0
    %4825 = vmatmul.mubr.f32.gmra.mrb[0].mxu0 %v4758
    %v4826 = vpop.f32.mrb[0].mxu0
    %v4827 = vadd.f32 %v4577, %v4826
    %v4828 = vpop.f32.mrb[0].mxu0
    %v4829 = vadd.f32 %v4581, %v4828
    %4830 = vdwg.mxu0
    %4831 = vmatprep.subr.mxu0 0.0
    %4832 = vmatpush1.msra.mxu0 %v4533
    %4833 = vmatprep.subr.mxu0 0.0
    %4834 = vmatpush1.msra.mxu0 %v4536
    %4835 = vmatprep.subr.mxu0 0.0
    %4836 = vmatpush1.msra.mxu0 %v4539
    %4837 = vmatprep.subr.mxu0 0.0
    %4838 = vmatpush1.msra.mxu0 %v4542
    %4839 = vmatprep.subr.mxu0 0.0
    %4840 = vmatpush1.msra.mxu0 0.0
    %4841 = vmatprep.subr.mxu0 0.0
    %4842 = vmatpush1.msra.mxu0 0.0
    %4843 = vmatprep.subr.mxu0 0.0
    %4844 = vmatpush1.msra.mxu0 0.0
    %4845 = vmatprep.subr.mxu0 0.0
    %4846 = vmatpush1.msra.mxu0 0.0
    %4847 = vmatprep.subr.mxu0 0.0
    %4848 = vmatpush1.msra.mxu0 0.0
    %4849 = vmatprep.subr.mxu0 0.0
    %4850 = vmatpush1.msra.mxu0 0.0
    %4851 = vmatprep.subr.mxu0 0.0
    %4852 = vmatpush1.msra.mxu0 0.0
    %4853 = vmatprep.subr.mxu0 0.0
    %4854 = vmatpush1.msra.mxu0 0.0
    %4855 = vmatprep.subr.mxu0 0.0
    %4856 = vmatpush1.msra.mxu0 0.0
    %4857 = vmatprep.subr.mxu0 0.0
    %4858 = vmatpush1.msra.mxu0 0.0
    %4859 = vmatprep.subr.mxu0 0.0
    %4860 = vmatpush1.msra.mxu0 0.0
    %4861 = vmatprep.subr.mxu0 0.0
    %4862 = vmatpush1.msra.mxu0 0.0
    %4863 = vmatprep.subr.mxu0 0.0
    %4864 = vmatpush1.msra.mxu0 0.0
    %4865 = vmatprep.subr.mxu0 0.0
    %4866 = vmatpush1.msra.mxu0 0.0
    %4867 = vmatprep.subr.mxu0 0.0
    %4868 = vmatpush1.msra.mxu0 0.0
    %4869 = vmatprep.subr.mxu0 0.0
    %4870 = vmatpush1.msra.mxu0 0.0
    %4871 = vmatprep.subr.mxu0 0.0
    %4872 = vmatpush1.msra.mxu0 0.0
    %4873 = vmatprep.subr.mxu0 0.0
    %4874 = vmatpush1.msra.mxu0 0.0
    %4875 = vmatprep.subr.mxu0 0.0
    %4876 = vmatpush1.msra.mxu0 0.0
    %4877 = vmatprep.subr.mxu0 0.0
    %4878 = vmatpush1.msra.mxu0 0.0
    %4879 = vmatprep.subr.mxu0 0.0
    %4880 = vmatpush1.msra.mxu0 0.0
    %4881 = vmatprep.subr.mxu0 0.0
    %4882 = vmatpush1.msra.mxu0 0.0
    %4883 = vmatprep.subr.mxu0 0.0
    %4884 = vmatpush1.msra.mxu0 0.0
    %4885 = vmatprep.subr.mxu0 0.0
    %4886 = vmatpush1.msra.mxu0 0.0
    %4887 = vmatprep.subr.mxu0 0.0
    %4888 = vmatpush1.msra.mxu0 0.0
    %4889 = vmatprep.subr.mxu0 0.0
    %4890 = vmatpush1.msra.mxu0 0.0
    %4891 = vmatprep.subr.mxu0 0.0
    %4892 = vmatpush1.msra.mxu0 0.0
    %4893 = vmatprep.subr.mxu0 0.0
    %4894 = vmatpush1.msra.mxu0 0.0
    %4895 = vmatprep.mubr.f32.mxu0 0.0
    %4896 = vmatmul.mubr.f32.gmra.mrb[0].mxu0 %v4758
    %v4897 = vpop.f32.mrb[0].mxu0
    %v4898 = vadd.f32 %v4585, %v4897
    %v4899 = vpop.f32.mrb[0].mxu0
    %4900 = vdwg.mxu0
    %v4902 = vlaneseq
    %v4903 = vshrl.u32 %v4902, 7
    %v4904 = vsub.s32 0, %v4903
    %v4905 = vrot.slane %v4570, %v4904
    %v4906 = vlaneseq
    %v4907 = vshrl.u32 %v4906, 7
    %v4908 = vsub.s32 1, %v4907
    %v4909 = vrot.slane %v4570, %v4908
    %v4910 = vlaneseq
    %v4911 = vshrl.u32 %v4910, 7
    %v4912 = vsub.s32 2, %v4911
    %v4913 = vrot.slane %v4570, %v4912
    %4917 = vmatprep.subr.mxu0 %v4544
    %4918 = vmatpush1.msra.mxu0 %v4543
    %4919 = vmatprep.subr.mxu0 %v4547
    %4920 = vmatpush1.msra.mxu0 %v4546
    %4921 = vmatprep.subr.mxu0 %v4550
    %4922 = vmatpush1.msra.mxu0 %v4549
    %4923 = vmatprep.subr.mxu0 %v4553
    %4924 = vmatpush1.msra.mxu0 %v4552
    %4925 = vmatprep.subr.mxu0 0.0
    %4926 = vmatpush1.msra.mxu0 0.0
    %4927 = vmatprep.subr.mxu0 0.0
    %4928 = vmatpush1.msra.mxu0 0.0
    %4929 = vmatprep.subr.mxu0 0.0
    %4930 = vmatpush1.msra.mxu0 0.0
    %4931 = vmatprep.subr.mxu0 0.0
    %4932 = vmatpush1.msra.mxu0 0.0
    %4933 = vmatprep.subr.mxu0 0.0
    %4934 = vmatpush1.msra.mxu0 0.0
    %4935 = vmatprep.subr.mxu0 0.0
    %4936 = vmatpush1.msra.mxu0 0.0
    %4937 = vmatprep.subr.mxu0 0.0
    %4938 = vmatpush1.msra.mxu0 0.0
    %4939 = vmatprep.subr.mxu0 0.0
    %4940 = vmatpush1.msra.mxu0 0.0
    %4941 = vmatprep.subr.mxu0 0.0
    %4942 = vmatpush1.msra.mxu0 0.0
    %4943 = vmatprep.subr.mxu0 0.0
    %4944 = vmatpush1.msra.mxu0 0.0
    %4945 = vmatprep.subr.mxu0 0.0
    %4946 = vmatpush1.msra.mxu0 0.0
    %4947 = vmatprep.subr.mxu0 0.0
    %4948 = vmatpush1.msra.mxu0 0.0
    %4949 = vmatprep.subr.mxu0 0.0
    %4950 = vmatpush1.msra.mxu0 0.0
    %4951 = vmatprep.subr.mxu0 0.0
    %4952 = vmatpush1.msra.mxu0 0.0
    %4953 = vmatprep.subr.mxu0 0.0
    %4954 = vmatpush1.msra.mxu0 0.0
    %4955 = vmatprep.subr.mxu0 0.0
    %4956 = vmatpush1.msra.mxu0 0.0
    %4957 = vmatprep.subr.mxu0 0.0
    %4958 = vmatpush1.msra.mxu0 0.0
    %4959 = vmatprep.subr.mxu0 0.0
    %4960 = vmatpush1.msra.mxu0 0.0
    %4961 = vmatprep.subr.mxu0 0.0
    %4962 = vmatpush1.msra.mxu0 0.0
    %4963 = vmatprep.subr.mxu0 0.0
    %4964 = vmatpush1.msra.mxu0 0.0
    %4965 = vmatprep.subr.mxu0 0.0
    %4966 = vmatpush1.msra.mxu0 0.0
    %4967 = vmatprep.subr.mxu0 0.0
    %4968 = vmatpush1.msra.mxu0 0.0
    %4969 = vmatprep.subr.mxu0 0.0
    %4970 = vmatpush1.msra.mxu0 0.0
    %4971 = vmatprep.subr.mxu0 0.0
    %4972 = vmatpush1.msra.mxu0 0.0
    %4973 = vmatprep.subr.mxu0 0.0
    %4974 = vmatpush1.msra.mxu0 0.0
    %4975 = vmatprep.subr.mxu0 0.0
    %4976 = vmatpush1.msra.mxu0 0.0
    %4977 = vmatprep.subr.mxu0 0.0
    %4978 = vmatpush1.msra.mxu0 0.0
    %4979 = vmatprep.subr.mxu0 0.0
    %4980 = vmatpush1.msra.mxu0 0.0
    %4981 = vmatprep.mubr.f32.mxu0 0.0
    %4982 = vmatmul.mubr.f32.gmra.mrb[0].mxu0 %v4758
    %v4983 = vpop.f32.mrb[0].mxu0
    %v4984 = vadd.f32 %v4905, %v4983
    %v4985 = vpop.f32.mrb[0].mxu0
    %v4986 = vadd.f32 %v4909, %v4985
    %4987 = vdwg.mxu0
    %4988 = vmatprep.subr.mxu0 0.0
    %4989 = vmatpush1.msra.mxu0 %v4545
    %4990 = vmatprep.subr.mxu0 0.0
    %4991 = vmatpush1.msra.mxu0 %v4548
    %4992 = vmatprep.subr.mxu0 0.0
    %4993 = vmatpush1.msra.mxu0 %v4551
    %4994 = vmatprep.subr.mxu0 0.0
    %4995 = vmatpush1.msra.mxu0 %v4554
    %4996 = vmatprep.subr.mxu0 0.0
    %4997 = vmatpush1.msra.mxu0 0.0
    %4998 = vmatprep.subr.mxu0 0.0
    %4999 = vmatpush1.msra.mxu0 0.0
    %5000 = vmatprep.subr.mxu0 0.0
    %5001 = vmatpush1.msra.mxu0 0.0
    %5002 = vmatprep.subr.mxu0 0.0
    %5003 = vmatpush1.msra.mxu0 0.0
    %5004 = vmatprep.subr.mxu0 0.0
    %5005 = vmatpush1.msra.mxu0 0.0
    %5006 = vmatprep.subr.mxu0 0.0
    %5007 = vmatpush1.msra.mxu0 0.0
    %5008 = vmatprep.subr.mxu0 0.0
    %5009 = vmatpush1.msra.mxu0 0.0
    %5010 = vmatprep.subr.mxu0 0.0
    %5011 = vmatpush1.msra.mxu0 0.0
    %5012 = vmatprep.subr.mxu0 0.0
    %5013 = vmatpush1.msra.mxu0 0.0
    %5014 = vmatprep.subr.mxu0 0.0
    %5015 = vmatpush1.msra.mxu0 0.0
    %5016 = vmatprep.subr.mxu0 0.0
    %5017 = vmatpush1.msra.mxu0 0.0
    %5018 = vmatprep.subr.mxu0 0.0
    %5019 = vmatpush1.msra.mxu0 0.0
    %5020 = vmatprep.subr.mxu0 0.0
    %5021 = vmatpush1.msra.mxu0 0.0
    %5022 = vmatprep.subr.mxu0 0.0
    %5023 = vmatpush1.msra.mxu0 0.0
    %5024 = vmatprep.subr.mxu0 0.0
    %5025 = vmatpush1.msra.mxu0 0.0
    %5026 = vmatprep.subr.mxu0 0.0
    %5027 = vmatpush1.msra.mxu0 0.0
    %5028 = vmatprep.subr.mxu0 0.0
    %5029 = vmatpush1.msra.mxu0 0.0
    %5030 = vmatprep.subr.mxu0 0.0
    %5031 = vmatpush1.msra.mxu0 0.0
    %5032 = vmatprep.subr.mxu0 0.0
    %5033 = vmatpush1.msra.mxu0 0.0
    %5034 = vmatprep.subr.mxu0 0.0
    %5035 = vmatpush1.msra.mxu0 0.0
    %5036 = vmatprep.subr.mxu0 0.0
    %5037 = vmatpush1.msra.mxu0 0.0
    %5038 = vmatprep.subr.mxu0 0.0
    %5039 = vmatpush1.msra.mxu0 0.0
    %5040 = vmatprep.subr.mxu0 0.0
    %5041 = vmatpush1.msra.mxu0 0.0
    %5042 = vmatprep.subr.mxu0 0.0
    %5043 = vmatpush1.msra.mxu0 0.0
    %5044 = vmatprep.subr.mxu0 0.0
    %5045 = vmatpush1.msra.mxu0 0.0
    %5046 = vmatprep.subr.mxu0 0.0
    %5047 = vmatpush1.msra.mxu0 0.0
    %5048 = vmatprep.subr.mxu0 0.0
    %5049 = vmatpush1.msra.mxu0 0.0
    %5050 = vmatprep.subr.mxu0 0.0
    %5051 = vmatpush1.msra.mxu0 0.0
    %5052 = vmatprep.mubr.f32.mxu0 0.0
    %5053 = vmatmul.mubr.f32.gmra.mrb[0].mxu0 %v4758
    %v5054 = vpop.f32.mrb[0].mxu0
    %v5055 = vadd.f32 %v4913, %v5054
    %v5056 = vpop.f32.mrb[0].mxu0
    %5057 = vdwg.mxu0
    %v5059 = vlaneseq
    %v5060 = vshrl.u32 %v5059, 7
    %v5061 = vsub.s32 0, %v5060
    %v5062 = vrot.slane %v4572, %v5061
    %v5063 = vlaneseq
    %v5064 = vshrl.u32 %v5063, 7
    %v5065 = vsub.s32 1, %v5064
    %v5066 = vrot.slane %v4572, %v5065
    %v5067 = vlaneseq
    %v5068 = vshrl.u32 %v5067, 7
    %v5069 = vsub.s32 2, %v5068
    %v5070 = vrot.slane %v4572, %v5069
    %5074 = vmatprep.subr.mxu0 %v4556
    %5075 = vmatpush1.msra.mxu0 %v4555
    %5076 = vmatprep.subr.mxu0 %v4559
    %5077 = vmatpush1.msra.mxu0 %v4558
    %5078 = vmatprep.subr.mxu0 %v4562
    %5079 = vmatpush1.msra.mxu0 %v4561
    %5080 = vmatprep.subr.mxu0 %v4565
    %5081 = vmatpush1.msra.mxu0 %v4564
    %5082 = vmatprep.subr.mxu0 0.0
    %5083 = vmatpush1.msra.mxu0 0.0
    %5084 = vmatprep.subr.mxu0 0.0
    %5085 = vmatpush1.msra.mxu0 0.0
    %5086 = vmatprep.subr.mxu0 0.0
    %5087 = vmatpush1.msra.mxu0 0.0
    %5088 = vmatprep.subr.mxu0 0.0
    %5089 = vmatpush1.msra.mxu0 0.0
    %5090 = vmatprep.subr.mxu0 0.0
    %5091 = vmatpush1.msra.mxu0 0.0
    %5092 = vmatprep.subr.mxu0 0.0
    %5093 = vmatpush1.msra.mxu0 0.0
    %5094 = vmatprep.subr.mxu0 0.0
    %5095 = vmatpush1.msra.mxu0 0.0
    %5096 = vmatprep.subr.mxu0 0.0
    %5097 = vmatpush1.msra.mxu0 0.0
    %5098 = vmatprep.subr.mxu0 0.0
    %5099 = vmatpush1.msra.mxu0 0.0
    %5100 = vmatprep.subr.mxu0 0.0
    %5101 = vmatpush1.msra.mxu0 0.0
    %5102 = vmatprep.subr.mxu0 0.0
    %5103 = vmatpush1.msra.mxu0 0.0
    %5104 = vmatprep.subr.mxu0 0.0
    %5105 = vmatpush1.msra.mxu0 0.0
    %5106 = vmatprep.subr.mxu0 0.0
    %5107 = vmatpush1.msra.mxu0 0.0
    %5108 = vmatprep.subr.mxu0 0.0
    %5109 = vmatpush1.msra.mxu0 0.0
    %5110 = vmatprep.subr.mxu0 0.0
    %5111 = vmatpush1.msra.mxu0 0.0
    %5112 = vmatprep.subr.mxu0 0.0
    %5113 = vmatpush1.msra.mxu0 0.0
    %5114 = vmatprep.subr.mxu0 0.0
    %5115 = vmatpush1.msra.mxu0 0.0
    %5116 = vmatprep.subr.mxu0 0.0
    %5117 = vmatpush1.msra.mxu0 0.0
    %5118 = vmatprep.subr.mxu0 0.0
    %5119 = vmatpush1.msra.mxu0 0.0
    %5120 = vmatprep.subr.mxu0 0.0
    %5121 = vmatpush1.msra.mxu0 0.0
    %5122 = vmatprep.subr.mxu0 0.0
    %5123 = vmatpush1.msra.mxu0 0.0
    %5124 = vmatprep.subr.mxu0 0.0
    %5125 = vmatpush1.msra.mxu0 0.0
    %5126 = vmatprep.subr.mxu0 0.0
    %5127 = vmatpush1.msra.mxu0 0.0
    %5128 = vmatprep.subr.mxu0 0.0
    %5129 = vmatpush1.msra.mxu0 0.0
    %5130 = vmatprep.subr.mxu0 0.0
    %5131 = vmatpush1.msra.mxu0 0.0
    %5132 = vmatprep.subr.mxu0 0.0
    %5133 = vmatpush1.msra.mxu0 0.0
    %5134 = vmatprep.subr.mxu0 0.0
    %5135 = vmatpush1.msra.mxu0 0.0
    %5136 = vmatprep.subr.mxu0 0.0
    %5137 = vmatpush1.msra.mxu0 0.0
    %5138 = vmatprep.mubr.f32.mxu0 0.0
    %5139 = vmatmul.mubr.f32.gmra.mrb[0].mxu0 %v4185
    %v5140 = vpop.f32.mrb[0].mxu0
    %v5141 = vadd.f32 %v5062, %v5140
    %v5142 = vpop.f32.mrb[0].mxu0
    %v5143 = vadd.f32 %v5066, %v5142
    %5144 = vdwg.mxu0
    %5145 = vmatprep.subr.mxu0 0.0
    %5146 = vmatpush1.msra.mxu0 %v4557
    %5147 = vmatprep.subr.mxu0 0.0
    %5148 = vmatpush1.msra.mxu0 %v4560
    %5149 = vmatprep.subr.mxu0 0.0
    %5150 = vmatpush1.msra.mxu0 %v4563
    %5151 = vmatprep.subr.mxu0 0.0
    %5152 = vmatpush1.msra.mxu0 %v4566
    %5153 = vmatprep.subr.mxu0 0.0
    %5154 = vmatpush1.msra.mxu0 0.0
    %5155 = vmatprep.subr.mxu0 0.0
    %5156 = vmatpush1.msra.mxu0 0.0
    %5157 = vmatprep.subr.mxu0 0.0
    %5158 = vmatpush1.msra.mxu0 0.0
    %5159 = vmatprep.subr.mxu0 0.0
    %5160 = vmatpush1.msra.mxu0 0.0
    %5161 = vmatprep.subr.mxu0 0.0
    %5162 = vmatpush1.msra.mxu0 0.0
    %5163 = vmatprep.subr.mxu0 0.0
    %5164 = vmatpush1.msra.mxu0 0.0
    %5165 = vmatprep.subr.mxu0 0.0
    %5166 = vmatpush1.msra.mxu0 0.0
    %5167 = vmatprep.subr.mxu0 0.0
    %5168 = vmatpush1.msra.mxu0 0.0
    %5169 = vmatprep.subr.mxu0 0.0
    %5170 = vmatpush1.msra.mxu0 0.0
    %5171 = vmatprep.subr.mxu0 0.0
    %5172 = vmatpush1.msra.mxu0 0.0
    %5173 = vmatprep.subr.mxu0 0.0
    %5174 = vmatpush1.msra.mxu0 0.0
    %5175 = vmatprep.subr.mxu0 0.0
    %5176 = vmatpush1.msra.mxu0 0.0
    %5177 = vmatprep.subr.mxu0 0.0
    %5178 = vmatpush1.msra.mxu0 0.0
    %5179 = vmatprep.subr.mxu0 0.0
    %5180 = vmatpush1.msra.mxu0 0.0
    %5181 = vmatprep.subr.mxu0 0.0
    %5182 = vmatpush1.msra.mxu0 0.0
    %5183 = vmatprep.subr.mxu0 0.0
    %5184 = vmatpush1.msra.mxu0 0.0
    %5185 = vmatprep.subr.mxu0 0.0
    %5186 = vmatpush1.msra.mxu0 0.0
    %5187 = vmatprep.subr.mxu0 0.0
    %5188 = vmatpush1.msra.mxu0 0.0
    %5189 = vmatprep.subr.mxu0 0.0
    %5190 = vmatpush1.msra.mxu0 0.0
    %5191 = vmatprep.subr.mxu0 0.0
    %5192 = vmatpush1.msra.mxu0 0.0
    %5193 = vmatprep.subr.mxu0 0.0
    %5194 = vmatpush1.msra.mxu0 0.0
    %5195 = vmatprep.subr.mxu0 0.0
    %5196 = vmatpush1.msra.mxu0 0.0
    %5197 = vmatprep.subr.mxu0 0.0
    %5198 = vmatpush1.msra.mxu0 0.0
    %5199 = vmatprep.subr.mxu0 0.0
    %5200 = vmatpush1.msra.mxu0 0.0
    %5201 = vmatprep.subr.mxu0 0.0
    %5202 = vmatpush1.msra.mxu0 0.0
    %5203 = vmatprep.subr.mxu0 0.0
    %5204 = vmatpush1.msra.mxu0 0.0
    %5205 = vmatprep.subr.mxu0 0.0
    %5206 = vmatpush1.msra.mxu0 0.0
    %5207 = vmatprep.subr.mxu0 0.0
    %5208 = vmatpush1.msra.mxu0 0.0
    %5209 = vmatprep.mubr.f32.mxu0 0.0
    %5210 = vmatmul.mubr.f32.gmra.mrb[0].mxu0 %v4185
    %v5211 = vpop.f32.mrb[0].mxu0
    %v5212 = vadd.f32 %v5070, %v5211
    %v5213 = vpop.f32.mrb[0].mxu0
    %5214 = vdwg.mxu0
    %v5215 = vld [vmem:[%s4403] sm:$0x3f]
    %v5216 = vadd.f32 %v5215, %v4827
    %v5217 = vxor.u32 %v5216, 2147483648
    %v5218 = vmul.f32 %v5217, 1.442695
    %v5219 = vpow.pop %v5218
    %v5220 = vadd.f32 %v5219, 1.0
    %v5221 = vrcp.pop %v5220
    %v5222 = vmul.f32 1.0, %v5221
    %v5224 = vrot.slane %v5215, 2
    %v5226 = vadd.f32 %v5224, %v4829
    %v5227 = vxor.u32 %v5226, 2147483648
    %v5228 = vmul.f32 %v5227, 1.442695
    %v5229 = vpow.pop %v5228
    %v5230 = vadd.f32 %v5229, 1.0
    %v5231 = vrcp.pop %v5230
    %v5232 = vmul.f32 1.0, %v5231
    %v5233 = vmul.f32 %v5222, %v4898
    %v5234 = vrot.slane %v5215, 4
    %v5236 = vadd.f32 %v5234, %v5233
    %v5237 = vtanh.pop %v5236
    %v5238 = vsub.f32 1.0, %v5232
    %v5239 = vmul.f32 %v5238, %v5237
    %v5240 = vmul.f32 %v5232, %v4756
    %v5241 = vadd.f32 %v5239, %v5240
    %v5242 = vadd.f32 %v4984, %v5141
    %v5243 = vxor.u32 %v5242, 2147483648
    %v5244 = vmul.f32 %v5243, 1.442695
    %v5245 = vpow.pop %v5244
    %v5246 = vadd.f32 %v5245, 1.0
    %v5247 = vrcp.pop %v5246
    %v5248 = vmul.f32 1.0, %v5247
    %v5249 = vadd.f32 %v4986, %v5143
    %v5250 = vxor.u32 %v5249, 2147483648
    %v5251 = vmul.f32 %v5250, 1.442695
    %v5252 = vpow.pop %v5251
    %v5253 = vadd.f32 %v5252, 1.0
    %v5254 = vrcp.pop %v5253
    %v5255 = vmul.f32 1.0, %v5254
    %v5256 = vmul.f32 %v5248, %v5212
    %v5257 = vadd.f32 %v5055, %v5256
    %v5258 = vtanh.pop %v5257
    %v5259 = vsub.f32 1.0, %v5255
    %v5260 = vmul.f32 %v5259, %v5258
    %v5261 = vmul.f32 %v5255, %v4171
    %v5262 = vadd.f32 %v5260, %v5261
    %v5264 = vsel %vm323, %v5241, 0
    %5266 = vmatprep.subr.mxu0 %v4532
    %5267 = vmatpush1.msra.mxu0 %v4531
    %5268 = vmatprep.subr.mxu0 %v4535
    %5269 = vmatpush1.msra.mxu0 %v4534
    %5270 = vmatprep.subr.mxu0 %v4538
    %5271 = vmatpush1.msra.mxu0 %v4537
    %5272 = vmatprep.subr.mxu0 %v4541
    %5273 = vmatpush1.msra.mxu0 %v4540
    %5274 = vmatprep.subr.mxu0 0.0
    %5275 = vmatpush1.msra.mxu0 0.0
    %5276 = vmatprep.subr.mxu0 0.0
    %5277 = vmatpush1.msra.mxu0 0.0
    %5278 = vmatprep.subr.mxu0 0.0
    %5279 = vmatpush1.msra.mxu0 0.0
    %5280 = vmatprep.subr.mxu0 0.0
    %5281 = vmatpush1.msra.mxu0 0.0
    %5282 = vmatprep.subr.mxu0 0.0
    %5283 = vmatpush1.msra.mxu0 0.0
    %5284 = vmatprep.subr.mxu0 0.0
    %5285 = vmatpush1.msra.mxu0 0.0
    %5286 = vmatprep.subr.mxu0 0.0
    %5287 = vmatpush1.msra.mxu0 0.0
    %5288 = vmatprep.subr.mxu0 0.0
    %5289 = vmatpush1.msra.mxu0 0.0
    %5290 = vmatprep.subr.mxu0 0.0
    %5291 = vmatpush1.msra.mxu0 0.0
    %5292 = vmatprep.subr.mxu0 0.0
    %5293 = vmatpush1.msra.mxu0 0.0
    %5294 = vmatprep.subr.mxu0 0.0
    %5295 = vmatpush1.msra.mxu0 0.0
    %5296 = vmatprep.subr.mxu0 0.0
    %5297 = vmatpush1.msra.mxu0 0.0
    %5298 = vmatprep.subr.mxu0 0.0
    %5299 = vmatpush1.msra.mxu0 0.0
    %5300 = vmatprep.subr.mxu0 0.0
    %5301 = vmatpush1.msra.mxu0 0.0
    %5302 = vmatprep.subr.mxu0 0.0
    %5303 = vmatpush1.msra.mxu0 0.0
    %5304 = vmatprep.subr.mxu0 0.0
    %5305 = vmatpush1.msra.mxu0 0.0
    %5306 = vmatprep.subr.mxu0 0.0
    %5307 = vmatpush1.msra.mxu0 0.0
    %5308 = vmatprep.subr.mxu0 0.0
    %5309 = vmatpush1.msra.mxu0 0.0
    %5310 = vmatprep.subr.mxu0 0.0
    %5311 = vmatpush1.msra.mxu0 0.0
    %5312 = vmatprep.subr.mxu0 0.0
    %5313 = vmatpush1.msra.mxu0 0.0
    %5314 = vmatprep.subr.mxu0 0.0
    %5315 = vmatpush1.msra.mxu0 0.0
    %5316 = vmatprep.subr.mxu0 0.0
    %5317 = vmatpush1.msra.mxu0 0.0
    %5318 = vmatprep.subr.mxu0 0.0
    %5319 = vmatpush1.msra.mxu0 0.0
    %5320 = vmatprep.subr.mxu0 0.0
    %5321 = vmatpush1.msra.mxu0 0.0
    %5322 = vmatprep.subr.mxu0 0.0
    %5323 = vmatpush1.msra.mxu0 0.0
    %5324 = vmatprep.subr.mxu0 0.0
    %5325 = vmatpush1.msra.mxu0 0.0
    %5326 = vmatprep.subr.mxu0 0.0
    %5327 = vmatpush1.msra.mxu0 0.0
    %5328 = vmatprep.subr.mxu0 0.0
    %5329 = vmatpush1.msra.mxu0 0.0
    %5330 = vmatprep.mubr.f32.mxu0 0.0
    %5331 = vmatmul.mubr.f32.gmra.mrb[0].mxu0 %v5264
    %v5332 = vpop.f32.mrb[0].mxu0
    %v5333 = vadd.f32 %v4577, %v5332
    %v5334 = vpop.f32.mrb[0].mxu0
    %v5335 = vadd.f32 %v4581, %v5334
    %5336 = vdwg.mxu0
    %5337 = vmatprep.subr.mxu0 0.0
    %5338 = vmatpush1.msra.mxu0 %v4533
    %5339 = vmatprep.subr.mxu0 0.0
    %5340 = vmatpush1.msra.mxu0 %v4536
    %5341 = vmatprep.subr.mxu0 0.0
    %5342 = vmatpush1.msra.mxu0 %v4539
    %5343 = vmatprep.subr.mxu0 0.0
    %5344 = vmatpush1.msra.mxu0 %v4542
    %5345 = vmatprep.subr.mxu0 0.0
    %5346 = vmatpush1.msra.mxu0 0.0
    %5347 = vmatprep.subr.mxu0 0.0
    %5348 = vmatpush1.msra.mxu0 0.0
    %5349 = vmatprep.subr.mxu0 0.0
    %5350 = vmatpush1.msra.mxu0 0.0
    %5351 = vmatprep.subr.mxu0 0.0
    %5352 = vmatpush1.msra.mxu0 0.0
    %5353 = vmatprep.subr.mxu0 0.0
    %5354 = vmatpush1.msra.mxu0 0.0
    %5355 = vmatprep.subr.mxu0 0.0
    %5356 = vmatpush1.msra.mxu0 0.0
    %5357 = vmatprep.subr.mxu0 0.0
    %5358 = vmatpush1.msra.mxu0 0.0
    %5359 = vmatprep.subr.mxu0 0.0
    %5360 = vmatpush1.msra.mxu0 0.0
    %5361 = vmatprep.subr.mxu0 0.0
    %5362 = vmatpush1.msra.mxu0 0.0
    %5363 = vmatprep.subr.mxu0 0.0
    %5364 = vmatpush1.msra.mxu0 0.0
    %5365 = vmatprep.subr.mxu0 0.0
    %5366 = vmatpush1.msra.mxu0 0.0
    %5367 = vmatprep.subr.mxu0 0.0
    %5368 = vmatpush1.msra.mxu0 0.0
    %5369 = vmatprep.subr.mxu0 0.0
    %5370 = vmatpush1.msra.mxu0 0.0
    %5371 = vmatprep.subr.mxu0 0.0
    %5372 = vmatpush1.msra.mxu0 0.0
    %5373 = vmatprep.subr.mxu0 0.0
    %5374 = vmatpush1.msra.mxu0 0.0
    %5375 = vmatprep.subr.mxu0 0.0
    %5376 = vmatpush1.msra.mxu0 0.0
    %5377 = vmatprep.subr.mxu0 0.0
    %5378 = vmatpush1.msra.mxu0 0.0
    %5379 = vmatprep.subr.mxu0 0.0
    %5380 = vmatpush1.msra.mxu0 0.0
    %5381 = vmatprep.subr.mxu0 0.0
    %5382 = vmatpush1.msra.mxu0 0.0
    %5383 = vmatprep.subr.mxu0 0.0
    %5384 = vmatpush1.msra.mxu0 0.0
    %5385 = vmatprep.subr.mxu0 0.0
    %5386 = vmatpush1.msra.mxu0 0.0
    %5387 = vmatprep.subr.mxu0 0.0
    %5388 = vmatpush1.msra.mxu0 0.0
    %5389 = vmatprep.subr.mxu0 0.0
    %5390 = vmatpush1.msra.mxu0 0.0
    %5391 = vmatprep.subr.mxu0 0.0
    %5392 = vmatpush1.msra.mxu0 0.0
    %5393 = vmatprep.subr.mxu0 0.0
    %5394 = vmatpush1.msra.mxu0 0.0
    %5395 = vmatprep.subr.mxu0 0.0
    %5396 = vmatpush1.msra.mxu0 0.0
    %5397 = vmatprep.subr.mxu0 0.0
    %5398 = vmatpush1.msra.mxu0 0.0
    %5399 = vmatprep.subr.mxu0 0.0
    %5400 = vmatpush1.msra.mxu0 0.0
    %5401 = vmatprep.mubr.f32.mxu0 0.0
    %5402 = vmatmul.mubr.f32.gmra.mrb[0].mxu0 %v5264
    %v5403 = vpop.f32.mrb[0].mxu0
    %v5404 = vadd.f32 %v4585, %v5403
    %v5405 = vpop.f32.mrb[0].mxu0
    %5406 = vdwg.mxu0
    %5407 = vmatprep.subr.mxu0 %v4544
    %5408 = vmatpush1.msra.mxu0 %v4543
    %5409 = vmatprep.subr.mxu0 %v4547
    %5410 = vmatpush1.msra.mxu0 %v4546
    %5411 = vmatprep.subr.mxu0 %v4550
    %5412 = vmatpush1.msra.mxu0 %v4549
    %5413 = vmatprep.subr.mxu0 %v4553
    %5414 = vmatpush1.msra.mxu0 %v4552
    %5415 = vmatprep.subr.mxu0 0.0
    %5416 = vmatpush1.msra.mxu0 0.0
    %5417 = vmatprep.subr.mxu0 0.0
    %5418 = vmatpush1.msra.mxu0 0.0
    %5419 = vmatprep.subr.mxu0 0.0
    %5420 = vmatpush1.msra.mxu0 0.0
    %5421 = vmatprep.subr.mxu0 0.0
    %5422 = vmatpush1.msra.mxu0 0.0
    %5423 = vmatprep.subr.mxu0 0.0
    %5424 = vmatpush1.msra.mxu0 0.0
    %5425 = vmatprep.subr.mxu0 0.0
    %5426 = vmatpush1.msra.mxu0 0.0
    %5427 = vmatprep.subr.mxu0 0.0
    %5428 = vmatpush1.msra.mxu0 0.0
    %5429 = vmatprep.subr.mxu0 0.0
    %5430 = vmatpush1.msra.mxu0 0.0
    %5431 = vmatprep.subr.mxu0 0.0
    %5432 = vmatpush1.msra.mxu0 0.0
    %5433 = vmatprep.subr.mxu0 0.0
    %5434 = vmatpush1.msra.mxu0 0.0
    %5435 = vmatprep.subr.mxu0 0.0
    %5436 = vmatpush1.msra.mxu0 0.0
    %5437 = vmatprep.subr.mxu0 0.0
    %5438 = vmatpush1.msra.mxu0 0.0
    %5439 = vmatprep.subr.mxu0 0.0
    %5440 = vmatpush1.msra.mxu0 0.0
    %5441 = vmatprep.subr.mxu0 0.0
    %5442 = vmatpush1.msra.mxu0 0.0
    %5443 = vmatprep.subr.mxu0 0.0
    %5444 = vmatpush1.msra.mxu0 0.0
    %5445 = vmatprep.subr.mxu0 0.0
    %5446 = vmatpush1.msra.mxu0 0.0
    %5447 = vmatprep.subr.mxu0 0.0
    %5448 = vmatpush1.msra.mxu0 0.0
    %5449 = vmatprep.subr.mxu0 0.0
    %5450 = vmatpush1.msra.mxu0 0.0
    %5451 = vmatprep.subr.mxu0 0.0
    %5452 = vmatpush1.msra.mxu0 0.0
    %5453 = vmatprep.subr.mxu0 0.0
    %5454 = vmatpush1.msra.mxu0 0.0
    %5455 = vmatprep.subr.mxu0 0.0
    %5456 = vmatpush1.msra.mxu0 0.0
    %5457 = vmatprep.subr.mxu0 0.0
    %5458 = vmatpush1.msra.mxu0 0.0
    %5459 = vmatprep.subr.mxu0 0.0
    %5460 = vmatpush1.msra.mxu0 0.0
    %5461 = vmatprep.subr.mxu0 0.0
    %5462 = vmatpush1.msra.mxu0 0.0
    %5463 = vmatprep.subr.mxu0 0.0
    %5464 = vmatpush1.msra.mxu0 0.0
    %5465 = vmatprep.subr.mxu0 0.0
    %5466 = vmatpush1.msra.mxu0 0.0
    %5467 = vmatprep.subr.mxu0 0.0
    %5468 = vmatpush1.msra.mxu0 0.0
    %5469 = vmatprep.subr.mxu0 0.0
    %5470 = vmatpush1.msra.mxu0 0.0
    %5471 = vmatprep.mubr.f32.mxu0 0.0
    %5472 = vmatmul.mubr.f32.gmra.mrb[0].mxu0 %v5264
    %v5473 = vpop.f32.mrb[0].mxu0
    %v5474 = vadd.f32 %v4905, %v5473
    %v5475 = vpop.f32.mrb[0].mxu0
    %v5476 = vadd.f32 %v4909, %v5475
    %5477 = vdwg.mxu0
    %5478 = vmatprep.subr.mxu0 0.0
    %5479 = vmatpush1.msra.mxu0 %v4545
    %5480 = vmatprep.subr.mxu0 0.0
    %5481 = vmatpush1.msra.mxu0 %v4548
    %5482 = vmatprep.subr.mxu0 0.0
    %5483 = vmatpush1.msra.mxu0 %v4551
    %5484 = vmatprep.subr.mxu0 0.0
    %5485 = vmatpush1.msra.mxu0 %v4554
    %5486 = vmatprep.subr.mxu0 0.0
    %5487 = vmatpush1.msra.mxu0 0.0
    %5488 = vmatprep.subr.mxu0 0.0
    %5489 = vmatpush1.msra.mxu0 0.0
    %5490 = vmatprep.subr.mxu0 0.0
    %5491 = vmatpush1.msra.mxu0 0.0
    %5492 = vmatprep.subr.mxu0 0.0
    %5493 = vmatpush1.msra.mxu0 0.0
    %5494 = vmatprep.subr.mxu0 0.0
    %5495 = vmatpush1.msra.mxu0 0.0
    %5496 = vmatprep.subr.mxu0 0.0
    %5497 = vmatpush1.msra.mxu0 0.0
    %5498 = vmatprep.subr.mxu0 0.0
    %5499 = vmatpush1.msra.mxu0 0.0
    %5500 = vmatprep.subr.mxu0 0.0
    %5501 = vmatpush1.msra.mxu0 0.0
    %5502 = vmatprep.subr.mxu0 0.0
    %5503 = vmatpush1.msra.mxu0 0.0
    %5504 = vmatprep.subr.mxu0 0.0
    %5505 = vmatpush1.msra.mxu0 0.0
    %5506 = vmatprep.subr.mxu0 0.0
    %5507 = vmatpush1.msra.mxu0 0.0
    %5508 = vmatprep.subr.mxu0 0.0
    %5509 = vmatpush1.msra.mxu0 0.0
    %5510 = vmatprep.subr.mxu0 0.0
    %5511 = vmatpush1.msra.mxu0 0.0
    %5512 = vmatprep.subr.mxu0 0.0
    %5513 = vmatpush1.msra.mxu0 0.0
    %5514 = vmatprep.subr.mxu0 0.0
    %5515 = vmatpush1.msra.mxu0 0.0
    %5516 = vmatprep.subr.mxu0 0.0
    %5517 = vmatpush1.msra.mxu0 0.0
    %5518 = vmatprep.subr.mxu0 0.0
    %5519 = vmatpush1.msra.mxu0 0.0
    %5520 = vmatprep.subr.mxu0 0.0
    %5521 = vmatpush1.msra.mxu0 0.0
    %5522 = vmatprep.subr.mxu0 0.0
    %5523 = vmatpush1.msra.mxu0 0.0
    %5524 = vmatprep.subr.mxu0 0.0
    %5525 = vmatpush1.msra.mxu0 0.0
    %5526 = vmatprep.subr.mxu0 0.0
    %5527 = vmatpush1.msra.mxu0 0.0
    %5528 = vmatprep.subr.mxu0 0.0
    %5529 = vmatpush1.msra.mxu0 0.0
    %5530 = vmatprep.subr.mxu0 0.0
    %5531 = vmatpush1.msra.mxu0 0.0
    %5532 = vmatprep.subr.mxu0 0.0
    %5533 = vmatpush1.msra.mxu0 0.0
    %5534 = vmatprep.subr.mxu0 0.0
    %5535 = vmatpush1.msra.mxu0 0.0
    %5536 = vmatprep.subr.mxu0 0.0
    %5537 = vmatpush1.msra.mxu0 0.0
    %5538 = vmatprep.subr.mxu0 0.0
    %5539 = vmatpush1.msra.mxu0 0.0
    %5540 = vmatprep.subr.mxu0 0.0
    %5541 = vmatpush1.msra.mxu0 0.0
    %5542 = vmatprep.mubr.f32.mxu0 0.0
    %5543 = vmatmul.mubr.f32.gmra.mrb[0].mxu0 %v5264
    %v5544 = vpop.f32.mrb[0].mxu0
    %v5545 = vadd.f32 %v4913, %v5544
    %v5546 = vpop.f32.mrb[0].mxu0
    %5547 = vdwg.mxu0
    %v5549 = vsel %vm323, %v5262, 0
    %5551 = vmatprep.subr.mxu0 %v4556
    %5552 = vmatpush1.msra.mxu0 %v4555
    %5553 = vmatprep.subr.mxu0 %v4559
    %5554 = vmatpush1.msra.mxu0 %v4558
    %5555 = vmatprep.subr.mxu0 %v4562
    %5556 = vmatpush1.msra.mxu0 %v4561
    %5557 = vmatprep.subr.mxu0 %v4565
    %5558 = vmatpush1.msra.mxu0 %v4564
    %5559 = vmatprep.subr.mxu0 0.0
    %5560 = vmatpush1.msra.mxu0 0.0
    %5561 = vmatprep.subr.mxu0 0.0
    %5562 = vmatpush1.msra.mxu0 0.0
    %5563 = vmatprep.subr.mxu0 0.0
    %5564 = vmatpush1.msra.mxu0 0.0
    %5565 = vmatprep.subr.mxu0 0.0
    %5566 = vmatpush1.msra.mxu0 0.0
    %5567 = vmatprep.subr.mxu0 0.0
    %5568 = vmatpush1.msra.mxu0 0.0
    %5569 = vmatprep.subr.mxu0 0.0
    %5570 = vmatpush1.msra.mxu0 0.0
    %5571 = vmatprep.subr.mxu0 0.0
    %5572 = vmatpush1.msra.mxu0 0.0
    %5573 = vmatprep.subr.mxu0 0.0
    %5574 = vmatpush1.msra.mxu0 0.0
    %5575 = vmatprep.subr.mxu0 0.0
    %5576 = vmatpush1.msra.mxu0 0.0
    %5577 = vmatprep.subr.mxu0 0.0
    %5578 = vmatpush1.msra.mxu0 0.0
    %5579 = vmatprep.subr.mxu0 0.0
    %5580 = vmatpush1.msra.mxu0 0.0
    %5581 = vmatprep.subr.mxu0 0.0
    %5582 = vmatpush1.msra.mxu0 0.0
    %5583 = vmatprep.subr.mxu0 0.0
    %5584 = vmatpush1.msra.mxu0 0.0
    %5585 = vmatprep.subr.mxu0 0.0
    %5586 = vmatpush1.msra.mxu0 0.0
    %5587 = vmatprep.subr.mxu0 0.0
    %5588 = vmatpush1.msra.mxu0 0.0
    %5589 = vmatprep.subr.mxu0 0.0
    %5590 = vmatpush1.msra.mxu0 0.0
    %5591 = vmatprep.subr.mxu0 0.0
    %5592 = vmatpush1.msra.mxu0 0.0
    %5593 = vmatprep.subr.mxu0 0.0
    %5594 = vmatpush1.msra.mxu0 0.0
    %5595 = vmatprep.subr.mxu0 0.0
    %5596 = vmatpush1.msra.mxu0 0.0
    %5597 = vmatprep.subr.mxu0 0.0
    %5598 = vmatpush1.msra.mxu0 0.0
    %5599 = vmatprep.subr.mxu0 0.0
    %5600 = vmatpush1.msra.mxu0 0.0
    %5601 = vmatprep.subr.mxu0 0.0
    %5602 = vmatpush1.msra.mxu0 0.0
    %5603 = vmatprep.subr.mxu0 0.0
    %5604 = vmatpush1.msra.mxu0 0.0
    %5605 = vmatprep.subr.mxu0 0.0
    %5606 = vmatpush1.msra.mxu0 0.0
    %5607 = vmatprep.subr.mxu0 0.0
    %5608 = vmatpush1.msra.mxu0 0.0
    %5609 = vmatprep.subr.mxu0 0.0
    %5610 = vmatpush1.msra.mxu0 0.0
    %5611 = vmatprep.subr.mxu0 0.0
    %5612 = vmatpush1.msra.mxu0 0.0
    %5613 = vmatprep.subr.mxu0 0.0
    %5614 = vmatpush1.msra.mxu0 0.0
    %5615 = vmatprep.mubr.f32.mxu0 0.0
    %5616 = vmatmul.mubr.f32.gmra.mrb[0].mxu0 %v5549
    %v5617 = vpop.f32.mrb[0].mxu0
    %v5618 = vadd.f32 %v5062, %v5617
    %v5619 = vpop.f32.mrb[0].mxu0
    %v5620 = vadd.f32 %v5066, %v5619
    %5621 = vdwg.mxu0
    %5622 = vmatprep.subr.mxu0 0.0
    %5623 = vmatpush1.msra.mxu0 %v4557
    %5624 = vmatprep.subr.mxu0 0.0
    %5625 = vmatpush1.msra.mxu0 %v4560
    %5626 = vmatprep.subr.mxu0 0.0
    %5627 = vmatpush1.msra.mxu0 %v4563
    %5628 = vmatprep.subr.mxu0 0.0
    %5629 = vmatpush1.msra.mxu0 %v4566
    %5630 = vmatprep.subr.mxu0 0.0
    %5631 = vmatpush1.msra.mxu0 0.0
    %5632 = vmatprep.subr.mxu0 0.0
    %5633 = vmatpush1.msra.mxu0 0.0
    %5634 = vmatprep.subr.mxu0 0.0
    %5635 = vmatpush1.msra.mxu0 0.0
    %5636 = vmatprep.subr.mxu0 0.0
    %5637 = vmatpush1.msra.mxu0 0.0
    %5638 = vmatprep.subr.mxu0 0.0
    %5639 = vmatpush1.msra.mxu0 0.0
    %5640 = vmatprep.subr.mxu0 0.0
    %5641 = vmatpush1.msra.mxu0 0.0
    %5642 = vmatprep.subr.mxu0 0.0
    %5643 = vmatpush1.msra.mxu0 0.0
    %5644 = vmatprep.subr.mxu0 0.0
    %5645 = vmatpush1.msra.mxu0 0.0
    %5646 = vmatprep.subr.mxu0 0.0
    %5647 = vmatpush1.msra.mxu0 0.0
    %5648 = vmatprep.subr.mxu0 0.0
    %5649 = vmatpush1.msra.mxu0 0.0
    %5650 = vmatprep.subr.mxu0 0.0
    %5651 = vmatpush1.msra.mxu0 0.0
    %5652 = vmatprep.subr.mxu0 0.0
    %5653 = vmatpush1.msra.mxu0 0.0
    %5654 = vmatprep.subr.mxu0 0.0
    %5655 = vmatpush1.msra.mxu0 0.0
    %5656 = vmatprep.subr.mxu0 0.0
    %5657 = vmatpush1.msra.mxu0 0.0
    %5658 = vmatprep.subr.mxu0 0.0
    %5659 = vmatpush1.msra.mxu0 0.0
    %5660 = vmatprep.subr.mxu0 0.0
    %5661 = vmatpush1.msra.mxu0 0.0
    %5662 = vmatprep.subr.mxu0 0.0
    %5663 = vmatpush1.msra.mxu0 0.0
    %5664 = vmatprep.subr.mxu0 0.0
    %5665 = vmatpush1.msra.mxu0 0.0
    %5666 = vmatprep.subr.mxu0 0.0
    %5667 = vmatpush1.msra.mxu0 0.0
    %5668 = vmatprep.subr.mxu0 0.0
    %5669 = vmatpush1.msra.mxu0 0.0
    %5670 = vmatprep.subr.mxu0 0.0
    %5671 = vmatpush1.msra.mxu0 0.0
    %5672 = vmatprep.subr.mxu0 0.0
    %5673 = vmatpush1.msra.mxu0 0.0
    %5674 = vmatprep.subr.mxu0 0.0
    %5675 = vmatpush1.msra.mxu0 0.0
    %5676 = vmatprep.subr.mxu0 0.0
    %5677 = vmatpush1.msra.mxu0 0.0
    %5678 = vmatprep.subr.mxu0 0.0
    %5679 = vmatpush1.msra.mxu0 0.0
    %5680 = vmatprep.subr.mxu0 0.0
    %5681 = vmatpush1.msra.mxu0 0.0
    %5682 = vmatprep.subr.mxu0 0.0
    %5683 = vmatpush1.msra.mxu0 0.0
    %5684 = vmatprep.subr.mxu0 0.0
    %5685 = vmatpush1.msra.mxu0 0.0
    %5686 = vmatprep.mubr.f32.mxu0 0.0
    %5687 = vmatmul.mubr.f32.gmra.mrb[0].mxu0 %v5549
    %v5688 = vpop.f32.mrb[0].mxu0
    %v5689 = vadd.f32 %v5070, %v5688
    %v5690 = vpop.f32.mrb[0].mxu0
    %5691 = vdwg.mxu0
    %v5692 = vld [vmem:[%s4431] sm:$0x3f]
    %v5693 = vadd.f32 %v5692, %v5333
    %v5694 = vxor.u32 %v5693, 2147483648
    %v5695 = vmul.f32 %v5694, 1.442695
    %v5696 = vpow.pop %v5695
    %v5697 = vadd.f32 %v5696, 1.0
    %v5698 = vrcp.pop %v5697
    %v5699 = vmul.f32 1.0, %v5698
    %v5701 = vrot.slane %v5692, 2
    %v5703 = vadd.f32 %v5701, %v5335
    %v5704 = vxor.u32 %v5703, 2147483648
    %v5705 = vmul.f32 %v5704, 1.442695
    %v5706 = vpow.pop %v5705
    %v5707 = vadd.f32 %v5706, 1.0
    %v5708 = vrcp.pop %v5707
    %v5709 = vmul.f32 1.0, %v5708
    %v5710 = vmul.f32 %v5699, %v5404
    %v5711 = vrot.slane %v5692, 4
    %v5713 = vadd.f32 %v5711, %v5710
    %v5714 = vtanh.pop %v5713
    %v5715 = vsub.f32 1.0, %v5709
    %v5716 = vmul.f32 %v5715, %v5714
    %v5717 = vmul.f32 %v5709, %v5241
    %v5718 = vadd.f32 %v5716, %v5717
    %v5719 = vadd.f32 %v5474, %v5618
    %v5720 = vxor.u32 %v5719, 2147483648
    %v5721 = vmul.f32 %v5720, 1.442695
    %v5722 = vpow.pop %v5721
    %v5723 = vadd.f32 %v5722, 1.0
    %v5724 = vrcp.pop %v5723
    %v5725 = vmul.f32 1.0, %v5724
    %v5726 = vadd.f32 %v5476, %v5620
    %v5727 = vxor.u32 %v5726, 2147483648
    %v5728 = vmul.f32 %v5727, 1.442695
    %v5729 = vpow.pop %v5728
    %v5730 = vadd.f32 %v5729, 1.0
    %v5731 = vrcp.pop %v5730
    %v5732 = vmul.f32 1.0, %v5731
    %v5733 = vmul.f32 %v5725, %v5689
    %v5734 = vadd.f32 %v5545, %v5733
    %v5735 = vtanh.pop %v5734
    %v5736 = vsub.f32 1.0, %v5732
    %v5737 = vmul.f32 %v5736, %v5735
    %v5738 = vmul.f32 %v5732, %v5262
    %v5739 = vadd.f32 %v5737, %v5738
    %v5741 = vsel %vm323, %v5718, 0
    %5743 = vmatprep.subr.mxu0 %v4532
    %5744 = vmatpush1.msra.mxu0 %v4531
    %5745 = vmatprep.subr.mxu0 %v4535
    %5746 = vmatpush1.msra.mxu0 %v4534
    %5747 = vmatprep.subr.mxu0 %v4538
    %5748 = vmatpush1.msra.mxu0 %v4537
    %5749 = vmatprep.subr.mxu0 %v4541
    %5750 = vmatpush1.msra.mxu0 %v4540
    %5751 = vmatprep.subr.mxu0 0.0
    %5752 = vmatpush1.msra.mxu0 0.0
    %5753 = vmatprep.subr.mxu0 0.0
    %5754 = vmatpush1.msra.mxu0 0.0
    %5755 = vmatprep.subr.mxu0 0.0
    %5756 = vmatpush1.msra.mxu0 0.0
    %5757 = vmatprep.subr.mxu0 0.0
    %5758 = vmatpush1.msra.mxu0 0.0
    %5759 = vmatprep.subr.mxu0 0.0
    %5760 = vmatpush1.msra.mxu0 0.0
    %5761 = vmatprep.subr.mxu0 0.0
    %5762 = vmatpush1.msra.mxu0 0.0
    %5763 = vmatprep.subr.mxu0 0.0
    %5764 = vmatpush1.msra.mxu0 0.0
    %5765 = vmatprep.subr.mxu0 0.0
    %5766 = vmatpush1.msra.mxu0 0.0
    %5767 = vmatprep.subr.mxu0 0.0
    %5768 = vmatpush1.msra.mxu0 0.0
    %5769 = vmatprep.subr.mxu0 0.0
    %5770 = vmatpush1.msra.mxu0 0.0
    %5771 = vmatprep.subr.mxu0 0.0
    %5772 = vmatpush1.msra.mxu0 0.0
    %5773 = vmatprep.subr.mxu0 0.0
    %5774 = vmatpush1.msra.mxu0 0.0
    %5775 = vmatprep.subr.mxu0 0.0
    %5776 = vmatpush1.msra.mxu0 0.0
    %5777 = vmatprep.subr.mxu0 0.0
    %5778 = vmatpush1.msra.mxu0 0.0
    %5779 = vmatprep.subr.mxu0 0.0
    %5780 = vmatpush1.msra.mxu0 0.0
    %5781 = vmatprep.subr.mxu0 0.0
    %5782 = vmatpush1.msra.mxu0 0.0
    %5783 = vmatprep.subr.mxu0 0.0
    %5784 = vmatpush1.msra.mxu0 0.0
    %5785 = vmatprep.subr.mxu0 0.0
    %5786 = vmatpush1.msra.mxu0 0.0
    %5787 = vmatprep.subr.mxu0 0.0
    %5788 = vmatpush1.msra.mxu0 0.0
    %5789 = vmatprep.subr.mxu0 0.0
    %5790 = vmatpush1.msra.mxu0 0.0
    %5791 = vmatprep.subr.mxu0 0.0
    %5792 = vmatpush1.msra.mxu0 0.0
    %5793 = vmatprep.subr.mxu0 0.0
    %5794 = vmatpush1.msra.mxu0 0.0
    %5795 = vmatprep.subr.mxu0 0.0
    %5796 = vmatpush1.msra.mxu0 0.0
    %5797 = vmatprep.subr.mxu0 0.0
    %5798 = vmatpush1.msra.mxu0 0.0
    %5799 = vmatprep.subr.mxu0 0.0
    %5800 = vmatpush1.msra.mxu0 0.0
    %5801 = vmatprep.subr.mxu0 0.0
    %5802 = vmatpush1.msra.mxu0 0.0
    %5803 = vmatprep.subr.mxu0 0.0
    %5804 = vmatpush1.msra.mxu0 0.0
    %5805 = vmatprep.subr.mxu0 0.0
    %5806 = vmatpush1.msra.mxu0 0.0
    %5807 = vmatprep.mubr.f32.mxu0 0.0
    %5808 = vmatmul.mubr.f32.gmra.mrb[0].mxu0 %v5741
    %v5809 = vpop.f32.mrb[0].mxu0
    %v5810 = vadd.f32 %v4577, %v5809
    %v5811 = vpop.f32.mrb[0].mxu0
    %v5812 = vadd.f32 %v4581, %v5811
    %5813 = vdwg.mxu0
    %5814 = vmatprep.subr.mxu0 0.0
    %5815 = vmatpush1.msra.mxu0 %v4533
    %5816 = vmatprep.subr.mxu0 0.0
    %5817 = vmatpush1.msra.mxu0 %v4536
    %5818 = vmatprep.subr.mxu0 0.0
    %5819 = vmatpush1.msra.mxu0 %v4539
    %5820 = vmatprep.subr.mxu0 0.0
    %5821 = vmatpush1.msra.mxu0 %v4542
    %5822 = vmatprep.subr.mxu0 0.0
    %5823 = vmatpush1.msra.mxu0 0.0
    %5824 = vmatprep.subr.mxu0 0.0
    %5825 = vmatpush1.msra.mxu0 0.0
    %5826 = vmatprep.subr.mxu0 0.0
    %5827 = vmatpush1.msra.mxu0 0.0
    %5828 = vmatprep.subr.mxu0 0.0
    %5829 = vmatpush1.msra.mxu0 0.0
    %5830 = vmatprep.subr.mxu0 0.0
    %5831 = vmatpush1.msra.mxu0 0.0
    %5832 = vmatprep.subr.mxu0 0.0
    %5833 = vmatpush1.msra.mxu0 0.0
    %5834 = vmatprep.subr.mxu0 0.0
    %5835 = vmatpush1.msra.mxu0 0.0
    %5836 = vmatprep.subr.mxu0 0.0
    %5837 = vmatpush1.msra.mxu0 0.0
    %5838 = vmatprep.subr.mxu0 0.0
    %5839 = vmatpush1.msra.mxu0 0.0
    %5840 = vmatprep.subr.mxu0 0.0
    %5841 = vmatpush1.msra.mxu0 0.0
    %5842 = vmatprep.subr.mxu0 0.0
    %5843 = vmatpush1.msra.mxu0 0.0
    %5844 = vmatprep.subr.mxu0 0.0
    %5845 = vmatpush1.msra.mxu0 0.0
    %5846 = vmatprep.subr.mxu0 0.0
    %5847 = vmatpush1.msra.mxu0 0.0
    %5848 = vmatprep.subr.mxu0 0.0
    %5849 = vmatpush1.msra.mxu0 0.0
    %5850 = vmatprep.subr.mxu0 0.0
    %5851 = vmatpush1.msra.mxu0 0.0
    %5852 = vmatprep.subr.mxu0 0.0
    %5853 = vmatpush1.msra.mxu0 0.0
    %5854 = vmatprep.subr.mxu0 0.0
    %5855 = vmatpush1.msra.mxu0 0.0
    %5856 = vmatprep.subr.mxu0 0.0
    %5857 = vmatpush1.msra.mxu0 0.0
    %5858 = vmatprep.subr.mxu0 0.0
    %5859 = vmatpush1.msra.mxu0 0.0
    %5860 = vmatprep.subr.mxu0 0.0
    %5861 = vmatpush1.msra.mxu0 0.0
    %5862 = vmatprep.subr.mxu0 0.0
    %5863 = vmatpush1.msra.mxu0 0.0
    %5864 = vmatprep.subr.mxu0 0.0
    %5865 = vmatpush1.msra.mxu0 0.0
    %5866 = vmatprep.subr.mxu0 0.0
    %5867 = vmatpush1.msra.mxu0 0.0
    %5868 = vmatprep.subr.mxu0 0.0
    %5869 = vmatpush1.msra.mxu0 0.0
    %5870 = vmatprep.subr.mxu0 0.0
    %5871 = vmatpush1.msra.mxu0 0.0
    %5872 = vmatprep.subr.mxu0 0.0
    %5873 = vmatpush1.msra.mxu0 0.0
    %5874 = vmatprep.subr.mxu0 0.0
    %5875 = vmatpush1.msra.mxu0 0.0
    %5876 = vmatprep.subr.mxu0 0.0
    %5877 = vmatpush1.msra.mxu0 0.0
    %5878 = vmatprep.mubr.f32.mxu0 0.0
    %5879 = vmatmul.mubr.f32.gmra.mrb[0].mxu0 %v5741
    %v5880 = vpop.f32.mrb[0].mxu0
    %v5881 = vadd.f32 %v4585, %v5880
    %v5882 = vpop.f32.mrb[0].mxu0
    %5883 = vdwg.mxu0
    %5884 = vmatprep.subr.mxu0 %v4544
    %5885 = vmatpush1.msra.mxu0 %v4543
    %5886 = vmatprep.subr.mxu0 %v4547
    %5887 = vmatpush1.msra.mxu0 %v4546
    %5888 = vmatprep.subr.mxu0 %v4550
    %5889 = vmatpush1.msra.mxu0 %v4549
    %5890 = vmatprep.subr.mxu0 %v4553
    %5891 = vmatpush1.msra.mxu0 %v4552
    %5892 = vmatprep.subr.mxu0 0.0
    %5893 = vmatpush1.msra.mxu0 0.0
    %5894 = vmatprep.subr.mxu0 0.0
    %5895 = vmatpush1.msra.mxu0 0.0
    %5896 = vmatprep.subr.mxu0 0.0
    %5897 = vmatpush1.msra.mxu0 0.0
    %5898 = vmatprep.subr.mxu0 0.0
    %5899 = vmatpush1.msra.mxu0 0.0
    %5900 = vmatprep.subr.mxu0 0.0
    %5901 = vmatpush1.msra.mxu0 0.0
    %5902 = vmatprep.subr.mxu0 0.0
    %5903 = vmatpush1.msra.mxu0 0.0
    %5904 = vmatprep.subr.mxu0 0.0
    %5905 = vmatpush1.msra.mxu0 0.0
    %5906 = vmatprep.subr.mxu0 0.0
    %5907 = vmatpush1.msra.mxu0 0.0
    %5908 = vmatprep.subr.mxu0 0.0
    %5909 = vmatpush1.msra.mxu0 0.0
    %5910 = vmatprep.subr.mxu0 0.0
    %5911 = vmatpush1.msra.mxu0 0.0
    %5912 = vmatprep.subr.mxu0 0.0
    %5913 = vmatpush1.msra.mxu0 0.0
    %5914 = vmatprep.subr.mxu0 0.0
    %5915 = vmatpush1.msra.mxu0 0.0
    %5916 = vmatprep.subr.mxu0 0.0
    %5917 = vmatpush1.msra.mxu0 0.0
    %5918 = vmatprep.subr.mxu0 0.0
    %5919 = vmatpush1.msra.mxu0 0.0
    %5920 = vmatprep.subr.mxu0 0.0
    %5921 = vmatpush1.msra.mxu0 0.0
    %5922 = vmatprep.subr.mxu0 0.0
    %5923 = vmatpush1.msra.mxu0 0.0
    %5924 = vmatprep.subr.mxu0 0.0
    %5925 = vmatpush1.msra.mxu0 0.0
    %5926 = vmatprep.subr.mxu0 0.0
    %5927 = vmatpush1.msra.mxu0 0.0
    %5928 = vmatprep.subr.mxu0 0.0
    %5929 = vmatpush1.msra.mxu0 0.0
    %5930 = vmatprep.subr.mxu0 0.0
    %5931 = vmatpush1.msra.mxu0 0.0
    %5932 = vmatprep.subr.mxu0 0.0
    %5933 = vmatpush1.msra.mxu0 0.0
    %5934 = vmatprep.subr.mxu0 0.0
    %5935 = vmatpush1.msra.mxu0 0.0
    %5936 = vmatprep.subr.mxu0 0.0
    %5937 = vmatpush1.msra.mxu0 0.0
    %5938 = vmatprep.subr.mxu0 0.0
    %5939 = vmatpush1.msra.mxu0 0.0
    %5940 = vmatprep.subr.mxu0 0.0
    %5941 = vmatpush1.msra.mxu0 0.0
    %5942 = vmatprep.subr.mxu0 0.0
    %5943 = vmatpush1.msra.mxu0 0.0
    %5944 = vmatprep.subr.mxu0 0.0
    %5945 = vmatpush1.msra.mxu0 0.0
    %5946 = vmatprep.subr.mxu0 0.0
    %5947 = vmatpush1.msra.mxu0 0.0
    %5948 = vmatprep.mubr.f32.mxu0 0.0
    %5949 = vmatmul.mubr.f32.gmra.mrb[0].mxu0 %v5741
    %v5950 = vpop.f32.mrb[0].mxu0
    %v5951 = vadd.f32 %v4905, %v5950
    %v5952 = vpop.f32.mrb[0].mxu0
    %v5953 = vadd.f32 %v4909, %v5952
    %5954 = vdwg.mxu0
    %5955 = vmatprep.subr.mxu0 0.0
    %5956 = vmatpush1.msra.mxu0 %v4545
    %5957 = vmatprep.subr.mxu0 0.0
    %5958 = vmatpush1.msra.mxu0 %v4548
    %5959 = vmatprep.subr.mxu0 0.0
    %5960 = vmatpush1.msra.mxu0 %v4551
    %5961 = vmatprep.subr.mxu0 0.0
    %5962 = vmatpush1.msra.mxu0 %v4554
    %5963 = vmatprep.subr.mxu0 0.0
    %5964 = vmatpush1.msra.mxu0 0.0
    %5965 = vmatprep.subr.mxu0 0.0
    %5966 = vmatpush1.msra.mxu0 0.0
    %5967 = vmatprep.subr.mxu0 0.0
    %5968 = vmatpush1.msra.mxu0 0.0
    %5969 = vmatprep.subr.mxu0 0.0
    %5970 = vmatpush1.msra.mxu0 0.0
    %5971 = vmatprep.subr.mxu0 0.0
    %5972 = vmatpush1.msra.mxu0 0.0
    %5973 = vmatprep.subr.mxu0 0.0
    %5974 = vmatpush1.msra.mxu0 0.0
    %5975 = vmatprep.subr.mxu0 0.0
    %5976 = vmatpush1.msra.mxu0 0.0
    %5977 = vmatprep.subr.mxu0 0.0
    %5978 = vmatpush1.msra.mxu0 0.0
    %5979 = vmatprep.subr.mxu0 0.0
    %5980 = vmatpush1.msra.mxu0 0.0
    %5981 = vmatprep.subr.mxu0 0.0
    %5982 = vmatpush1.msra.mxu0 0.0
    %5983 = vmatprep.subr.mxu0 0.0
    %5984 = vmatpush1.msra.mxu0 0.0
    %5985 = vmatprep.subr.mxu0 0.0
    %5986 = vmatpush1.msra.mxu0 0.0
    %5987 = vmatprep.subr.mxu0 0.0
    %5988 = vmatpush1.msra.mxu0 0.0
    %5989 = vmatprep.subr.mxu0 0.0
    %5990 = vmatpush1.msra.mxu0 0.0
    %5991 = vmatprep.subr.mxu0 0.0
    %5992 = vmatpush1.msra.mxu0 0.0
    %5993 = vmatprep.subr.mxu0 0.0
    %5994 = vmatpush1.msra.mxu0 0.0
    %5995 = vmatprep.subr.mxu0 0.0
    %5996 = vmatpush1.msra.mxu0 0.0
    %5997 = vmatprep.subr.mxu0 0.0
    %5998 = vmatpush1.msra.mxu0 0.0
    %5999 = vmatprep.subr.mxu0 0.0
    %6000 = vmatpush1.msra.mxu0 0.0
    %6001 = vmatprep.subr.mxu0 0.0
    %6002 = vmatpush1.msra.mxu0 0.0
    %6003 = vmatprep.subr.mxu0 0.0
    %6004 = vmatpush1.msra.mxu0 0.0
    %6005 = vmatprep.subr.mxu0 0.0
    %6006 = vmatpush1.msra.mxu0 0.0
    %6007 = vmatprep.subr.mxu0 0.0
    %6008 = vmatpush1.msra.mxu0 0.0
    %6009 = vmatprep.subr.mxu0 0.0
    %6010 = vmatpush1.msra.mxu0 0.0
    %6011 = vmatprep.subr.mxu0 0.0
    %6012 = vmatpush1.msra.mxu0 0.0
    %6013 = vmatprep.subr.mxu0 0.0
    %6014 = vmatpush1.msra.mxu0 0.0
    %6015 = vmatprep.subr.mxu0 0.0
    %6016 = vmatpush1.msra.mxu0 0.0
    %6017 = vmatprep.subr.mxu0 0.0
    %6018 = vmatpush1.msra.mxu0 0.0
    %6019 = vmatprep.mubr.f32.mxu0 0.0
    %6020 = vmatmul.mubr.f32.gmra.mrb[0].mxu0 %v5741
    %v6021 = vpop.f32.mrb[0].mxu0
    %v6022 = vadd.f32 %v4913, %v6021
    %v6023 = vpop.f32.mrb[0].mxu0
    %6024 = vdwg.mxu0
    %v6026 = vsel %vm323, %v5739, 0
    %6028 = vmatprep.subr.mxu0 %v4556
    %6029 = vmatpush1.msra.mxu0 %v4555
    %6030 = vmatprep.subr.mxu0 %v4559
    %6031 = vmatpush1.msra.mxu0 %v4558
    %6032 = vmatprep.subr.mxu0 %v4562
    %6033 = vmatpush1.msra.mxu0 %v4561
    %6034 = vmatprep.subr.mxu0 %v4565
    %6035 = vmatpush1.msra.mxu0 %v4564
    %6036 = vmatprep.subr.mxu0 0.0
    %6037 = vmatpush1.msra.mxu0 0.0
    %6038 = vmatprep.subr.mxu0 0.0
    %6039 = vmatpush1.msra.mxu0 0.0
    %6040 = vmatprep.subr.mxu0 0.0
    %6041 = vmatpush1.msra.mxu0 0.0
    %6042 = vmatprep.subr.mxu0 0.0
    %6043 = vmatpush1.msra.mxu0 0.0
    %6044 = vmatprep.subr.mxu0 0.0
    %6045 = vmatpush1.msra.mxu0 0.0
    %6046 = vmatprep.subr.mxu0 0.0
    %6047 = vmatpush1.msra.mxu0 0.0
    %6048 = vmatprep.subr.mxu0 0.0
    %6049 = vmatpush1.msra.mxu0 0.0
    %6050 = vmatprep.subr.mxu0 0.0
    %6051 = vmatpush1.msra.mxu0 0.0
    %6052 = vmatprep.subr.mxu0 0.0
    %6053 = vmatpush1.msra.mxu0 0.0
    %6054 = vmatprep.subr.mxu0 0.0
    %6055 = vmatpush1.msra.mxu0 0.0
    %6056 = vmatprep.subr.mxu0 0.0
    %6057 = vmatpush1.msra.mxu0 0.0
    %6058 = vmatprep.subr.mxu0 0.0
    %6059 = vmatpush1.msra.mxu0 0.0
    %6060 = vmatprep.subr.mxu0 0.0
    %6061 = vmatpush1.msra.mxu0 0.0
    %6062 = vmatprep.subr.mxu0 0.0
    %6063 = vmatpush1.msra.mxu0 0.0
    %6064 = vmatprep.subr.mxu0 0.0
    %6065 = vmatpush1.msra.mxu0 0.0
    %6066 = vmatprep.subr.mxu0 0.0
    %6067 = vmatpush1.msra.mxu0 0.0
    %6068 = vmatprep.subr.mxu0 0.0
    %6069 = vmatpush1.msra.mxu0 0.0
    %6070 = vmatprep.subr.mxu0 0.0
    %6071 = vmatpush1.msra.mxu0 0.0
    %6072 = vmatprep.subr.mxu0 0.0
    %6073 = vmatpush1.msra.mxu0 0.0
    %6074 = vmatprep.subr.mxu0 0.0
    %6075 = vmatpush1.msra.mxu0 0.0
    %6076 = vmatprep.subr.mxu0 0.0
    %6077 = vmatpush1.msra.mxu0 0.0
    %6078 = vmatprep.subr.mxu0 0.0
    %6079 = vmatpush1.msra.mxu0 0.0
    %6080 = vmatprep.subr.mxu0 0.0
    %6081 = vmatpush1.msra.mxu0 0.0
    %6082 = vmatprep.subr.mxu0 0.0
    %6083 = vmatpush1.msra.mxu0 0.0
    %6084 = vmatprep.subr.mxu0 0.0
    %6085 = vmatpush1.msra.mxu0 0.0
    %6086 = vmatprep.subr.mxu0 0.0
    %6087 = vmatpush1.msra.mxu0 0.0
    %6088 = vmatprep.subr.mxu0 0.0
    %6089 = vmatpush1.msra.mxu0 0.0
    %6090 = vmatprep.subr.mxu0 0.0
    %6091 = vmatpush1.msra.mxu0 0.0
    %6092 = vmatprep.mubr.f32.mxu0 0.0
    %6093 = vmatmul.mubr.f32.gmra.mrb[0].mxu0 %v6026
    %v6094 = vpop.f32.mrb[0].mxu0
    %v6095 = vadd.f32 %v5062, %v6094
    %v6096 = vpop.f32.mrb[0].mxu0
    %v6097 = vadd.f32 %v5066, %v6096
    %6098 = vdwg.mxu0
    %6099 = vmatprep.subr.mxu0 0.0
    %6100 = vmatpush1.msra.mxu0 %v4557
    %6101 = vmatprep.subr.mxu0 0.0
    %6102 = vmatpush1.msra.mxu0 %v4560
    %6103 = vmatprep.subr.mxu0 0.0
    %6104 = vmatpush1.msra.mxu0 %v4563
    %6105 = vmatprep.subr.mxu0 0.0
    %6106 = vmatpush1.msra.mxu0 %v4566
    %6107 = vmatprep.subr.mxu0 0.0
    %6108 = vmatpush1.msra.mxu0 0.0
    %6109 = vmatprep.subr.mxu0 0.0
    %6110 = vmatpush1.msra.mxu0 0.0
    %6111 = vmatprep.subr.mxu0 0.0
    %6112 = vmatpush1.msra.mxu0 0.0
    %6113 = vmatprep.subr.mxu0 0.0
    %6114 = vmatpush1.msra.mxu0 0.0
    %6115 = vmatprep.subr.mxu0 0.0
    %6116 = vmatpush1.msra.mxu0 0.0
    %6117 = vmatprep.subr.mxu0 0.0
    %6118 = vmatpush1.msra.mxu0 0.0
    %6119 = vmatprep.subr.mxu0 0.0
    %6120 = vmatpush1.msra.mxu0 0.0
    %6121 = vmatprep.subr.mxu0 0.0
    %6122 = vmatpush1.msra.mxu0 0.0
    %6123 = vmatprep.subr.mxu0 0.0
    %6124 = vmatpush1.msra.mxu0 0.0
    %6125 = vmatprep.subr.mxu0 0.0
    %6126 = vmatpush1.msra.mxu0 0.0
    %6127 = vmatprep.subr.mxu0 0.0
    %6128 = vmatpush1.msra.mxu0 0.0
    %6129 = vmatprep.subr.mxu0 0.0
    %6130 = vmatpush1.msra.mxu0 0.0
    %6131 = vmatprep.subr.mxu0 0.0
    %6132 = vmatpush1.msra.mxu0 0.0
    %6133 = vmatprep.subr.mxu0 0.0
    %6134 = vmatpush1.msra.mxu0 0.0
    %6135 = vmatprep.subr.mxu0 0.0
    %6136 = vmatpush1.msra.mxu0 0.0
    %6137 = vmatprep.subr.mxu0 0.0
    %6138 = vmatpush1.msra.mxu0 0.0
    %6139 = vmatprep.subr.mxu0 0.0
    %6140 = vmatpush1.msra.mxu0 0.0
    %6141 = vmatprep.subr.mxu0 0.0
    %6142 = vmatpush1.msra.mxu0 0.0
    %6143 = vmatprep.subr.mxu0 0.0
    %6144 = vmatpush1.msra.mxu0 0.0
    %6145 = vmatprep.subr.mxu0 0.0
    %6146 = vmatpush1.msra.mxu0 0.0
    %6147 = vmatprep.subr.mxu0 0.0
    %6148 = vmatpush1.msra.mxu0 0.0
    %6149 = vmatprep.subr.mxu0 0.0
    %6150 = vmatpush1.msra.mxu0 0.0
    %6151 = vmatprep.subr.mxu0 0.0
    %6152 = vmatpush1.msra.mxu0 0.0
    %6153 = vmatprep.subr.mxu0 0.0
    %6154 = vmatpush1.msra.mxu0 0.0
    %6155 = vmatprep.subr.mxu0 0.0
    %6156 = vmatpush1.msra.mxu0 0.0
    %6157 = vmatprep.subr.mxu0 0.0
    %6158 = vmatpush1.msra.mxu0 0.0
    %6159 = vmatprep.subr.mxu0 0.0
    %6160 = vmatpush1.msra.mxu0 0.0
    %6161 = vmatprep.subr.mxu0 0.0
    %6162 = vmatpush1.msra.mxu0 0.0
    %6163 = vmatprep.mubr.f32.mxu0 0.0
    %6164 = vmatmul.mubr.f32.gmra.mrb[0].mxu0 %v6026
    %v6165 = vpop.f32.mrb[0].mxu0
    %v6166 = vadd.f32 %v5070, %v6165
    %v6167 = vpop.f32.mrb[0].mxu0
    %6168 = vdwg.mxu0
    %v6169 = vld [vmem:[%s4459] sm:$0x3f]
    %v6170 = vadd.f32 %v6169, %v5810
    %v6171 = vxor.u32 %v6170, 2147483648
    %v6172 = vmul.f32 %v6171, 1.442695
    %v6173 = vpow.pop %v6172
    %v6174 = vadd.f32 %v6173, 1.0
    %v6175 = vrcp.pop %v6174
    %v6176 = vmul.f32 1.0, %v6175
    %v6178 = vrot.slane %v6169, 2
    %v6180 = vadd.f32 %v6178, %v5812
    %v6181 = vxor.u32 %v6180, 2147483648
    %v6182 = vmul.f32 %v6181, 1.442695
    %v6183 = vpow.pop %v6182
    %v6184 = vadd.f32 %v6183, 1.0
    %v6185 = vrcp.pop %v6184
    %v6186 = vmul.f32 1.0, %v6185
    %v6187 = vmul.f32 %v6176, %v5881
    %v6188 = vrot.slane %v6169, 4
    %v6190 = vadd.f32 %v6188, %v6187
    %v6191 = vtanh.pop %v6190
    %v6192 = vsub.f32 1.0, %v6186
    %v6193 = vmul.f32 %v6192, %v6191
    %v6194 = vmul.f32 %v6186, %v5718
    %v6195 = vadd.f32 %v6193, %v6194
    %v6196 = vadd.f32 %v5951, %v6095
    %v6197 = vxor.u32 %v6196, 2147483648
    %v6198 = vmul.f32 %v6197, 1.442695
    %v6199 = vpow.pop %v6198
    %v6200 = vadd.f32 %v6199, 1.0
    %v6201 = vrcp.pop %v6200
    %v6202 = vmul.f32 1.0, %v6201
    %v6203 = vadd.f32 %v5953, %v6097
    %v6204 = vxor.u32 %v6203, 2147483648
    %v6205 = vmul.f32 %v6204, 1.442695
    %v6206 = vpow.pop %v6205
    %v6207 = vadd.f32 %v6206, 1.0
    %v6208 = vrcp.pop %v6207
    %v6209 = vmul.f32 1.0, %v6208
    %v6210 = vmul.f32 %v6202, %v6166
    %v6211 = vadd.f32 %v6022, %v6210
    %v6212 = vtanh.pop %v6211
    %v6213 = vsub.f32 1.0, %v6209
    %v6214 = vmul.f32 %v6213, %v6212
    %v6215 = vmul.f32 %v6209, %v5739
    %v6216 = vadd.f32 %v6214, %v6215
    %v6218 = vsel %vm323, %v6195, 0
    %6220 = vmatprep.subr.mxu0 %v4532
    %6221 = vmatpush1.msra.mxu0 %v4531
    %6222 = vmatprep.subr.mxu0 %v4535
    %6223 = vmatpush1.msra.mxu0 %v4534
    %6224 = vmatprep.subr.mxu0 %v4538
    %6225 = vmatpush1.msra.mxu0 %v4537
    %6226 = vmatprep.subr.mxu0 %v4541
    %6227 = vmatpush1.msra.mxu0 %v4540
    %6228 = vmatprep.subr.mxu0 0.0
    %6229 = vmatpush1.msra.mxu0 0.0
    %6230 = vmatprep.subr.mxu0 0.0
    %6231 = vmatpush1.msra.mxu0 0.0
    %6232 = vmatprep.subr.mxu0 0.0
    %6233 = vmatpush1.msra.mxu0 0.0
    %6234 = vmatprep.subr.mxu0 0.0
    %6235 = vmatpush1.msra.mxu0 0.0
    %6236 = vmatprep.subr.mxu0 0.0
    %6237 = vmatpush1.msra.mxu0 0.0
    %6238 = vmatprep.subr.mxu0 0.0
    %6239 = vmatpush1.msra.mxu0 0.0
    %6240 = vmatprep.subr.mxu0 0.0
    %6241 = vmatpush1.msra.mxu0 0.0
    %6242 = vmatprep.subr.mxu0 0.0
    %6243 = vmatpush1.msra.mxu0 0.0
    %6244 = vmatprep.subr.mxu0 0.0
    %6245 = vmatpush1.msra.mxu0 0.0
    %6246 = vmatprep.subr.mxu0 0.0
    %6247 = vmatpush1.msra.mxu0 0.0
    %6248 = vmatprep.subr.mxu0 0.0
    %6249 = vmatpush1.msra.mxu0 0.0
    %6250 = vmatprep.subr.mxu0 0.0
    %6251 = vmatpush1.msra.mxu0 0.0
    %6252 = vmatprep.subr.mxu0 0.0
    %6253 = vmatpush1.msra.mxu0 0.0
    %6254 = vmatprep.subr.mxu0 0.0
    %6255 = vmatpush1.msra.mxu0 0.0
    %6256 = vmatprep.subr.mxu0 0.0
    %6257 = vmatpush1.msra.mxu0 0.0
    %6258 = vmatprep.subr.mxu0 0.0
    %6259 = vmatpush1.msra.mxu0 0.0
    %6260 = vmatprep.subr.mxu0 0.0
    %6261 = vmatpush1.msra.mxu0 0.0
    %6262 = vmatprep.subr.mxu0 0.0
    %6263 = vmatpush1.msra.mxu0 0.0
    %6264 = vmatprep.subr.mxu0 0.0
    %6265 = vmatpush1.msra.mxu0 0.0
    %6266 = vmatprep.subr.mxu0 0.0
    %6267 = vmatpush1.msra.mxu0 0.0
    %6268 = vmatprep.subr.mxu0 0.0
    %6269 = vmatpush1.msra.mxu0 0.0
    %6270 = vmatprep.subr.mxu0 0.0
    %6271 = vmatpush1.msra.mxu0 0.0
    %6272 = vmatprep.subr.mxu0 0.0
    %6273 = vmatpush1.msra.mxu0 0.0
    %6274 = vmatprep.subr.mxu0 0.0
    %6275 = vmatpush1.msra.mxu0 0.0
    %6276 = vmatprep.subr.mxu0 0.0
    %6277 = vmatpush1.msra.mxu0 0.0
    %6278 = vmatprep.subr.mxu0 0.0
    %6279 = vmatpush1.msra.mxu0 0.0
    %6280 = vmatprep.subr.mxu0 0.0
    %6281 = vmatpush1.msra.mxu0 0.0
    %6282 = vmatprep.subr.mxu0 0.0
    %6283 = vmatpush1.msra.mxu0 0.0
    %6284 = vmatprep.mubr.f32.mxu0 0.0
    %6285 = vmatmul.mubr.f32.gmra.mrb[0].mxu0 %v6218
    %v6286 = vpop.f32.mrb[0].mxu0
    %v6287 = vadd.f32 %v4577, %v6286
    %v6288 = vpop.f32.mrb[0].mxu0
    %v6289 = vadd.f32 %v4581, %v6288
    %6290 = vdwg.mxu0
    %6291 = vmatprep.subr.mxu0 0.0
    %6292 = vmatpush1.msra.mxu0 %v4533
    %6293 = vmatprep.subr.mxu0 0.0
    %6294 = vmatpush1.msra.mxu0 %v4536
    %6295 = vmatprep.subr.mxu0 0.0
    %6296 = vmatpush1.msra.mxu0 %v4539
    %6297 = vmatprep.subr.mxu0 0.0
    %6298 = vmatpush1.msra.mxu0 %v4542
    %6299 = vmatprep.subr.mxu0 0.0
    %6300 = vmatpush1.msra.mxu0 0.0
    %6301 = vmatprep.subr.mxu0 0.0
    %6302 = vmatpush1.msra.mxu0 0.0
    %6303 = vmatprep.subr.mxu0 0.0
    %6304 = vmatpush1.msra.mxu0 0.0
    %6305 = vmatprep.subr.mxu0 0.0
    %6306 = vmatpush1.msra.mxu0 0.0
    %6307 = vmatprep.subr.mxu0 0.0
    %6308 = vmatpush1.msra.mxu0 0.0
    %6309 = vmatprep.subr.mxu0 0.0
    %6310 = vmatpush1.msra.mxu0 0.0
    %6311 = vmatprep.subr.mxu0 0.0
    %6312 = vmatpush1.msra.mxu0 0.0
    %6313 = vmatprep.subr.mxu0 0.0
    %6314 = vmatpush1.msra.mxu0 0.0
    %6315 = vmatprep.subr.mxu0 0.0
    %6316 = vmatpush1.msra.mxu0 0.0
    %6317 = vmatprep.subr.mxu0 0.0
    %6318 = vmatpush1.msra.mxu0 0.0
    %6319 = vmatprep.subr.mxu0 0.0
    %6320 = vmatpush1.msra.mxu0 0.0
    %6321 = vmatprep.subr.mxu0 0.0
    %6322 = vmatpush1.msra.mxu0 0.0
    %6323 = vmatprep.subr.mxu0 0.0
    %6324 = vmatpush1.msra.mxu0 0.0
    %6325 = vmatprep.subr.mxu0 0.0
    %6326 = vmatpush1.msra.mxu0 0.0
    %6327 = vmatprep.subr.mxu0 0.0
    %6328 = vmatpush1.msra.mxu0 0.0
    %6329 = vmatprep.subr.mxu0 0.0
    %6330 = vmatpush1.msra.mxu0 0.0
    %6331 = vmatprep.subr.mxu0 0.0
    %6332 = vmatpush1.msra.mxu0 0.0
    %6333 = vmatprep.subr.mxu0 0.0
    %6334 = vmatpush1.msra.mxu0 0.0
    %6335 = vmatprep.subr.mxu0 0.0
    %6336 = vmatpush1.msra.mxu0 0.0
    %6337 = vmatprep.subr.mxu0 0.0
    %6338 = vmatpush1.msra.mxu0 0.0
    %6339 = vmatprep.subr.mxu0 0.0
    %6340 = vmatpush1.msra.mxu0 0.0
    %6341 = vmatprep.subr.mxu0 0.0
    %6342 = vmatpush1.msra.mxu0 0.0
    %6343 = vmatprep.subr.mxu0 0.0
    %6344 = vmatpush1.msra.mxu0 0.0
    %6345 = vmatprep.subr.mxu0 0.0
    %6346 = vmatpush1.msra.mxu0 0.0
    %6347 = vmatprep.subr.mxu0 0.0
    %6348 = vmatpush1.msra.mxu0 0.0
    %6349 = vmatprep.subr.mxu0 0.0
    %6350 = vmatpush1.msra.mxu0 0.0
    %6351 = vmatprep.subr.mxu0 0.0
    %6352 = vmatpush1.msra.mxu0 0.0
    %6353 = vmatprep.subr.mxu0 0.0
    %6354 = vmatpush1.msra.mxu0 0.0
    %6355 = vmatprep.mubr.f32.mxu0 0.0
    %6356 = vmatmul.mubr.f32.gmra.mrb[0].mxu0 %v6218
    %v6357 = vpop.f32.mrb[0].mxu0
    %v6358 = vadd.f32 %v4585, %v6357
    %v6359 = vpop.f32.mrb[0].mxu0
    %6360 = vdwg.mxu0
    %6361 = vmatprep.subr.mxu0 %v4544
    %6362 = vmatpush1.msra.mxu0 %v4543
    %6363 = vmatprep.subr.mxu0 %v4547
    %6364 = vmatpush1.msra.mxu0 %v4546
    %6365 = vmatprep.subr.mxu0 %v4550
    %6366 = vmatpush1.msra.mxu0 %v4549
    %6367 = vmatprep.subr.mxu0 %v4553
    %6368 = vmatpush1.msra.mxu0 %v4552
    %6369 = vmatprep.subr.mxu0 0.0
    %6370 = vmatpush1.msra.mxu0 0.0
    %6371 = vmatprep.subr.mxu0 0.0
    %6372 = vmatpush1.msra.mxu0 0.0
    %6373 = vmatprep.subr.mxu0 0.0
    %6374 = vmatpush1.msra.mxu0 0.0
    %6375 = vmatprep.subr.mxu0 0.0
    %6376 = vmatpush1.msra.mxu0 0.0
    %6377 = vmatprep.subr.mxu0 0.0
    %6378 = vmatpush1.msra.mxu0 0.0
    %6379 = vmatprep.subr.mxu0 0.0
    %6380 = vmatpush1.msra.mxu0 0.0
    %6381 = vmatprep.subr.mxu0 0.0
    %6382 = vmatpush1.msra.mxu0 0.0
    %6383 = vmatprep.subr.mxu0 0.0
    %6384 = vmatpush1.msra.mxu0 0.0
    %6385 = vmatprep.subr.mxu0 0.0
    %6386 = vmatpush1.msra.mxu0 0.0
    %6387 = vmatprep.subr.mxu0 0.0
    %6388 = vmatpush1.msra.mxu0 0.0
    %6389 = vmatprep.subr.mxu0 0.0
    %6390 = vmatpush1.msra.mxu0 0.0
    %6391 = vmatprep.subr.mxu0 0.0
    %6392 = vmatpush1.msra.mxu0 0.0
    %6393 = vmatprep.subr.mxu0 0.0
    %6394 = vmatpush1.msra.mxu0 0.0
    %6395 = vmatprep.subr.mxu0 0.0
    %6396 = vmatpush1.msra.mxu0 0.0
    %6397 = vmatprep.subr.mxu0 0.0
    %6398 = vmatpush1.msra.mxu0 0.0
    %6399 = vmatprep.subr.mxu0 0.0
    %6400 = vmatpush1.msra.mxu0 0.0
    %6401 = vmatprep.subr.mxu0 0.0
    %6402 = vmatpush1.msra.mxu0 0.0
    %6403 = vmatprep.subr.mxu0 0.0
    %6404 = vmatpush1.msra.mxu0 0.0
    %6405 = vmatprep.subr.mxu0 0.0
    %6406 = vmatpush1.msra.mxu0 0.0
    %6407 = vmatprep.subr.mxu0 0.0
    %6408 = vmatpush1.msra.mxu0 0.0
    %6409 = vmatprep.subr.mxu0 0.0
    %6410 = vmatpush1.msra.mxu0 0.0
    %6411 = vmatprep.subr.mxu0 0.0
    %6412 = vmatpush1.msra.mxu0 0.0
    %6413 = vmatprep.subr.mxu0 0.0
    %6414 = vmatpush1.msra.mxu0 0.0
    %6415 = vmatprep.subr.mxu0 0.0
    %6416 = vmatpush1.msra.mxu0 0.0
    %6417 = vmatprep.subr.mxu0 0.0
    %6418 = vmatpush1.msra.mxu0 0.0
    %6419 = vmatprep.subr.mxu0 0.0
    %6420 = vmatpush1.msra.mxu0 0.0
    %6421 = vmatprep.subr.mxu0 0.0
    %6422 = vmatpush1.msra.mxu0 0.0
    %6423 = vmatprep.subr.mxu0 0.0
    %6424 = vmatpush1.msra.mxu0 0.0
    %6425 = vmatprep.mubr.f32.mxu0 0.0
    %6426 = vmatmul.mubr.f32.gmra.mrb[0].mxu0 %v6218
    %v6427 = vpop.f32.mrb[0].mxu0
    %v6428 = vadd.f32 %v4905, %v6427
    %v6429 = vpop.f32.mrb[0].mxu0
    %v6430 = vadd.f32 %v4909, %v6429
    %6431 = vdwg.mxu0
    %6432 = vmatprep.subr.mxu0 0.0
    %6433 = vmatpush1.msra.mxu0 %v4545
    %6434 = vmatprep.subr.mxu0 0.0
    %6435 = vmatpush1.msra.mxu0 %v4548
    %6436 = vmatprep.subr.mxu0 0.0
    %6437 = vmatpush1.msra.mxu0 %v4551
    %6438 = vmatprep.subr.mxu0 0.0
    %6439 = vmatpush1.msra.mxu0 %v4554
    %6440 = vmatprep.subr.mxu0 0.0
    %6441 = vmatpush1.msra.mxu0 0.0
    %6442 = vmatprep.subr.mxu0 0.0
    %6443 = vmatpush1.msra.mxu0 0.0
    %6444 = vmatprep.subr.mxu0 0.0
    %6445 = vmatpush1.msra.mxu0 0.0
    %6446 = vmatprep.subr.mxu0 0.0
    %6447 = vmatpush1.msra.mxu0 0.0
    %6448 = vmatprep.subr.mxu0 0.0
    %6449 = vmatpush1.msra.mxu0 0.0
    %6450 = vmatprep.subr.mxu0 0.0
    %6451 = vmatpush1.msra.mxu0 0.0
    %6452 = vmatprep.subr.mxu0 0.0
    %6453 = vmatpush1.msra.mxu0 0.0
    %6454 = vmatprep.subr.mxu0 0.0
    %6455 = vmatpush1.msra.mxu0 0.0
    %6456 = vmatprep.subr.mxu0 0.0
    %6457 = vmatpush1.msra.mxu0 0.0
    %6458 = vmatprep.subr.mxu0 0.0
    %6459 = vmatpush1.msra.mxu0 0.0
    %6460 = vmatprep.subr.mxu0 0.0
    %6461 = vmatpush1.msra.mxu0 0.0
    %6462 = vmatprep.subr.mxu0 0.0
    %6463 = vmatpush1.msra.mxu0 0.0
    %6464 = vmatprep.subr.mxu0 0.0
    %6465 = vmatpush1.msra.mxu0 0.0
    %6466 = vmatprep.subr.mxu0 0.0
    %6467 = vmatpush1.msra.mxu0 0.0
    %6468 = vmatprep.subr.mxu0 0.0
    %6469 = vmatpush1.msra.mxu0 0.0
    %6470 = vmatprep.subr.mxu0 0.0
    %6471 = vmatpush1.msra.mxu0 0.0
    %6472 = vmatprep.subr.mxu0 0.0
    %6473 = vmatpush1.msra.mxu0 0.0
    %6474 = vmatprep.subr.mxu0 0.0
    %6475 = vmatpush1.msra.mxu0 0.0
    %6476 = vmatprep.subr.mxu0 0.0
    %6477 = vmatpush1.msra.mxu0 0.0
    %6478 = vmatprep.subr.mxu0 0.0
    %6479 = vmatpush1.msra.mxu0 0.0
    %6480 = vmatprep.subr.mxu0 0.0
    %6481 = vmatpush1.msra.mxu0 0.0
    %6482 = vmatprep.subr.mxu0 0.0
    %6483 = vmatpush1.msra.mxu0 0.0
    %6484 = vmatprep.subr.mxu0 0.0
    %6485 = vmatpush1.msra.mxu0 0.0
    %6486 = vmatprep.subr.mxu0 0.0
    %6487 = vmatpush1.msra.mxu0 0.0
    %6488 = vmatprep.subr.mxu0 0.0
    %6489 = vmatpush1.msra.mxu0 0.0
    %6490 = vmatprep.subr.mxu0 0.0
    %6491 = vmatpush1.msra.mxu0 0.0
    %6492 = vmatprep.subr.mxu0 0.0
    %6493 = vmatpush1.msra.mxu0 0.0
    %6494 = vmatprep.subr.mxu0 0.0
    %6495 = vmatpush1.msra.mxu0 0.0
    %6496 = vmatprep.mubr.f32.mxu0 0.0
    %6497 = vmatmul.mubr.f32.gmra.mrb[0].mxu0 %v6218
    %v6498 = vpop.f32.mrb[0].mxu0
    %v6499 = vadd.f32 %v4913, %v6498
    %v6500 = vpop.f32.mrb[0].mxu0
    %6501 = vdwg.mxu0
    %v6503 = vsel %vm323, %v6216, 0
    %6505 = vmatprep.subr.mxu0 %v4556
    %6506 = vmatpush1.msra.mxu0 %v4555
    %6507 = vmatprep.subr.mxu0 %v4559
    %6508 = vmatpush1.msra.mxu0 %v4558
    %6509 = vmatprep.subr.mxu0 %v4562
    %6510 = vmatpush1.msra.mxu0 %v4561
    %6511 = vmatprep.subr.mxu0 %v4565
    %6512 = vmatpush1.msra.mxu0 %v4564
    %6513 = vmatprep.subr.mxu0 0.0
    %6514 = vmatpush1.msra.mxu0 0.0
    %6515 = vmatprep.subr.mxu0 0.0
    %6516 = vmatpush1.msra.mxu0 0.0
    %6517 = vmatprep.subr.mxu0 0.0
    %6518 = vmatpush1.msra.mxu0 0.0
    %6519 = vmatprep.subr.mxu0 0.0
    %6520 = vmatpush1.msra.mxu0 0.0
    %6521 = vmatprep.subr.mxu0 0.0
    %6522 = vmatpush1.msra.mxu0 0.0
    %6523 = vmatprep.subr.mxu0 0.0
    %6524 = vmatpush1.msra.mxu0 0.0
    %6525 = vmatprep.subr.mxu0 0.0
    %6526 = vmatpush1.msra.mxu0 0.0
    %6527 = vmatprep.subr.mxu0 0.0
    %6528 = vmatpush1.msra.mxu0 0.0
    %6529 = vmatprep.subr.mxu0 0.0
    %6530 = vmatpush1.msra.mxu0 0.0
    %6531 = vmatprep.subr.mxu0 0.0
    %6532 = vmatpush1.msra.mxu0 0.0
    %6533 = vmatprep.subr.mxu0 0.0
    %6534 = vmatpush1.msra.mxu0 0.0
    %6535 = vmatprep.subr.mxu0 0.0
    %6536 = vmatpush1.msra.mxu0 0.0
    %6537 = vmatprep.subr.mxu0 0.0
    %6538 = vmatpush1.msra.mxu0 0.0
    %6539 = vmatprep.subr.mxu0 0.0
    %6540 = vmatpush1.msra.mxu0 0.0
    %6541 = vmatprep.subr.mxu0 0.0
    %6542 = vmatpush1.msra.mxu0 0.0
    %6543 = vmatprep.subr.mxu0 0.0
    %6544 = vmatpush1.msra.mxu0 0.0
    %6545 = vmatprep.subr.mxu0 0.0
    %6546 = vmatpush1.msra.mxu0 0.0
    %6547 = vmatprep.subr.mxu0 0.0
    %6548 = vmatpush1.msra.mxu0 0.0
    %6549 = vmatprep.subr.mxu0 0.0
    %6550 = vmatpush1.msra.mxu0 0.0
    %6551 = vmatprep.subr.mxu0 0.0
    %6552 = vmatpush1.msra.mxu0 0.0
    %6553 = vmatprep.subr.mxu0 0.0
    %6554 = vmatpush1.msra.mxu0 0.0
    %6555 = vmatprep.subr.mxu0 0.0
    %6556 = vmatpush1.msra.mxu0 0.0
    %6557 = vmatprep.subr.mxu0 0.0
    %6558 = vmatpush1.msra.mxu0 0.0
    %6559 = vmatprep.subr.mxu0 0.0
    %6560 = vmatpush1.msra.mxu0 0.0
    %6561 = vmatprep.subr.mxu0 0.0
    %6562 = vmatpush1.msra.mxu0 0.0
    %6563 = vmatprep.subr.mxu0 0.0
    %6564 = vmatpush1.msra.mxu0 0.0
    %6565 = vmatprep.subr.mxu0 0.0
    %6566 = vmatpush1.msra.mxu0 0.0
    %6567 = vmatprep.subr.mxu0 0.0
    %6568 = vmatpush1.msra.mxu0 0.0
    %6569 = vmatprep.mubr.f32.mxu0 0.0
    %6570 = vmatmul.mubr.f32.gmra.mrb[0].mxu0 %v6503
    %v6571 = vpop.f32.mrb[0].mxu0
    %v6572 = vadd.f32 %v5062, %v6571
    %v6573 = vpop.f32.mrb[0].mxu0
    %v6574 = vadd.f32 %v5066, %v6573
    %6575 = vdwg.mxu0
    %6576 = vmatprep.subr.mxu0 0.0
    %6577 = vmatpush1.msra.mxu0 %v4557
    %6578 = vmatprep.subr.mxu0 0.0
    %6579 = vmatpush1.msra.mxu0 %v4560
    %6580 = vmatprep.subr.mxu0 0.0
    %6581 = vmatpush1.msra.mxu0 %v4563
    %6582 = vmatprep.subr.mxu0 0.0
    %6583 = vmatpush1.msra.mxu0 %v4566
    %6584 = vmatprep.subr.mxu0 0.0
    %6585 = vmatpush1.msra.mxu0 0.0
    %6586 = vmatprep.subr.mxu0 0.0
    %6587 = vmatpush1.msra.mxu0 0.0
    %6588 = vmatprep.subr.mxu0 0.0
    %6589 = vmatpush1.msra.mxu0 0.0
    %6590 = vmatprep.subr.mxu0 0.0
    %6591 = vmatpush1.msra.mxu0 0.0
    %6592 = vmatprep.subr.mxu0 0.0
    %6593 = vmatpush1.msra.mxu0 0.0
    %6594 = vmatprep.subr.mxu0 0.0
    %6595 = vmatpush1.msra.mxu0 0.0
    %6596 = vmatprep.subr.mxu0 0.0
    %6597 = vmatpush1.msra.mxu0 0.0
    %6598 = vmatprep.subr.mxu0 0.0
    %6599 = vmatpush1.msra.mxu0 0.0
    %6600 = vmatprep.subr.mxu0 0.0
    %6601 = vmatpush1.msra.mxu0 0.0
    %6602 = vmatprep.subr.mxu0 0.0
    %6603 = vmatpush1.msra.mxu0 0.0
    %6604 = vmatprep.subr.mxu0 0.0
    %6605 = vmatpush1.msra.mxu0 0.0
    %6606 = vmatprep.subr.mxu0 0.0
    %6607 = vmatpush1.msra.mxu0 0.0
    %6608 = vmatprep.subr.mxu0 0.0
    %6609 = vmatpush1.msra.mxu0 0.0
    %6610 = vmatprep.subr.mxu0 0.0
    %6611 = vmatpush1.msra.mxu0 0.0
    %6612 = vmatprep.subr.mxu0 0.0
    %6613 = vmatpush1.msra.mxu0 0.0
    %6614 = vmatprep.subr.mxu0 0.0
    %6615 = vmatpush1.msra.mxu0 0.0
    %6616 = vmatprep.subr.mxu0 0.0
    %6617 = vmatpush1.msra.mxu0 0.0
    %6618 = vmatprep.subr.mxu0 0.0
    %6619 = vmatpush1.msra.mxu0 0.0
    %6620 = vmatprep.subr.mxu0 0.0
    %6621 = vmatpush1.msra.mxu0 0.0
    %6622 = vmatprep.subr.mxu0 0.0
    %6623 = vmatpush1.msra.mxu0 0.0
    %6624 = vmatprep.subr.mxu0 0.0
    %6625 = vmatpush1.msra.mxu0 0.0
    %6626 = vmatprep.subr.mxu0 0.0
    %6627 = vmatpush1.msra.mxu0 0.0
    %6628 = vmatprep.subr.mxu0 0.0
    %6629 = vmatpush1.msra.mxu0 0.0
    %6630 = vmatprep.subr.mxu0 0.0
    %6631 = vmatpush1.msra.mxu0 0.0
    %6632 = vmatprep.subr.mxu0 0.0
    %6633 = vmatpush1.msra.mxu0 0.0
    %6634 = vmatprep.subr.mxu0 0.0
    %6635 = vmatpush1.msra.mxu0 0.0
    %6636 = vmatprep.subr.mxu0 0.0
    %6637 = vmatpush1.msra.mxu0 0.0
    %6638 = vmatprep.subr.mxu0 0.0
    %6639 = vmatpush1.msra.mxu0 0.0
    %6640 = vmatprep.mubr.f32.mxu0 0.0
    %6641 = vmatmul.mubr.f32.gmra.mrb[0].mxu0 %v6503
    %v6642 = vpop.f32.mrb[0].mxu0
    %v6643 = vadd.f32 %v5070, %v6642
    %v6644 = vpop.f32.mrb[0].mxu0
    %6645 = vdwg.mxu0
    %v6646 = vld [vmem:[%s4487] sm:$0x3f]
    %v6647 = vadd.f32 %v6646, %v6287
    %v6648 = vxor.u32 %v6647, 2147483648
    %v6649 = vmul.f32 %v6648, 1.442695
    %v6650 = vpow.pop %v6649
    %v6651 = vadd.f32 %v6650, 1.0
    %v6652 = vrcp.pop %v6651
    %v6653 = vmul.f32 1.0, %v6652
    %v6655 = vrot.slane %v6646, 2
    %v6657 = vadd.f32 %v6655, %v6289
    %v6658 = vxor.u32 %v6657, 2147483648
    %v6659 = vmul.f32 %v6658, 1.442695
    %v6660 = vpow.pop %v6659
    %v6661 = vadd.f32 %v6660, 1.0
    %v6662 = vrcp.pop %v6661
    %v6663 = vmul.f32 1.0, %v6662
    %v6664 = vmul.f32 %v6653, %v6358
    %v6665 = vrot.slane %v6646, 4
    %v6667 = vadd.f32 %v6665, %v6664
    %v6668 = vtanh.pop %v6667
    %v6669 = vsub.f32 1.0, %v6663
    %v6670 = vmul.f32 %v6669, %v6668
    %v6671 = vmul.f32 %v6663, %v6195
    %v6672 = vadd.f32 %v6670, %v6671
    %v6673 = vadd.f32 %v6428, %v6572
    %v6674 = vxor.u32 %v6673, 2147483648
    %v6675 = vmul.f32 %v6674, 1.442695
    %v6676 = vpow.pop %v6675
    %v6677 = vadd.f32 %v6676, 1.0
    %v6678 = vrcp.pop %v6677
    %v6679 = vmul.f32 1.0, %v6678
    %v6680 = vadd.f32 %v6430, %v6574
    %v6681 = vxor.u32 %v6680, 2147483648
    %v6682 = vmul.f32 %v6681, 1.442695
    %v6683 = vpow.pop %v6682
    %v6684 = vadd.f32 %v6683, 1.0
    %v6685 = vrcp.pop %v6684
    %v6686 = vmul.f32 1.0, %v6685
    %v6687 = vmul.f32 %v6679, %v6643
    %v6688 = vadd.f32 %v6499, %v6687
    %v6689 = vtanh.pop %v6688
    %v6690 = vsub.f32 1.0, %v6686
    %v6691 = vmul.f32 %v6690, %v6689
    %v6692 = vmul.f32 %v6686, %v6216
    %v6693 = vadd.f32 %v6691, %v6692
    %v6695 = vsel %vm323, %v6672, 0
    %6697 = vmatprep.subr.mxu0 %v4532
    %6698 = vmatpush1.msra.mxu0 %v4531
    %6699 = vmatprep.subr.mxu0 %v4535
    %6700 = vmatpush1.msra.mxu0 %v4534
    %6701 = vmatprep.subr.mxu0 %v4538
    %6702 = vmatpush1.msra.mxu0 %v4537
    %6703 = vmatprep.subr.mxu0 %v4541
    %6704 = vmatpush1.msra.mxu0 %v4540
    %6705 = vmatprep.subr.mxu0 0.0
    %6706 = vmatpush1.msra.mxu0 0.0
    %6707 = vmatprep.subr.mxu0 0.0
    %6708 = vmatpush1.msra.mxu0 0.0
    %6709 = vmatprep.subr.mxu0 0.0
    %6710 = vmatpush1.msra.mxu0 0.0
    %6711 = vmatprep.subr.mxu0 0.0
    %6712 = vmatpush1.msra.mxu0 0.0
    %6713 = vmatprep.subr.mxu0 0.0
    %6714 = vmatpush1.msra.mxu0 0.0
    %6715 = vmatprep.subr.mxu0 0.0
    %6716 = vmatpush1.msra.mxu0 0.0
    %6717 = vmatprep.subr.mxu0 0.0
    %6718 = vmatpush1.msra.mxu0 0.0
    %6719 = vmatprep.subr.mxu0 0.0
    %6720 = vmatpush1.msra.mxu0 0.0
    %6721 = vmatprep.subr.mxu0 0.0
    %6722 = vmatpush1.msra.mxu0 0.0
    %6723 = vmatprep.subr.mxu0 0.0
    %6724 = vmatpush1.msra.mxu0 0.0
    %6725 = vmatprep.subr.mxu0 0.0
    %6726 = vmatpush1.msra.mxu0 0.0
    %6727 = vmatprep.subr.mxu0 0.0
    %6728 = vmatpush1.msra.mxu0 0.0
    %6729 = vmatprep.subr.mxu0 0.0
    %6730 = vmatpush1.msra.mxu0 0.0
    %6731 = vmatprep.subr.mxu0 0.0
    %6732 = vmatpush1.msra.mxu0 0.0
    %6733 = vmatprep.subr.mxu0 0.0
    %6734 = vmatpush1.msra.mxu0 0.0
    %6735 = vmatprep.subr.mxu0 0.0
    %6736 = vmatpush1.msra.mxu0 0.0
    %6737 = vmatprep.subr.mxu0 0.0
    %6738 = vmatpush1.msra.mxu0 0.0
    %6739 = vmatprep.subr.mxu0 0.0
    %6740 = vmatpush1.msra.mxu0 0.0
    %6741 = vmatprep.subr.mxu0 0.0
    %6742 = vmatpush1.msra.mxu0 0.0
    %6743 = vmatprep.subr.mxu0 0.0
    %6744 = vmatpush1.msra.mxu0 0.0
    %6745 = vmatprep.subr.mxu0 0.0
    %6746 = vmatpush1.msra.mxu0 0.0
    %6747 = vmatprep.subr.mxu0 0.0
    %6748 = vmatpush1.msra.mxu0 0.0
    %6749 = vmatprep.subr.mxu0 0.0
    %6750 = vmatpush1.msra.mxu0 0.0
    %6751 = vmatprep.subr.mxu0 0.0
    %6752 = vmatpush1.msra.mxu0 0.0
    %6753 = vmatprep.subr.mxu0 0.0
    %6754 = vmatpush1.msra.mxu0 0.0
    %6755 = vmatprep.subr.mxu0 0.0
    %6756 = vmatpush1.msra.mxu0 0.0
    %6757 = vmatprep.subr.mxu0 0.0
    %6758 = vmatpush1.msra.mxu0 0.0
    %6759 = vmatprep.subr.mxu0 0.0
    %6760 = vmatpush1.msra.mxu0 0.0
    %6761 = vmatprep.mubr.f32.mxu0 0.0
    %6762 = vmatmul.mubr.f32.gmra.mrb[0].mxu0 %v6695
    %v6763 = vpop.f32.mrb[0].mxu0
    %v6764 = vadd.f32 %v4577, %v6763
    %v6765 = vpop.f32.mrb[0].mxu0
    %v6766 = vadd.f32 %v4581, %v6765
    %6767 = vdwg.mxu0
    %6768 = vmatprep.subr.mxu0 0.0
    %6769 = vmatpush1.msra.mxu0 %v4533
    %6770 = vmatprep.subr.mxu0 0.0
    %6771 = vmatpush1.msra.mxu0 %v4536
    %6772 = vmatprep.subr.mxu0 0.0
    %6773 = vmatpush1.msra.mxu0 %v4539
    %6774 = vmatprep.subr.mxu0 0.0
    %6775 = vmatpush1.msra.mxu0 %v4542
    %6776 = vmatprep.subr.mxu0 0.0
    %6777 = vmatpush1.msra.mxu0 0.0
    %6778 = vmatprep.subr.mxu0 0.0
    %6779 = vmatpush1.msra.mxu0 0.0
    %6780 = vmatprep.subr.mxu0 0.0
    %6781 = vmatpush1.msra.mxu0 0.0
    %6782 = vmatprep.subr.mxu0 0.0
    %6783 = vmatpush1.msra.mxu0 0.0
    %6784 = vmatprep.subr.mxu0 0.0
    %6785 = vmatpush1.msra.mxu0 0.0
    %6786 = vmatprep.subr.mxu0 0.0
    %6787 = vmatpush1.msra.mxu0 0.0
    %6788 = vmatprep.subr.mxu0 0.0
    %6789 = vmatpush1.msra.mxu0 0.0
    %6790 = vmatprep.subr.mxu0 0.0
    %6791 = vmatpush1.msra.mxu0 0.0
    %6792 = vmatprep.subr.mxu0 0.0
    %6793 = vmatpush1.msra.mxu0 0.0
    %6794 = vmatprep.subr.mxu0 0.0
    %6795 = vmatpush1.msra.mxu0 0.0
    %6796 = vmatprep.subr.mxu0 0.0
    %6797 = vmatpush1.msra.mxu0 0.0
    %6798 = vmatprep.subr.mxu0 0.0
    %6799 = vmatpush1.msra.mxu0 0.0
    %6800 = vmatprep.subr.mxu0 0.0
    %6801 = vmatpush1.msra.mxu0 0.0
    %6802 = vmatprep.subr.mxu0 0.0
    %6803 = vmatpush1.msra.mxu0 0.0
    %6804 = vmatprep.subr.mxu0 0.0
    %6805 = vmatpush1.msra.mxu0 0.0
    %6806 = vmatprep.subr.mxu0 0.0
    %6807 = vmatpush1.msra.mxu0 0.0
    %6808 = vmatprep.subr.mxu0 0.0
    %6809 = vmatpush1.msra.mxu0 0.0
    %6810 = vmatprep.subr.mxu0 0.0
    %6811 = vmatpush1.msra.mxu0 0.0
    %6812 = vmatprep.subr.mxu0 0.0
    %6813 = vmatpush1.msra.mxu0 0.0
    %6814 = vmatprep.subr.mxu0 0.0
    %6815 = vmatpush1.msra.mxu0 0.0
    %6816 = vmatprep.subr.mxu0 0.0
    %6817 = vmatpush1.msra.mxu0 0.0
    %6818 = vmatprep.subr.mxu0 0.0
    %6819 = vmatpush1.msra.mxu0 0.0
    %6820 = vmatprep.subr.mxu0 0.0
    %6821 = vmatpush1.msra.mxu0 0.0
    %6822 = vmatprep.subr.mxu0 0.0
    %6823 = vmatpush1.msra.mxu0 0.0
    %6824 = vmatprep.subr.mxu0 0.0
    %6825 = vmatpush1.msra.mxu0 0.0
    %6826 = vmatprep.subr.mxu0 0.0
    %6827 = vmatpush1.msra.mxu0 0.0
    %6828 = vmatprep.subr.mxu0 0.0
    %6829 = vmatpush1.msra.mxu0 0.0
    %6830 = vmatprep.subr.mxu0 0.0
    %6831 = vmatpush1.msra.mxu0 0.0
    %6832 = vmatprep.mubr.f32.mxu0 0.0
    %6833 = vmatmul.mubr.f32.gmra.mrb[0].mxu0 %v6695
    %v6834 = vpop.f32.mrb[0].mxu0
    %v6835 = vadd.f32 %v4585, %v6834
    %v6836 = vpop.f32.mrb[0].mxu0
    %6837 = vdwg.mxu0
    %6838 = vmatprep.subr.mxu0 %v4544
    %6839 = vmatpush1.msra.mxu0 %v4543
    %6840 = vmatprep.subr.mxu0 %v4547
    %6841 = vmatpush1.msra.mxu0 %v4546
    %6842 = vmatprep.subr.mxu0 %v4550
    %6843 = vmatpush1.msra.mxu0 %v4549
    %6844 = vmatprep.subr.mxu0 %v4553
    %6845 = vmatpush1.msra.mxu0 %v4552
    %6846 = vmatprep.subr.mxu0 0.0
    %6847 = vmatpush1.msra.mxu0 0.0
    %6848 = vmatprep.subr.mxu0 0.0
    %6849 = vmatpush1.msra.mxu0 0.0
    %6850 = vmatprep.subr.mxu0 0.0
    %6851 = vmatpush1.msra.mxu0 0.0
    %6852 = vmatprep.subr.mxu0 0.0
    %6853 = vmatpush1.msra.mxu0 0.0
    %6854 = vmatprep.subr.mxu0 0.0
    %6855 = vmatpush1.msra.mxu0 0.0
    %6856 = vmatprep.subr.mxu0 0.0
    %6857 = vmatpush1.msra.mxu0 0.0
    %6858 = vmatprep.subr.mxu0 0.0
    %6859 = vmatpush1.msra.mxu0 0.0
    %6860 = vmatprep.subr.mxu0 0.0
    %6861 = vmatpush1.msra.mxu0 0.0
    %6862 = vmatprep.subr.mxu0 0.0
    %6863 = vmatpush1.msra.mxu0 0.0
    %6864 = vmatprep.subr.mxu0 0.0
    %6865 = vmatpush1.msra.mxu0 0.0
    %6866 = vmatprep.subr.mxu0 0.0
    %6867 = vmatpush1.msra.mxu0 0.0
    %6868 = vmatprep.subr.mxu0 0.0
    %6869 = vmatpush1.msra.mxu0 0.0
    %6870 = vmatprep.subr.mxu0 0.0
    %6871 = vmatpush1.msra.mxu0 0.0
    %6872 = vmatprep.subr.mxu0 0.0
    %6873 = vmatpush1.msra.mxu0 0.0
    %6874 = vmatprep.subr.mxu0 0.0
    %6875 = vmatpush1.msra.mxu0 0.0
    %6876 = vmatprep.subr.mxu0 0.0
    %6877 = vmatpush1.msra.mxu0 0.0
    %6878 = vmatprep.subr.mxu0 0.0
    %6879 = vmatpush1.msra.mxu0 0.0
    %6880 = vmatprep.subr.mxu0 0.0
    %6881 = vmatpush1.msra.mxu0 0.0
    %6882 = vmatprep.subr.mxu0 0.0
    %6883 = vmatpush1.msra.mxu0 0.0
    %6884 = vmatprep.subr.mxu0 0.0
    %6885 = vmatpush1.msra.mxu0 0.0
    %6886 = vmatprep.subr.mxu0 0.0
    %6887 = vmatpush1.msra.mxu0 0.0
    %6888 = vmatprep.subr.mxu0 0.0
    %6889 = vmatpush1.msra.mxu0 0.0
    %6890 = vmatprep.subr.mxu0 0.0
    %6891 = vmatpush1.msra.mxu0 0.0
    %6892 = vmatprep.subr.mxu0 0.0
    %6893 = vmatpush1.msra.mxu0 0.0
    %6894 = vmatprep.subr.mxu0 0.0
    %6895 = vmatpush1.msra.mxu0 0.0
    %6896 = vmatprep.subr.mxu0 0.0
    %6897 = vmatpush1.msra.mxu0 0.0
    %6898 = vmatprep.subr.mxu0 0.0
    %6899 = vmatpush1.msra.mxu0 0.0
    %6900 = vmatprep.subr.mxu0 0.0
    %6901 = vmatpush1.msra.mxu0 0.0
    %6902 = vmatprep.mubr.f32.mxu0 0.0
    %6903 = vmatmul.mubr.f32.gmra.mrb[0].mxu0 %v6695
    %v6904 = vpop.f32.mrb[0].mxu0
    %v6905 = vadd.f32 %v4905, %v6904
    %v6906 = vpop.f32.mrb[0].mxu0
    %v6907 = vadd.f32 %v4909, %v6906
    %6908 = vdwg.mxu0
    %6909 = vmatprep.subr.mxu0 0.0
    %6910 = vmatpush1.msra.mxu0 %v4545
    %6911 = vmatprep.subr.mxu0 0.0
    %6912 = vmatpush1.msra.mxu0 %v4548
    %6913 = vmatprep.subr.mxu0 0.0
    %6914 = vmatpush1.msra.mxu0 %v4551
    %6915 = vmatprep.subr.mxu0 0.0
    %6916 = vmatpush1.msra.mxu0 %v4554
    %6917 = vmatprep.subr.mxu0 0.0
    %6918 = vmatpush1.msra.mxu0 0.0
    %6919 = vmatprep.subr.mxu0 0.0
    %6920 = vmatpush1.msra.mxu0 0.0
    %6921 = vmatprep.subr.mxu0 0.0
    %6922 = vmatpush1.msra.mxu0 0.0
    %6923 = vmatprep.subr.mxu0 0.0
    %6924 = vmatpush1.msra.mxu0 0.0
    %6925 = vmatprep.subr.mxu0 0.0
    %6926 = vmatpush1.msra.mxu0 0.0
    %6927 = vmatprep.subr.mxu0 0.0
    %6928 = vmatpush1.msra.mxu0 0.0
    %6929 = vmatprep.subr.mxu0 0.0
    %6930 = vmatpush1.msra.mxu0 0.0
    %6931 = vmatprep.subr.mxu0 0.0
    %6932 = vmatpush1.msra.mxu0 0.0
    %6933 = vmatprep.subr.mxu0 0.0
    %6934 = vmatpush1.msra.mxu0 0.0
    %6935 = vmatprep.subr.mxu0 0.0
    %6936 = vmatpush1.msra.mxu0 0.0
    %6937 = vmatprep.subr.mxu0 0.0
    %6938 = vmatpush1.msra.mxu0 0.0
    %6939 = vmatprep.subr.mxu0 0.0
    %6940 = vmatpush1.msra.mxu0 0.0
    %6941 = vmatprep.subr.mxu0 0.0
    %6942 = vmatpush1.msra.mxu0 0.0
    %6943 = vmatprep.subr.mxu0 0.0
    %6944 = vmatpush1.msra.mxu0 0.0
    %6945 = vmatprep.subr.mxu0 0.0
    %6946 = vmatpush1.msra.mxu0 0.0
    %6947 = vmatprep.subr.mxu0 0.0
    %6948 = vmatpush1.msra.mxu0 0.0
    %6949 = vmatprep.subr.mxu0 0.0
    %6950 = vmatpush1.msra.mxu0 0.0
    %6951 = vmatprep.subr.mxu0 0.0
    %6952 = vmatpush1.msra.mxu0 0.0
    %6953 = vmatprep.subr.mxu0 0.0
    %6954 = vmatpush1.msra.mxu0 0.0
    %6955 = vmatprep.subr.mxu0 0.0
    %6956 = vmatpush1.msra.mxu0 0.0
    %6957 = vmatprep.subr.mxu0 0.0
    %6958 = vmatpush1.msra.mxu0 0.0
    %6959 = vmatprep.subr.mxu0 0.0
    %6960 = vmatpush1.msra.mxu0 0.0
    %6961 = vmatprep.subr.mxu0 0.0
    %6962 = vmatpush1.msra.mxu0 0.0
    %6963 = vmatprep.subr.mxu0 0.0
    %6964 = vmatpush1.msra.mxu0 0.0
    %6965 = vmatprep.subr.mxu0 0.0
    %6966 = vmatpush1.msra.mxu0 0.0
    %6967 = vmatprep.subr.mxu0 0.0
    %6968 = vmatpush1.msra.mxu0 0.0
    %6969 = vmatprep.subr.mxu0 0.0
    %6970 = vmatpush1.msra.mxu0 0.0
    %6971 = vmatprep.subr.mxu0 0.0
    %6972 = vmatpush1.msra.mxu0 0.0
    %6973 = vmatprep.mubr.f32.mxu0 0.0
    %6974 = vmatmul.mubr.f32.gmra.mrb[0].mxu0 %v6695
    %v6975 = vpop.f32.mrb[0].mxu0
    %v6976 = vadd.f32 %v4913, %v6975
    %v6977 = vpop.f32.mrb[0].mxu0
    %6978 = vdwg.mxu0
    %v6980 = vsel %vm323, %v6693, 0
    %6982 = vmatprep.subr.mxu0 %v4556
    %6983 = vmatpush1.msra.mxu0 %v4555
    %6984 = vmatprep.subr.mxu0 %v4559
    %6985 = vmatpush1.msra.mxu0 %v4558
    %6986 = vmatprep.subr.mxu0 %v4562
    %6987 = vmatpush1.msra.mxu0 %v4561
    %6988 = vmatprep.subr.mxu0 %v4565
    %6989 = vmatpush1.msra.mxu0 %v4564
    %6990 = vmatprep.subr.mxu0 0.0
    %6991 = vmatpush1.msra.mxu0 0.0
    %6992 = vmatprep.subr.mxu0 0.0
    %6993 = vmatpush1.msra.mxu0 0.0
    %6994 = vmatprep.subr.mxu0 0.0
    %6995 = vmatpush1.msra.mxu0 0.0
    %6996 = vmatprep.subr.mxu0 0.0
    %6997 = vmatpush1.msra.mxu0 0.0
    %6998 = vmatprep.subr.mxu0 0.0
    %6999 = vmatpush1.msra.mxu0 0.0
    %7000 = vmatprep.subr.mxu0 0.0
    %7001 = vmatpush1.msra.mxu0 0.0
    %7002 = vmatprep.subr.mxu0 0.0
    %7003 = vmatpush1.msra.mxu0 0.0
    %7004 = vmatprep.subr.mxu0 0.0
    %7005 = vmatpush1.msra.mxu0 0.0
    %7006 = vmatprep.subr.mxu0 0.0
    %7007 = vmatpush1.msra.mxu0 0.0
    %7008 = vmatprep.subr.mxu0 0.0
    %7009 = vmatpush1.msra.mxu0 0.0
    %7010 = vmatprep.subr.mxu0 0.0
    %7011 = vmatpush1.msra.mxu0 0.0
    %7012 = vmatprep.subr.mxu0 0.0
    %7013 = vmatpush1.msra.mxu0 0.0
    %7014 = vmatprep.subr.mxu0 0.0
    %7015 = vmatpush1.msra.mxu0 0.0
    %7016 = vmatprep.subr.mxu0 0.0
    %7017 = vmatpush1.msra.mxu0 0.0
    %7018 = vmatprep.subr.mxu0 0.0
    %7019 = vmatpush1.msra.mxu0 0.0
    %7020 = vmatprep.subr.mxu0 0.0
    %7021 = vmatpush1.msra.mxu0 0.0
    %7022 = vmatprep.subr.mxu0 0.0
    %7023 = vmatpush1.msra.mxu0 0.0
    %7024 = vmatprep.subr.mxu0 0.0
    %7025 = vmatpush1.msra.mxu0 0.0
    %7026 = vmatprep.subr.mxu0 0.0
    %7027 = vmatpush1.msra.mxu0 0.0
    %7028 = vmatprep.subr.mxu0 0.0
    %7029 = vmatpush1.msra.mxu0 0.0
    %7030 = vmatprep.subr.mxu0 0.0
    %7031 = vmatpush1.msra.mxu0 0.0
    %7032 = vmatprep.subr.mxu0 0.0
    %7033 = vmatpush1.msra.mxu0 0.0
    %7034 = vmatprep.subr.mxu0 0.0
    %7035 = vmatpush1.msra.mxu0 0.0
    %7036 = vmatprep.subr.mxu0 0.0
    %7037 = vmatpush1.msra.mxu0 0.0
    %7038 = vmatprep.subr.mxu0 0.0
    %7039 = vmatpush1.msra.mxu0 0.0
    %7040 = vmatprep.subr.mxu0 0.0
    %7041 = vmatpush1.msra.mxu0 0.0
    %7042 = vmatprep.subr.mxu0 0.0
    %7043 = vmatpush1.msra.mxu0 0.0
    %7044 = vmatprep.subr.mxu0 0.0
    %7045 = vmatpush1.msra.mxu0 0.0
    %7046 = vmatprep.mubr.f32.mxu0 0.0
    %7047 = vmatmul.mubr.f32.gmra.mrb[0].mxu0 %v6980
    %v7048 = vpop.f32.mrb[0].mxu0
    %v7049 = vadd.f32 %v5062, %v7048
    %v7050 = vpop.f32.mrb[0].mxu0
    %v7051 = vadd.f32 %v5066, %v7050
    %7052 = vdwg.mxu0
    %7053 = vmatprep.subr.mxu0 0.0
    %7054 = vmatpush1.msra.mxu0 %v4557
    %7055 = vmatprep.subr.mxu0 0.0
    %7056 = vmatpush1.msra.mxu0 %v4560
    %7057 = vmatprep.subr.mxu0 0.0
    %7058 = vmatpush1.msra.mxu0 %v4563
    %7059 = vmatprep.subr.mxu0 0.0
    %7060 = vmatpush1.msra.mxu0 %v4566
    %7061 = vmatprep.subr.mxu0 0.0
    %7062 = vmatpush1.msra.mxu0 0.0
    %7063 = vmatprep.subr.mxu0 0.0
    %7064 = vmatpush1.msra.mxu0 0.0
    %7065 = vmatprep.subr.mxu0 0.0
    %7066 = vmatpush1.msra.mxu0 0.0
    %7067 = vmatprep.subr.mxu0 0.0
    %7068 = vmatpush1.msra.mxu0 0.0
    %7069 = vmatprep.subr.mxu0 0.0
    %7070 = vmatpush1.msra.mxu0 0.0
    %7071 = vmatprep.subr.mxu0 0.0
    %7072 = vmatpush1.msra.mxu0 0.0
    %7073 = vmatprep.subr.mxu0 0.0
    %7074 = vmatpush1.msra.mxu0 0.0
    %7075 = vmatprep.subr.mxu0 0.0
    %7076 = vmatpush1.msra.mxu0 0.0
    %7077 = vmatprep.subr.mxu0 0.0
    %7078 = vmatpush1.msra.mxu0 0.0
    %7079 = vmatprep.subr.mxu0 0.0
    %7080 = vmatpush1.msra.mxu0 0.0
    %7081 = vmatprep.subr.mxu0 0.0
    %7082 = vmatpush1.msra.mxu0 0.0
    %7083 = vmatprep.subr.mxu0 0.0
    %7084 = vmatpush1.msra.mxu0 0.0
    %7085 = vmatprep.subr.mxu0 0.0
    %7086 = vmatpush1.msra.mxu0 0.0
    %7087 = vmatprep.subr.mxu0 0.0
    %7088 = vmatpush1.msra.mxu0 0.0
    %7089 = vmatprep.subr.mxu0 0.0
    %7090 = vmatpush1.msra.mxu0 0.0
    %7091 = vmatprep.subr.mxu0 0.0
    %7092 = vmatpush1.msra.mxu0 0.0
    %7093 = vmatprep.subr.mxu0 0.0
    %7094 = vmatpush1.msra.mxu0 0.0
    %7095 = vmatprep.subr.mxu0 0.0
    %7096 = vmatpush1.msra.mxu0 0.0
    %7097 = vmatprep.subr.mxu0 0.0
    %7098 = vmatpush1.msra.mxu0 0.0
    %7099 = vmatprep.subr.mxu0 0.0
    %7100 = vmatpush1.msra.mxu0 0.0
    %7101 = vmatprep.subr.mxu0 0.0
    %7102 = vmatpush1.msra.mxu0 0.0
    %7103 = vmatprep.subr.mxu0 0.0
    %7104 = vmatpush1.msra.mxu0 0.0
    %7105 = vmatprep.subr.mxu0 0.0
    %7106 = vmatpush1.msra.mxu0 0.0
    %7107 = vmatprep.subr.mxu0 0.0
    %7108 = vmatpush1.msra.mxu0 0.0
    %7109 = vmatprep.subr.mxu0 0.0
    %7110 = vmatpush1.msra.mxu0 0.0
    %7111 = vmatprep.subr.mxu0 0.0
    %7112 = vmatpush1.msra.mxu0 0.0
    %7113 = vmatprep.subr.mxu0 0.0
    %7114 = vmatpush1.msra.mxu0 0.0
    %7115 = vmatprep.subr.mxu0 0.0
    %7116 = vmatpush1.msra.mxu0 0.0
    %7117 = vmatprep.mubr.f32.mxu0 0.0
    %7118 = vmatmul.mubr.f32.gmra.mrb[0].mxu0 %v6980
    %v7119 = vpop.f32.mrb[0].mxu0
    %v7120 = vadd.f32 %v5070, %v7119
    %v7121 = vpop.f32.mrb[0].mxu0
    %7122 = vdwg.mxu0
    %v7123 = vld [vmem:[%s4515] sm:$0x3f]
    %v7124 = vadd.f32 %v7123, %v6764
    %v7125 = vxor.u32 %v7124, 2147483648
    %v7126 = vmul.f32 %v7125, 1.442695
    %v7127 = vpow.pop %v7126
    %v7128 = vadd.f32 %v7127, 1.0
    %v7129 = vrcp.pop %v7128
    %v7130 = vmul.f32 1.0, %v7129
    %v7132 = vrot.slane %v7123, 2
    %v7134 = vadd.f32 %v7132, %v6766
    %v7135 = vxor.u32 %v7134, 2147483648
    %v7136 = vmul.f32 %v7135, 1.442695
    %v7137 = vpow.pop %v7136
    %v7138 = vadd.f32 %v7137, 1.0
    %v7139 = vrcp.pop %v7138
    %v7140 = vmul.f32 1.0, %v7139
    %v7141 = vmul.f32 %v7130, %v6835
    %v7142 = vrot.slane %v7123, 4
    %v7144 = vadd.f32 %v7142, %v7141
    %v7145 = vtanh.pop %v7144
    %v7146 = vsub.f32 1.0, %v7140
    %v7147 = vmul.f32 %v7146, %v7145
    %v7148 = vmul.f32 %v7140, %v6672
    %v7149 = vadd.f32 %v7147, %v7148
    %v7150 = vadd.f32 %v6905, %v7049
    %v7151 = vxor.u32 %v7150, 2147483648
    %v7152 = vmul.f32 %v7151, 1.442695
    %v7153 = vpow.pop %v7152
    %v7154 = vadd.f32 %v7153, 1.0
    %v7155 = vrcp.pop %v7154
    %v7156 = vmul.f32 1.0, %v7155
    %v7157 = vadd.f32 %v6907, %v7051
    %v7158 = vxor.u32 %v7157, 2147483648
    %v7159 = vmul.f32 %v7158, 1.442695
    %v7160 = vpow.pop %v7159
    %v7161 = vadd.f32 %v7160, 1.0
    %v7162 = vrcp.pop %v7161
    %v7163 = vmul.f32 1.0, %v7162
    %v7164 = vmul.f32 %v7156, %v7120
    %v7165 = vadd.f32 %v6976, %v7164
    %v7166 = vtanh.pop %v7165
    %v7167 = vsub.f32 1.0, %v7163
    %v7168 = vmul.f32 %v7167, %v7166
    %v7169 = vmul.f32 %v7163, %v6693
    %v7170 = vadd.f32 %v7168, %v7169
    %v7172 = vsel %vm323, %v7149, 0
    %7174 = vmatprep.subr.mxu0 %v4544
    %7175 = vmatpush1.msra.mxu0 %v4543
    %7176 = vmatprep.subr.mxu0 %v4547
    %7177 = vmatpush1.msra.mxu0 %v4546
    %7178 = vmatprep.subr.mxu0 %v4550
    %7179 = vmatpush1.msra.mxu0 %v4549
    %7180 = vmatprep.subr.mxu0 %v4553
    %7181 = vmatpush1.msra.mxu0 %v4552
    %7182 = vmatprep.subr.mxu0 0.0
    %7183 = vmatpush1.msra.mxu0 0.0
    %7184 = vmatprep.subr.mxu0 0.0
    %7185 = vmatpush1.msra.mxu0 0.0
    %7186 = vmatprep.subr.mxu0 0.0
    %7187 = vmatpush1.msra.mxu0 0.0
    %7188 = vmatprep.subr.mxu0 0.0
    %7189 = vmatpush1.msra.mxu0 0.0
    %7190 = vmatprep.subr.mxu0 0.0
    %7191 = vmatpush1.msra.mxu0 0.0
    %7192 = vmatprep.subr.mxu0 0.0
    %7193 = vmatpush1.msra.mxu0 0.0
    %7194 = vmatprep.subr.mxu0 0.0
    %7195 = vmatpush1.msra.mxu0 0.0
    %7196 = vmatprep.subr.mxu0 0.0
    %7197 = vmatpush1.msra.mxu0 0.0
    %7198 = vmatprep.subr.mxu0 0.0
    %7199 = vmatpush1.msra.mxu0 0.0
    %7200 = vmatprep.subr.mxu0 0.0
    %7201 = vmatpush1.msra.mxu0 0.0
    %7202 = vmatprep.subr.mxu0 0.0
    %7203 = vmatpush1.msra.mxu0 0.0
    %7204 = vmatprep.subr.mxu0 0.0
    %7205 = vmatpush1.msra.mxu0 0.0
    %7206 = vmatprep.subr.mxu0 0.0
    %7207 = vmatpush1.msra.mxu0 0.0
    %7208 = vmatprep.subr.mxu0 0.0
    %7209 = vmatpush1.msra.mxu0 0.0
    %7210 = vmatprep.subr.mxu0 0.0
    %7211 = vmatpush1.msra.mxu0 0.0
    %7212 = vmatprep.subr.mxu0 0.0
    %7213 = vmatpush1.msra.mxu0 0.0
    %7214 = vmatprep.subr.mxu0 0.0
    %7215 = vmatpush1.msra.mxu0 0.0
    %7216 = vmatprep.subr.mxu0 0.0
    %7217 = vmatpush1.msra.mxu0 0.0
    %7218 = vmatprep.subr.mxu0 0.0
    %7219 = vmatpush1.msra.mxu0 0.0
    %7220 = vmatprep.subr.mxu0 0.0
    %7221 = vmatpush1.msra.mxu0 0.0
    %7222 = vmatprep.subr.mxu0 0.0
    %7223 = vmatpush1.msra.mxu0 0.0
    %7224 = vmatprep.subr.mxu0 0.0
    %7225 = vmatpush1.msra.mxu0 0.0
    %7226 = vmatprep.subr.mxu0 0.0
    %7227 = vmatpush1.msra.mxu0 0.0
    %7228 = vmatprep.subr.mxu0 0.0
    %7229 = vmatpush1.msra.mxu0 0.0
    %7230 = vmatprep.subr.mxu0 0.0
    %7231 = vmatpush1.msra.mxu0 0.0
    %7232 = vmatprep.subr.mxu0 0.0
    %7233 = vmatpush1.msra.mxu0 0.0
    %7234 = vmatprep.subr.mxu0 0.0
    %7235 = vmatpush1.msra.mxu0 0.0
    %7236 = vmatprep.subr.mxu0 0.0
    %7237 = vmatpush1.msra.mxu0 0.0
    %7238 = vmatprep.mubr.f32.mxu0 0.0
    %7239 = vmatmul.mubr.f32.gmra.mrb[0].mxu0 %v7172
    %v7240 = vpop.f32.mrb[0].mxu0
    %v7241 = vadd.f32 %v4905, %v7240
    %v7242 = vpop.f32.mrb[0].mxu0
    %v7243 = vadd.f32 %v4909, %v7242
    %7244 = vdwg.mxu0
    %7245 = vmatprep.subr.mxu0 0.0
    %7246 = vmatpush1.msra.mxu0 %v4545
    %7247 = vmatprep.subr.mxu0 0.0
    %7248 = vmatpush1.msra.mxu0 %v4548
    %7249 = vmatprep.subr.mxu0 0.0
    %7250 = vmatpush1.msra.mxu0 %v4551
    %7251 = vmatprep.subr.mxu0 0.0
    %7252 = vmatpush1.msra.mxu0 %v4554
    %7253 = vmatprep.subr.mxu0 0.0
    %7254 = vmatpush1.msra.mxu0 0.0
    %7255 = vmatprep.subr.mxu0 0.0
    %7256 = vmatpush1.msra.mxu0 0.0
    %7257 = vmatprep.subr.mxu0 0.0
    %7258 = vmatpush1.msra.mxu0 0.0
    %7259 = vmatprep.subr.mxu0 0.0
    %7260 = vmatpush1.msra.mxu0 0.0
    %7261 = vmatprep.subr.mxu0 0.0
    %7262 = vmatpush1.msra.mxu0 0.0
    %7263 = vmatprep.subr.mxu0 0.0
    %7264 = vmatpush1.msra.mxu0 0.0
    %7265 = vmatprep.subr.mxu0 0.0
    %7266 = vmatpush1.msra.mxu0 0.0
    %7267 = vmatprep.subr.mxu0 0.0
    %7268 = vmatpush1.msra.mxu0 0.0
    %7269 = vmatprep.subr.mxu0 0.0
    %7270 = vmatpush1.msra.mxu0 0.0
    %7271 = vmatprep.subr.mxu0 0.0
    %7272 = vmatpush1.msra.mxu0 0.0
    %7273 = vmatprep.subr.mxu0 0.0
    %7274 = vmatpush1.msra.mxu0 0.0
    %7275 = vmatprep.subr.mxu0 0.0
    %7276 = vmatpush1.msra.mxu0 0.0
    %7277 = vmatprep.subr.mxu0 0.0
    %7278 = vmatpush1.msra.mxu0 0.0
    %7279 = vmatprep.subr.mxu0 0.0
    %7280 = vmatpush1.msra.mxu0 0.0
    %7281 = vmatprep.subr.mxu0 0.0
    %7282 = vmatpush1.msra.mxu0 0.0
    %7283 = vmatprep.subr.mxu0 0.0
    %7284 = vmatpush1.msra.mxu0 0.0
    %7285 = vmatprep.subr.mxu0 0.0
    %7286 = vmatpush1.msra.mxu0 0.0
    %7287 = vmatprep.subr.mxu0 0.0
    %7288 = vmatpush1.msra.mxu0 0.0
    %7289 = vmatprep.subr.mxu0 0.0
    %7290 = vmatpush1.msra.mxu0 0.0
    %7291 = vmatprep.subr.mxu0 0.0
    %7292 = vmatpush1.msra.mxu0 0.0
    %7293 = vmatprep.subr.mxu0 0.0
    %7294 = vmatpush1.msra.mxu0 0.0
    %7295 = vmatprep.subr.mxu0 0.0
    %7296 = vmatpush1.msra.mxu0 0.0
    %7297 = vmatprep.subr.mxu0 0.0
    %7298 = vmatpush1.msra.mxu0 0.0
    %7299 = vmatprep.subr.mxu0 0.0
    %7300 = vmatpush1.msra.mxu0 0.0
    %7301 = vmatprep.subr.mxu0 0.0
    %7302 = vmatpush1.msra.mxu0 0.0
    %7303 = vmatprep.subr.mxu0 0.0
    %7304 = vmatpush1.msra.mxu0 0.0
    %7305 = vmatprep.subr.mxu0 0.0
    %7306 = vmatpush1.msra.mxu0 0.0
    %7307 = vmatprep.subr.mxu0 0.0
    %7308 = vmatpush1.msra.mxu0 0.0
    %7309 = vmatprep.mubr.f32.mxu0 0.0
    %7310 = vmatmul.mubr.f32.gmra.mrb[0].mxu0 %v7172
    %v7311 = vpop.f32.mrb[0].mxu0
    %v7312 = vadd.f32 %v4913, %v7311
    %v7313 = vpop.f32.mrb[0].mxu0
    %7314 = vdwg.mxu0
    %v7316 = vsel %vm323, %v7170, 0
    %7318 = vmatprep.subr.mxu0 %v4556
    %7319 = vmatpush1.msra.mxu0 %v4555
    %7320 = vmatprep.subr.mxu0 %v4559
    %7321 = vmatpush1.msra.mxu0 %v4558
    %7322 = vmatprep.subr.mxu0 %v4562
    %7323 = vmatpush1.msra.mxu0 %v4561
    %7324 = vmatprep.subr.mxu0 %v4565
    %7325 = vmatpush1.msra.mxu0 %v4564
    %7326 = vmatprep.subr.mxu0 0.0
    %7327 = vmatpush1.msra.mxu0 0.0
    %7328 = vmatprep.subr.mxu0 0.0
    %7329 = vmatpush1.msra.mxu0 0.0
    %7330 = vmatprep.subr.mxu0 0.0
    %7331 = vmatpush1.msra.mxu0 0.0
    %7332 = vmatprep.subr.mxu0 0.0
    %7333 = vmatpush1.msra.mxu0 0.0
    %7334 = vmatprep.subr.mxu0 0.0
    %7335 = vmatpush1.msra.mxu0 0.0
    %7336 = vmatprep.subr.mxu0 0.0
    %7337 = vmatpush1.msra.mxu0 0.0
    %7338 = vmatprep.subr.mxu0 0.0
    %7339 = vmatpush1.msra.mxu0 0.0
    %7340 = vmatprep.subr.mxu0 0.0
    %7341 = vmatpush1.msra.mxu0 0.0
    %7342 = vmatprep.subr.mxu0 0.0
    %7343 = vmatpush1.msra.mxu0 0.0
    %7344 = vmatprep.subr.mxu0 0.0
    %7345 = vmatpush1.msra.mxu0 0.0
    %7346 = vmatprep.subr.mxu0 0.0
    %7347 = vmatpush1.msra.mxu0 0.0
    %7348 = vmatprep.subr.mxu0 0.0
    %7349 = vmatpush1.msra.mxu0 0.0
    %7350 = vmatprep.subr.mxu0 0.0
    %7351 = vmatpush1.msra.mxu0 0.0
    %7352 = vmatprep.subr.mxu0 0.0
    %7353 = vmatpush1.msra.mxu0 0.0
    %7354 = vmatprep.subr.mxu0 0.0
    %7355 = vmatpush1.msra.mxu0 0.0
    %7356 = vmatprep.subr.mxu0 0.0
    %7357 = vmatpush1.msra.mxu0 0.0
    %7358 = vmatprep.subr.mxu0 0.0
    %7359 = vmatpush1.msra.mxu0 0.0
    %7360 = vmatprep.subr.mxu0 0.0
    %7361 = vmatpush1.msra.mxu0 0.0
    %7362 = vmatprep.subr.mxu0 0.0
    %7363 = vmatpush1.msra.mxu0 0.0
    %7364 = vmatprep.subr.mxu0 0.0
    %7365 = vmatpush1.msra.mxu0 0.0
    %7366 = vmatprep.subr.mxu0 0.0
    %7367 = vmatpush1.msra.mxu0 0.0
    %7368 = vmatprep.subr.mxu0 0.0
    %7369 = vmatpush1.msra.mxu0 0.0
    %7370 = vmatprep.subr.mxu0 0.0
    %7371 = vmatpush1.msra.mxu0 0.0
    %7372 = vmatprep.subr.mxu0 0.0
    %7373 = vmatpush1.msra.mxu0 0.0
    %7374 = vmatprep.subr.mxu0 0.0
    %7375 = vmatpush1.msra.mxu0 0.0
    %7376 = vmatprep.subr.mxu0 0.0
    %7377 = vmatpush1.msra.mxu0 0.0
    %7378 = vmatprep.subr.mxu0 0.0
    %7379 = vmatpush1.msra.mxu0 0.0
    %7380 = vmatprep.subr.mxu0 0.0
    %7381 = vmatpush1.msra.mxu0 0.0
    %7382 = vmatprep.mubr.f32.mxu0 0.0
    %7383 = vmatmul.mubr.f32.gmra.mrb[0].mxu0 %v7316
    %v7384 = vpop.f32.mrb[0].mxu0
    %v7385 = vadd.f32 %v5062, %v7384
    %v7386 = vpop.f32.mrb[0].mxu0
    %v7387 = vadd.f32 %v5066, %v7386
    %7388 = vdwg.mxu0
    %7389 = vmatprep.subr.mxu0 0.0
    %7390 = vmatpush1.msra.mxu0 %v4557
    %7391 = vmatprep.subr.mxu0 0.0
    %7392 = vmatpush1.msra.mxu0 %v4560
    %7393 = vmatprep.subr.mxu0 0.0
    %7394 = vmatpush1.msra.mxu0 %v4563
    %7395 = vmatprep.subr.mxu0 0.0
    %7396 = vmatpush1.msra.mxu0 %v4566
    %7397 = vmatprep.subr.mxu0 0.0
    %7398 = vmatpush1.msra.mxu0 0.0
    %7399 = vmatprep.subr.mxu0 0.0
    %7400 = vmatpush1.msra.mxu0 0.0
    %7401 = vmatprep.subr.mxu0 0.0
    %7402 = vmatpush1.msra.mxu0 0.0
    %7403 = vmatprep.subr.mxu0 0.0
    %7404 = vmatpush1.msra.mxu0 0.0
    %7405 = vmatprep.subr.mxu0 0.0
    %7406 = vmatpush1.msra.mxu0 0.0
    %7407 = vmatprep.subr.mxu0 0.0
    %7408 = vmatpush1.msra.mxu0 0.0
    %7409 = vmatprep.subr.mxu0 0.0
    %7410 = vmatpush1.msra.mxu0 0.0
    %7411 = vmatprep.subr.mxu0 0.0
    %7412 = vmatpush1.msra.mxu0 0.0
    %7413 = vmatprep.subr.mxu0 0.0
    %7414 = vmatpush1.msra.mxu0 0.0
    %7415 = vmatprep.subr.mxu0 0.0
    %7416 = vmatpush1.msra.mxu0 0.0
    %7417 = vmatprep.subr.mxu0 0.0
    %7418 = vmatpush1.msra.mxu0 0.0
    %7419 = vmatprep.subr.mxu0 0.0
    %7420 = vmatpush1.msra.mxu0 0.0
    %7421 = vmatprep.subr.mxu0 0.0
    %7422 = vmatpush1.msra.mxu0 0.0
    %7423 = vmatprep.subr.mxu0 0.0
    %7424 = vmatpush1.msra.mxu0 0.0
    %7425 = vmatprep.subr.mxu0 0.0
    %7426 = vmatpush1.msra.mxu0 0.0
    %7427 = vmatprep.subr.mxu0 0.0
    %7428 = vmatpush1.msra.mxu0 0.0
    %7429 = vmatprep.subr.mxu0 0.0
    %7430 = vmatpush1.msra.mxu0 0.0
    %7431 = vmatprep.subr.mxu0 0.0
    %7432 = vmatpush1.msra.mxu0 0.0
    %7433 = vmatprep.subr.mxu0 0.0
    %7434 = vmatpush1.msra.mxu0 0.0
    %7435 = vmatprep.subr.mxu0 0.0
    %7436 = vmatpush1.msra.mxu0 0.0
    %7437 = vmatprep.subr.mxu0 0.0
    %7438 = vmatpush1.msra.mxu0 0.0
    %7439 = vmatprep.subr.mxu0 0.0
    %7440 = vmatpush1.msra.mxu0 0.0
    %7441 = vmatprep.subr.mxu0 0.0
    %7442 = vmatpush1.msra.mxu0 0.0
    %7443 = vmatprep.subr.mxu0 0.0
    %7444 = vmatpush1.msra.mxu0 0.0
    %7445 = vmatprep.subr.mxu0 0.0
    %7446 = vmatpush1.msra.mxu0 0.0
    %7447 = vmatprep.subr.mxu0 0.0
    %7448 = vmatpush1.msra.mxu0 0.0
    %7449 = vmatprep.subr.mxu0 0.0
    %7450 = vmatpush1.msra.mxu0 0.0
    %7451 = vmatprep.subr.mxu0 0.0
    %7452 = vmatpush1.msra.mxu0 0.0
    %7453 = vmatprep.mubr.f32.mxu0 0.0
    %7454 = vmatmul.mubr.f32.gmra.mrb[0].mxu0 %v7316
    %v7455 = vpop.f32.mrb[0].mxu0
    %v7456 = vadd.f32 %v5070, %v7455
    %v7457 = vpop.f32.mrb[0].mxu0
    %7458 = vdwg.mxu0
    %v7459 = vadd.f32 %v7241, %v7385
    %v7460 = vxor.u32 %v7459, 2147483648
    %v7461 = vmul.f32 %v7460, 1.442695
    %v7462 = vpow.pop %v7461
    %v7463 = vadd.f32 %v7462, 1.0
    %v7464 = vrcp.pop %v7463
    %v7465 = vmul.f32 1.0, %v7464
    %v7466 = vadd.f32 %v7243, %v7387
    %v7467 = vxor.u32 %v7466, 2147483648
    %v7468 = vmul.f32 %v7467, 1.442695
    %v7469 = vpow.pop %v7468
    %v7470 = vadd.f32 %v7469, 1.0
    %v7471 = vrcp.pop %v7470
    %v7472 = vmul.f32 1.0, %v7471
    %v7473 = vmul.f32 %v7465, %v7456
    %v7474 = vadd.f32 %v7312, %v7473
    %v7475 = vtanh.pop %v7474
    %v7476 = vsub.f32 1.0, %v7472
    %v7477 = vmul.f32 %v7476, %v7475
    %v7478 = vmul.f32 %v7472, %v7170
    %v7479 = vadd.f32 %v7477, %v7478
    %v7480 = vld [vmem:[#allocation10 + $0x390] sm:$0xff]
    %v7481 = vld [vmem:[#allocation10 + $0x3a8] sm:$0xff]
    %v7482 = vld [vmem:[#allocation10 + $0x3c0] sm:$0xff]
    %v7483 = vld [vmem:[#allocation10 + $0x3d8] sm:$0xff]
    %s7484 = scalar_lea.vmem [#allocation11], 6
    %v7485 = vld [vmem:[%s7484] ss:$8 sm:$0x7]
    %v7486 = vrot.slane %v5739, 7
    %v7488 = vrot.slane %v6216, 6
    %v7490 = vrot.slane %v6693, 5
    %v7492 = vrot.slane %v7170, 4
    %v7495 = vrot.slane %v7479, 3
    %vm7497 = vcmask 1040384
    %v7498 = vsel %vm7497, %v5262, %v7486
    %vm7499 = vcmask 1041408
    %v7500 = vsel %vm7499, %v7498, %v7488
    %vm7501 = vcmask 1042432
    %v7502 = vsel %vm7501, %v7500, %v7490
    %vm7503 = vcmask 1043456
    %v7504 = vsel %vm7503, %v7502, %v7492
    %vm7505 = vcmask 1044480
    %v7506 = vsel %vm7505, %v7504, %v7495
    %v7508 = vlaneseq
    %v7509 = vshrl.u32 %v7508, 7
    %v7510 = vsub.s32 0, %v7509
    %v7511 = vrot.slane %v7485, %v7510
    %v7514 = vsel %vm323, %v7506, 0
    %7516 = vmatprep.subr.mxu0 0.0
    %7517 = vmatpush1.msra.mxu0 %v7480
    %7518 = vmatprep.subr.mxu0 0.0
    %7519 = vmatpush1.msra.mxu0 %v7481
    %7520 = vmatprep.subr.mxu0 0.0
    %7521 = vmatpush1.msra.mxu0 %v7482
    %7522 = vmatprep.subr.mxu0 0.0
    %7523 = vmatpush1.msra.mxu0 %v7483
    %7524 = vmatprep.subr.mxu0 0.0
    %7525 = vmatpush1.msra.mxu0 0.0
    %7526 = vmatprep.subr.mxu0 0.0
    %7527 = vmatpush1.msra.mxu0 0.0
    %7528 = vmatprep.subr.mxu0 0.0
    %7529 = vmatpush1.msra.mxu0 0.0
    %7530 = vmatprep.subr.mxu0 0.0
    %7531 = vmatpush1.msra.mxu0 0.0
    %7532 = vmatprep.subr.mxu0 0.0
    %7533 = vmatpush1.msra.mxu0 0.0
    %7534 = vmatprep.subr.mxu0 0.0
    %7535 = vmatpush1.msra.mxu0 0.0
    %7536 = vmatprep.subr.mxu0 0.0
    %7537 = vmatpush1.msra.mxu0 0.0
    %7538 = vmatprep.subr.mxu0 0.0
    %7539 = vmatpush1.msra.mxu0 0.0
    %7540 = vmatprep.subr.mxu0 0.0
    %7541 = vmatpush1.msra.mxu0 0.0
    %7542 = vmatprep.subr.mxu0 0.0
    %7543 = vmatpush1.msra.mxu0 0.0
    %7544 = vmatprep.subr.mxu0 0.0
    %7545 = vmatpush1.msra.mxu0 0.0
    %7546 = vmatprep.subr.mxu0 0.0
    %7547 = vmatpush1.msra.mxu0 0.0
    %7548 = vmatprep.subr.mxu0 0.0
    %7549 = vmatpush1.msra.mxu0 0.0
    %7550 = vmatprep.subr.mxu0 0.0
    %7551 = vmatpush1.msra.mxu0 0.0
    %7552 = vmatprep.subr.mxu0 0.0
    %7553 = vmatpush1.msra.mxu0 0.0
    %7554 = vmatprep.subr.mxu0 0.0
    %7555 = vmatpush1.msra.mxu0 0.0
    %7556 = vmatprep.subr.mxu0 0.0
    %7557 = vmatpush1.msra.mxu0 0.0
    %7558 = vmatprep.subr.mxu0 0.0
    %7559 = vmatpush1.msra.mxu0 0.0
    %7560 = vmatprep.subr.mxu0 0.0
    %7561 = vmatpush1.msra.mxu0 0.0
    %7562 = vmatprep.subr.mxu0 0.0
    %7563 = vmatpush1.msra.mxu0 0.0
    %7564 = vmatprep.subr.mxu0 0.0
    %7565 = vmatpush1.msra.mxu0 0.0
    %7566 = vmatprep.subr.mxu0 0.0
    %7567 = vmatpush1.msra.mxu0 0.0
    %7568 = vmatprep.subr.mxu0 0.0
    %7569 = vmatpush1.msra.mxu0 0.0
    %7570 = vmatprep.subr.mxu0 0.0
    %7571 = vmatpush1.msra.mxu0 0.0
    %7572 = vmatprep.subr.mxu0 0.0
    %7573 = vmatpush1.msra.mxu0 0.0
    %7574 = vmatprep.subr.mxu0 0.0
    %7575 = vmatpush1.msra.mxu0 0.0
    %7576 = vmatprep.subr.mxu0 0.0
    %7577 = vmatpush1.msra.mxu0 0.0
    %7578 = vmatprep.subr.mxu0 0.0
    %7579 = vmatpush1.msra.mxu0 0.0
    %7580 = vmatprep.mubr.f32.mxu0 0.0
    %7581 = vmatmul.mubr.f32.gmra.mrb[0].mxu0 %v7514
    %v7582 = vpop.f32.mrb[0].mxu0
    %v7583 = vadd.f32 %v7511, %v7582
    %v7584 = vpop.f32.mrb[0].mxu0
    %7585 = vdwg.mxu0
    %7586 = vst [vmem:[%s4] sm:$0x3f] %v7583
    %v7587 = vrot.slane %v5262, 1
    %v7589 = vrot.slane %v6216, 7
    %v7591 = vrot.slane %v6693, 6
    %v7593 = vrot.slane %v7170, 5
    %v7595 = vrot.slane %v7479, 4
    %v7597 = vsel %vm7497, %v7587, %v5739
    %v7598 = vsel %vm7499, %v7597, %v7589
    %v7599 = vsel %vm7501, %v7598, %v7591
    %v7600 = vsel %vm7503, %v7599, %v7593
    %v7601 = vsel %vm7505, %v7600, %v7595
    %v7603 = vsel %vm323, %v7601, 0
    %7605 = vmatprep.subr.mxu0 0.0
    %7606 = vmatpush1.msra.mxu0 %v7480
    %7607 = vmatprep.subr.mxu0 0.0
    %7608 = vmatpush1.msra.mxu0 %v7481
    %7609 = vmatprep.subr.mxu0 0.0
    %7610 = vmatpush1.msra.mxu0 %v7482
    %7611 = vmatprep.subr.mxu0 0.0
    %7612 = vmatpush1.msra.mxu0 %v7483
    %7613 = vmatprep.subr.mxu0 0.0
    %7614 = vmatpush1.msra.mxu0 0.0
    %7615 = vmatprep.subr.mxu0 0.0
    %7616 = vmatpush1.msra.mxu0 0.0
    %7617 = vmatprep.subr.mxu0 0.0
    %7618 = vmatpush1.msra.mxu0 0.0
    %7619 = vmatprep.subr.mxu0 0.0
    %7620 = vmatpush1.msra.mxu0 0.0
    %7621 = vmatprep.subr.mxu0 0.0
    %7622 = vmatpush1.msra.mxu0 0.0
    %7623 = vmatprep.subr.mxu0 0.0
    %7624 = vmatpush1.msra.mxu0 0.0
    %7625 = vmatprep.subr.mxu0 0.0
    %7626 = vmatpush1.msra.mxu0 0.0
    %7627 = vmatprep.subr.mxu0 0.0
    %7628 = vmatpush1.msra.mxu0 0.0
    %7629 = vmatprep.subr.mxu0 0.0
    %7630 = vmatpush1.msra.mxu0 0.0
    %7631 = vmatprep.subr.mxu0 0.0
    %7632 = vmatpush1.msra.mxu0 0.0
    %7633 = vmatprep.subr.mxu0 0.0
    %7634 = vmatpush1.msra.mxu0 0.0
    %7635 = vmatprep.subr.mxu0 0.0
    %7636 = vmatpush1.msra.mxu0 0.0
    %7637 = vmatprep.subr.mxu0 0.0
    %7638 = vmatpush1.msra.mxu0 0.0
    %7639 = vmatprep.subr.mxu0 0.0
    %7640 = vmatpush1.msra.mxu0 0.0
    %7641 = vmatprep.subr.mxu0 0.0
    %7642 = vmatpush1.msra.mxu0 0.0
    %7643 = vmatprep.subr.mxu0 0.0
    %7644 = vmatpush1.msra.mxu0 0.0
    %7645 = vmatprep.subr.mxu0 0.0
    %7646 = vmatpush1.msra.mxu0 0.0
    %7647 = vmatprep.subr.mxu0 0.0
    %7648 = vmatpush1.msra.mxu0 0.0
    %7649 = vmatprep.subr.mxu0 0.0
    %7650 = vmatpush1.msra.mxu0 0.0
    %7651 = vmatprep.subr.mxu0 0.0
    %7652 = vmatpush1.msra.mxu0 0.0
    %7653 = vmatprep.subr.mxu0 0.0
    %7654 = vmatpush1.msra.mxu0 0.0
    %7655 = vmatprep.subr.mxu0 0.0
    %7656 = vmatpush1.msra.mxu0 0.0
    %7657 = vmatprep.subr.mxu0 0.0
    %7658 = vmatpush1.msra.mxu0 0.0
    %7659 = vmatprep.subr.mxu0 0.0
    %7660 = vmatpush1.msra.mxu0 0.0
    %7661 = vmatprep.subr.mxu0 0.0
    %7662 = vmatpush1.msra.mxu0 0.0
    %7663 = vmatprep.subr.mxu0 0.0
    %7664 = vmatpush1.msra.mxu0 0.0
    %7665 = vmatprep.subr.mxu0 0.0
    %7666 = vmatpush1.msra.mxu0 0.0
    %7667 = vmatprep.subr.mxu0 0.0
    %7668 = vmatpush1.msra.mxu0 0.0
    %7669 = vmatprep.mubr.f32.mxu0 0.0
    %7670 = vmatmul.mubr.f32.gmra.mrb[0].mxu0 %v7603
    %v7671 = vpop.f32.mrb[0].mxu0
    %v7672 = vadd.f32 %v7511, %v7671
    %v7673 = vpop.f32.mrb[0].mxu0
    %7674 = vdwg.mxu0
    %s7675 = scalar_lea.vmem %s4, 8
    %7676 = vst [vmem:[%s7675] sm:$0x3f] %v7672
    %vm7677 = vcmask 254976
    %7678 = vst.msk [vmem:[#allocation13] sm:$0x3] %vm7677, %v7149
    %s7679 = scalar_lea.vmem [#allocation13], 2
    %7680 = vst.msk [vmem:[%s7679] sm:$0x3] %vm7677, %v7479
    // Predicated region
    $region34: #{seq2seq_pallas.1} parent=1 // pred_check
      _
    $region35: #{seq2seq_pallas.1} parent=1 // pred_check_branch
      %7682 = sbr.rel (0) target = $region37
    $region36: #{seq2seq_pallas.1} parent=1 // pred_region
      _
    $region37: #{seq2seq_pallas.1} parent=1 // pred_fallthru
      _
    // Predicated region
    $region38: #{seq2seq_pallas.1} parent=1 // pred_check
      _
    $region39: #{seq2seq_pallas.1} parent=1 // pred_check_branch
      %7684 = sbr.rel (0) target = $region41
    $region40: #{seq2seq_pallas.1} parent=1 // pred_region
      %s7686 = ssub.s32 64, 64
      %7687 = vsyncadd [#allocation6], %s7686
      %s7688 = sshll.u32 [#allocation13], 4
      %s7689 = int_to_ptr.vmem [resolvable:$true] %s7688
      %7694 = dma.vmem_to_hbm [thread:$0]  %s7689, 64, %s5, [#allocation6], 32, 32, 2
    $region41: #{seq2seq_pallas.1} parent=1 // pred_fallthru
      _
    // Predicated region
    $region42: #{seq2seq_pallas.1} parent=1 // pred_check
      _
    $region43: #{seq2seq_pallas.1} parent=1 // pred_check_branch
      %7696 = sbr.rel (0) target = $region45
    $region44: #{seq2seq_pallas.1} parent=1 // pred_region
      _
    $region45: #{seq2seq_pallas.1} parent=1 // pred_fallthru
      _
    // Predicated region
    $region46: #{seq2seq_pallas.1} parent=1 // pred_check
      _
    $region47: #{seq2seq_pallas.1} parent=1 // pred_check_branch
      %7698 = sbr.rel (0) target = $region49
    $region48: #{seq2seq_pallas.1} parent=1 // pred_region
      %7699 = dma.done [#allocation6], 64
    $region49: #{seq2seq_pallas.1} parent=1 // pred_fallthru
      _
    %7700 = vsyncpa [#allocation5], 1
    %7701 = vsyncpa [#allocation12], 1
    %7702 = vsyncpa [#allocation6], 1
    %7703 = vsyncpa [#allocation7], 1
    %7704 = vsyncpa [#allocation9], 1

</llo_original>
